<compile_context>
chip_gen: v7x
topology: tpu7x:2x2x1
jax: 0.10.0
libtpu: 0.0.40
codegen_flags: <defaults>
</compile_context>

<pallas_src>
import math
import functools

import jax
import jax.numpy as jnp
from jax import lax
from jax.experimental import pallas as pl
from jax.experimental.pallas import tpu as pltpu

# Small, self-consistent configuration (scaled-down version of the PyTorch defaults).
DICT_SIZE = 50
DIM_MODEL = 32
N_LAYERS = 2
N_HEADS = 4
DIM_FFN = 64
MAX_SEQ_LEN = 16
LN_EPS = 1e-5

D_PAD = 128  # every feature/lane dimension is zero-padded to the 128-lane vreg width

_VMEM = pl.BlockSpec(memory_space=pltpu.MemorySpace.VMEM)  # whole array resident in VMEM


# ----------------------------------------------------------------------------- fused kernel
def _transformer_kernel(
    x_ref, pe_ref, wqkv_ref, bqkv_ref, wo_ref, bo_ref, g1_ref, t1_ref,
    w1_ref, c1_ref, w2_ref, c2_ref, g2_ref, t2_ref, gf_ref, tf_ref,
    wout_ref, bout_ref, o_ref,
    *, n_layers, batch, seq, d_model, n_heads, d_head, vocab, eps,
):
    f32 = jnp.float32
    d_pad = o_ref.shape[-1]                                    # lane-padded width (128)
    inv_d = f32(1.0 / d_model)
    lane = lax.broadcasted_iota(jnp.int32, (1, d_pad), 1)
    mask_d = (lane < d_model).astype(f32)                      # valid-feature mask
    mask_v = lane < vocab                                      # valid-vocab mask

    def layer_norm(x, gamma, beta):
        # mean/var over the D valid features only (padding lanes of x are always zero);
        # gamma/beta padding is zero, so the output padding stays zero.
        mu = jnp.sum(x, axis=-1, keepdims=True) * inv_d
        diff = (x - mu) * mask_d
        var = jnp.sum(diff * diff, axis=-1, keepdims=True) * inv_d
        return diff * lax.rsqrt(var + eps) * gamma + beta

    # --- Embedder: scale by sqrt(D) and add sinusoidal PE (fused; no extra XLA/HBM pass) ---
    pe = jnp.concatenate([pe_ref[...]] * batch, axis=0)        # (B*S, P)
    x = x_ref[...] * f32(math.sqrt(d_model)) + pe

    attn_scale = f32(1.0 / math.sqrt(d_head))

    for l in range(n_layers):
        # ---- multi-head self-attention sublayer (packed QKV, per-head lane-padded blocks) ----
        qkv = jnp.dot(x, wqkv_ref[l], preferred_element_type=f32) + bqkv_ref[l]  # (B*S, 3*H*P)
        rows = []
        for b in range(batch):
            r0 = b * seq
            a_b = jnp.zeros((seq, d_pad), f32)
            for h in range(n_heads):
                q = qkv[r0:r0 + seq, h * d_pad:(h + 1) * d_pad]
                k = qkv[r0:r0 + seq, (n_heads + h) * d_pad:(n_heads + h + 1) * d_pad]
                v = qkv[r0:r0 + seq, (2 * n_heads + h) * d_pad:(2 * n_heads + h + 1) * d_pad]
                # padded lanes are zero in q/k, so contracting over all 128 lanes == valid Dh.
                s = lax.dot_general(q, k, (((1,), (1,)), ((), ())),
                                    preferred_element_type=f32) * attn_scale     # (S, S)
                mx = jnp.max(s, axis=-1, keepdims=True)
                p = jnp.exp(s - mx)
                p = p * pl.reciprocal(jnp.sum(p, axis=-1, keepdims=True), approx=True)
                ctx = jnp.dot(p, v, preferred_element_type=f32)                  # (S, P)
                # per-head slice of Wo (rows zero-padded to 128) -> accumulate output proj.
                a_b = a_b + jnp.dot(ctx, wo_ref[l * n_heads + h],
                                    preferred_element_type=f32)
            rows.append(a_b)
        attn_out = jnp.concatenate(rows, axis=0) + bo_ref[l]                     # (B*S, P)
        x = layer_norm(x + attn_out, g1_ref[l], t1_ref[l])

        # ---- position-wise feed-forward sublayer (post-norm) ----
        hdn = jnp.maximum(jnp.dot(x, w1_ref[l], preferred_element_type=f32) + c1_ref[l], 0.0)
        ffn = jnp.dot(hdn, w2_ref[l], preferred_element_type=f32) + c2_ref[l]
        x = layer_norm(x + ffn, g2_ref[l], t2_ref[l])

    # final encoder LayerNorm (no zeros residual, no extra kernel launch)
    x = layer_norm(x, gf_ref[...], tf_ref[...])

    # OutputLayer: Linear(d_model -> vocab) + softmax over the valid vocab lanes.
    logits = jnp.dot(x, wout_ref[...], preferred_element_type=f32) + bout_ref[...]
    logits = jnp.where(mask_v, logits, f32(-1e30))
    mx = jnp.max(logits, axis=-1, keepdims=True)
    e = jnp.exp(logits - mx)
    o_ref[...] = (e / jnp.sum(e, axis=-1, keepdims=True)).astype(o_ref.dtype)


# ----------------------------------------------------------------------------- params
def sinusoidal_pe(max_len, d_model):
    pos = jnp.arange(max_len, dtype=jnp.float32)[:, None]
    i = jnp.arange(0, d_model, 2, dtype=jnp.float32)[None, :]
    angle = pos / jnp.power(10000.0, i / d_model)
    pe = jnp.zeros((max_len, d_model), jnp.float32)
    pe = pe.at[:, 0::2].set(jnp.sin(angle))
    pe = pe.at[:, 1::2].set(jnp.cos(angle))
    return pe


def init_params(key):
    def dense(k, fan_in, fan_out):
        return jax.random.normal(k, (fan_in, fan_out), jnp.float32) * 0.02

    keys = jax.random.split(key, 2 + 8 * N_LAYERS)
    it = iter(keys)
    params = {
        "embed": jax.random.normal(next(it), (DICT_SIZE, DIM_MODEL), jnp.float32) * 0.02,
        "pos": sinusoidal_pe(MAX_SEQ_LEN, DIM_MODEL),
        "layers": [],
        "gf": jnp.ones((DIM_MODEL,), jnp.float32),
        "bf": jnp.zeros((DIM_MODEL,), jnp.float32),
        "wout": dense(next(it), DIM_MODEL, DICT_SIZE),
        "bout": jnp.zeros((DICT_SIZE,), jnp.float32),
    }
    for _ in range(N_LAYERS):
        layer = {
            "wq": dense(next(it), DIM_MODEL, DIM_MODEL), "bq": jnp.zeros((DIM_MODEL,), jnp.float32),
            "wk": dense(next(it), DIM_MODEL, DIM_MODEL), "bk": jnp.zeros((DIM_MODEL,), jnp.float32),
            "wv": dense(next(it), DIM_MODEL, DIM_MODEL), "bv": jnp.zeros((DIM_MODEL,), jnp.float32),
            "wo": dense(next(it), DIM_MODEL, DIM_MODEL), "bo": jnp.zeros((DIM_MODEL,), jnp.float32),
            "w1": dense(next(it), DIM_MODEL, DIM_FFN),   "b1f": jnp.zeros((DIM_FFN,), jnp.float32),
            "w2": dense(next(it), DIM_FFN, DIM_MODEL),   "b2f": jnp.zeros((DIM_MODEL,), jnp.float32),
            "g1": jnp.ones((DIM_MODEL,), jnp.float32), "b1": jnp.zeros((DIM_MODEL,), jnp.float32),
            "g2": jnp.ones((DIM_MODEL,), jnp.float32), "b2": jnp.zeros((DIM_MODEL,), jnp.float32),
        }
        params["layers"].append(layer)
    return params


def pack_params(params):
    """Zero-pad all lane dims to 128, pack per-head QKV/Wo blocks, stack layers."""
    D, P, H, Dh = DIM_MODEL, D_PAD, N_HEADS, DIM_MODEL // N_HEADS

    def pad2(a, rows, cols):
        r, c = a.shape
        return jnp.pad(a, ((0, rows - r), (0, cols - c)))

    def padrow(v):                                   # (n,) -> (1, P)
        return pad2(v[None, :], 1, P)

    def qkv_weight(layer):                           # (P, 3*H*P): [Q_0..Q_H-1 | K_.. | V_..]
        blocks = []
        for name in ("wq", "wk", "wv"):
            w = layer[name]
            for h in range(H):
                blocks.append(pad2(w[:, h * Dh:(h + 1) * Dh], P, P))
        return jnp.concatenate(blocks, axis=1)

    def qkv_bias(layer):                             # (1, 3*H*P)
        blocks = []
        for name in ("bq", "bk", "bv"):
            b = layer[name]
            for h in range(H):
                blocks.append(pad2(b[h * Dh:(h + 1) * Dh][None, :], 1, P))
        return jnp.concatenate(blocks, axis=1)

    def wo_heads(layer):                             # (H, P, P): rows h*Dh:(h+1)*Dh of Wo, padded
        return jnp.stack([pad2(layer["wo"][h * Dh:(h + 1) * Dh, :], P, P) for h in range(H)])

    layers = params["layers"]
    return {
        "emb": jnp.pad(params["embed"], ((0, 0), (0, P - D))),          # (V, P)
        "pe": jnp.pad(params["pos"], ((0, 0), (0, P - D))),             # (MAX_SEQ_LEN, P)
        "wqkv": jnp.stack([qkv_weight(l) for l in layers]),             # (L, P, 3*H*P)
        "bqkv": jnp.stack([qkv_bias(l) for l in layers]),               # (L, 1, 3*H*P)
        "wo": jnp.concatenate([wo_heads(l) for l in layers], axis=0),   # (L*H, P, P)
        "bo": jnp.stack([padrow(l["bo"]) for l in layers]),
        "g1": jnp.stack([padrow(l["g1"]) for l in layers]),
        "t1": jnp.stack([padrow(l["b1"]) for l in layers]),
        "w1": jnp.stack([pad2(l["w1"], P, P) for l in layers]),         # (L, P, P)
        "c1": jnp.stack([padrow(l["b1f"]) for l in layers]),
        "w2": jnp.stack([pad2(l["w2"], P, P) for l in layers]),         # (L, P, P)
        "c2": jnp.stack([padrow(l["b2f"]) for l in layers]),
        "g2": jnp.stack([padrow(l["g2"]) for l in layers]),
        "t2": jnp.stack([padrow(l["b2"]) for l in layers]),
        "gf": padrow(params["gf"]),
        "tf": padrow(params["bf"]),
        "wout": pad2(params["wout"], P, P),
        "bout": padrow(params["bout"]),
    }


# ----------------------------------------------------------------------------- forward
def transformer_forward(packed, tokens):
    B, S = tokens.shape
    BS = B * S

    # Token-id gather stays in XLA (glue). Table is pre-padded -> activation is already (BS, 128).
    x = packed["emb"][tokens.reshape(BS)]                 # (BS, P)
    pe = packed["pe"][:S]                                 # (S, P)

    kernel = functools.partial(
        _transformer_kernel,
        n_layers=N_LAYERS, batch=B, seq=S, d_model=DIM_MODEL,
        n_heads=N_HEADS, d_head=DIM_MODEL // N_HEADS,
        vocab=DICT_SIZE, eps=LN_EPS,
    )
    probs_p = pl.pallas_call(
        kernel,
        out_shape=jax.ShapeDtypeStruct((BS, D_PAD), jnp.float32),
        in_specs=[_VMEM] * 18,
        out_specs=_VMEM,
    )(
        x, pe,
        packed["wqkv"], packed["bqkv"], packed["wo"], packed["bo"],
        packed["g1"], packed["t1"],
        packed["w1"], packed["c1"], packed["w2"], packed["c2"],
        packed["g2"], packed["t2"],
        packed["gf"], packed["tf"], packed["wout"], packed["bout"],
    )
    return probs_p[:, :DICT_SIZE].reshape(B, S, DICT_SIZE)


# ----------------------------------------------------------------------------- main
if __name__ == "__main__":
    key = jax.random.PRNGKey(0)
    pkey, tkey = jax.random.split(key)
    params = init_params(pkey)
    packed = pack_params(params)

    B, S = 2, 8
    tokens = jax.random.randint(tkey, (B, S), 0, DICT_SIZE, dtype=jnp.int32)

    out = jax.jit(transformer_forward)(packed, tokens)
    out = jax.block_until_ready(out)

    assert out.shape == (B, S, DICT_SIZE), out.shape
    assert bool(jnp.all(jnp.isfinite(out)))
    # softmax rows sum to 1
    assert bool(jnp.allclose(jnp.sum(out, axis=-1), 1.0, atol=1e-4))
    print("KERNEL_OK")
</pallas_src>

<mosaic_0001>
module attributes {stable_mosaic.version = 11 : i64} {
  func.func @_transformer_kernel(%arg0: memref<16x128xf32, #tpu.memory_space<vmem>>, %arg1: memref<8x128xf32, #tpu.memory_space<vmem>>, %arg2: memref<2x128x1536xf32, #tpu.memory_space<vmem>>, %arg3: memref<2x1x1536xf32, #tpu.memory_space<vmem>>, %arg4: memref<8x128x128xf32, #tpu.memory_space<vmem>>, %arg5: memref<2x1x128xf32, #tpu.memory_space<vmem>>, %arg6: memref<2x1x128xf32, #tpu.memory_space<vmem>>, %arg7: memref<2x1x128xf32, #tpu.memory_space<vmem>>, %arg8: memref<2x128x128xf32, #tpu.memory_space<vmem>>, %arg9: memref<2x1x128xf32, #tpu.memory_space<vmem>>, %arg10: memref<2x128x128xf32, #tpu.memory_space<vmem>>, %arg11: memref<2x1x128xf32, #tpu.memory_space<vmem>>, %arg12: memref<2x1x128xf32, #tpu.memory_space<vmem>>, %arg13: memref<2x1x128xf32, #tpu.memory_space<vmem>>, %arg14: memref<1x128xf32, #tpu.memory_space<vmem>>, %arg15: memref<1x128xf32, #tpu.memory_space<vmem>>, %arg16: memref<128x128xf32, #tpu.memory_space<vmem>>, %arg17: memref<1x128xf32, #tpu.memory_space<vmem>>, %arg18: memref<16x128xf32, #tpu.memory_space<vmem>>) attributes {dimension_semantics = [], scalar_prefetch = 0 : i64, scratch_operands = 0 : i64, tpu.core_type = #tpu.core_type<tc>} {
    %0 = tpu.iota {dimensions = array<i32: 1>} : vector<1x128xi32>
    %c32_i32 = arith.constant 32 : i32
    %1 = vector.broadcast %c32_i32 : i32 to vector<1x128xi32>
    %2 = arith.cmpi slt, %0, %1 : vector<1x128xi32>
    %3 = arith.extui %2 : vector<1x128xi1> to vector<1x128xi32>
    %4 = arith.sitofp %3 : vector<1x128xi32> to vector<1x128xf32>
    %c50_i32 = arith.constant 50 : i32
    %5 = vector.broadcast %c50_i32 : i32 to vector<1x128xi32>
    %6 = arith.cmpi slt, %0, %5 : vector<1x128xi32>
    %c0 = arith.constant 0 : index
    %c0_0 = arith.constant 0 : index
    %7 = vector.load %arg1[%c0, %c0_0] : memref<8x128xf32, #tpu.memory_space<vmem>>, vector<8x128xf32>
    %8 = tpu.concatenate %7, %7 in 0 : vector<8x128xf32>, vector<8x128xf32> -> vector<16x128xf32>
    %c0_1 = arith.constant 0 : index
    %c0_2 = arith.constant 0 : index
    %9 = vector.load %arg0[%c0_1, %c0_2] : memref<16x128xf32, #tpu.memory_space<vmem>>, vector<16x128xf32>
    %cst = arith.constant 5.65685415 : f32
    %10 = vector.broadcast %cst : f32 to vector<16x128xf32>
    %11 = arith.mulf %9, %10 : vector<16x128xf32>
    %12 = arith.addf %11, %8 : vector<16x128xf32>
    %c0_3 = arith.constant 0 : index
    %c0_4 = arith.constant 0 : index
    %c0_5 = arith.constant 0 : index
    %13 = vector.load %arg2[%c0_3, %c0_4, %c0_5] : memref<2x128x1536xf32, #tpu.memory_space<vmem>>, vector<1x128x1536xf32>
    %14 = vector.shape_cast %13 : vector<1x128x1536xf32> to vector<128x1536xf32>
    %cst_6 = arith.constant dense<0.000000e+00> : vector<16x1536xf32>
    %15 = tpu.matmul %12, %14, %cst_6 {dimension_numbers = #tpu.dot_dimension_numbers<[1], [0], [0], [1], [0, 0, 1, 1], [], []>} : vector<16x128xf32>, vector<128x1536xf32>, vector<16x1536xf32> -> vector<16x1536xf32>
    %c0_7 = arith.constant 0 : index
    %c0_8 = arith.constant 0 : index
    %c0_9 = arith.constant 0 : index
    %16 = vector.load %arg3[%c0_7, %c0_8, %c0_9] : memref<2x1x1536xf32, #tpu.memory_space<vmem>>, vector<1x1x1536xf32>
    %17 = vector.shape_cast %16 : vector<1x1x1536xf32> to vector<1x1536xf32>
    %18 = vector.broadcast %17 : vector<1x1536xf32> to vector<16x1536xf32>
    %19 = arith.addf %15, %18 : vector<16x1536xf32>
    %cst_10 = arith.constant 0.000000e+00 : f32
    %20 = vector.broadcast %cst_10 : f32 to vector<8x128xf32>
    %21 = vector.extract_strided_slice %19 {offsets = [0, 0], sizes = [8, 128], strides = [1, 1]} : vector<16x1536xf32> to vector<8x128xf32>
    %22 = vector.extract_strided_slice %19 {offsets = [0, 512], sizes = [8, 128], strides = [1, 1]} : vector<16x1536xf32> to vector<8x128xf32>
    %23 = vector.extract_strided_slice %19 {offsets = [0, 1024], sizes = [8, 128], strides = [1, 1]} : vector<16x1536xf32> to vector<8x128xf32>
    %cst_11 = arith.constant dense<0.000000e+00> : vector<8x8xf32>
    %24 = tpu.matmul %21, %22, %cst_11 {dimension_numbers = #tpu.dot_dimension_numbers<[1], [1], [0], [0], [0, 0, 1, 0], [], []>} : vector<8x128xf32>, vector<8x128xf32>, vector<8x8xf32> -> vector<8x8xf32>
    %cst_12 = arith.constant 0.353553385 : f32
    %25 = vector.broadcast %cst_12 : f32 to vector<8x8xf32>
    %26 = arith.mulf %24, %25 : vector<8x8xf32>
    %cst_13 = arith.constant dense<0xFF800000> : vector<8xf32>
    %27 = vector.multi_reduction <maximumf>, %26, %cst_13 [1] : vector<8x8xf32> to vector<8xf32>
    %28 = vector.shape_cast %27 : vector<8xf32> to vector<8x1xf32>
    %29 = vector.broadcast %28 : vector<8x1xf32> to vector<8x8xf32>
    %30 = arith.subf %26, %29 : vector<8x8xf32>
    %31 = math.exp %30 : vector<8x8xf32>
    %cst_14 = arith.constant dense<0.000000e+00> : vector<8xf32>
    %32 = vector.multi_reduction <add>, %31, %cst_14 [1] : vector<8x8xf32> to vector<8xf32>
    %33 = vector.shape_cast %32 : vector<8xf32> to vector<8x1xf32>
    %34 = tpu.reciprocal %33 {approx = true} : vector<8x1xf32> -> vector<8x1xf32>
    %35 = vector.broadcast %34 : vector<8x1xf32> to vector<8x8xf32>
    %36 = arith.mulf %31, %35 : vector<8x8xf32>
    %cst_15 = arith.constant dense<0.000000e+00> : vector<8x128xf32>
    %37 = tpu.matmul %36, %23, %cst_15 {dimension_numbers = #tpu.dot_dimension_numbers<[1], [0], [0], [1], [0, 0, 1, 1], [], []>} : vector<8x8xf32>, vector<8x128xf32>, vector<8x128xf32> -> vector<8x128xf32>
    %c0_16 = arith.constant 0 : index
    %c0_17 = arith.constant 0 : index
    %c0_18 = arith.constant 0 : index
    %38 = vector.load %arg4[%c0_16, %c0_17, %c0_18] : memref<8x128x128xf32, #tpu.memory_space<vmem>>, vector<1x128x128xf32>
    %39 = vector.shape_cast %38 : vector<1x128x128xf32> to vector<128x128xf32>
    %cst_19 = arith.constant dense<0.000000e+00> : vector<8x128xf32>
    %40 = tpu.matmul %37, %39, %cst_19 {dimension_numbers = #tpu.dot_dimension_numbers<[1], [0], [0], [1], [0, 0, 1, 1], [], []>} : vector<8x128xf32>, vector<128x128xf32>, vector<8x128xf32> -> vector<8x128xf32>
    %41 = arith.addf %20, %40 : vector<8x128xf32>
    %42 = vector.extract_strided_slice %19 {offsets = [0, 128], sizes = [8, 128], strides = [1, 1]} : vector<16x1536xf32> to vector<8x128xf32>
    %43 = vector.extract_strided_slice %19 {offsets = [0, 640], sizes = [8, 128], strides = [1, 1]} : vector<16x1536xf32> to vector<8x128xf32>
    %44 = vector.extract_strided_slice %19 {offsets = [0, 1152], sizes = [8, 128], strides = [1, 1]} : vector<16x1536xf32> to vector<8x128xf32>
    %cst_20 = arith.constant dense<0.000000e+00> : vector<8x8xf32>
    %45 = tpu.matmul %42, %43, %cst_20 {dimension_numbers = #tpu.dot_dimension_numbers<[1], [1], [0], [0], [0, 0, 1, 0], [], []>} : vector<8x128xf32>, vector<8x128xf32>, vector<8x8xf32> -> vector<8x8xf32>
    %cst_21 = arith.constant 0.353553385 : f32
    %46 = vector.broadcast %cst_21 : f32 to vector<8x8xf32>
    %47 = arith.mulf %45, %46 : vector<8x8xf32>
    %cst_22 = arith.constant dense<0xFF800000> : vector<8xf32>
    %48 = vector.multi_reduction <maximumf>, %47, %cst_22 [1] : vector<8x8xf32> to vector<8xf32>
    %49 = vector.shape_cast %48 : vector<8xf32> to vector<8x1xf32>
    %50 = vector.broadcast %49 : vector<8x1xf32> to vector<8x8xf32>
    %51 = arith.subf %47, %50 : vector<8x8xf32>
    %52 = math.exp %51 : vector<8x8xf32>
    %cst_23 = arith.constant dense<0.000000e+00> : vector<8xf32>
    %53 = vector.multi_reduction <add>, %52, %cst_23 [1] : vector<8x8xf32> to vector<8xf32>
    %54 = vector.shape_cast %53 : vector<8xf32> to vector<8x1xf32>
    %55 = tpu.reciprocal %54 {approx = true} : vector<8x1xf32> -> vector<8x1xf32>
    %56 = vector.broadcast %55 : vector<8x1xf32> to vector<8x8xf32>
    %57 = arith.mulf %52, %56 : vector<8x8xf32>
    %cst_24 = arith.constant dense<0.000000e+00> : vector<8x128xf32>
    %58 = tpu.matmul %57, %44, %cst_24 {dimension_numbers = #tpu.dot_dimension_numbers<[1], [0], [0], [1], [0, 0, 1, 1], [], []>} : vector<8x8xf32>, vector<8x128xf32>, vector<8x128xf32> -> vector<8x128xf32>
    %c1 = arith.constant 1 : index
    %c0_25 = arith.constant 0 : index
    %c0_26 = arith.constant 0 : index
    %59 = vector.load %arg4[%c1, %c0_25, %c0_26] : memref<8x128x128xf32, #tpu.memory_space<vmem>>, vector<1x128x128xf32>
    %60 = vector.shape_cast %59 : vector<1x128x128xf32> to vector<128x128xf32>
    %cst_27 = arith.constant dense<0.000000e+00> : vector<8x128xf32>
    %61 = tpu.matmul %58, %60, %cst_27 {dimension_numbers = #tpu.dot_dimension_numbers<[1], [0], [0], [1], [0, 0, 1, 1], [], []>} : vector<8x128xf32>, vector<128x128xf32>, vector<8x128xf32> -> vector<8x128xf32>
    %62 = arith.addf %41, %61 : vector<8x128xf32>
    %63 = vector.extract_strided_slice %19 {offsets = [0, 256], sizes = [8, 128], strides = [1, 1]} : vector<16x1536xf32> to vector<8x128xf32>
    %64 = vector.extract_strided_slice %19 {offsets = [0, 768], sizes = [8, 128], strides = [1, 1]} : vector<16x1536xf32> to vector<8x128xf32>
    %65 = vector.extract_strided_slice %19 {offsets = [0, 1280], sizes = [8, 128], strides = [1, 1]} : vector<16x1536xf32> to vector<8x128xf32>
    %cst_28 = arith.constant dense<0.000000e+00> : vector<8x8xf32>
    %66 = tpu.matmul %63, %64, %cst_28 {dimension_numbers = #tpu.dot_dimension_numbers<[1], [1], [0], [0], [0, 0, 1, 0], [], []>} : vector<8x128xf32>, vector<8x128xf32>, vector<8x8xf32> -> vector<8x8xf32>
    %cst_29 = arith.constant 0.353553385 : f32
    %67 = vector.broadcast %cst_29 : f32 to vector<8x8xf32>
    %68 = arith.mulf %66, %67 : vector<8x8xf32>
    %cst_30 = arith.constant dense<0xFF800000> : vector<8xf32>
    %69 = vector.multi_reduction <maximumf>, %68, %cst_30 [1] : vector<8x8xf32> to vector<8xf32>
    %70 = vector.shape_cast %69 : vector<8xf32> to vector<8x1xf32>
    %71 = vector.broadcast %70 : vector<8x1xf32> to vector<8x8xf32>
    %72 = arith.subf %68, %71 : vector<8x8xf32>
    %73 = math.exp %72 : vector<8x8xf32>
    %cst_31 = arith.constant dense<0.000000e+00> : vector<8xf32>
    %74 = vector.multi_reduction <add>, %73, %cst_31 [1] : vector<8x8xf32> to vector<8xf32>
    %75 = vector.shape_cast %74 : vector<8xf32> to vector<8x1xf32>
    %76 = tpu.reciprocal %75 {approx = true} : vector<8x1xf32> -> vector<8x1xf32>
    %77 = vector.broadcast %76 : vector<8x1xf32> to vector<8x8xf32>
    %78 = arith.mulf %73, %77 : vector<8x8xf32>
    %cst_32 = arith.constant dense<0.000000e+00> : vector<8x128xf32>
    %79 = tpu.matmul %78, %65, %cst_32 {dimension_numbers = #tpu.dot_dimension_numbers<[1], [0], [0], [1], [0, 0, 1, 1], [], []>} : vector<8x8xf32>, vector<8x128xf32>, vector<8x128xf32> -> vector<8x128xf32>
    %c2 = arith.constant 2 : index
    %c0_33 = arith.constant 0 : index
    %c0_34 = arith.constant 0 : index
    %80 = vector.load %arg4[%c2, %c0_33, %c0_34] : memref<8x128x128xf32, #tpu.memory_space<vmem>>, vector<1x128x128xf32>
    %81 = vector.shape_cast %80 : vector<1x128x128xf32> to vector<128x128xf32>
    %cst_35 = arith.constant dense<0.000000e+00> : vector<8x128xf32>
    %82 = tpu.matmul %79, %81, %cst_35 {dimension_numbers = #tpu.dot_dimension_numbers<[1], [0], [0], [1], [0, 0, 1, 1], [], []>} : vector<8x128xf32>, vector<128x128xf32>, vector<8x128xf32> -> vector<8x128xf32>
    %83 = arith.addf %62, %82 : vector<8x128xf32>
    %84 = vector.extract_strided_slice %19 {offsets = [0, 384], sizes = [8, 128], strides = [1, 1]} : vector<16x1536xf32> to vector<8x128xf32>
    %85 = vector.extract_strided_slice %19 {offsets = [0, 896], sizes = [8, 128], strides = [1, 1]} : vector<16x1536xf32> to vector<8x128xf32>
    %86 = vector.extract_strided_slice %19 {offsets = [0, 1408], sizes = [8, 128], strides = [1, 1]} : vector<16x1536xf32> to vector<8x128xf32>
    %cst_36 = arith.constant dense<0.000000e+00> : vector<8x8xf32>
    %87 = tpu.matmul %84, %85, %cst_36 {dimension_numbers = #tpu.dot_dimension_numbers<[1], [1], [0], [0], [0, 0, 1, 0], [], []>} : vector<8x128xf32>, vector<8x128xf32>, vector<8x8xf32> -> vector<8x8xf32>
    %cst_37 = arith.constant 0.353553385 : f32
    %88 = vector.broadcast %cst_37 : f32 to vector<8x8xf32>
    %89 = arith.mulf %87, %88 : vector<8x8xf32>
    %cst_38 = arith.constant dense<0xFF800000> : vector<8xf32>
    %90 = vector.multi_reduction <maximumf>, %89, %cst_38 [1] : vector<8x8xf32> to vector<8xf32>
    %91 = vector.shape_cast %90 : vector<8xf32> to vector<8x1xf32>
    %92 = vector.broadcast %91 : vector<8x1xf32> to vector<8x8xf32>
    %93 = arith.subf %89, %92 : vector<8x8xf32>
    %94 = math.exp %93 : vector<8x8xf32>
    %cst_39 = arith.constant dense<0.000000e+00> : vector<8xf32>
    %95 = vector.multi_reduction <add>, %94, %cst_39 [1] : vector<8x8xf32> to vector<8xf32>
    %96 = vector.shape_cast %95 : vector<8xf32> to vector<8x1xf32>
    %97 = tpu.reciprocal %96 {approx = true} : vector<8x1xf32> -> vector<8x1xf32>
    %98 = vector.broadcast %97 : vector<8x1xf32> to vector<8x8xf32>
    %99 = arith.mulf %94, %98 : vector<8x8xf32>
    %cst_40 = arith.constant dense<0.000000e+00> : vector<8x128xf32>
    %100 = tpu.matmul %99, %86, %cst_40 {dimension_numbers = #tpu.dot_dimension_numbers<[1], [0], [0], [1], [0, 0, 1, 1], [], []>} : vector<8x8xf32>, vector<8x128xf32>, vector<8x128xf32> -> vector<8x128xf32>
    %c3 = arith.constant 3 : index
    %c0_41 = arith.constant 0 : index
    %c0_42 = arith.constant 0 : index
    %101 = vector.load %arg4[%c3, %c0_41, %c0_42] : memref<8x128x128xf32, #tpu.memory_space<vmem>>, vector<1x128x128xf32>
    %102 = vector.shape_cast %101 : vector<1x128x128xf32> to vector<128x128xf32>
    %cst_43 = arith.constant dense<0.000000e+00> : vector<8x128xf32>
    %103 = tpu.matmul %100, %102, %cst_43 {dimension_numbers = #tpu.dot_dimension_numbers<[1], [0], [0], [1], [0, 0, 1, 1], [], []>} : vector<8x128xf32>, vector<128x128xf32>, vector<8x128xf32> -> vector<8x128xf32>
    %104 = arith.addf %83, %103 : vector<8x128xf32>
    %cst_44 = arith.constant 0.000000e+00 : f32
    %105 = vector.broadcast %cst_44 : f32 to vector<8x128xf32>
    %106 = vector.extract_strided_slice %19 {offsets = [8, 0], sizes = [8, 128], strides = [1, 1]} : vector<16x1536xf32> to vector<8x128xf32>
    %107 = vector.extract_strided_slice %19 {offsets = [8, 512], sizes = [8, 128], strides = [1, 1]} : vector<16x1536xf32> to vector<8x128xf32>
    %108 = vector.extract_strided_slice %19 {offsets = [8, 1024], sizes = [8, 128], strides = [1, 1]} : vector<16x1536xf32> to vector<8x128xf32>
    %cst_45 = arith.constant dense<0.000000e+00> : vector<8x8xf32>
    %109 = tpu.matmul %106, %107, %cst_45 {dimension_numbers = #tpu.dot_dimension_numbers<[1], [1], [0], [0], [0, 0, 1, 0], [], []>} : vector<8x128xf32>, vector<8x128xf32>, vector<8x8xf32> -> vector<8x8xf32>
    %cst_46 = arith.constant 0.353553385 : f32
    %110 = vector.broadcast %cst_46 : f32 to vector<8x8xf32>
    %111 = arith.mulf %109, %110 : vector<8x8xf32>
    %cst_47 = arith.constant dense<0xFF800000> : vector<8xf32>
    %112 = vector.multi_reduction <maximumf>, %111, %cst_47 [1] : vector<8x8xf32> to vector<8xf32>
    %113 = vector.shape_cast %112 : vector<8xf32> to vector<8x1xf32>
    %114 = vector.broadcast %113 : vector<8x1xf32> to vector<8x8xf32>
    %115 = arith.subf %111, %114 : vector<8x8xf32>
    %116 = math.exp %115 : vector<8x8xf32>
    %cst_48 = arith.constant dense<0.000000e+00> : vector<8xf32>
    %117 = vector.multi_reduction <add>, %116, %cst_48 [1] : vector<8x8xf32> to vector<8xf32>
    %118 = vector.shape_cast %117 : vector<8xf32> to vector<8x1xf32>
    %119 = tpu.reciprocal %118 {approx = true} : vector<8x1xf32> -> vector<8x1xf32>
    %120 = vector.broadcast %119 : vector<8x1xf32> to vector<8x8xf32>
    %121 = arith.mulf %116, %120 : vector<8x8xf32>
    %cst_49 = arith.constant dense<0.000000e+00> : vector<8x128xf32>
    %122 = tpu.matmul %121, %108, %cst_49 {dimension_numbers = #tpu.dot_dimension_numbers<[1], [0], [0], [1], [0, 0, 1, 1], [], []>} : vector<8x8xf32>, vector<8x128xf32>, vector<8x128xf32> -> vector<8x128xf32>
    %c0_50 = arith.constant 0 : index
    %c0_51 = arith.constant 0 : index
    %c0_52 = arith.constant 0 : index
    %123 = vector.load %arg4[%c0_50, %c0_51, %c0_52] : memref<8x128x128xf32, #tpu.memory_space<vmem>>, vector<1x128x128xf32>
    %124 = vector.shape_cast %123 : vector<1x128x128xf32> to vector<128x128xf32>
    %cst_53 = arith.constant dense<0.000000e+00> : vector<8x128xf32>
    %125 = tpu.matmul %122, %124, %cst_53 {dimension_numbers = #tpu.dot_dimension_numbers<[1], [0], [0], [1], [0, 0, 1, 1], [], []>} : vector<8x128xf32>, vector<128x128xf32>, vector<8x128xf32> -> vector<8x128xf32>
    %126 = arith.addf %105, %125 : vector<8x128xf32>
    %127 = vector.extract_strided_slice %19 {offsets = [8, 128], sizes = [8, 128], strides = [1, 1]} : vector<16x1536xf32> to vector<8x128xf32>
    %128 = vector.extract_strided_slice %19 {offsets = [8, 640], sizes = [8, 128], strides = [1, 1]} : vector<16x1536xf32> to vector<8x128xf32>
    %129 = vector.extract_strided_slice %19 {offsets = [8, 1152], sizes = [8, 128], strides = [1, 1]} : vector<16x1536xf32> to vector<8x128xf32>
    %cst_54 = arith.constant dense<0.000000e+00> : vector<8x8xf32>
    %130 = tpu.matmul %127, %128, %cst_54 {dimension_numbers = #tpu.dot_dimension_numbers<[1], [1], [0], [0], [0, 0, 1, 0], [], []>} : vector<8x128xf32>, vector<8x128xf32>, vector<8x8xf32> -> vector<8x8xf32>
    %cst_55 = arith.constant 0.353553385 : f32
    %131 = vector.broadcast %cst_55 : f32 to vector<8x8xf32>
    %132 = arith.mulf %130, %131 : vector<8x8xf32>
    %cst_56 = arith.constant dense<0xFF800000> : vector<8xf32>
    %133 = vector.multi_reduction <maximumf>, %132, %cst_56 [1] : vector<8x8xf32> to vector<8xf32>
    %134 = vector.shape_cast %133 : vector<8xf32> to vector<8x1xf32>
    %135 = vector.broadcast %134 : vector<8x1xf32> to vector<8x8xf32>
    %136 = arith.subf %132, %135 : vector<8x8xf32>
    %137 = math.exp %136 : vector<8x8xf32>
    %cst_57 = arith.constant dense<0.000000e+00> : vector<8xf32>
    %138 = vector.multi_reduction <add>, %137, %cst_57 [1] : vector<8x8xf32> to vector<8xf32>
    %139 = vector.shape_cast %138 : vector<8xf32> to vector<8x1xf32>
    %140 = tpu.reciprocal %139 {approx = true} : vector<8x1xf32> -> vector<8x1xf32>
    %141 = vector.broadcast %140 : vector<8x1xf32> to vector<8x8xf32>
    %142 = arith.mulf %137, %141 : vector<8x8xf32>
    %cst_58 = arith.constant dense<0.000000e+00> : vector<8x128xf32>
    %143 = tpu.matmul %142, %129, %cst_58 {dimension_numbers = #tpu.dot_dimension_numbers<[1], [0], [0], [1], [0, 0, 1, 1], [], []>} : vector<8x8xf32>, vector<8x128xf32>, vector<8x128xf32> -> vector<8x128xf32>
    %c1_59 = arith.constant 1 : index
    %c0_60 = arith.constant 0 : index
    %c0_61 = arith.constant 0 : index
    %144 = vector.load %arg4[%c1_59, %c0_60, %c0_61] : memref<8x128x128xf32, #tpu.memory_space<vmem>>, vector<1x128x128xf32>
    %145 = vector.shape_cast %144 : vector<1x128x128xf32> to vector<128x128xf32>
    %cst_62 = arith.constant dense<0.000000e+00> : vector<8x128xf32>
    %146 = tpu.matmul %143, %145, %cst_62 {dimension_numbers = #tpu.dot_dimension_numbers<[1], [0], [0], [1], [0, 0, 1, 1], [], []>} : vector<8x128xf32>, vector<128x128xf32>, vector<8x128xf32> -> vector<8x128xf32>
    %147 = arith.addf %126, %146 : vector<8x128xf32>
    %148 = vector.extract_strided_slice %19 {offsets = [8, 256], sizes = [8, 128], strides = [1, 1]} : vector<16x1536xf32> to vector<8x128xf32>
    %149 = vector.extract_strided_slice %19 {offsets = [8, 768], sizes = [8, 128], strides = [1, 1]} : vector<16x1536xf32> to vector<8x128xf32>
    %150 = vector.extract_strided_slice %19 {offsets = [8, 1280], sizes = [8, 128], strides = [1, 1]} : vector<16x1536xf32> to vector<8x128xf32>
    %cst_63 = arith.constant dense<0.000000e+00> : vector<8x8xf32>
    %151 = tpu.matmul %148, %149, %cst_63 {dimension_numbers = #tpu.dot_dimension_numbers<[1], [1], [0], [0], [0, 0, 1, 0], [], []>} : vector<8x128xf32>, vector<8x128xf32>, vector<8x8xf32> -> vector<8x8xf32>
    %cst_64 = arith.constant 0.353553385 : f32
    %152 = vector.broadcast %cst_64 : f32 to vector<8x8xf32>
    %153 = arith.mulf %151, %152 : vector<8x8xf32>
    %cst_65 = arith.constant dense<0xFF800000> : vector<8xf32>
    %154 = vector.multi_reduction <maximumf>, %153, %cst_65 [1] : vector<8x8xf32> to vector<8xf32>
    %155 = vector.shape_cast %154 : vector<8xf32> to vector<8x1xf32>
    %156 = vector.broadcast %155 : vector<8x1xf32> to vector<8x8xf32>
    %157 = arith.subf %153, %156 : vector<8x8xf32>
    %158 = math.exp %157 : vector<8x8xf32>
    %cst_66 = arith.constant dense<0.000000e+00> : vector<8xf32>
    %159 = vector.multi_reduction <add>, %158, %cst_66 [1] : vector<8x8xf32> to vector<8xf32>
    %160 = vector.shape_cast %159 : vector<8xf32> to vector<8x1xf32>
    %161 = tpu.reciprocal %160 {approx = true} : vector<8x1xf32> -> vector<8x1xf32>
    %162 = vector.broadcast %161 : vector<8x1xf32> to vector<8x8xf32>
    %163 = arith.mulf %158, %162 : vector<8x8xf32>
    %cst_67 = arith.constant dense<0.000000e+00> : vector<8x128xf32>
    %164 = tpu.matmul %163, %150, %cst_67 {dimension_numbers = #tpu.dot_dimension_numbers<[1], [0], [0], [1], [0, 0, 1, 1], [], []>} : vector<8x8xf32>, vector<8x128xf32>, vector<8x128xf32> -> vector<8x128xf32>
    %c2_68 = arith.constant 2 : index
    %c0_69 = arith.constant 0 : index
    %c0_70 = arith.constant 0 : index
    %165 = vector.load %arg4[%c2_68, %c0_69, %c0_70] : memref<8x128x128xf32, #tpu.memory_space<vmem>>, vector<1x128x128xf32>
    %166 = vector.shape_cast %165 : vector<1x128x128xf32> to vector<128x128xf32>
    %cst_71 = arith.constant dense<0.000000e+00> : vector<8x128xf32>
    %167 = tpu.matmul %164, %166, %cst_71 {dimension_numbers = #tpu.dot_dimension_numbers<[1], [0], [0], [1], [0, 0, 1, 1], [], []>} : vector<8x128xf32>, vector<128x128xf32>, vector<8x128xf32> -> vector<8x128xf32>
    %168 = arith.addf %147, %167 : vector<8x128xf32>
    %169 = vector.extract_strided_slice %19 {offsets = [8, 384], sizes = [8, 128], strides = [1, 1]} : vector<16x1536xf32> to vector<8x128xf32>
    %170 = vector.extract_strided_slice %19 {offsets = [8, 896], sizes = [8, 128], strides = [1, 1]} : vector<16x1536xf32> to vector<8x128xf32>
    %171 = vector.extract_strided_slice %19 {offsets = [8, 1408], sizes = [8, 128], strides = [1, 1]} : vector<16x1536xf32> to vector<8x128xf32>
    %cst_72 = arith.constant dense<0.000000e+00> : vector<8x8xf32>
    %172 = tpu.matmul %169, %170, %cst_72 {dimension_numbers = #tpu.dot_dimension_numbers<[1], [1], [0], [0], [0, 0, 1, 0], [], []>} : vector<8x128xf32>, vector<8x128xf32>, vector<8x8xf32> -> vector<8x8xf32>
    %cst_73 = arith.constant 0.353553385 : f32
    %173 = vector.broadcast %cst_73 : f32 to vector<8x8xf32>
    %174 = arith.mulf %172, %173 : vector<8x8xf32>
    %cst_74 = arith.constant dense<0xFF800000> : vector<8xf32>
    %175 = vector.multi_reduction <maximumf>, %174, %cst_74 [1] : vector<8x8xf32> to vector<8xf32>
    %176 = vector.shape_cast %175 : vector<8xf32> to vector<8x1xf32>
    %177 = vector.broadcast %176 : vector<8x1xf32> to vector<8x8xf32>
    %178 = arith.subf %174, %177 : vector<8x8xf32>
    %179 = math.exp %178 : vector<8x8xf32>
    %cst_75 = arith.constant dense<0.000000e+00> : vector<8xf32>
    %180 = vector.multi_reduction <add>, %179, %cst_75 [1] : vector<8x8xf32> to vector<8xf32>
    %181 = vector.shape_cast %180 : vector<8xf32> to vector<8x1xf32>
    %182 = tpu.reciprocal %181 {approx = true} : vector<8x1xf32> -> vector<8x1xf32>
    %183 = vector.broadcast %182 : vector<8x1xf32> to vector<8x8xf32>
    %184 = arith.mulf %179, %183 : vector<8x8xf32>
    %cst_76 = arith.constant dense<0.000000e+00> : vector<8x128xf32>
    %185 = tpu.matmul %184, %171, %cst_76 {dimension_numbers = #tpu.dot_dimension_numbers<[1], [0], [0], [1], [0, 0, 1, 1], [], []>} : vector<8x8xf32>, vector<8x128xf32>, vector<8x128xf32> -> vector<8x128xf32>
    %c3_77 = arith.constant 3 : index
    %c0_78 = arith.constant 0 : index
    %c0_79 = arith.constant 0 : index
    %186 = vector.load %arg4[%c3_77, %c0_78, %c0_79] : memref<8x128x128xf32, #tpu.memory_space<vmem>>, vector<1x128x128xf32>
    %187 = vector.shape_cast %186 : vector<1x128x128xf32> to vector<128x128xf32>
    %cst_80 = arith.constant dense<0.000000e+00> : vector<8x128xf32>
    %188 = tpu.matmul %185, %187, %cst_80 {dimension_numbers = #tpu.dot_dimension_numbers<[1], [0], [0], [1], [0, 0, 1, 1], [], []>} : vector<8x128xf32>, vector<128x128xf32>, vector<8x128xf32> -> vector<8x128xf32>
    %189 = arith.addf %168, %188 : vector<8x128xf32>
    %190 = tpu.concatenate %104, %189 in 0 : vector<8x128xf32>, vector<8x128xf32> -> vector<16x128xf32>
    %c0_81 = arith.constant 0 : index
    %c0_82 = arith.constant 0 : index
    %c0_83 = arith.constant 0 : index
    %191 = vector.load %arg5[%c0_81, %c0_82, %c0_83] : memref<2x1x128xf32, #tpu.memory_space<vmem>>, vector<1x1x128xf32>
    %192 = vector.shape_cast %191 : vector<1x1x128xf32> to vector<1x128xf32>
    %193 = vector.broadcast %192 : vector<1x128xf32> to vector<16x128xf32>
    %194 = arith.addf %190, %193 : vector<16x128xf32>
    %195 = arith.addf %12, %194 : vector<16x128xf32>
    %c0_84 = arith.constant 0 : index
    %c0_85 = arith.constant 0 : index
    %c0_86 = arith.constant 0 : index
    %196 = vector.load %arg6[%c0_84, %c0_85, %c0_86] : memref<2x1x128xf32, #tpu.memory_space<vmem>>, vector<1x1x128xf32>
    %197 = vector.shape_cast %196 : vector<1x1x128xf32> to vector<1x128xf32>
    %c0_87 = arith.constant 0 : index
    %c0_88 = arith.constant 0 : index
    %c0_89 = arith.constant 0 : index
    %198 = vector.load %arg7[%c0_87, %c0_88, %c0_89] : memref<2x1x128xf32, #tpu.memory_space<vmem>>, vector<1x1x128xf32>
    %199 = vector.shape_cast %198 : vector<1x1x128xf32> to vector<1x128xf32>
    %cst_90 = arith.constant dense<0.000000e+00> : vector<16xf32>
    %200 = vector.multi_reduction <add>, %195, %cst_90 [1] : vector<16x128xf32> to vector<16xf32>
    %201 = vector.shape_cast %200 : vector<16xf32> to vector<16x1xf32>
    %cst_91 = arith.constant 3.125000e-02 : f32
    %202 = vector.broadcast %cst_91 : f32 to vector<16x1xf32>
    %203 = arith.mulf %201, %202 : vector<16x1xf32>
    %204 = vector.broadcast %203 : vector<16x1xf32> to vector<16x128xf32>
    %205 = arith.subf %195, %204 : vector<16x128xf32>
    %206 = vector.broadcast %4 : vector<1x128xf32> to vector<16x128xf32>
    %207 = arith.mulf %205, %206 : vector<16x128xf32>
    %208 = arith.mulf %207, %207 : vector<16x128xf32>
    %cst_92 = arith.constant dense<0.000000e+00> : vector<16xf32>
    %209 = vector.multi_reduction <add>, %208, %cst_92 [1] : vector<16x128xf32> to vector<16xf32>
    %210 = vector.shape_cast %209 : vector<16xf32> to vector<16x1xf32>
    %cst_93 = arith.constant 3.125000e-02 : f32
    %211 = vector.broadcast %cst_93 : f32 to vector<16x1xf32>
    %212 = arith.mulf %210, %211 : vector<16x1xf32>
    %cst_94 = arith.constant 9.99999974E-6 : f32
    %213 = vector.broadcast %cst_94 : f32 to vector<16x1xf32>
    %214 = arith.addf %212, %213 : vector<16x1xf32>
    %215 = math.rsqrt %214 : vector<16x1xf32>
    %216 = vector.broadcast %215 : vector<16x1xf32> to vector<16x128xf32>
    %217 = arith.mulf %207, %216 : vector<16x128xf32>
    %218 = vector.broadcast %197 : vector<1x128xf32> to vector<16x128xf32>
    %219 = arith.mulf %217, %218 : vector<16x128xf32>
    %220 = vector.broadcast %199 : vector<1x128xf32> to vector<16x128xf32>
    %221 = arith.addf %219, %220 : vector<16x128xf32>
    %c0_95 = arith.constant 0 : index
    %c0_96 = arith.constant 0 : index
    %c0_97 = arith.constant 0 : index
    %222 = vector.load %arg8[%c0_95, %c0_96, %c0_97] : memref<2x128x128xf32, #tpu.memory_space<vmem>>, vector<1x128x128xf32>
    %223 = vector.shape_cast %222 : vector<1x128x128xf32> to vector<128x128xf32>
    %cst_98 = arith.constant dense<0.000000e+00> : vector<16x128xf32>
    %224 = tpu.matmul %221, %223, %cst_98 {dimension_numbers = #tpu.dot_dimension_numbers<[1], [0], [0], [1], [0, 0, 1, 1], [], []>} : vector<16x128xf32>, vector<128x128xf32>, vector<16x128xf32> -> vector<16x128xf32>
    %c0_99 = arith.constant 0 : index
    %c0_100 = arith.constant 0 : index
    %c0_101 = arith.constant 0 : index
    %225 = vector.load %arg9[%c0_99, %c0_100, %c0_101] : memref<2x1x128xf32, #tpu.memory_space<vmem>>, vector<1x1x128xf32>
    %226 = vector.shape_cast %225 : vector<1x1x128xf32> to vector<1x128xf32>
    %227 = vector.broadcast %226 : vector<1x128xf32> to vector<16x128xf32>
    %228 = arith.addf %224, %227 : vector<16x128xf32>
    %cst_102 = arith.constant 0.000000e+00 : f32
    %229 = vector.broadcast %cst_102 : f32 to vector<16x128xf32>
    %230 = arith.maximumf %228, %229 : vector<16x128xf32>
    %c0_103 = arith.constant 0 : index
    %c0_104 = arith.constant 0 : index
    %c0_105 = arith.constant 0 : index
    %231 = vector.load %arg10[%c0_103, %c0_104, %c0_105] : memref<2x128x128xf32, #tpu.memory_space<vmem>>, vector<1x128x128xf32>
    %232 = vector.shape_cast %231 : vector<1x128x128xf32> to vector<128x128xf32>
    %cst_106 = arith.constant dense<0.000000e+00> : vector<16x128xf32>
    %233 = tpu.matmul %230, %232, %cst_106 {dimension_numbers = #tpu.dot_dimension_numbers<[1], [0], [0], [1], [0, 0, 1, 1], [], []>} : vector<16x128xf32>, vector<128x128xf32>, vector<16x128xf32> -> vector<16x128xf32>
    %c0_107 = arith.constant 0 : index
    %c0_108 = arith.constant 0 : index
    %c0_109 = arith.constant 0 : index
    %234 = vector.load %arg11[%c0_107, %c0_108, %c0_109] : memref<2x1x128xf32, #tpu.memory_space<vmem>>, vector<1x1x128xf32>
    %235 = vector.shape_cast %234 : vector<1x1x128xf32> to vector<1x128xf32>
    %236 = vector.broadcast %235 : vector<1x128xf32> to vector<16x128xf32>
    %237 = arith.addf %233, %236 : vector<16x128xf32>
    %238 = arith.addf %221, %237 : vector<16x128xf32>
    %c0_110 = arith.constant 0 : index
    %c0_111 = arith.constant 0 : index
    %c0_112 = arith.constant 0 : index
    %239 = vector.load %arg12[%c0_110, %c0_111, %c0_112] : memref<2x1x128xf32, #tpu.memory_space<vmem>>, vector<1x1x128xf32>
    %240 = vector.shape_cast %239 : vector<1x1x128xf32> to vector<1x128xf32>
    %c0_113 = arith.constant 0 : index
    %c0_114 = arith.constant 0 : index
    %c0_115 = arith.constant 0 : index
    %241 = vector.load %arg13[%c0_113, %c0_114, %c0_115] : memref<2x1x128xf32, #tpu.memory_space<vmem>>, vector<1x1x128xf32>
    %242 = vector.shape_cast %241 : vector<1x1x128xf32> to vector<1x128xf32>
    %cst_116 = arith.constant dense<0.000000e+00> : vector<16xf32>
    %243 = vector.multi_reduction <add>, %238, %cst_116 [1] : vector<16x128xf32> to vector<16xf32>
    %244 = vector.shape_cast %243 : vector<16xf32> to vector<16x1xf32>
    %cst_117 = arith.constant 3.125000e-02 : f32
    %245 = vector.broadcast %cst_117 : f32 to vector<16x1xf32>
    %246 = arith.mulf %244, %245 : vector<16x1xf32>
    %247 = vector.broadcast %246 : vector<16x1xf32> to vector<16x128xf32>
    %248 = arith.subf %238, %247 : vector<16x128xf32>
    %249 = vector.broadcast %4 : vector<1x128xf32> to vector<16x128xf32>
    %250 = arith.mulf %248, %249 : vector<16x128xf32>
    %251 = arith.mulf %250, %250 : vector<16x128xf32>
    %cst_118 = arith.constant dense<0.000000e+00> : vector<16xf32>
    %252 = vector.multi_reduction <add>, %251, %cst_118 [1] : vector<16x128xf32> to vector<16xf32>
    %253 = vector.shape_cast %252 : vector<16xf32> to vector<16x1xf32>
    %cst_119 = arith.constant 3.125000e-02 : f32
    %254 = vector.broadcast %cst_119 : f32 to vector<16x1xf32>
    %255 = arith.mulf %253, %254 : vector<16x1xf32>
    %cst_120 = arith.constant 9.99999974E-6 : f32
    %256 = vector.broadcast %cst_120 : f32 to vector<16x1xf32>
    %257 = arith.addf %255, %256 : vector<16x1xf32>
    %258 = math.rsqrt %257 : vector<16x1xf32>
    %259 = vector.broadcast %258 : vector<16x1xf32> to vector<16x128xf32>
    %260 = arith.mulf %250, %259 : vector<16x128xf32>
    %261 = vector.broadcast %240 : vector<1x128xf32> to vector<16x128xf32>
    %262 = arith.mulf %260, %261 : vector<16x128xf32>
    %263 = vector.broadcast %242 : vector<1x128xf32> to vector<16x128xf32>
    %264 = arith.addf %262, %263 : vector<16x128xf32>
    %c1_121 = arith.constant 1 : index
    %c0_122 = arith.constant 0 : index
    %c0_123 = arith.constant 0 : index
    %265 = vector.load %arg2[%c1_121, %c0_122, %c0_123] : memref<2x128x1536xf32, #tpu.memory_space<vmem>>, vector<1x128x1536xf32>
    %266 = vector.shape_cast %265 : vector<1x128x1536xf32> to vector<128x1536xf32>
    %cst_124 = arith.constant dense<0.000000e+00> : vector<16x1536xf32>
    %267 = tpu.matmul %264, %266, %cst_124 {dimension_numbers = #tpu.dot_dimension_numbers<[1], [0], [0], [1], [0, 0, 1, 1], [], []>} : vector<16x128xf32>, vector<128x1536xf32>, vector<16x1536xf32> -> vector<16x1536xf32>
    %c1_125 = arith.constant 1 : index
    %c0_126 = arith.constant 0 : index
    %c0_127 = arith.constant 0 : index
    %268 = vector.load %arg3[%c1_125, %c0_126, %c0_127] : memref<2x1x1536xf32, #tpu.memory_space<vmem>>, vector<1x1x1536xf32>
    %269 = vector.shape_cast %268 : vector<1x1x1536xf32> to vector<1x1536xf32>
    %270 = vector.broadcast %269 : vector<1x1536xf32> to vector<16x1536xf32>
    %271 = arith.addf %267, %270 : vector<16x1536xf32>
    %cst_128 = arith.constant 0.000000e+00 : f32
    %272 = vector.broadcast %cst_128 : f32 to vector<8x128xf32>
    %273 = vector.extract_strided_slice %271 {offsets = [0, 0], sizes = [8, 128], strides = [1, 1]} : vector<16x1536xf32> to vector<8x128xf32>
    %274 = vector.extract_strided_slice %271 {offsets = [0, 512], sizes = [8, 128], strides = [1, 1]} : vector<16x1536xf32> to vector<8x128xf32>
    %275 = vector.extract_strided_slice %271 {offsets = [0, 1024], sizes = [8, 128], strides = [1, 1]} : vector<16x1536xf32> to vector<8x128xf32>
    %cst_129 = arith.constant dense<0.000000e+00> : vector<8x8xf32>
    %276 = tpu.matmul %273, %274, %cst_129 {dimension_numbers = #tpu.dot_dimension_numbers<[1], [1], [0], [0], [0, 0, 1, 0], [], []>} : vector<8x128xf32>, vector<8x128xf32>, vector<8x8xf32> -> vector<8x8xf32>
    %cst_130 = arith.constant 0.353553385 : f32
    %277 = vector.broadcast %cst_130 : f32 to vector<8x8xf32>
    %278 = arith.mulf %276, %277 : vector<8x8xf32>
    %cst_131 = arith.constant dense<0xFF800000> : vector<8xf32>
    %279 = vector.multi_reduction <maximumf>, %278, %cst_131 [1] : vector<8x8xf32> to vector<8xf32>
    %280 = vector.shape_cast %279 : vector<8xf32> to vector<8x1xf32>
    %281 = vector.broadcast %280 : vector<8x1xf32> to vector<8x8xf32>
    %282 = arith.subf %278, %281 : vector<8x8xf32>
    %283 = math.exp %282 : vector<8x8xf32>
    %cst_132 = arith.constant dense<0.000000e+00> : vector<8xf32>
    %284 = vector.multi_reduction <add>, %283, %cst_132 [1] : vector<8x8xf32> to vector<8xf32>
    %285 = vector.shape_cast %284 : vector<8xf32> to vector<8x1xf32>
    %286 = tpu.reciprocal %285 {approx = true} : vector<8x1xf32> -> vector<8x1xf32>
    %287 = vector.broadcast %286 : vector<8x1xf32> to vector<8x8xf32>
    %288 = arith.mulf %283, %287 : vector<8x8xf32>
    %cst_133 = arith.constant dense<0.000000e+00> : vector<8x128xf32>
    %289 = tpu.matmul %288, %275, %cst_133 {dimension_numbers = #tpu.dot_dimension_numbers<[1], [0], [0], [1], [0, 0, 1, 1], [], []>} : vector<8x8xf32>, vector<8x128xf32>, vector<8x128xf32> -> vector<8x128xf32>
    %c4 = arith.constant 4 : index
    %c0_134 = arith.constant 0 : index
    %c0_135 = arith.constant 0 : index
    %290 = vector.load %arg4[%c4, %c0_134, %c0_135] : memref<8x128x128xf32, #tpu.memory_space<vmem>>, vector<1x128x128xf32>
    %291 = vector.shape_cast %290 : vector<1x128x128xf32> to vector<128x128xf32>
    %cst_136 = arith.constant dense<0.000000e+00> : vector<8x128xf32>
    %292 = tpu.matmul %289, %291, %cst_136 {dimension_numbers = #tpu.dot_dimension_numbers<[1], [0], [0], [1], [0, 0, 1, 1], [], []>} : vector<8x128xf32>, vector<128x128xf32>, vector<8x128xf32> -> vector<8x128xf32>
    %293 = arith.addf %272, %292 : vector<8x128xf32>
    %294 = vector.extract_strided_slice %271 {offsets = [0, 128], sizes = [8, 128], strides = [1, 1]} : vector<16x1536xf32> to vector<8x128xf32>
    %295 = vector.extract_strided_slice %271 {offsets = [0, 640], sizes = [8, 128], strides = [1, 1]} : vector<16x1536xf32> to vector<8x128xf32>
    %296 = vector.extract_strided_slice %271 {offsets = [0, 1152], sizes = [8, 128], strides = [1, 1]} : vector<16x1536xf32> to vector<8x128xf32>
    %cst_137 = arith.constant dense<0.000000e+00> : vector<8x8xf32>
    %297 = tpu.matmul %294, %295, %cst_137 {dimension_numbers = #tpu.dot_dimension_numbers<[1], [1], [0], [0], [0, 0, 1, 0], [], []>} : vector<8x128xf32>, vector<8x128xf32>, vector<8x8xf32> -> vector<8x8xf32>
    %cst_138 = arith.constant 0.353553385 : f32
    %298 = vector.broadcast %cst_138 : f32 to vector<8x8xf32>
    %299 = arith.mulf %297, %298 : vector<8x8xf32>
    %cst_139 = arith.constant dense<0xFF800000> : vector<8xf32>
    %300 = vector.multi_reduction <maximumf>, %299, %cst_139 [1] : vector<8x8xf32> to vector<8xf32>
    %301 = vector.shape_cast %300 : vector<8xf32> to vector<8x1xf32>
    %302 = vector.broadcast %301 : vector<8x1xf32> to vector<8x8xf32>
    %303 = arith.subf %299, %302 : vector<8x8xf32>
    %304 = math.exp %303 : vector<8x8xf32>
    %cst_140 = arith.constant dense<0.000000e+00> : vector<8xf32>
    %305 = vector.multi_reduction <add>, %304, %cst_140 [1] : vector<8x8xf32> to vector<8xf32>
    %306 = vector.shape_cast %305 : vector<8xf32> to vector<8x1xf32>
    %307 = tpu.reciprocal %306 {approx = true} : vector<8x1xf32> -> vector<8x1xf32>
    %308 = vector.broadcast %307 : vector<8x1xf32> to vector<8x8xf32>
    %309 = arith.mulf %304, %308 : vector<8x8xf32>
    %cst_141 = arith.constant dense<0.000000e+00> : vector<8x128xf32>
    %310 = tpu.matmul %309, %296, %cst_141 {dimension_numbers = #tpu.dot_dimension_numbers<[1], [0], [0], [1], [0, 0, 1, 1], [], []>} : vector<8x8xf32>, vector<8x128xf32>, vector<8x128xf32> -> vector<8x128xf32>
    %c5 = arith.constant 5 : index
    %c0_142 = arith.constant 0 : index
    %c0_143 = arith.constant 0 : index
    %311 = vector.load %arg4[%c5, %c0_142, %c0_143] : memref<8x128x128xf32, #tpu.memory_space<vmem>>, vector<1x128x128xf32>
    %312 = vector.shape_cast %311 : vector<1x128x128xf32> to vector<128x128xf32>
    %cst_144 = arith.constant dense<0.000000e+00> : vector<8x128xf32>
    %313 = tpu.matmul %310, %312, %cst_144 {dimension_numbers = #tpu.dot_dimension_numbers<[1], [0], [0], [1], [0, 0, 1, 1], [], []>} : vector<8x128xf32>, vector<128x128xf32>, vector<8x128xf32> -> vector<8x128xf32>
    %314 = arith.addf %293, %313 : vector<8x128xf32>
    %315 = vector.extract_strided_slice %271 {offsets = [0, 256], sizes = [8, 128], strides = [1, 1]} : vector<16x1536xf32> to vector<8x128xf32>
    %316 = vector.extract_strided_slice %271 {offsets = [0, 768], sizes = [8, 128], strides = [1, 1]} : vector<16x1536xf32> to vector<8x128xf32>
    %317 = vector.extract_strided_slice %271 {offsets = [0, 1280], sizes = [8, 128], strides = [1, 1]} : vector<16x1536xf32> to vector<8x128xf32>
    %cst_145 = arith.constant dense<0.000000e+00> : vector<8x8xf32>
    %318 = tpu.matmul %315, %316, %cst_145 {dimension_numbers = #tpu.dot_dimension_numbers<[1], [1], [0], [0], [0, 0, 1, 0], [], []>} : vector<8x128xf32>, vector<8x128xf32>, vector<8x8xf32> -> vector<8x8xf32>
    %cst_146 = arith.constant 0.353553385 : f32
    %319 = vector.broadcast %cst_146 : f32 to vector<8x8xf32>
    %320 = arith.mulf %318, %319 : vector<8x8xf32>
    %cst_147 = arith.constant dense<0xFF800000> : vector<8xf32>
    %321 = vector.multi_reduction <maximumf>, %320, %cst_147 [1] : vector<8x8xf32> to vector<8xf32>
    %322 = vector.shape_cast %321 : vector<8xf32> to vector<8x1xf32>
    %323 = vector.broadcast %322 : vector<8x1xf32> to vector<8x8xf32>
    %324 = arith.subf %320, %323 : vector<8x8xf32>
    %325 = math.exp %324 : vector<8x8xf32>
    %cst_148 = arith.constant dense<0.000000e+00> : vector<8xf32>
    %326 = vector.multi_reduction <add>, %325, %cst_148 [1] : vector<8x8xf32> to vector<8xf32>
    %327 = vector.shape_cast %326 : vector<8xf32> to vector<8x1xf32>
    %328 = tpu.reciprocal %327 {approx = true} : vector<8x1xf32> -> vector<8x1xf32>
    %329 = vector.broadcast %328 : vector<8x1xf32> to vector<8x8xf32>
    %330 = arith.mulf %325, %329 : vector<8x8xf32>
    %cst_149 = arith.constant dense<0.000000e+00> : vector<8x128xf32>
    %331 = tpu.matmul %330, %317, %cst_149 {dimension_numbers = #tpu.dot_dimension_numbers<[1], [0], [0], [1], [0, 0, 1, 1], [], []>} : vector<8x8xf32>, vector<8x128xf32>, vector<8x128xf32> -> vector<8x128xf32>
    %c6 = arith.constant 6 : index
    %c0_150 = arith.constant 0 : index
    %c0_151 = arith.constant 0 : index
    %332 = vector.load %arg4[%c6, %c0_150, %c0_151] : memref<8x128x128xf32, #tpu.memory_space<vmem>>, vector<1x128x128xf32>
    %333 = vector.shape_cast %332 : vector<1x128x128xf32> to vector<128x128xf32>
    %cst_152 = arith.constant dense<0.000000e+00> : vector<8x128xf32>
    %334 = tpu.matmul %331, %333, %cst_152 {dimension_numbers = #tpu.dot_dimension_numbers<[1], [0], [0], [1], [0, 0, 1, 1], [], []>} : vector<8x128xf32>, vector<128x128xf32>, vector<8x128xf32> -> vector<8x128xf32>
    %335 = arith.addf %314, %334 : vector<8x128xf32>
    %336 = vector.extract_strided_slice %271 {offsets = [0, 384], sizes = [8, 128], strides = [1, 1]} : vector<16x1536xf32> to vector<8x128xf32>
    %337 = vector.extract_strided_slice %271 {offsets = [0, 896], sizes = [8, 128], strides = [1, 1]} : vector<16x1536xf32> to vector<8x128xf32>
    %338 = vector.extract_strided_slice %271 {offsets = [0, 1408], sizes = [8, 128], strides = [1, 1]} : vector<16x1536xf32> to vector<8x128xf32>
    %cst_153 = arith.constant dense<0.000000e+00> : vector<8x8xf32>
    %339 = tpu.matmul %336, %337, %cst_153 {dimension_numbers = #tpu.dot_dimension_numbers<[1], [1], [0], [0], [0, 0, 1, 0], [], []>} : vector<8x128xf32>, vector<8x128xf32>, vector<8x8xf32> -> vector<8x8xf32>
    %cst_154 = arith.constant 0.353553385 : f32
    %340 = vector.broadcast %cst_154 : f32 to vector<8x8xf32>
    %341 = arith.mulf %339, %340 : vector<8x8xf32>
    %cst_155 = arith.constant dense<0xFF800000> : vector<8xf32>
    %342 = vector.multi_reduction <maximumf>, %341, %cst_155 [1] : vector<8x8xf32> to vector<8xf32>
    %343 = vector.shape_cast %342 : vector<8xf32> to vector<8x1xf32>
    %344 = vector.broadcast %343 : vector<8x1xf32> to vector<8x8xf32>
    %345 = arith.subf %341, %344 : vector<8x8xf32>
    %346 = math.exp %345 : vector<8x8xf32>
    %cst_156 = arith.constant dense<0.000000e+00> : vector<8xf32>
    %347 = vector.multi_reduction <add>, %346, %cst_156 [1] : vector<8x8xf32> to vector<8xf32>
    %348 = vector.shape_cast %347 : vector<8xf32> to vector<8x1xf32>
    %349 = tpu.reciprocal %348 {approx = true} : vector<8x1xf32> -> vector<8x1xf32>
    %350 = vector.broadcast %349 : vector<8x1xf32> to vector<8x8xf32>
    %351 = arith.mulf %346, %350 : vector<8x8xf32>
    %cst_157 = arith.constant dense<0.000000e+00> : vector<8x128xf32>
    %352 = tpu.matmul %351, %338, %cst_157 {dimension_numbers = #tpu.dot_dimension_numbers<[1], [0], [0], [1], [0, 0, 1, 1], [], []>} : vector<8x8xf32>, vector<8x128xf32>, vector<8x128xf32> -> vector<8x128xf32>
    %c7 = arith.constant 7 : index
    %c0_158 = arith.constant 0 : index
    %c0_159 = arith.constant 0 : index
    %353 = vector.load %arg4[%c7, %c0_158, %c0_159] : memref<8x128x128xf32, #tpu.memory_space<vmem>>, vector<1x128x128xf32>
    %354 = vector.shape_cast %353 : vector<1x128x128xf32> to vector<128x128xf32>
    %cst_160 = arith.constant dense<0.000000e+00> : vector<8x128xf32>
    %355 = tpu.matmul %352, %354, %cst_160 {dimension_numbers = #tpu.dot_dimension_numbers<[1], [0], [0], [1], [0, 0, 1, 1], [], []>} : vector<8x128xf32>, vector<128x128xf32>, vector<8x128xf32> -> vector<8x128xf32>
    %356 = arith.addf %335, %355 : vector<8x128xf32>
    %cst_161 = arith.constant 0.000000e+00 : f32
    %357 = vector.broadcast %cst_161 : f32 to vector<8x128xf32>
    %358 = vector.extract_strided_slice %271 {offsets = [8, 0], sizes = [8, 128], strides = [1, 1]} : vector<16x1536xf32> to vector<8x128xf32>
    %359 = vector.extract_strided_slice %271 {offsets = [8, 512], sizes = [8, 128], strides = [1, 1]} : vector<16x1536xf32> to vector<8x128xf32>
    %360 = vector.extract_strided_slice %271 {offsets = [8, 1024], sizes = [8, 128], strides = [1, 1]} : vector<16x1536xf32> to vector<8x128xf32>
    %cst_162 = arith.constant dense<0.000000e+00> : vector<8x8xf32>
    %361 = tpu.matmul %358, %359, %cst_162 {dimension_numbers = #tpu.dot_dimension_numbers<[1], [1], [0], [0], [0, 0, 1, 0], [], []>} : vector<8x128xf32>, vector<8x128xf32>, vector<8x8xf32> -> vector<8x8xf32>
    %cst_163 = arith.constant 0.353553385 : f32
    %362 = vector.broadcast %cst_163 : f32 to vector<8x8xf32>
    %363 = arith.mulf %361, %362 : vector<8x8xf32>
    %cst_164 = arith.constant dense<0xFF800000> : vector<8xf32>
    %364 = vector.multi_reduction <maximumf>, %363, %cst_164 [1] : vector<8x8xf32> to vector<8xf32>
    %365 = vector.shape_cast %364 : vector<8xf32> to vector<8x1xf32>
    %366 = vector.broadcast %365 : vector<8x1xf32> to vector<8x8xf32>
    %367 = arith.subf %363, %366 : vector<8x8xf32>
    %368 = math.exp %367 : vector<8x8xf32>
    %cst_165 = arith.constant dense<0.000000e+00> : vector<8xf32>
    %369 = vector.multi_reduction <add>, %368, %cst_165 [1] : vector<8x8xf32> to vector<8xf32>
    %370 = vector.shape_cast %369 : vector<8xf32> to vector<8x1xf32>
    %371 = tpu.reciprocal %370 {approx = true} : vector<8x1xf32> -> vector<8x1xf32>
    %372 = vector.broadcast %371 : vector<8x1xf32> to vector<8x8xf32>
    %373 = arith.mulf %368, %372 : vector<8x8xf32>
    %cst_166 = arith.constant dense<0.000000e+00> : vector<8x128xf32>
    %374 = tpu.matmul %373, %360, %cst_166 {dimension_numbers = #tpu.dot_dimension_numbers<[1], [0], [0], [1], [0, 0, 1, 1], [], []>} : vector<8x8xf32>, vector<8x128xf32>, vector<8x128xf32> -> vector<8x128xf32>
    %c4_167 = arith.constant 4 : index
    %c0_168 = arith.constant 0 : index
    %c0_169 = arith.constant 0 : index
    %375 = vector.load %arg4[%c4_167, %c0_168, %c0_169] : memref<8x128x128xf32, #tpu.memory_space<vmem>>, vector<1x128x128xf32>
    %376 = vector.shape_cast %375 : vector<1x128x128xf32> to vector<128x128xf32>
    %cst_170 = arith.constant dense<0.000000e+00> : vector<8x128xf32>
    %377 = tpu.matmul %374, %376, %cst_170 {dimension_numbers = #tpu.dot_dimension_numbers<[1], [0], [0], [1], [0, 0, 1, 1], [], []>} : vector<8x128xf32>, vector<128x128xf32>, vector<8x128xf32> -> vector<8x128xf32>
    %378 = arith.addf %357, %377 : vector<8x128xf32>
    %379 = vector.extract_strided_slice %271 {offsets = [8, 128], sizes = [8, 128], strides = [1, 1]} : vector<16x1536xf32> to vector<8x128xf32>
    %380 = vector.extract_strided_slice %271 {offsets = [8, 640], sizes = [8, 128], strides = [1, 1]} : vector<16x1536xf32> to vector<8x128xf32>
    %381 = vector.extract_strided_slice %271 {offsets = [8, 1152], sizes = [8, 128], strides = [1, 1]} : vector<16x1536xf32> to vector<8x128xf32>
    %cst_171 = arith.constant dense<0.000000e+00> : vector<8x8xf32>
    %382 = tpu.matmul %379, %380, %cst_171 {dimension_numbers = #tpu.dot_dimension_numbers<[1], [1], [0], [0], [0, 0, 1, 0], [], []>} : vector<8x128xf32>, vector<8x128xf32>, vector<8x8xf32> -> vector<8x8xf32>
    %cst_172 = arith.constant 0.353553385 : f32
    %383 = vector.broadcast %cst_172 : f32 to vector<8x8xf32>
    %384 = arith.mulf %382, %383 : vector<8x8xf32>
    %cst_173 = arith.constant dense<0xFF800000> : vector<8xf32>
    %385 = vector.multi_reduction <maximumf>, %384, %cst_173 [1] : vector<8x8xf32> to vector<8xf32>
    %386 = vector.shape_cast %385 : vector<8xf32> to vector<8x1xf32>
    %387 = vector.broadcast %386 : vector<8x1xf32> to vector<8x8xf32>
    %388 = arith.subf %384, %387 : vector<8x8xf32>
    %389 = math.exp %388 : vector<8x8xf32>
    %cst_174 = arith.constant dense<0.000000e+00> : vector<8xf32>
    %390 = vector.multi_reduction <add>, %389, %cst_174 [1] : vector<8x8xf32> to vector<8xf32>
    %391 = vector.shape_cast %390 : vector<8xf32> to vector<8x1xf32>
    %392 = tpu.reciprocal %391 {approx = true} : vector<8x1xf32> -> vector<8x1xf32>
    %393 = vector.broadcast %392 : vector<8x1xf32> to vector<8x8xf32>
    %394 = arith.mulf %389, %393 : vector<8x8xf32>
    %cst_175 = arith.constant dense<0.000000e+00> : vector<8x128xf32>
    %395 = tpu.matmul %394, %381, %cst_175 {dimension_numbers = #tpu.dot_dimension_numbers<[1], [0], [0], [1], [0, 0, 1, 1], [], []>} : vector<8x8xf32>, vector<8x128xf32>, vector<8x128xf32> -> vector<8x128xf32>
    %c5_176 = arith.constant 5 : index
    %c0_177 = arith.constant 0 : index
    %c0_178 = arith.constant 0 : index
    %396 = vector.load %arg4[%c5_176, %c0_177, %c0_178] : memref<8x128x128xf32, #tpu.memory_space<vmem>>, vector<1x128x128xf32>
    %397 = vector.shape_cast %396 : vector<1x128x128xf32> to vector<128x128xf32>
    %cst_179 = arith.constant dense<0.000000e+00> : vector<8x128xf32>
    %398 = tpu.matmul %395, %397, %cst_179 {dimension_numbers = #tpu.dot_dimension_numbers<[1], [0], [0], [1], [0, 0, 1, 1], [], []>} : vector<8x128xf32>, vector<128x128xf32>, vector<8x128xf32> -> vector<8x128xf32>
    %399 = arith.addf %378, %398 : vector<8x128xf32>
    %400 = vector.extract_strided_slice %271 {offsets = [8, 256], sizes = [8, 128], strides = [1, 1]} : vector<16x1536xf32> to vector<8x128xf32>
    %401 = vector.extract_strided_slice %271 {offsets = [8, 768], sizes = [8, 128], strides = [1, 1]} : vector<16x1536xf32> to vector<8x128xf32>
    %402 = vector.extract_strided_slice %271 {offsets = [8, 1280], sizes = [8, 128], strides = [1, 1]} : vector<16x1536xf32> to vector<8x128xf32>
    %cst_180 = arith.constant dense<0.000000e+00> : vector<8x8xf32>
    %403 = tpu.matmul %400, %401, %cst_180 {dimension_numbers = #tpu.dot_dimension_numbers<[1], [1], [0], [0], [0, 0, 1, 0], [], []>} : vector<8x128xf32>, vector<8x128xf32>, vector<8x8xf32> -> vector<8x8xf32>
    %cst_181 = arith.constant 0.353553385 : f32
    %404 = vector.broadcast %cst_181 : f32 to vector<8x8xf32>
    %405 = arith.mulf %403, %404 : vector<8x8xf32>
    %cst_182 = arith.constant dense<0xFF800000> : vector<8xf32>
    %406 = vector.multi_reduction <maximumf>, %405, %cst_182 [1] : vector<8x8xf32> to vector<8xf32>
    %407 = vector.shape_cast %406 : vector<8xf32> to vector<8x1xf32>
    %408 = vector.broadcast %407 : vector<8x1xf32> to vector<8x8xf32>
    %409 = arith.subf %405, %408 : vector<8x8xf32>
    %410 = math.exp %409 : vector<8x8xf32>
    %cst_183 = arith.constant dense<0.000000e+00> : vector<8xf32>
    %411 = vector.multi_reduction <add>, %410, %cst_183 [1] : vector<8x8xf32> to vector<8xf32>
    %412 = vector.shape_cast %411 : vector<8xf32> to vector<8x1xf32>
    %413 = tpu.reciprocal %412 {approx = true} : vector<8x1xf32> -> vector<8x1xf32>
    %414 = vector.broadcast %413 : vector<8x1xf32> to vector<8x8xf32>
    %415 = arith.mulf %410, %414 : vector<8x8xf32>
    %cst_184 = arith.constant dense<0.000000e+00> : vector<8x128xf32>
    %416 = tpu.matmul %415, %402, %cst_184 {dimension_numbers = #tpu.dot_dimension_numbers<[1], [0], [0], [1], [0, 0, 1, 1], [], []>} : vector<8x8xf32>, vector<8x128xf32>, vector<8x128xf32> -> vector<8x128xf32>
    %c6_185 = arith.constant 6 : index
    %c0_186 = arith.constant 0 : index
    %c0_187 = arith.constant 0 : index
    %417 = vector.load %arg4[%c6_185, %c0_186, %c0_187] : memref<8x128x128xf32, #tpu.memory_space<vmem>>, vector<1x128x128xf32>
    %418 = vector.shape_cast %417 : vector<1x128x128xf32> to vector<128x128xf32>
    %cst_188 = arith.constant dense<0.000000e+00> : vector<8x128xf32>
    %419 = tpu.matmul %416, %418, %cst_188 {dimension_numbers = #tpu.dot_dimension_numbers<[1], [0], [0], [1], [0, 0, 1, 1], [], []>} : vector<8x128xf32>, vector<128x128xf32>, vector<8x128xf32> -> vector<8x128xf32>
    %420 = arith.addf %399, %419 : vector<8x128xf32>
    %421 = vector.extract_strided_slice %271 {offsets = [8, 384], sizes = [8, 128], strides = [1, 1]} : vector<16x1536xf32> to vector<8x128xf32>
    %422 = vector.extract_strided_slice %271 {offsets = [8, 896], sizes = [8, 128], strides = [1, 1]} : vector<16x1536xf32> to vector<8x128xf32>
    %423 = vector.extract_strided_slice %271 {offsets = [8, 1408], sizes = [8, 128], strides = [1, 1]} : vector<16x1536xf32> to vector<8x128xf32>
    %cst_189 = arith.constant dense<0.000000e+00> : vector<8x8xf32>
    %424 = tpu.matmul %421, %422, %cst_189 {dimension_numbers = #tpu.dot_dimension_numbers<[1], [1], [0], [0], [0, 0, 1, 0], [], []>} : vector<8x128xf32>, vector<8x128xf32>, vector<8x8xf32> -> vector<8x8xf32>
    %cst_190 = arith.constant 0.353553385 : f32
    %425 = vector.broadcast %cst_190 : f32 to vector<8x8xf32>
    %426 = arith.mulf %424, %425 : vector<8x8xf32>
    %cst_191 = arith.constant dense<0xFF800000> : vector<8xf32>
    %427 = vector.multi_reduction <maximumf>, %426, %cst_191 [1] : vector<8x8xf32> to vector<8xf32>
    %428 = vector.shape_cast %427 : vector<8xf32> to vector<8x1xf32>
    %429 = vector.broadcast %428 : vector<8x1xf32> to vector<8x8xf32>
    %430 = arith.subf %426, %429 : vector<8x8xf32>
    %431 = math.exp %430 : vector<8x8xf32>
    %cst_192 = arith.constant dense<0.000000e+00> : vector<8xf32>
    %432 = vector.multi_reduction <add>, %431, %cst_192 [1] : vector<8x8xf32> to vector<8xf32>
    %433 = vector.shape_cast %432 : vector<8xf32> to vector<8x1xf32>
    %434 = tpu.reciprocal %433 {approx = true} : vector<8x1xf32> -> vector<8x1xf32>
    %435 = vector.broadcast %434 : vector<8x1xf32> to vector<8x8xf32>
    %436 = arith.mulf %431, %435 : vector<8x8xf32>
    %cst_193 = arith.constant dense<0.000000e+00> : vector<8x128xf32>
    %437 = tpu.matmul %436, %423, %cst_193 {dimension_numbers = #tpu.dot_dimension_numbers<[1], [0], [0], [1], [0, 0, 1, 1], [], []>} : vector<8x8xf32>, vector<8x128xf32>, vector<8x128xf32> -> vector<8x128xf32>
    %c7_194 = arith.constant 7 : index
    %c0_195 = arith.constant 0 : index
    %c0_196 = arith.constant 0 : index
    %438 = vector.load %arg4[%c7_194, %c0_195, %c0_196] : memref<8x128x128xf32, #tpu.memory_space<vmem>>, vector<1x128x128xf32>
    %439 = vector.shape_cast %438 : vector<1x128x128xf32> to vector<128x128xf32>
    %cst_197 = arith.constant dense<0.000000e+00> : vector<8x128xf32>
    %440 = tpu.matmul %437, %439, %cst_197 {dimension_numbers = #tpu.dot_dimension_numbers<[1], [0], [0], [1], [0, 0, 1, 1], [], []>} : vector<8x128xf32>, vector<128x128xf32>, vector<8x128xf32> -> vector<8x128xf32>
    %441 = arith.addf %420, %440 : vector<8x128xf32>
    %442 = tpu.concatenate %356, %441 in 0 : vector<8x128xf32>, vector<8x128xf32> -> vector<16x128xf32>
    %c1_198 = arith.constant 1 : index
    %c0_199 = arith.constant 0 : index
    %c0_200 = arith.constant 0 : index
    %443 = vector.load %arg5[%c1_198, %c0_199, %c0_200] : memref<2x1x128xf32, #tpu.memory_space<vmem>>, vector<1x1x128xf32>
    %444 = vector.shape_cast %443 : vector<1x1x128xf32> to vector<1x128xf32>
    %445 = vector.broadcast %444 : vector<1x128xf32> to vector<16x128xf32>
    %446 = arith.addf %442, %445 : vector<16x128xf32>
    %447 = arith.addf %264, %446 : vector<16x128xf32>
    %c1_201 = arith.constant 1 : index
    %c0_202 = arith.constant 0 : index
    %c0_203 = arith.constant 0 : index
    %448 = vector.load %arg6[%c1_201, %c0_202, %c0_203] : memref<2x1x128xf32, #tpu.memory_space<vmem>>, vector<1x1x128xf32>
    %449 = vector.shape_cast %448 : vector<1x1x128xf32> to vector<1x128xf32>
    %c1_204 = arith.constant 1 : index
    %c0_205 = arith.constant 0 : index
    %c0_206 = arith.constant 0 : index
    %450 = vector.load %arg7[%c1_204, %c0_205, %c0_206] : memref<2x1x128xf32, #tpu.memory_space<vmem>>, vector<1x1x128xf32>
    %451 = vector.shape_cast %450 : vector<1x1x128xf32> to vector<1x128xf32>
    %cst_207 = arith.constant dense<0.000000e+00> : vector<16xf32>
    %452 = vector.multi_reduction <add>, %447, %cst_207 [1] : vector<16x128xf32> to vector<16xf32>
    %453 = vector.shape_cast %452 : vector<16xf32> to vector<16x1xf32>
    %cst_208 = arith.constant 3.125000e-02 : f32
    %454 = vector.broadcast %cst_208 : f32 to vector<16x1xf32>
    %455 = arith.mulf %453, %454 : vector<16x1xf32>
    %456 = vector.broadcast %455 : vector<16x1xf32> to vector<16x128xf32>
    %457 = arith.subf %447, %456 : vector<16x128xf32>
    %458 = vector.broadcast %4 : vector<1x128xf32> to vector<16x128xf32>
    %459 = arith.mulf %457, %458 : vector<16x128xf32>
    %460 = arith.mulf %459, %459 : vector<16x128xf32>
    %cst_209 = arith.constant dense<0.000000e+00> : vector<16xf32>
    %461 = vector.multi_reduction <add>, %460, %cst_209 [1] : vector<16x128xf32> to vector<16xf32>
    %462 = vector.shape_cast %461 : vector<16xf32> to vector<16x1xf32>
    %cst_210 = arith.constant 3.125000e-02 : f32
    %463 = vector.broadcast %cst_210 : f32 to vector<16x1xf32>
    %464 = arith.mulf %462, %463 : vector<16x1xf32>
    %cst_211 = arith.constant 9.99999974E-6 : f32
    %465 = vector.broadcast %cst_211 : f32 to vector<16x1xf32>
    %466 = arith.addf %464, %465 : vector<16x1xf32>
    %467 = math.rsqrt %466 : vector<16x1xf32>
    %468 = vector.broadcast %467 : vector<16x1xf32> to vector<16x128xf32>
    %469 = arith.mulf %459, %468 : vector<16x128xf32>
    %470 = vector.broadcast %449 : vector<1x128xf32> to vector<16x128xf32>
    %471 = arith.mulf %469, %470 : vector<16x128xf32>
    %472 = vector.broadcast %451 : vector<1x128xf32> to vector<16x128xf32>
    %473 = arith.addf %471, %472 : vector<16x128xf32>
    %c1_212 = arith.constant 1 : index
    %c0_213 = arith.constant 0 : index
    %c0_214 = arith.constant 0 : index
    %474 = vector.load %arg8[%c1_212, %c0_213, %c0_214] : memref<2x128x128xf32, #tpu.memory_space<vmem>>, vector<1x128x128xf32>
    %475 = vector.shape_cast %474 : vector<1x128x128xf32> to vector<128x128xf32>
    %cst_215 = arith.constant dense<0.000000e+00> : vector<16x128xf32>
    %476 = tpu.matmul %473, %475, %cst_215 {dimension_numbers = #tpu.dot_dimension_numbers<[1], [0], [0], [1], [0, 0, 1, 1], [], []>} : vector<16x128xf32>, vector<128x128xf32>, vector<16x128xf32> -> vector<16x128xf32>
    %c1_216 = arith.constant 1 : index
    %c0_217 = arith.constant 0 : index
    %c0_218 = arith.constant 0 : index
    %477 = vector.load %arg9[%c1_216, %c0_217, %c0_218] : memref<2x1x128xf32, #tpu.memory_space<vmem>>, vector<1x1x128xf32>
    %478 = vector.shape_cast %477 : vector<1x1x128xf32> to vector<1x128xf32>
    %479 = vector.broadcast %478 : vector<1x128xf32> to vector<16x128xf32>
    %480 = arith.addf %476, %479 : vector<16x128xf32>
    %cst_219 = arith.constant 0.000000e+00 : f32
    %481 = vector.broadcast %cst_219 : f32 to vector<16x128xf32>
    %482 = arith.maximumf %480, %481 : vector<16x128xf32>
    %c1_220 = arith.constant 1 : index
    %c0_221 = arith.constant 0 : index
    %c0_222 = arith.constant 0 : index
    %483 = vector.load %arg10[%c1_220, %c0_221, %c0_222] : memref<2x128x128xf32, #tpu.memory_space<vmem>>, vector<1x128x128xf32>
    %484 = vector.shape_cast %483 : vector<1x128x128xf32> to vector<128x128xf32>
    %cst_223 = arith.constant dense<0.000000e+00> : vector<16x128xf32>
    %485 = tpu.matmul %482, %484, %cst_223 {dimension_numbers = #tpu.dot_dimension_numbers<[1], [0], [0], [1], [0, 0, 1, 1], [], []>} : vector<16x128xf32>, vector<128x128xf32>, vector<16x128xf32> -> vector<16x128xf32>
    %c1_224 = arith.constant 1 : index
    %c0_225 = arith.constant 0 : index
    %c0_226 = arith.constant 0 : index
    %486 = vector.load %arg11[%c1_224, %c0_225, %c0_226] : memref<2x1x128xf32, #tpu.memory_space<vmem>>, vector<1x1x128xf32>
    %487 = vector.shape_cast %486 : vector<1x1x128xf32> to vector<1x128xf32>
    %488 = vector.broadcast %487 : vector<1x128xf32> to vector<16x128xf32>
    %489 = arith.addf %485, %488 : vector<16x128xf32>
    %490 = arith.addf %473, %489 : vector<16x128xf32>
    %c1_227 = arith.constant 1 : index
    %c0_228 = arith.constant 0 : index
    %c0_229 = arith.constant 0 : index
    %491 = vector.load %arg12[%c1_227, %c0_228, %c0_229] : memref<2x1x128xf32, #tpu.memory_space<vmem>>, vector<1x1x128xf32>
    %492 = vector.shape_cast %491 : vector<1x1x128xf32> to vector<1x128xf32>
    %c1_230 = arith.constant 1 : index
    %c0_231 = arith.constant 0 : index
    %c0_232 = arith.constant 0 : index
    %493 = vector.load %arg13[%c1_230, %c0_231, %c0_232] : memref<2x1x128xf32, #tpu.memory_space<vmem>>, vector<1x1x128xf32>
    %494 = vector.shape_cast %493 : vector<1x1x128xf32> to vector<1x128xf32>
    %cst_233 = arith.constant dense<0.000000e+00> : vector<16xf32>
    %495 = vector.multi_reduction <add>, %490, %cst_233 [1] : vector<16x128xf32> to vector<16xf32>
    %496 = vector.shape_cast %495 : vector<16xf32> to vector<16x1xf32>
    %cst_234 = arith.constant 3.125000e-02 : f32
    %497 = vector.broadcast %cst_234 : f32 to vector<16x1xf32>
    %498 = arith.mulf %496, %497 : vector<16x1xf32>
    %499 = vector.broadcast %498 : vector<16x1xf32> to vector<16x128xf32>
    %500 = arith.subf %490, %499 : vector<16x128xf32>
    %501 = vector.broadcast %4 : vector<1x128xf32> to vector<16x128xf32>
    %502 = arith.mulf %500, %501 : vector<16x128xf32>
    %503 = arith.mulf %502, %502 : vector<16x128xf32>
    %cst_235 = arith.constant dense<0.000000e+00> : vector<16xf32>
    %504 = vector.multi_reduction <add>, %503, %cst_235 [1] : vector<16x128xf32> to vector<16xf32>
    %505 = vector.shape_cast %504 : vector<16xf32> to vector<16x1xf32>
    %cst_236 = arith.constant 3.125000e-02 : f32
    %506 = vector.broadcast %cst_236 : f32 to vector<16x1xf32>
    %507 = arith.mulf %505, %506 : vector<16x1xf32>
    %cst_237 = arith.constant 9.99999974E-6 : f32
    %508 = vector.broadcast %cst_237 : f32 to vector<16x1xf32>
    %509 = arith.addf %507, %508 : vector<16x1xf32>
    %510 = math.rsqrt %509 : vector<16x1xf32>
    %511 = vector.broadcast %510 : vector<16x1xf32> to vector<16x128xf32>
    %512 = arith.mulf %502, %511 : vector<16x128xf32>
    %513 = vector.broadcast %492 : vector<1x128xf32> to vector<16x128xf32>
    %514 = arith.mulf %512, %513 : vector<16x128xf32>
    %515 = vector.broadcast %494 : vector<1x128xf32> to vector<16x128xf32>
    %516 = arith.addf %514, %515 : vector<16x128xf32>
    %c0_238 = arith.constant 0 : index
    %c0_239 = arith.constant 0 : index
    %517 = vector.load %arg14[%c0_238, %c0_239] : memref<1x128xf32, #tpu.memory_space<vmem>>, vector<1x128xf32>
    %c0_240 = arith.constant 0 : index
    %c0_241 = arith.constant 0 : index
    %518 = vector.load %arg15[%c0_240, %c0_241] : memref<1x128xf32, #tpu.memory_space<vmem>>, vector<1x128xf32>
    %cst_242 = arith.constant dense<0.000000e+00> : vector<16xf32>
    %519 = vector.multi_reduction <add>, %516, %cst_242 [1] : vector<16x128xf32> to vector<16xf32>
    %520 = vector.shape_cast %519 : vector<16xf32> to vector<16x1xf32>
    %cst_243 = arith.constant 3.125000e-02 : f32
    %521 = vector.broadcast %cst_243 : f32 to vector<16x1xf32>
    %522 = arith.mulf %520, %521 : vector<16x1xf32>
    %523 = vector.broadcast %522 : vector<16x1xf32> to vector<16x128xf32>
    %524 = arith.subf %516, %523 : vector<16x128xf32>
    %525 = vector.broadcast %4 : vector<1x128xf32> to vector<16x128xf32>
    %526 = arith.mulf %524, %525 : vector<16x128xf32>
    %527 = arith.mulf %526, %526 : vector<16x128xf32>
    %cst_244 = arith.constant dense<0.000000e+00> : vector<16xf32>
    %528 = vector.multi_reduction <add>, %527, %cst_244 [1] : vector<16x128xf32> to vector<16xf32>
    %529 = vector.shape_cast %528 : vector<16xf32> to vector<16x1xf32>
    %cst_245 = arith.constant 3.125000e-02 : f32
    %530 = vector.broadcast %cst_245 : f32 to vector<16x1xf32>
    %531 = arith.mulf %529, %530 : vector<16x1xf32>
    %cst_246 = arith.constant 9.99999974E-6 : f32
    %532 = vector.broadcast %cst_246 : f32 to vector<16x1xf32>
    %533 = arith.addf %531, %532 : vector<16x1xf32>
    %534 = math.rsqrt %533 : vector<16x1xf32>
    %535 = vector.broadcast %534 : vector<16x1xf32> to vector<16x128xf32>
    %536 = arith.mulf %526, %535 : vector<16x128xf32>
    %537 = vector.broadcast %517 : vector<1x128xf32> to vector<16x128xf32>
    %538 = arith.mulf %536, %537 : vector<16x128xf32>
    %539 = vector.broadcast %518 : vector<1x128xf32> to vector<16x128xf32>
    %540 = arith.addf %538, %539 : vector<16x128xf32>
    %c0_247 = arith.constant 0 : index
    %c0_248 = arith.constant 0 : index
    %541 = vector.load %arg16[%c0_247, %c0_248] : memref<128x128xf32, #tpu.memory_space<vmem>>, vector<128x128xf32>
    %cst_249 = arith.constant dense<0.000000e+00> : vector<16x128xf32>
    %542 = tpu.matmul %540, %541, %cst_249 {dimension_numbers = #tpu.dot_dimension_numbers<[1], [0], [0], [1], [0, 0, 1, 1], [], []>} : vector<16x128xf32>, vector<128x128xf32>, vector<16x128xf32> -> vector<16x128xf32>
    %c0_250 = arith.constant 0 : index
    %c0_251 = arith.constant 0 : index
    %543 = vector.load %arg17[%c0_250, %c0_251] : memref<1x128xf32, #tpu.memory_space<vmem>>, vector<1x128xf32>
    %544 = vector.broadcast %543 : vector<1x128xf32> to vector<16x128xf32>
    %545 = arith.addf %542, %544 : vector<16x128xf32>
    %cst_252 = arith.constant -1.000000e+30 : f32
    %546 = vector.shape_cast %6 : vector<1x128xi1> to vector<1x128xi1>
    %547 = vector.broadcast %546 : vector<1x128xi1> to vector<16x128xi1>
    %548 = vector.broadcast %cst_252 : f32 to vector<16x128xf32>
    %549 = arith.select %547, %545, %548 : vector<16x128xi1>, vector<16x128xf32>
    %cst_253 = arith.constant dense<0xFF800000> : vector<16xf32>
    %550 = vector.multi_reduction <maximumf>, %549, %cst_253 [1] : vector<16x128xf32> to vector<16xf32>
    %551 = vector.shape_cast %550 : vector<16xf32> to vector<16x1xf32>
    %552 = vector.broadcast %551 : vector<16x1xf32> to vector<16x128xf32>
    %553 = arith.subf %549, %552 : vector<16x128xf32>
    %554 = math.exp %553 : vector<16x128xf32>
    %cst_254 = arith.constant dense<0.000000e+00> : vector<16xf32>
    %555 = vector.multi_reduction <add>, %554, %cst_254 [1] : vector<16x128xf32> to vector<16xf32>
    %556 = vector.shape_cast %555 : vector<16xf32> to vector<16x1xf32>
    %557 = vector.broadcast %556 : vector<16x1xf32> to vector<16x128xf32>
    %558 = arith.divf %554, %557 : vector<16x128xf32>
    %c0_255 = arith.constant 0 : index
    %c0_256 = arith.constant 0 : index
    %559 = vector.load %arg18[%c0_255, %c0_256] : memref<16x128xf32, #tpu.memory_space<vmem>>, vector<16x128xf32>
    tpu.vector_store %arg18[%c0_255, %c0_256], %558 {strides = array<i32>} : memref<16x128xf32, #tpu.memory_space<vmem>>, vector<16x128xf32>,
    return
  }
}

</mosaic_0001>

<llo_original>
// kernel: transformer_forward.1
$region0: #{transformer_forward.1}
  #allocation0 [shape = 'u32[]', space=smem, size = 0x4, offset = 0x4, fixed_abs, tag = 'smem constant byte address 0x4 - core index']
  #allocation1 [shape = 'u32[144,128]{1,0:T(1,128)}', space=vmem, size = 0x12000, scoped, tag = 'internal scratch']
  %s0 = inlined_call_operand.vmem [shape: f32[16,128], index: 0, kind: input, shape index: {}]
  %s1 = inlined_call_operand.vmem [shape: f32[8,128], index: 1, kind: input, shape index: {}]
  %s2 = inlined_call_operand.hbm [shape: f32[2,128,1536], index: 2, kind: input, shape index: {}]
  %s3 = inlined_call_operand.hbm [shape: f32[2,1,1536], index: 3, kind: input, shape index: {}]
  %s4 = inlined_call_operand.hbm [shape: f32[8,128,128], index: 4, kind: input, shape index: {}]
  %s5 = inlined_call_operand.hbm [shape: f32[2,1,128], index: 5, kind: input, shape index: {}]
  %s6 = inlined_call_operand.hbm [shape: f32[2,1,128], index: 6, kind: input, shape index: {}]
  %s7 = inlined_call_operand.hbm [shape: f32[2,1,128], index: 7, kind: input, shape index: {}]
  %s8 = inlined_call_operand.hbm [shape: f32[2,128,128], index: 8, kind: input, shape index: {}]
  %s9 = inlined_call_operand.hbm [shape: f32[2,1,128], index: 9, kind: input, shape index: {}]
  %s10 = inlined_call_operand.hbm [shape: f32[2,128,128], index: 10, kind: input, shape index: {}]
  %s11 = inlined_call_operand.hbm [shape: f32[2,1,128], index: 11, kind: input, shape index: {}]
  %s12 = inlined_call_operand.hbm [shape: f32[2,1,128], index: 12, kind: input, shape index: {}]
  %s13 = inlined_call_operand.hbm [shape: f32[2,1,128], index: 13, kind: input, shape index: {}]
  %s14 = inlined_call_operand.hbm [shape: f32[1,128], index: 14, kind: input, shape index: {}]
  %s15 = inlined_call_operand.hbm [shape: f32[1,128], index: 15, kind: input, shape index: {}]
  %s16 = inlined_call_operand.hbm [shape: f32[128,128], index: 16, kind: input, shape index: {}]
  %s17 = inlined_call_operand.hbm [shape: f32[1,128], index: 17, kind: input, shape index: {}]
  %s18 = inlined_call_operand.vmem [shape: f32[16,128], index: 18, kind: output, shape index: {}]
  %s19 = sld [smem:[#allocation0]]
  $region146: #{transformer_forward.1} parent=0
    _
  %s21 = ssub.s32 1, %s19
  %s22 = scalar_select 0, %s21, %s19
  $region1: #{transformer_forward.1} parent=0
    #allocation2 [shape = 'u8[1572864]{0}', space=vmem, size = 0x180000, scoped, tag = 'input window, operand 2, single buffered']
    #allocation3 [shape = 's32[1]{0}', space=sflag, size = 0x4, scoped, tag = 'scoped memory for transformer_forward.1']
    #allocation4 [shape = 'u8[12288]{0}', space=vmem, size = 0x3000, scoped, tag = 'input window, operand 3, single buffered']
    #allocation5 [shape = 's32[1]{0}', space=sflag, size = 0x4, scoped, tag = 'scoped memory for transformer_forward.1']
    #allocation6 [shape = 'u8[524288]{0}', space=vmem, size = 0x80000, scoped, tag = 'input window, operand 4, single buffered']
    #allocation7 [shape = 'u8[1024]{0}', space=vmem, size = 0x400, scoped, tag = 'input window, operand 5, single buffered']
    #allocation8 [shape = 's32[1]{0}', space=sflag, size = 0x4, scoped, tag = 'scoped memory for transformer_forward.1']
    #allocation9 [shape = 'u8[1024]{0}', space=vmem, size = 0x400, scoped, tag = 'input window, operand 6, single buffered']
    #allocation10 [shape = 'u8[1024]{0}', space=vmem, size = 0x400, scoped, tag = 'input window, operand 7, single buffered']
    #allocation11 [shape = 's32[1]{0}', space=sflag, size = 0x4, scoped, tag = 'scoped memory for transformer_forward.1']
    #allocation12 [shape = 'u8[131072]{0}', space=vmem, size = 0x20000, scoped, tag = 'input window, operand 8, single buffered']
    #allocation13 [shape = 'u8[1024]{0}', space=vmem, size = 0x400, scoped, tag = 'input window, operand 9, single buffered']
    #allocation14 [shape = 's32[1]{0}', space=sflag, size = 0x4, scoped, tag = 'scoped memory for transformer_forward.1']
    #allocation15 [shape = 'u8[131072]{0}', space=vmem, size = 0x20000, scoped, tag = 'input window, operand 10, single buffered']
    #allocation16 [shape = 'u8[1024]{0}', space=vmem, size = 0x400, scoped, tag = 'input window, operand 11, single buffered']
    #allocation17 [shape = 's32[1]{0}', space=sflag, size = 0x4, scoped, tag = 'scoped memory for transformer_forward.1']
    #allocation18 [shape = 'u8[1024]{0}', space=vmem, size = 0x400, scoped, tag = 'input window, operand 12, single buffered']
    #allocation19 [shape = 'u8[1024]{0}', space=vmem, size = 0x400, scoped, tag = 'input window, operand 13, single buffered']
    #allocation20 [shape = 's32[1]{0}', space=sflag, size = 0x4, scoped, tag = 'scoped memory for transformer_forward.1']
    #allocation21 [shape = 'u8[512]{0}', space=vmem, size = 0x400, scoped, tag = 'input window, operand 14, single buffered']
    #allocation22 [shape = 'u8[512]{0}', space=vmem, size = 0x400, scoped, tag = 'input window, operand 15, single buffered']
    #allocation23 [shape = 's32[1]{0}', space=sflag, size = 0x4, scoped, tag = 'scoped memory for transformer_forward.1']
    #allocation24 [shape = 'u8[65536]{0}', space=vmem, size = 0x10000, scoped, tag = 'input window, operand 16, single buffered']
    #allocation25 [shape = 'u8[512]{0}', space=vmem, size = 0x400, scoped, tag = 'input window, operand 17, single buffered']
    #allocation26 [shape = 's32[1]{0}', space=sflag, size = 0x4, scoped, tag = 'scoped memory for transformer_forward.1']
    %23 = vsyncpa [#allocation3], 0
    %24 = vsyncpa [#allocation5], 0
    %25 = vsyncpa [#allocation8], 0
    %26 = vsyncpa [#allocation11], 0
    %27 = vsyncpa [#allocation14], 0
    %28 = vsyncpa [#allocation17], 0
    %29 = vsyncpa [#allocation20], 0
    %30 = vsyncpa [#allocation23], 0
    %31 = vsyncpa [#allocation26], 0
    // Predicated region
    $region2: #{transformer_forward.1} parent=1 // pred_check
      _
    $region3: #{transformer_forward.1} parent=1 // pred_check_branch
      %33 = sbr.rel (0) target = $region5
    $region4: #{transformer_forward.1} parent=1 // pred_region
      _
    $region5: #{transformer_forward.1} parent=1 // pred_fallthru
      _
    // Predicated region
    $region6: #{transformer_forward.1} parent=1 // pred_check
      _
    $region7: #{transformer_forward.1} parent=1 // pred_check_branch
      %35 = sbr.rel (0) target = $region9
    $region8: #{transformer_forward.1} parent=1 // pred_region
      _
    $region9: #{transformer_forward.1} parent=1 // pred_fallthru
      _
    // Predicated region
    $region10: #{transformer_forward.1} parent=1 // pred_check
      _
    $region11: #{transformer_forward.1} parent=1 // pred_check_branch
      %37 = sbr.rel (0) target = $region13
    $region12: #{transformer_forward.1} parent=1 // pred_region
      %s39 = ssub.s32 49152, 49152
      %40 = vsyncadd [#allocation3], %s39
      %s41 = sshll.u32 [#allocation2], 4
      %s42 = int_to_ptr.vmem [resolvable:$true] %s41
      %47 = dma.hbm_to_vmem [thread:$0]  %s2, 49152, %s42, [#allocation3], 1536, 1536, 96
    $region13: #{transformer_forward.1} parent=1 // pred_fallthru
      _
    // Predicated region
    $region14: #{transformer_forward.1} parent=1 // pred_check
      _
    $region15: #{transformer_forward.1} parent=1 // pred_check_branch
      %49 = sbr.rel (0) target = $region17
    $region16: #{transformer_forward.1} parent=1 // pred_region
      %s51 = ssub.s32 384, 384
      %52 = vsyncadd [#allocation5], %s51
      %s53 = sshll.u32 [#allocation4], 4
      %s54 = int_to_ptr.vmem [resolvable:$true] %s53
      %59 = dma.hbm_to_vmem [thread:$0]  %s3, 384, %s54, [#allocation5], 192, 192, 12
    $region17: #{transformer_forward.1} parent=1 // pred_fallthru
      _
    // Predicated region
    $region18: #{transformer_forward.1} parent=1 // pred_check
      _
    $region19: #{transformer_forward.1} parent=1 // pred_check_branch
      %61 = sbr.rel (0) target = $region21
    $region20: #{transformer_forward.1} parent=1 // pred_region
      %s63 = ssub.s32 16384, 16384
      %64 = vsyncadd [#allocation5], %s63
      %s65 = sshll.u32 [#allocation6], 4
      %s66 = int_to_ptr.vmem [resolvable:$true] %s65
      %71 = dma.hbm_to_vmem [thread:$0]  %s4, 16384, %s66, [#allocation5], 128, 128, 8
    $region21: #{transformer_forward.1} parent=1 // pred_fallthru
      _
    // Predicated region
    $region22: #{transformer_forward.1} parent=1 // pred_check
      _
    $region23: #{transformer_forward.1} parent=1 // pred_check_branch
      %73 = sbr.rel (0) target = $region25
    $region24: #{transformer_forward.1} parent=1 // pred_region
      %s75 = ssub.s32 32, 32
      %76 = vsyncadd [#allocation8], %s75
      %s77 = sshll.u32 [#allocation7], 4
      %s78 = int_to_ptr.vmem [resolvable:$true] %s77
      %83 = dma.hbm_to_vmem [thread:$0]  %s5, 32, %s78, [#allocation8], 16, 16, 1
    $region25: #{transformer_forward.1} parent=1 // pred_fallthru
      _
    // Predicated region
    $region26: #{transformer_forward.1} parent=1 // pred_check
      _
    $region27: #{transformer_forward.1} parent=1 // pred_check_branch
      %85 = sbr.rel (0) target = $region29
    $region28: #{transformer_forward.1} parent=1 // pred_region
      %s87 = ssub.s32 32, 32
      %88 = vsyncadd [#allocation8], %s87
      %s89 = sshll.u32 [#allocation9], 4
      %s90 = int_to_ptr.vmem [resolvable:$true] %s89
      %95 = dma.hbm_to_vmem [thread:$0]  %s6, 32, %s90, [#allocation8], 16, 16, 1
    $region29: #{transformer_forward.1} parent=1 // pred_fallthru
      _
    // Predicated region
    $region30: #{transformer_forward.1} parent=1 // pred_check
      _
    $region31: #{transformer_forward.1} parent=1 // pred_check_branch
      %97 = sbr.rel (0) target = $region33
    $region32: #{transformer_forward.1} parent=1 // pred_region
      %s99 = ssub.s32 32, 32
      %100 = vsyncadd [#allocation11], %s99
      %s101 = sshll.u32 [#allocation10], 4
      %s102 = int_to_ptr.vmem [resolvable:$true] %s101
      %107 = dma.hbm_to_vmem [thread:$0]  %s7, 32, %s102, [#allocation11], 16, 16, 1
    $region33: #{transformer_forward.1} parent=1 // pred_fallthru
      _
    // Predicated region
    $region34: #{transformer_forward.1} parent=1 // pred_check
      _
    $region35: #{transformer_forward.1} parent=1 // pred_check_branch
      %109 = sbr.rel (0) target = $region37
    $region36: #{transformer_forward.1} parent=1 // pred_region
      %s111 = ssub.s32 4096, 4096
      %112 = vsyncadd [#allocation11], %s111
      %s113 = sshll.u32 [#allocation12], 4
      %s114 = int_to_ptr.vmem [resolvable:$true] %s113
      %119 = dma.hbm_to_vmem [thread:$0]  %s8, 4096, %s114, [#allocation11], 128, 128, 8
    $region37: #{transformer_forward.1} parent=1 // pred_fallthru
      _
    // Predicated region
    $region38: #{transformer_forward.1} parent=1 // pred_check
      _
    $region39: #{transformer_forward.1} parent=1 // pred_check_branch
      %121 = sbr.rel (0) target = $region41
    $region40: #{transformer_forward.1} parent=1 // pred_region
      %s123 = ssub.s32 32, 32
      %124 = vsyncadd [#allocation14], %s123
      %s125 = sshll.u32 [#allocation13], 4
      %s126 = int_to_ptr.vmem [resolvable:$true] %s125
      %131 = dma.hbm_to_vmem [thread:$0]  %s9, 32, %s126, [#allocation14], 16, 16, 1
    $region41: #{transformer_forward.1} parent=1 // pred_fallthru
      _
    // Predicated region
    $region42: #{transformer_forward.1} parent=1 // pred_check
      _
    $region43: #{transformer_forward.1} parent=1 // pred_check_branch
      %133 = sbr.rel (0) target = $region45
    $region44: #{transformer_forward.1} parent=1 // pred_region
      %s135 = ssub.s32 4096, 4096
      %136 = vsyncadd [#allocation14], %s135
      %s137 = sshll.u32 [#allocation15], 4
      %s138 = int_to_ptr.vmem [resolvable:$true] %s137
      %143 = dma.hbm_to_vmem [thread:$0]  %s10, 4096, %s138, [#allocation14], 128, 128, 8
    $region45: #{transformer_forward.1} parent=1 // pred_fallthru
      _
    // Predicated region
    $region46: #{transformer_forward.1} parent=1 // pred_check
      _
    $region47: #{transformer_forward.1} parent=1 // pred_check_branch
      %145 = sbr.rel (0) target = $region49
    $region48: #{transformer_forward.1} parent=1 // pred_region
      %s147 = ssub.s32 32, 32
      %148 = vsyncadd [#allocation17], %s147
      %s149 = sshll.u32 [#allocation16], 4
      %s150 = int_to_ptr.vmem [resolvable:$true] %s149
      %155 = dma.hbm_to_vmem [thread:$0]  %s11, 32, %s150, [#allocation17], 16, 16, 1
    $region49: #{transformer_forward.1} parent=1 // pred_fallthru
      _
    // Predicated region
    $region50: #{transformer_forward.1} parent=1 // pred_check
      _
    $region51: #{transformer_forward.1} parent=1 // pred_check_branch
      %157 = sbr.rel (0) target = $region53
    $region52: #{transformer_forward.1} parent=1 // pred_region
      %s159 = ssub.s32 32, 32
      %160 = vsyncadd [#allocation17], %s159
      %s161 = sshll.u32 [#allocation18], 4
      %s162 = int_to_ptr.vmem [resolvable:$true] %s161
      %167 = dma.hbm_to_vmem [thread:$0]  %s12, 32, %s162, [#allocation17], 16, 16, 1
    $region53: #{transformer_forward.1} parent=1 // pred_fallthru
      _
    // Predicated region
    $region54: #{transformer_forward.1} parent=1 // pred_check
      _
    $region55: #{transformer_forward.1} parent=1 // pred_check_branch
      %169 = sbr.rel (0) target = $region57
    $region56: #{transformer_forward.1} parent=1 // pred_region
      %s171 = ssub.s32 32, 32
      %172 = vsyncadd [#allocation20], %s171
      %s173 = sshll.u32 [#allocation19], 4
      %s174 = int_to_ptr.vmem [resolvable:$true] %s173
      %179 = dma.hbm_to_vmem [thread:$0]  %s13, 32, %s174, [#allocation20], 16, 16, 1
    $region57: #{transformer_forward.1} parent=1 // pred_fallthru
      _
    // Predicated region
    $region58: #{transformer_forward.1} parent=1 // pred_check
      _
    $region59: #{transformer_forward.1} parent=1 // pred_check_branch
      %181 = sbr.rel (0) target = $region61
    $region60: #{transformer_forward.1} parent=1 // pred_region
      %s183 = ssub.s32 16, 16
      %184 = vsyncadd [#allocation20], %s183
      %s186 = sshll.u32 [#allocation21], 4
      %s187 = int_to_ptr.vmem [resolvable:$true] %s186
      %189 = dma.hbm_to_vmem [thread:$0]  %s14, 16, %s187, [#allocation20]
    $region61: #{transformer_forward.1} parent=1 // pred_fallthru
      _
    // Predicated region
    $region62: #{transformer_forward.1} parent=1 // pred_check
      _
    $region63: #{transformer_forward.1} parent=1 // pred_check_branch
      %191 = sbr.rel (0) target = $region65
    $region64: #{transformer_forward.1} parent=1 // pred_region
      %s193 = ssub.s32 16, 16
      %194 = vsyncadd [#allocation23], %s193
      %s196 = sshll.u32 [#allocation22], 4
      %s197 = int_to_ptr.vmem [resolvable:$true] %s196
      %199 = dma.hbm_to_vmem [thread:$0]  %s15, 16, %s197, [#allocation23]
    $region65: #{transformer_forward.1} parent=1 // pred_fallthru
      _
    // Predicated region
    $region66: #{transformer_forward.1} parent=1 // pred_check
      _
    $region67: #{transformer_forward.1} parent=1 // pred_check_branch
      %201 = sbr.rel (0) target = $region69
    $region68: #{transformer_forward.1} parent=1 // pred_region
      %s203 = ssub.s32 2048, 2048
      %204 = vsyncadd [#allocation23], %s203
      %s205 = sshll.u32 [#allocation24], 4
      %s206 = int_to_ptr.vmem [resolvable:$true] %s205
      %211 = dma.hbm_to_vmem [thread:$0]  %s16, 2048, %s206, [#allocation23], 128, 128, 8
    $region69: #{transformer_forward.1} parent=1 // pred_fallthru
      _
    // Predicated region
    $region70: #{transformer_forward.1} parent=1 // pred_check
      _
    $region71: #{transformer_forward.1} parent=1 // pred_check_branch
      %213 = sbr.rel (0) target = $region73
    $region72: #{transformer_forward.1} parent=1 // pred_region
      %s215 = ssub.s32 16, 16
      %216 = vsyncadd [#allocation26], %s215
      %s218 = sshll.u32 [#allocation25], 4
      %s219 = int_to_ptr.vmem [resolvable:$true] %s218
      %221 = dma.hbm_to_vmem [thread:$0]  %s17, 16, %s219, [#allocation26]
    $region73: #{transformer_forward.1} parent=1 // pred_fallthru
      _
    // Predicated region
    $region74: #{transformer_forward.1} parent=1 // pred_check
      _
    $region75: #{transformer_forward.1} parent=1 // pred_check_branch
      %223 = sbr.rel (0) target = $region77
    $region76: #{transformer_forward.1} parent=1 // pred_region
      %224 = dma.done [#allocation3], 49152
    $region77: #{transformer_forward.1} parent=1 // pred_fallthru
      _
    // Predicated region
    $region78: #{transformer_forward.1} parent=1 // pred_check
      _
    $region79: #{transformer_forward.1} parent=1 // pred_check_branch
      %226 = sbr.rel (0) target = $region81
    $region80: #{transformer_forward.1} parent=1 // pred_region
      %227 = dma.done [#allocation5], 384
    $region81: #{transformer_forward.1} parent=1 // pred_fallthru
      _
    // Predicated region
    $region82: #{transformer_forward.1} parent=1 // pred_check
      _
    $region83: #{transformer_forward.1} parent=1 // pred_check_branch
      %229 = sbr.rel (0) target = $region85
    $region84: #{transformer_forward.1} parent=1 // pred_region
      %230 = dma.done [#allocation5], 16384
    $region85: #{transformer_forward.1} parent=1 // pred_fallthru
      _
    // Predicated region
    $region86: #{transformer_forward.1} parent=1 // pred_check
      _
    $region87: #{transformer_forward.1} parent=1 // pred_check_branch
      %232 = sbr.rel (0) target = $region89
    $region88: #{transformer_forward.1} parent=1 // pred_region
      %233 = dma.done [#allocation8], 32
    $region89: #{transformer_forward.1} parent=1 // pred_fallthru
      _
    // Predicated region
    $region90: #{transformer_forward.1} parent=1 // pred_check
      _
    $region91: #{transformer_forward.1} parent=1 // pred_check_branch
      %235 = sbr.rel (0) target = $region93
    $region92: #{transformer_forward.1} parent=1 // pred_region
      %236 = dma.done [#allocation8], 32
    $region93: #{transformer_forward.1} parent=1 // pred_fallthru
      _
    // Predicated region
    $region94: #{transformer_forward.1} parent=1 // pred_check
      _
    $region95: #{transformer_forward.1} parent=1 // pred_check_branch
      %238 = sbr.rel (0) target = $region97
    $region96: #{transformer_forward.1} parent=1 // pred_region
      %239 = dma.done [#allocation11], 32
    $region97: #{transformer_forward.1} parent=1 // pred_fallthru
      _
    // Predicated region
    $region98: #{transformer_forward.1} parent=1 // pred_check
      _
    $region99: #{transformer_forward.1} parent=1 // pred_check_branch
      %241 = sbr.rel (0) target = $region101
    $region100: #{transformer_forward.1} parent=1 // pred_region
      %242 = dma.done [#allocation11], 4096
    $region101: #{transformer_forward.1} parent=1 // pred_fallthru
      _
    // Predicated region
    $region102: #{transformer_forward.1} parent=1 // pred_check
      _
    $region103: #{transformer_forward.1} parent=1 // pred_check_branch
      %244 = sbr.rel (0) target = $region105
    $region104: #{transformer_forward.1} parent=1 // pred_region
      %245 = dma.done [#allocation14], 32
    $region105: #{transformer_forward.1} parent=1 // pred_fallthru
      _
    // Predicated region
    $region106: #{transformer_forward.1} parent=1 // pred_check
      _
    $region107: #{transformer_forward.1} parent=1 // pred_check_branch
      %247 = sbr.rel (0) target = $region109
    $region108: #{transformer_forward.1} parent=1 // pred_region
      %248 = dma.done [#allocation14], 4096
    $region109: #{transformer_forward.1} parent=1 // pred_fallthru
      _
    // Predicated region
    $region110: #{transformer_forward.1} parent=1 // pred_check
      _
    $region111: #{transformer_forward.1} parent=1 // pred_check_branch
      %250 = sbr.rel (0) target = $region113
    $region112: #{transformer_forward.1} parent=1 // pred_region
      %251 = dma.done [#allocation17], 32
    $region113: #{transformer_forward.1} parent=1 // pred_fallthru
      _
    // Predicated region
    $region114: #{transformer_forward.1} parent=1 // pred_check
      _
    $region115: #{transformer_forward.1} parent=1 // pred_check_branch
      %253 = sbr.rel (0) target = $region117
    $region116: #{transformer_forward.1} parent=1 // pred_region
      %254 = dma.done [#allocation17], 32
    $region117: #{transformer_forward.1} parent=1 // pred_fallthru
      _
    // Predicated region
    $region118: #{transformer_forward.1} parent=1 // pred_check
      _
    $region119: #{transformer_forward.1} parent=1 // pred_check_branch
      %256 = sbr.rel (0) target = $region121
    $region120: #{transformer_forward.1} parent=1 // pred_region
      %257 = dma.done [#allocation20], 32
    $region121: #{transformer_forward.1} parent=1 // pred_fallthru
      _
    // Predicated region
    $region122: #{transformer_forward.1} parent=1 // pred_check
      _
    $region123: #{transformer_forward.1} parent=1 // pred_check_branch
      %259 = sbr.rel (0) target = $region125
    $region124: #{transformer_forward.1} parent=1 // pred_region
      %260 = dma.done [#allocation20], 16
    $region125: #{transformer_forward.1} parent=1 // pred_fallthru
      _
    // Predicated region
    $region126: #{transformer_forward.1} parent=1 // pred_check
      _
    $region127: #{transformer_forward.1} parent=1 // pred_check_branch
      %262 = sbr.rel (0) target = $region129
    $region128: #{transformer_forward.1} parent=1 // pred_region
      %263 = dma.done [#allocation23], 16
    $region129: #{transformer_forward.1} parent=1 // pred_fallthru
      _
    // Predicated region
    $region130: #{transformer_forward.1} parent=1 // pred_check
      _
    $region131: #{transformer_forward.1} parent=1 // pred_check_branch
      %265 = sbr.rel (0) target = $region133
    $region132: #{transformer_forward.1} parent=1 // pred_region
      %266 = dma.done [#allocation23], 2048
    $region133: #{transformer_forward.1} parent=1 // pred_fallthru
      _
    // Predicated region
    $region134: #{transformer_forward.1} parent=1 // pred_check
      _
    $region135: #{transformer_forward.1} parent=1 // pred_check_branch
      %268 = sbr.rel (0) target = $region137
    $region136: #{transformer_forward.1} parent=1 // pred_region
      %269 = dma.done [#allocation26], 16
    $region137: #{transformer_forward.1} parent=1 // pred_fallthru
      _
    %v270 = vlaneseq
    %v271 = vand.u32 %v270, 127
    %vm272 = vcmp.lt.s32.totalorder %v271, 32
    %v273 = vsel %vm272, 1, 0
    %v274 = vcvt.s32.f32 %v273
    %vm275 = vcmp.lt.s32.totalorder %v271, 50
    %v276 = vld [vmem:[%s1] sm:$0xff]
    %v277 = vld [vmem:[%s0] sm:$0xff]
    %v278 = vld [vmem:[%s0 + $0x8] sm:$0xff]
    %v279 = vmul.f32 %v277, 5.656854
    %v280 = vmul.f32 %v278, 5.656854
    %v281 = vadd.f32 %v279, %v276
    %v282 = vadd.f32 %v280, %v276
    %v283 = vld [vmem:[#allocation2] sm:$0xff]
    %v284 = vld [vmem:[#allocation2 + $0x8] sm:$0xff]
    %v285 = vld [vmem:[#allocation2 + $0x10] sm:$0xff]
    %v286 = vld [vmem:[#allocation2 + $0x18] sm:$0xff]
    %v287 = vld [vmem:[#allocation2 + $0x20] sm:$0xff]
    %v288 = vld [vmem:[#allocation2 + $0x28] sm:$0xff]
    %v289 = vld [vmem:[#allocation2 + $0x30] sm:$0xff]
    %v290 = vld [vmem:[#allocation2 + $0x38] sm:$0xff]
    %v291 = vld [vmem:[#allocation2 + $0x40] sm:$0xff]
    %v292 = vld [vmem:[#allocation2 + $0x48] sm:$0xff]
    %v293 = vld [vmem:[#allocation2 + $0x50] sm:$0xff]
    %v294 = vld [vmem:[#allocation2 + $0x58] sm:$0xff]
    %v295 = vld [vmem:[#allocation2 + $0x60] sm:$0xff]
    %v296 = vld [vmem:[#allocation2 + $0x68] sm:$0xff]
    %v297 = vld [vmem:[#allocation2 + $0x70] sm:$0xff]
    %v298 = vld [vmem:[#allocation2 + $0x78] sm:$0xff]
    %v299 = vld [vmem:[#allocation2 + $0x80] sm:$0xff]
    %v300 = vld [vmem:[#allocation2 + $0x88] sm:$0xff]
    %v301 = vld [vmem:[#allocation2 + $0x90] sm:$0xff]
    %v302 = vld [vmem:[#allocation2 + $0x98] sm:$0xff]
    %v303 = vld [vmem:[#allocation2 + $0xa0] sm:$0xff]
    %v304 = vld [vmem:[#allocation2 + $0xa8] sm:$0xff]
    %v305 = vld [vmem:[#allocation2 + $0xb0] sm:$0xff]
    %v306 = vld [vmem:[#allocation2 + $0xb8] sm:$0xff]
    %v307 = vld [vmem:[#allocation2 + $0xc0] sm:$0xff]
    %v308 = vld [vmem:[#allocation2 + $0xc8] sm:$0xff]
    %v309 = vld [vmem:[#allocation2 + $0xd0] sm:$0xff]
    %v310 = vld [vmem:[#allocation2 + $0xd8] sm:$0xff]
    %v311 = vld [vmem:[#allocation2 + $0xe0] sm:$0xff]
    %v312 = vld [vmem:[#allocation2 + $0xe8] sm:$0xff]
    %v313 = vld [vmem:[#allocation2 + $0xf0] sm:$0xff]
    %v314 = vld [vmem:[#allocation2 + $0xf8] sm:$0xff]
    %v315 = vld [vmem:[#allocation2 + $0x100] sm:$0xff]
    %v316 = vld [vmem:[#allocation2 + $0x108] sm:$0xff]
    %v317 = vld [vmem:[#allocation2 + $0x110] sm:$0xff]
    %v318 = vld [vmem:[#allocation2 + $0x118] sm:$0xff]
    %v319 = vld [vmem:[#allocation2 + $0x120] sm:$0xff]
    %v320 = vld [vmem:[#allocation2 + $0x128] sm:$0xff]
    %v321 = vld [vmem:[#allocation2 + $0x130] sm:$0xff]
    %v322 = vld [vmem:[#allocation2 + $0x138] sm:$0xff]
    %v323 = vld [vmem:[#allocation2 + $0x140] sm:$0xff]
    %v324 = vld [vmem:[#allocation2 + $0x148] sm:$0xff]
    %v325 = vld [vmem:[#allocation2 + $0x150] sm:$0xff]
    %v326 = vld [vmem:[#allocation2 + $0x158] sm:$0xff]
    %v327 = vld [vmem:[#allocation2 + $0x160] sm:$0xff]
    %v328 = vld [vmem:[#allocation2 + $0x168] sm:$0xff]
    %v329 = vld [vmem:[#allocation2 + $0x170] sm:$0xff]
    %v330 = vld [vmem:[#allocation2 + $0x178] sm:$0xff]
    %v331 = vld [vmem:[#allocation2 + $0x180] sm:$0xff]
    %v332 = vld [vmem:[#allocation2 + $0x188] sm:$0xff]
    %v333 = vld [vmem:[#allocation2 + $0x190] sm:$0xff]
    %v334 = vld [vmem:[#allocation2 + $0x198] sm:$0xff]
    %v335 = vld [vmem:[#allocation2 + $0x1a0] sm:$0xff]
    %v336 = vld [vmem:[#allocation2 + $0x1a8] sm:$0xff]
    %v337 = vld [vmem:[#allocation2 + $0x1b0] sm:$0xff]
    %v338 = vld [vmem:[#allocation2 + $0x1b8] sm:$0xff]
    %v339 = vld [vmem:[#allocation2 + $0x1c0] sm:$0xff]
    %v340 = vld [vmem:[#allocation2 + $0x1c8] sm:$0xff]
    %v341 = vld [vmem:[#allocation2 + $0x1d0] sm:$0xff]
    %v342 = vld [vmem:[#allocation2 + $0x1d8] sm:$0xff]
    %v343 = vld [vmem:[#allocation2 + $0x1e0] sm:$0xff]
    %v344 = vld [vmem:[#allocation2 + $0x1e8] sm:$0xff]
    %v345 = vld [vmem:[#allocation2 + $0x1f0] sm:$0xff]
    %v346 = vld [vmem:[#allocation2 + $0x1f8] sm:$0xff]
    %v347 = vld [vmem:[#allocation2 + $0x200] sm:$0xff]
    %v348 = vld [vmem:[#allocation2 + $0x208] sm:$0xff]
    %v349 = vld [vmem:[#allocation2 + $0x210] sm:$0xff]
    %v350 = vld [vmem:[#allocation2 + $0x218] sm:$0xff]
    %v351 = vld [vmem:[#allocation2 + $0x220] sm:$0xff]
    %v352 = vld [vmem:[#allocation2 + $0x228] sm:$0xff]
    %v353 = vld [vmem:[#allocation2 + $0x230] sm:$0xff]
    %v354 = vld [vmem:[#allocation2 + $0x238] sm:$0xff]
    %v355 = vld [vmem:[#allocation2 + $0x240] sm:$0xff]
    %v356 = vld [vmem:[#allocation2 + $0x248] sm:$0xff]
    %v357 = vld [vmem:[#allocation2 + $0x250] sm:$0xff]
    %v358 = vld [vmem:[#allocation2 + $0x258] sm:$0xff]
    %v359 = vld [vmem:[#allocation2 + $0x260] sm:$0xff]
    %v360 = vld [vmem:[#allocation2 + $0x268] sm:$0xff]
    %v361 = vld [vmem:[#allocation2 + $0x270] sm:$0xff]
    %v362 = vld [vmem:[#allocation2 + $0x278] sm:$0xff]
    %v363 = vld [vmem:[#allocation2 + $0x280] sm:$0xff]
    %v364 = vld [vmem:[#allocation2 + $0x288] sm:$0xff]
    %v365 = vld [vmem:[#allocation2 + $0x290] sm:$0xff]
    %v366 = vld [vmem:[#allocation2 + $0x298] sm:$0xff]
    %v367 = vld [vmem:[#allocation2 + $0x2a0] sm:$0xff]
    %v368 = vld [vmem:[#allocation2 + $0x2a8] sm:$0xff]
    %v369 = vld [vmem:[#allocation2 + $0x2b0] sm:$0xff]
    %v370 = vld [vmem:[#allocation2 + $0x2b8] sm:$0xff]
    %v371 = vld [vmem:[#allocation2 + $0x2c0] sm:$0xff]
    %v372 = vld [vmem:[#allocation2 + $0x2c8] sm:$0xff]
    %v373 = vld [vmem:[#allocation2 + $0x2d0] sm:$0xff]
    %v374 = vld [vmem:[#allocation2 + $0x2d8] sm:$0xff]
    %v375 = vld [vmem:[#allocation2 + $0x2e0] sm:$0xff]
    %v376 = vld [vmem:[#allocation2 + $0x2e8] sm:$0xff]
    %v377 = vld [vmem:[#allocation2 + $0x2f0] sm:$0xff]
    %v378 = vld [vmem:[#allocation2 + $0x2f8] sm:$0xff]
    %v379 = vld [vmem:[#allocation2 + $0x300] sm:$0xff]
    %v380 = vld [vmem:[#allocation2 + $0x308] sm:$0xff]
    %v381 = vld [vmem:[#allocation2 + $0x310] sm:$0xff]
    %v382 = vld [vmem:[#allocation2 + $0x318] sm:$0xff]
    %v383 = vld [vmem:[#allocation2 + $0x320] sm:$0xff]
    %v384 = vld [vmem:[#allocation2 + $0x328] sm:$0xff]
    %v385 = vld [vmem:[#allocation2 + $0x330] sm:$0xff]
    %v386 = vld [vmem:[#allocation2 + $0x338] sm:$0xff]
    %v387 = vld [vmem:[#allocation2 + $0x340] sm:$0xff]
    %v388 = vld [vmem:[#allocation2 + $0x348] sm:$0xff]
    %v389 = vld [vmem:[#allocation2 + $0x350] sm:$0xff]
    %v390 = vld [vmem:[#allocation2 + $0x358] sm:$0xff]
    %v391 = vld [vmem:[#allocation2 + $0x360] sm:$0xff]
    %v392 = vld [vmem:[#allocation2 + $0x368] sm:$0xff]
    %v393 = vld [vmem:[#allocation2 + $0x370] sm:$0xff]
    %v394 = vld [vmem:[#allocation2 + $0x378] sm:$0xff]
    %v395 = vld [vmem:[#allocation2 + $0x380] sm:$0xff]
    %v396 = vld [vmem:[#allocation2 + $0x388] sm:$0xff]
    %v397 = vld [vmem:[#allocation2 + $0x390] sm:$0xff]
    %v398 = vld [vmem:[#allocation2 + $0x398] sm:$0xff]
    %v399 = vld [vmem:[#allocation2 + $0x3a0] sm:$0xff]
    %v400 = vld [vmem:[#allocation2 + $0x3a8] sm:$0xff]
    %v401 = vld [vmem:[#allocation2 + $0x3b0] sm:$0xff]
    %v402 = vld [vmem:[#allocation2 + $0x3b8] sm:$0xff]
    %v403 = vld [vmem:[#allocation2 + $0x3c0] sm:$0xff]
    %v404 = vld [vmem:[#allocation2 + $0x3c8] sm:$0xff]
    %v405 = vld [vmem:[#allocation2 + $0x3d0] sm:$0xff]
    %v406 = vld [vmem:[#allocation2 + $0x3d8] sm:$0xff]
    %v407 = vld [vmem:[#allocation2 + $0x3e0] sm:$0xff]
    %v408 = vld [vmem:[#allocation2 + $0x3e8] sm:$0xff]
    %v409 = vld [vmem:[#allocation2 + $0x3f0] sm:$0xff]
    %v410 = vld [vmem:[#allocation2 + $0x3f8] sm:$0xff]
    %v411 = vld [vmem:[#allocation2 + $0x400] sm:$0xff]
    %v412 = vld [vmem:[#allocation2 + $0x408] sm:$0xff]
    %v413 = vld [vmem:[#allocation2 + $0x410] sm:$0xff]
    %v414 = vld [vmem:[#allocation2 + $0x418] sm:$0xff]
    %v415 = vld [vmem:[#allocation2 + $0x420] sm:$0xff]
    %v416 = vld [vmem:[#allocation2 + $0x428] sm:$0xff]
    %v417 = vld [vmem:[#allocation2 + $0x430] sm:$0xff]
    %v418 = vld [vmem:[#allocation2 + $0x438] sm:$0xff]
    %v419 = vld [vmem:[#allocation2 + $0x440] sm:$0xff]
    %v420 = vld [vmem:[#allocation2 + $0x448] sm:$0xff]
    %v421 = vld [vmem:[#allocation2 + $0x450] sm:$0xff]
    %v422 = vld [vmem:[#allocation2 + $0x458] sm:$0xff]
    %v423 = vld [vmem:[#allocation2 + $0x460] sm:$0xff]
    %v424 = vld [vmem:[#allocation2 + $0x468] sm:$0xff]
    %v425 = vld [vmem:[#allocation2 + $0x470] sm:$0xff]
    %v426 = vld [vmem:[#allocation2 + $0x478] sm:$0xff]
    %v427 = vld [vmem:[#allocation2 + $0x480] sm:$0xff]
    %v428 = vld [vmem:[#allocation2 + $0x488] sm:$0xff]
    %v429 = vld [vmem:[#allocation2 + $0x490] sm:$0xff]
    %v430 = vld [vmem:[#allocation2 + $0x498] sm:$0xff]
    %v431 = vld [vmem:[#allocation2 + $0x4a0] sm:$0xff]
    %v432 = vld [vmem:[#allocation2 + $0x4a8] sm:$0xff]
    %v433 = vld [vmem:[#allocation2 + $0x4b0] sm:$0xff]
    %v434 = vld [vmem:[#allocation2 + $0x4b8] sm:$0xff]
    %v435 = vld [vmem:[#allocation2 + $0x4c0] sm:$0xff]
    %v436 = vld [vmem:[#allocation2 + $0x4c8] sm:$0xff]
    %v437 = vld [vmem:[#allocation2 + $0x4d0] sm:$0xff]
    %v438 = vld [vmem:[#allocation2 + $0x4d8] sm:$0xff]
    %v439 = vld [vmem:[#allocation2 + $0x4e0] sm:$0xff]
    %v440 = vld [vmem:[#allocation2 + $0x4e8] sm:$0xff]
    %v441 = vld [vmem:[#allocation2 + $0x4f0] sm:$0xff]
    %v442 = vld [vmem:[#allocation2 + $0x4f8] sm:$0xff]
    %v443 = vld [vmem:[#allocation2 + $0x500] sm:$0xff]
    %v444 = vld [vmem:[#allocation2 + $0x508] sm:$0xff]
    %v445 = vld [vmem:[#allocation2 + $0x510] sm:$0xff]
    %v446 = vld [vmem:[#allocation2 + $0x518] sm:$0xff]
    %v447 = vld [vmem:[#allocation2 + $0x520] sm:$0xff]
    %v448 = vld [vmem:[#allocation2 + $0x528] sm:$0xff]
    %v449 = vld [vmem:[#allocation2 + $0x530] sm:$0xff]
    %v450 = vld [vmem:[#allocation2 + $0x538] sm:$0xff]
    %v451 = vld [vmem:[#allocation2 + $0x540] sm:$0xff]
    %v452 = vld [vmem:[#allocation2 + $0x548] sm:$0xff]
    %v453 = vld [vmem:[#allocation2 + $0x550] sm:$0xff]
    %v454 = vld [vmem:[#allocation2 + $0x558] sm:$0xff]
    %v455 = vld [vmem:[#allocation2 + $0x560] sm:$0xff]
    %v456 = vld [vmem:[#allocation2 + $0x568] sm:$0xff]
    %v457 = vld [vmem:[#allocation2 + $0x570] sm:$0xff]
    %v458 = vld [vmem:[#allocation2 + $0x578] sm:$0xff]
    %v459 = vld [vmem:[#allocation2 + $0x580] sm:$0xff]
    %v460 = vld [vmem:[#allocation2 + $0x588] sm:$0xff]
    %v461 = vld [vmem:[#allocation2 + $0x590] sm:$0xff]
    %v462 = vld [vmem:[#allocation2 + $0x598] sm:$0xff]
    %v463 = vld [vmem:[#allocation2 + $0x5a0] sm:$0xff]
    %v464 = vld [vmem:[#allocation2 + $0x5a8] sm:$0xff]
    %v465 = vld [vmem:[#allocation2 + $0x5b0] sm:$0xff]
    %v466 = vld [vmem:[#allocation2 + $0x5b8] sm:$0xff]
    %v467 = vld [vmem:[#allocation2 + $0x5c0] sm:$0xff]
    %v468 = vld [vmem:[#allocation2 + $0x5c8] sm:$0xff]
    %v469 = vld [vmem:[#allocation2 + $0x5d0] sm:$0xff]
    %v470 = vld [vmem:[#allocation2 + $0x5d8] sm:$0xff]
    %v471 = vld [vmem:[#allocation2 + $0x5e0] sm:$0xff]
    %v472 = vld [vmem:[#allocation2 + $0x5e8] sm:$0xff]
    %v473 = vld [vmem:[#allocation2 + $0x5f0] sm:$0xff]
    %v474 = vld [vmem:[#allocation2 + $0x5f8] sm:$0xff]
    %v475 = vld [vmem:[#allocation4] sm:$0xff]
    %v476 = vld [vmem:[#allocation4 + $0x8] sm:$0xf]
    %v479 = vlaneseq
    %v480 = vshrl.u32 %v479, 7
    %v481 = vsub.s32 0, %v480
    %v482 = vrot.slane %v475, %v481
    %v483 = vlaneseq
    %v484 = vshrl.u32 %v483, 7
    %v485 = vsub.s32 1, %v484
    %v486 = vrot.slane %v475, %v485
    %v487 = vlaneseq
    %v488 = vshrl.u32 %v487, 7
    %v489 = vsub.s32 2, %v488
    %v490 = vrot.slane %v475, %v489
    %v491 = vlaneseq
    %v492 = vshrl.u32 %v491, 7
    %v493 = vsub.s32 3, %v492
    %v494 = vrot.slane %v475, %v493
    %v495 = vlaneseq
    %v496 = vshrl.u32 %v495, 7
    %v497 = vsub.s32 4, %v496
    %v498 = vrot.slane %v475, %v497
    %v499 = vlaneseq
    %v500 = vshrl.u32 %v499, 7
    %v501 = vsub.s32 5, %v500
    %v502 = vrot.slane %v475, %v501
    %v503 = vlaneseq
    %v504 = vshrl.u32 %v503, 7
    %v505 = vsub.s32 6, %v504
    %v506 = vrot.slane %v475, %v505
    %v507 = vlaneseq
    %v508 = vshrl.u32 %v507, 7
    %v509 = vsub.s32 7, %v508
    %v510 = vrot.slane %v475, %v509
    %v511 = vlaneseq
    %v512 = vshrl.u32 %v511, 7
    %v513 = vsub.s32 0, %v512
    %v514 = vrot.slane %v476, %v513
    %v515 = vlaneseq
    %v516 = vshrl.u32 %v515, 7
    %v517 = vsub.s32 1, %v516
    %v518 = vrot.slane %v476, %v517
    %v519 = vlaneseq
    %v520 = vshrl.u32 %v519, 7
    %v521 = vsub.s32 2, %v520
    %v522 = vrot.slane %v476, %v521
    %v523 = vlaneseq
    %v524 = vshrl.u32 %v523, 7
    %v525 = vsub.s32 3, %v524
    %v526 = vrot.slane %v476, %v525
    %539 = vmatprep.subr.mxu0 %v284
    %540 = vmatpush1.msra.mxu0 %v283
    %541 = vmatprep.subr.mxu0 %v296
    %542 = vmatpush1.msra.mxu0 %v295
    %543 = vmatprep.subr.mxu0 %v308
    %544 = vmatpush1.msra.mxu0 %v307
    %545 = vmatprep.subr.mxu0 %v320
    %546 = vmatpush1.msra.mxu0 %v319
    %547 = vmatprep.subr.mxu0 %v332
    %548 = vmatpush1.msra.mxu0 %v331
    %549 = vmatprep.subr.mxu0 %v344
    %550 = vmatpush1.msra.mxu0 %v343
    %551 = vmatprep.subr.mxu0 %v356
    %552 = vmatpush1.msra.mxu0 %v355
    %553 = vmatprep.subr.mxu0 %v368
    %554 = vmatpush1.msra.mxu0 %v367
    %555 = vmatprep.subr.mxu0 %v380
    %556 = vmatpush1.msra.mxu0 %v379
    %557 = vmatprep.subr.mxu0 %v392
    %558 = vmatpush1.msra.mxu0 %v391
    %559 = vmatprep.subr.mxu0 %v404
    %560 = vmatpush1.msra.mxu0 %v403
    %561 = vmatprep.subr.mxu0 %v416
    %562 = vmatpush1.msra.mxu0 %v415
    %563 = vmatprep.subr.mxu0 %v428
    %564 = vmatpush1.msra.mxu0 %v427
    %565 = vmatprep.subr.mxu0 %v440
    %566 = vmatpush1.msra.mxu0 %v439
    %567 = vmatprep.subr.mxu0 %v452
    %568 = vmatpush1.msra.mxu0 %v451
    %569 = vmatprep.subr.mxu0 %v464
    %570 = vmatpush1.msra.mxu0 %v463
    %571 = vmatprep.subr.mxu0 0.0
    %572 = vmatpush1.msra.mxu0 0.0
    %573 = vmatprep.subr.mxu0 0.0
    %574 = vmatpush1.msra.mxu0 0.0
    %575 = vmatprep.subr.mxu0 0.0
    %576 = vmatpush1.msra.mxu0 0.0
    %577 = vmatprep.subr.mxu0 0.0
    %578 = vmatpush1.msra.mxu0 0.0
    %579 = vmatprep.subr.mxu0 0.0
    %580 = vmatpush1.msra.mxu0 0.0
    %581 = vmatprep.subr.mxu0 0.0
    %582 = vmatpush1.msra.mxu0 0.0
    %583 = vmatprep.subr.mxu0 0.0
    %584 = vmatpush1.msra.mxu0 0.0
    %585 = vmatprep.subr.mxu0 0.0
    %586 = vmatpush1.msra.mxu0 0.0
    %587 = vmatprep.subr.mxu0 0.0
    %588 = vmatpush1.msra.mxu0 0.0
    %589 = vmatprep.subr.mxu0 0.0
    %590 = vmatpush1.msra.mxu0 0.0
    %591 = vmatprep.subr.mxu0 0.0
    %592 = vmatpush1.msra.mxu0 0.0
    %593 = vmatprep.subr.mxu0 0.0
    %594 = vmatpush1.msra.mxu0 0.0
    %595 = vmatprep.subr.mxu0 0.0
    %596 = vmatpush1.msra.mxu0 0.0
    %597 = vmatprep.subr.mxu0 0.0
    %598 = vmatpush1.msra.mxu0 0.0
    %599 = vmatprep.subr.mxu0 0.0
    %600 = vmatpush1.msra.mxu0 0.0
    %601 = vmatprep.subr.mxu0 0.0
    %602 = vmatpush1.msra.mxu0 0.0
    %603 = vmatprep.mubr.f32.mxu0 0.0
    %604 = vmatmul.mubr.f32.gmra.mrb[0].mxu0 %v281
    %v605 = vpop.f32.mrb[0].mxu0
    %v606 = vadd.f32 %v482, %v605
    %v607 = vpop.f32.mrb[0].mxu0
    %v608 = vadd.f32 %v486, %v607
    %609 = vmatprep.mubr.f32.mxu0 0.0
    %610 = vmatmul.mubr.f32.gmra.mrb[0].mxu0 %v282
    %v611 = vpop.f32.mrb[0].mxu0
    %v612 = vadd.f32 %v482, %v611
    %v613 = vpop.f32.mrb[0].mxu0
    %v614 = vadd.f32 %v486, %v613
    %615 = vdwg.mxu0
    %616 = vmatprep.subr.mxu0 %v286
    %617 = vmatpush1.msra.mxu0 %v285
    %618 = vmatprep.subr.mxu0 %v298
    %619 = vmatpush1.msra.mxu0 %v297
    %620 = vmatprep.subr.mxu0 %v310
    %621 = vmatpush1.msra.mxu0 %v309
    %622 = vmatprep.subr.mxu0 %v322
    %623 = vmatpush1.msra.mxu0 %v321
    %624 = vmatprep.subr.mxu0 %v334
    %625 = vmatpush1.msra.mxu0 %v333
    %626 = vmatprep.subr.mxu0 %v346
    %627 = vmatpush1.msra.mxu0 %v345
    %628 = vmatprep.subr.mxu0 %v358
    %629 = vmatpush1.msra.mxu0 %v357
    %630 = vmatprep.subr.mxu0 %v370
    %631 = vmatpush1.msra.mxu0 %v369
    %632 = vmatprep.subr.mxu0 %v382
    %633 = vmatpush1.msra.mxu0 %v381
    %634 = vmatprep.subr.mxu0 %v394
    %635 = vmatpush1.msra.mxu0 %v393
    %636 = vmatprep.subr.mxu0 %v406
    %637 = vmatpush1.msra.mxu0 %v405
    %638 = vmatprep.subr.mxu0 %v418
    %639 = vmatpush1.msra.mxu0 %v417
    %640 = vmatprep.subr.mxu0 %v430
    %641 = vmatpush1.msra.mxu0 %v429
    %642 = vmatprep.subr.mxu0 %v442
    %643 = vmatpush1.msra.mxu0 %v441
    %644 = vmatprep.subr.mxu0 %v454
    %645 = vmatpush1.msra.mxu0 %v453
    %646 = vmatprep.subr.mxu0 %v466
    %647 = vmatpush1.msra.mxu0 %v465
    %648 = vmatprep.subr.mxu0 0.0
    %649 = vmatpush1.msra.mxu0 0.0
    %650 = vmatprep.subr.mxu0 0.0
    %651 = vmatpush1.msra.mxu0 0.0
    %652 = vmatprep.subr.mxu0 0.0
    %653 = vmatpush1.msra.mxu0 0.0
    %654 = vmatprep.subr.mxu0 0.0
    %655 = vmatpush1.msra.mxu0 0.0
    %656 = vmatprep.subr.mxu0 0.0
    %657 = vmatpush1.msra.mxu0 0.0
    %658 = vmatprep.subr.mxu0 0.0
    %659 = vmatpush1.msra.mxu0 0.0
    %660 = vmatprep.subr.mxu0 0.0
    %661 = vmatpush1.msra.mxu0 0.0
    %662 = vmatprep.subr.mxu0 0.0
    %663 = vmatpush1.msra.mxu0 0.0
    %664 = vmatprep.subr.mxu0 0.0
    %665 = vmatpush1.msra.mxu0 0.0
    %666 = vmatprep.subr.mxu0 0.0
    %667 = vmatpush1.msra.mxu0 0.0
    %668 = vmatprep.subr.mxu0 0.0
    %669 = vmatpush1.msra.mxu0 0.0
    %670 = vmatprep.subr.mxu0 0.0
    %671 = vmatpush1.msra.mxu0 0.0
    %672 = vmatprep.subr.mxu0 0.0
    %673 = vmatpush1.msra.mxu0 0.0
    %674 = vmatprep.subr.mxu0 0.0
    %675 = vmatpush1.msra.mxu0 0.0
    %676 = vmatprep.subr.mxu0 0.0
    %677 = vmatpush1.msra.mxu0 0.0
    %678 = vmatprep.subr.mxu0 0.0
    %679 = vmatpush1.msra.mxu0 0.0
    %680 = vmatprep.mubr.f32.mxu0 0.0
    %681 = vmatmul.mubr.f32.gmra.mrb[0].mxu0 %v281
    %v682 = vpop.f32.mrb[0].mxu0
    %v683 = vadd.f32 %v490, %v682
    %v684 = vpop.f32.mrb[0].mxu0
    %v685 = vadd.f32 %v494, %v684
    %686 = vmatprep.mubr.f32.mxu0 0.0
    %687 = vmatmul.mubr.f32.gmra.mrb[0].mxu0 %v282
    %v688 = vpop.f32.mrb[0].mxu0
    %v689 = vadd.f32 %v490, %v688
    %v690 = vpop.f32.mrb[0].mxu0
    %v691 = vadd.f32 %v494, %v690
    %692 = vdwg.mxu0
    %693 = vmatprep.subr.mxu0 %v288
    %694 = vmatpush1.msra.mxu0 %v287
    %695 = vmatprep.subr.mxu0 %v300
    %696 = vmatpush1.msra.mxu0 %v299
    %697 = vmatprep.subr.mxu0 %v312
    %698 = vmatpush1.msra.mxu0 %v311
    %699 = vmatprep.subr.mxu0 %v324
    %700 = vmatpush1.msra.mxu0 %v323
    %701 = vmatprep.subr.mxu0 %v336
    %702 = vmatpush1.msra.mxu0 %v335
    %703 = vmatprep.subr.mxu0 %v348
    %704 = vmatpush1.msra.mxu0 %v347
    %705 = vmatprep.subr.mxu0 %v360
    %706 = vmatpush1.msra.mxu0 %v359
    %707 = vmatprep.subr.mxu0 %v372
    %708 = vmatpush1.msra.mxu0 %v371
    %709 = vmatprep.subr.mxu0 %v384
    %710 = vmatpush1.msra.mxu0 %v383
    %711 = vmatprep.subr.mxu0 %v396
    %712 = vmatpush1.msra.mxu0 %v395
    %713 = vmatprep.subr.mxu0 %v408
    %714 = vmatpush1.msra.mxu0 %v407
    %715 = vmatprep.subr.mxu0 %v420
    %716 = vmatpush1.msra.mxu0 %v419
    %717 = vmatprep.subr.mxu0 %v432
    %718 = vmatpush1.msra.mxu0 %v431
    %719 = vmatprep.subr.mxu0 %v444
    %720 = vmatpush1.msra.mxu0 %v443
    %721 = vmatprep.subr.mxu0 %v456
    %722 = vmatpush1.msra.mxu0 %v455
    %723 = vmatprep.subr.mxu0 %v468
    %724 = vmatpush1.msra.mxu0 %v467
    %725 = vmatprep.subr.mxu0 0.0
    %726 = vmatpush1.msra.mxu0 0.0
    %727 = vmatprep.subr.mxu0 0.0
    %728 = vmatpush1.msra.mxu0 0.0
    %729 = vmatprep.subr.mxu0 0.0
    %730 = vmatpush1.msra.mxu0 0.0
    %731 = vmatprep.subr.mxu0 0.0
    %732 = vmatpush1.msra.mxu0 0.0
    %733 = vmatprep.subr.mxu0 0.0
    %734 = vmatpush1.msra.mxu0 0.0
    %735 = vmatprep.subr.mxu0 0.0
    %736 = vmatpush1.msra.mxu0 0.0
    %737 = vmatprep.subr.mxu0 0.0
    %738 = vmatpush1.msra.mxu0 0.0
    %739 = vmatprep.subr.mxu0 0.0
    %740 = vmatpush1.msra.mxu0 0.0
    %741 = vmatprep.subr.mxu0 0.0
    %742 = vmatpush1.msra.mxu0 0.0
    %743 = vmatprep.subr.mxu0 0.0
    %744 = vmatpush1.msra.mxu0 0.0
    %745 = vmatprep.subr.mxu0 0.0
    %746 = vmatpush1.msra.mxu0 0.0
    %747 = vmatprep.subr.mxu0 0.0
    %748 = vmatpush1.msra.mxu0 0.0
    %749 = vmatprep.subr.mxu0 0.0
    %750 = vmatpush1.msra.mxu0 0.0
    %751 = vmatprep.subr.mxu0 0.0
    %752 = vmatpush1.msra.mxu0 0.0
    %753 = vmatprep.subr.mxu0 0.0
    %754 = vmatpush1.msra.mxu0 0.0
    %755 = vmatprep.subr.mxu0 0.0
    %756 = vmatpush1.msra.mxu0 0.0
    %757 = vmatprep.mubr.f32.mxu0 0.0
    %758 = vmatmul.mubr.f32.gmra.mrb[0].mxu0 %v281
    %v759 = vpop.f32.mrb[0].mxu0
    %v760 = vadd.f32 %v498, %v759
    %v761 = vpop.f32.mrb[0].mxu0
    %v762 = vadd.f32 %v502, %v761
    %763 = vmatprep.mubr.f32.mxu0 0.0
    %764 = vmatmul.mubr.f32.gmra.mrb[0].mxu0 %v282
    %v765 = vpop.f32.mrb[0].mxu0
    %v766 = vadd.f32 %v498, %v765
    %v767 = vpop.f32.mrb[0].mxu0
    %v768 = vadd.f32 %v502, %v767
    %769 = vdwg.mxu0
    %770 = vmatprep.subr.mxu0 %v290
    %771 = vmatpush1.msra.mxu0 %v289
    %772 = vmatprep.subr.mxu0 %v302
    %773 = vmatpush1.msra.mxu0 %v301
    %774 = vmatprep.subr.mxu0 %v314
    %775 = vmatpush1.msra.mxu0 %v313
    %776 = vmatprep.subr.mxu0 %v326
    %777 = vmatpush1.msra.mxu0 %v325
    %778 = vmatprep.subr.mxu0 %v338
    %779 = vmatpush1.msra.mxu0 %v337
    %780 = vmatprep.subr.mxu0 %v350
    %781 = vmatpush1.msra.mxu0 %v349
    %782 = vmatprep.subr.mxu0 %v362
    %783 = vmatpush1.msra.mxu0 %v361
    %784 = vmatprep.subr.mxu0 %v374
    %785 = vmatpush1.msra.mxu0 %v373
    %786 = vmatprep.subr.mxu0 %v386
    %787 = vmatpush1.msra.mxu0 %v385
    %788 = vmatprep.subr.mxu0 %v398
    %789 = vmatpush1.msra.mxu0 %v397
    %790 = vmatprep.subr.mxu0 %v410
    %791 = vmatpush1.msra.mxu0 %v409
    %792 = vmatprep.subr.mxu0 %v422
    %793 = vmatpush1.msra.mxu0 %v421
    %794 = vmatprep.subr.mxu0 %v434
    %795 = vmatpush1.msra.mxu0 %v433
    %796 = vmatprep.subr.mxu0 %v446
    %797 = vmatpush1.msra.mxu0 %v445
    %798 = vmatprep.subr.mxu0 %v458
    %799 = vmatpush1.msra.mxu0 %v457
    %800 = vmatprep.subr.mxu0 %v470
    %801 = vmatpush1.msra.mxu0 %v469
    %802 = vmatprep.subr.mxu0 0.0
    %803 = vmatpush1.msra.mxu0 0.0
    %804 = vmatprep.subr.mxu0 0.0
    %805 = vmatpush1.msra.mxu0 0.0
    %806 = vmatprep.subr.mxu0 0.0
    %807 = vmatpush1.msra.mxu0 0.0
    %808 = vmatprep.subr.mxu0 0.0
    %809 = vmatpush1.msra.mxu0 0.0
    %810 = vmatprep.subr.mxu0 0.0
    %811 = vmatpush1.msra.mxu0 0.0
    %812 = vmatprep.subr.mxu0 0.0
    %813 = vmatpush1.msra.mxu0 0.0
    %814 = vmatprep.subr.mxu0 0.0
    %815 = vmatpush1.msra.mxu0 0.0
    %816 = vmatprep.subr.mxu0 0.0
    %817 = vmatpush1.msra.mxu0 0.0
    %818 = vmatprep.subr.mxu0 0.0
    %819 = vmatpush1.msra.mxu0 0.0
    %820 = vmatprep.subr.mxu0 0.0
    %821 = vmatpush1.msra.mxu0 0.0
    %822 = vmatprep.subr.mxu0 0.0
    %823 = vmatpush1.msra.mxu0 0.0
    %824 = vmatprep.subr.mxu0 0.0
    %825 = vmatpush1.msra.mxu0 0.0
    %826 = vmatprep.subr.mxu0 0.0
    %827 = vmatpush1.msra.mxu0 0.0
    %828 = vmatprep.subr.mxu0 0.0
    %829 = vmatpush1.msra.mxu0 0.0
    %830 = vmatprep.subr.mxu0 0.0
    %831 = vmatpush1.msra.mxu0 0.0
    %832 = vmatprep.subr.mxu0 0.0
    %833 = vmatpush1.msra.mxu0 0.0
    %834 = vmatprep.mubr.f32.mxu0 0.0
    %835 = vmatmul.mubr.f32.gmra.mrb[0].mxu0 %v281
    %v836 = vpop.f32.mrb[0].mxu0
    %v837 = vadd.f32 %v506, %v836
    %v838 = vpop.f32.mrb[0].mxu0
    %v839 = vadd.f32 %v510, %v838
    %840 = vmatprep.mubr.f32.mxu0 0.0
    %841 = vmatmul.mubr.f32.gmra.mrb[0].mxu0 %v282
    %v842 = vpop.f32.mrb[0].mxu0
    %v843 = vadd.f32 %v506, %v842
    %v844 = vpop.f32.mrb[0].mxu0
    %v845 = vadd.f32 %v510, %v844
    %846 = vdwg.mxu0
    %847 = vmatprep.subr.mxu0 %v292
    %848 = vmatpush1.msra.mxu0 %v291
    %849 = vmatprep.subr.mxu0 %v304
    %850 = vmatpush1.msra.mxu0 %v303
    %851 = vmatprep.subr.mxu0 %v316
    %852 = vmatpush1.msra.mxu0 %v315
    %853 = vmatprep.subr.mxu0 %v328
    %854 = vmatpush1.msra.mxu0 %v327
    %855 = vmatprep.subr.mxu0 %v340
    %856 = vmatpush1.msra.mxu0 %v339
    %857 = vmatprep.subr.mxu0 %v352
    %858 = vmatpush1.msra.mxu0 %v351
    %859 = vmatprep.subr.mxu0 %v364
    %860 = vmatpush1.msra.mxu0 %v363
    %861 = vmatprep.subr.mxu0 %v376
    %862 = vmatpush1.msra.mxu0 %v375
    %863 = vmatprep.subr.mxu0 %v388
    %864 = vmatpush1.msra.mxu0 %v387
    %865 = vmatprep.subr.mxu0 %v400
    %866 = vmatpush1.msra.mxu0 %v399
    %867 = vmatprep.subr.mxu0 %v412
    %868 = vmatpush1.msra.mxu0 %v411
    %869 = vmatprep.subr.mxu0 %v424
    %870 = vmatpush1.msra.mxu0 %v423
    %871 = vmatprep.subr.mxu0 %v436
    %872 = vmatpush1.msra.mxu0 %v435
    %873 = vmatprep.subr.mxu0 %v448
    %874 = vmatpush1.msra.mxu0 %v447
    %875 = vmatprep.subr.mxu0 %v460
    %876 = vmatpush1.msra.mxu0 %v459
    %877 = vmatprep.subr.mxu0 %v472
    %878 = vmatpush1.msra.mxu0 %v471
    %879 = vmatprep.subr.mxu0 0.0
    %880 = vmatpush1.msra.mxu0 0.0
    %881 = vmatprep.subr.mxu0 0.0
    %882 = vmatpush1.msra.mxu0 0.0
    %883 = vmatprep.subr.mxu0 0.0
    %884 = vmatpush1.msra.mxu0 0.0
    %885 = vmatprep.subr.mxu0 0.0
    %886 = vmatpush1.msra.mxu0 0.0
    %887 = vmatprep.subr.mxu0 0.0
    %888 = vmatpush1.msra.mxu0 0.0
    %889 = vmatprep.subr.mxu0 0.0
    %890 = vmatpush1.msra.mxu0 0.0
    %891 = vmatprep.subr.mxu0 0.0
    %892 = vmatpush1.msra.mxu0 0.0
    %893 = vmatprep.subr.mxu0 0.0
    %894 = vmatpush1.msra.mxu0 0.0
    %895 = vmatprep.subr.mxu0 0.0
    %896 = vmatpush1.msra.mxu0 0.0
    %897 = vmatprep.subr.mxu0 0.0
    %898 = vmatpush1.msra.mxu0 0.0
    %899 = vmatprep.subr.mxu0 0.0
    %900 = vmatpush1.msra.mxu0 0.0
    %901 = vmatprep.subr.mxu0 0.0
    %902 = vmatpush1.msra.mxu0 0.0
    %903 = vmatprep.subr.mxu0 0.0
    %904 = vmatpush1.msra.mxu0 0.0
    %905 = vmatprep.subr.mxu0 0.0
    %906 = vmatpush1.msra.mxu0 0.0
    %907 = vmatprep.subr.mxu0 0.0
    %908 = vmatpush1.msra.mxu0 0.0
    %909 = vmatprep.subr.mxu0 0.0
    %910 = vmatpush1.msra.mxu0 0.0
    %911 = vmatprep.mubr.f32.mxu0 0.0
    %912 = vmatmul.mubr.f32.gmra.mrb[0].mxu0 %v281
    %v913 = vpop.f32.mrb[0].mxu0
    %v914 = vadd.f32 %v514, %v913
    %v915 = vpop.f32.mrb[0].mxu0
    %v916 = vadd.f32 %v518, %v915
    %917 = vmatprep.mubr.f32.mxu0 0.0
    %918 = vmatmul.mubr.f32.gmra.mrb[0].mxu0 %v282
    %v919 = vpop.f32.mrb[0].mxu0
    %v920 = vadd.f32 %v514, %v919
    %v921 = vpop.f32.mrb[0].mxu0
    %v922 = vadd.f32 %v518, %v921
    %923 = vdwg.mxu0
    %924 = vmatprep.subr.mxu0 %v294
    %925 = vmatpush1.msra.mxu0 %v293
    %926 = vmatprep.subr.mxu0 %v306
    %927 = vmatpush1.msra.mxu0 %v305
    %928 = vmatprep.subr.mxu0 %v318
    %929 = vmatpush1.msra.mxu0 %v317
    %930 = vmatprep.subr.mxu0 %v330
    %931 = vmatpush1.msra.mxu0 %v329
    %932 = vmatprep.subr.mxu0 %v342
    %933 = vmatpush1.msra.mxu0 %v341
    %934 = vmatprep.subr.mxu0 %v354
    %935 = vmatpush1.msra.mxu0 %v353
    %936 = vmatprep.subr.mxu0 %v366
    %937 = vmatpush1.msra.mxu0 %v365
    %938 = vmatprep.subr.mxu0 %v378
    %939 = vmatpush1.msra.mxu0 %v377
    %940 = vmatprep.subr.mxu0 %v390
    %941 = vmatpush1.msra.mxu0 %v389
    %942 = vmatprep.subr.mxu0 %v402
    %943 = vmatpush1.msra.mxu0 %v401
    %944 = vmatprep.subr.mxu0 %v414
    %945 = vmatpush1.msra.mxu0 %v413
    %946 = vmatprep.subr.mxu0 %v426
    %947 = vmatpush1.msra.mxu0 %v425
    %948 = vmatprep.subr.mxu0 %v438
    %949 = vmatpush1.msra.mxu0 %v437
    %950 = vmatprep.subr.mxu0 %v450
    %951 = vmatpush1.msra.mxu0 %v449
    %952 = vmatprep.subr.mxu0 %v462
    %953 = vmatpush1.msra.mxu0 %v461
    %954 = vmatprep.subr.mxu0 %v474
    %955 = vmatpush1.msra.mxu0 %v473
    %956 = vmatprep.subr.mxu0 0.0
    %957 = vmatpush1.msra.mxu0 0.0
    %958 = vmatprep.subr.mxu0 0.0
    %959 = vmatpush1.msra.mxu0 0.0
    %960 = vmatprep.subr.mxu0 0.0
    %961 = vmatpush1.msra.mxu0 0.0
    %962 = vmatprep.subr.mxu0 0.0
    %963 = vmatpush1.msra.mxu0 0.0
    %964 = vmatprep.subr.mxu0 0.0
    %965 = vmatpush1.msra.mxu0 0.0
    %966 = vmatprep.subr.mxu0 0.0
    %967 = vmatpush1.msra.mxu0 0.0
    %968 = vmatprep.subr.mxu0 0.0
    %969 = vmatpush1.msra.mxu0 0.0
    %970 = vmatprep.subr.mxu0 0.0
    %971 = vmatpush1.msra.mxu0 0.0
    %972 = vmatprep.subr.mxu0 0.0
    %973 = vmatpush1.msra.mxu0 0.0
    %974 = vmatprep.subr.mxu0 0.0
    %975 = vmatpush1.msra.mxu0 0.0
    %976 = vmatprep.subr.mxu0 0.0
    %977 = vmatpush1.msra.mxu0 0.0
    %978 = vmatprep.subr.mxu0 0.0
    %979 = vmatpush1.msra.mxu0 0.0
    %980 = vmatprep.subr.mxu0 0.0
    %981 = vmatpush1.msra.mxu0 0.0
    %982 = vmatprep.subr.mxu0 0.0
    %983 = vmatpush1.msra.mxu0 0.0
    %984 = vmatprep.subr.mxu0 0.0
    %985 = vmatpush1.msra.mxu0 0.0
    %986 = vmatprep.subr.mxu0 0.0
    %987 = vmatpush1.msra.mxu0 0.0
    %988 = vmatprep.mubr.f32.mxu0 0.0
    %989 = vmatmul.mubr.f32.gmra.mrb[0].mxu0 %v281
    %v990 = vpop.f32.mrb[0].mxu0
    %v991 = vadd.f32 %v522, %v990
    %v992 = vpop.f32.mrb[0].mxu0
    %v993 = vadd.f32 %v526, %v992
    %994 = vmatprep.mubr.f32.mxu0 0.0
    %995 = vmatmul.mubr.f32.gmra.mrb[0].mxu0 %v282
    %v996 = vpop.f32.mrb[0].mxu0
    %v997 = vadd.f32 %v522, %v996
    %v998 = vpop.f32.mrb[0].mxu0
    %v999 = vadd.f32 %v526, %v998
    %1000 = vdwg.mxu0
    %1001 = vmatprep.subr.mxu0 0.0
    %1002 = vmatpush1.xpose.msra.mxu0 %v760
    %1003 = vmatprep.subr.mxu0 0.0
    %1004 = vmatpush1.xpose.msra.mxu0 0.0
    %1005 = vmatprep.subr.mxu0 0.0
    %1006 = vmatpush1.xpose.msra.mxu0 0.0
    %1007 = vmatprep.subr.mxu0 0.0
    %1008 = vmatpush1.xpose.msra.mxu0 0.0
    %1009 = vmatprep.subr.mxu0 0.0
    %1010 = vmatpush1.xpose.msra.mxu0 0.0
    %1011 = vmatprep.subr.mxu0 0.0
    %1012 = vmatpush1.xpose.msra.mxu0 0.0
    %1013 = vmatprep.subr.mxu0 0.0
    %1014 = vmatpush1.xpose.msra.mxu0 0.0
    %1015 = vmatprep.subr.mxu0 0.0
    %1016 = vmatpush1.xpose.msra.mxu0 0.0
    %1017 = vmatprep.subr.mxu0 0.0
    %1018 = vmatpush1.xpose.msra.mxu0 0.0
    %1019 = vmatprep.subr.mxu0 0.0
    %1020 = vmatpush1.xpose.msra.mxu0 0.0
    %1021 = vmatprep.subr.mxu0 0.0
    %1022 = vmatpush1.xpose.msra.mxu0 0.0
    %1023 = vmatprep.subr.mxu0 0.0
    %1024 = vmatpush1.xpose.msra.mxu0 0.0
    %1025 = vmatprep.subr.mxu0 0.0
    %1026 = vmatpush1.xpose.msra.mxu0 0.0
    %1027 = vmatprep.subr.mxu0 0.0
    %1028 = vmatpush1.xpose.msra.mxu0 0.0
    %1029 = vmatprep.subr.mxu0 0.0
    %1030 = vmatpush1.xpose.msra.mxu0 0.0
    %1031 = vmatprep.subr.mxu0 0.0
    %1032 = vmatpush1.xpose.msra.mxu0 0.0
    %1033 = vmatprep.subr.mxu0 0.0
    %1034 = vmatpush1.xpose.msra.mxu0 0.0
    %1035 = vmatprep.subr.mxu0 0.0
    %1036 = vmatpush1.xpose.msra.mxu0 0.0
    %1037 = vmatprep.subr.mxu0 0.0
    %1038 = vmatpush1.xpose.msra.mxu0 0.0
    %1039 = vmatprep.subr.mxu0 0.0
    %1040 = vmatpush1.xpose.msra.mxu0 0.0
    %1041 = vmatprep.subr.mxu0 0.0
    %1042 = vmatpush1.xpose.msra.mxu0 0.0
    %1043 = vmatprep.subr.mxu0 0.0
    %1044 = vmatpush1.xpose.msra.mxu0 0.0
    %1045 = vmatprep.subr.mxu0 0.0
    %1046 = vmatpush1.xpose.msra.mxu0 0.0
    %1047 = vmatprep.subr.mxu0 0.0
    %1048 = vmatpush1.xpose.msra.mxu0 0.0
    %1049 = vmatprep.subr.mxu0 0.0
    %1050 = vmatpush1.xpose.msra.mxu0 0.0
    %1051 = vmatprep.subr.mxu0 0.0
    %1052 = vmatpush1.xpose.msra.mxu0 0.0
    %1053 = vmatprep.subr.mxu0 0.0
    %1054 = vmatpush1.xpose.msra.mxu0 0.0
    %1055 = vmatprep.subr.mxu0 0.0
    %1056 = vmatpush1.xpose.msra.mxu0 0.0
    %1057 = vmatprep.subr.mxu0 0.0
    %1058 = vmatpush1.xpose.msra.mxu0 0.0
    %1059 = vmatprep.subr.mxu0 0.0
    %1060 = vmatpush1.xpose.msra.mxu0 0.0
    %1061 = vmatprep.subr.mxu0 0.0
    %1062 = vmatpush1.xpose.msra.mxu0 0.0
    %1063 = vmatprep.subr.mxu0 0.0
    %1064 = vmatpush1.xpose.msra.mxu0 0.0
    %1065 = vmatprep.mubr.f32.mxu0 0.0
    %1066 = vmatmul.mubr.f32.gmra.mrb[0].mxu0 %v606
    %v1067 = vpop.f32.mrb[0].mxu0
    %v1068 = vadd.f32 0.0, %v1067
    %v1069 = vpop.f32.mrb[0].mxu0
    %1070 = vdwg.mxu0
    %v1071 = vmul.f32 %v1068, 0.35355338
    %vm1072 = vcmask 64512
    %v1073 = vsel %vm1072, %v1071, -inf
    %1074 = vmax.xlane.f32.xlu0 %v1073
    %v1075 = vpop.xlane.xlu0 %1074
    %v1076 = vsub.f32 %v1071, %v1075
    %v1077 = vmul.f32 %v1076, 1.442695
    %v1078 = vpow.pop %v1077
    %v1079 = vsel %vm1072, %v1078, 0.0
    %1080 = vadd.xlane.f32.xlu0 %v1079
    %v1081 = vpop.xlane.xlu0 %1080
    %v1082 = vrcp.pop %v1081
    %v1083 = vmul.f32 %v1078, %v1082
    %v1085 = vsel %vm1072, %v1083, 0
    %1087 = vmatprep.subr.mxu0 0.0
    %1088 = vmatpush1.msra.mxu0 %v914
    %1089 = vmatprep.subr.mxu0 0.0
    %1090 = vmatpush1.msra.mxu0 0.0
    %1091 = vmatprep.subr.mxu0 0.0
    %1092 = vmatpush1.msra.mxu0 0.0
    %1093 = vmatprep.subr.mxu0 0.0
    %1094 = vmatpush1.msra.mxu0 0.0
    %1095 = vmatprep.subr.mxu0 0.0
    %1096 = vmatpush1.msra.mxu0 0.0
    %1097 = vmatprep.subr.mxu0 0.0
    %1098 = vmatpush1.msra.mxu0 0.0
    %1099 = vmatprep.subr.mxu0 0.0
    %1100 = vmatpush1.msra.mxu0 0.0
    %1101 = vmatprep.subr.mxu0 0.0
    %1102 = vmatpush1.msra.mxu0 0.0
    %1103 = vmatprep.subr.mxu0 0.0
    %1104 = vmatpush1.msra.mxu0 0.0
    %1105 = vmatprep.subr.mxu0 0.0
    %1106 = vmatpush1.msra.mxu0 0.0
    %1107 = vmatprep.subr.mxu0 0.0
    %1108 = vmatpush1.msra.mxu0 0.0
    %1109 = vmatprep.subr.mxu0 0.0
    %1110 = vmatpush1.msra.mxu0 0.0
    %1111 = vmatprep.subr.mxu0 0.0
    %1112 = vmatpush1.msra.mxu0 0.0
    %1113 = vmatprep.subr.mxu0 0.0
    %1114 = vmatpush1.msra.mxu0 0.0
    %1115 = vmatprep.subr.mxu0 0.0
    %1116 = vmatpush1.msra.mxu0 0.0
    %1117 = vmatprep.subr.mxu0 0.0
    %1118 = vmatpush1.msra.mxu0 0.0
    %1119 = vmatprep.subr.mxu0 0.0
    %1120 = vmatpush1.msra.mxu0 0.0
    %1121 = vmatprep.subr.mxu0 0.0
    %1122 = vmatpush1.msra.mxu0 0.0
    %1123 = vmatprep.subr.mxu0 0.0
    %1124 = vmatpush1.msra.mxu0 0.0
    %1125 = vmatprep.subr.mxu0 0.0
    %1126 = vmatpush1.msra.mxu0 0.0
    %1127 = vmatprep.subr.mxu0 0.0
    %1128 = vmatpush1.msra.mxu0 0.0
    %1129 = vmatprep.subr.mxu0 0.0
    %1130 = vmatpush1.msra.mxu0 0.0
    %1131 = vmatprep.subr.mxu0 0.0
    %1132 = vmatpush1.msra.mxu0 0.0
    %1133 = vmatprep.subr.mxu0 0.0
    %1134 = vmatpush1.msra.mxu0 0.0
    %1135 = vmatprep.subr.mxu0 0.0
    %1136 = vmatpush1.msra.mxu0 0.0
    %1137 = vmatprep.subr.mxu0 0.0
    %1138 = vmatpush1.msra.mxu0 0.0
    %1139 = vmatprep.subr.mxu0 0.0
    %1140 = vmatpush1.msra.mxu0 0.0
    %1141 = vmatprep.subr.mxu0 0.0
    %1142 = vmatpush1.msra.mxu0 0.0
    %1143 = vmatprep.subr.mxu0 0.0
    %1144 = vmatpush1.msra.mxu0 0.0
    %1145 = vmatprep.subr.mxu0 0.0
    %1146 = vmatpush1.msra.mxu0 0.0
    %1147 = vmatprep.subr.mxu0 0.0
    %1148 = vmatpush1.msra.mxu0 0.0
    %1149 = vmatprep.subr.mxu0 0.0
    %1150 = vmatpush1.msra.mxu0 0.0
    %1151 = vmatprep.mubr.f32.mxu0 0.0
    %1152 = vmatmul.mubr.f32.gmra.mrb[0].mxu0 %v1085
    %v1153 = vpop.f32.mrb[0].mxu0
    %v1154 = vadd.f32 0.0, %v1153
    %v1155 = vpop.f32.mrb[0].mxu0
    %1156 = vdwg.mxu0
    %v1157 = vld [vmem:[#allocation6] sm:$0xff]
    %v1158 = vld [vmem:[#allocation6 + $0x8] sm:$0xff]
    %v1159 = vld [vmem:[#allocation6 + $0x10] sm:$0xff]
    %v1160 = vld [vmem:[#allocation6 + $0x18] sm:$0xff]
    %v1161 = vld [vmem:[#allocation6 + $0x20] sm:$0xff]
    %v1162 = vld [vmem:[#allocation6 + $0x28] sm:$0xff]
    %v1163 = vld [vmem:[#allocation6 + $0x30] sm:$0xff]
    %v1164 = vld [vmem:[#allocation6 + $0x38] sm:$0xff]
    %v1165 = vld [vmem:[#allocation6 + $0x40] sm:$0xff]
    %v1166 = vld [vmem:[#allocation6 + $0x48] sm:$0xff]
    %v1167 = vld [vmem:[#allocation6 + $0x50] sm:$0xff]
    %v1168 = vld [vmem:[#allocation6 + $0x58] sm:$0xff]
    %v1169 = vld [vmem:[#allocation6 + $0x60] sm:$0xff]
    %v1170 = vld [vmem:[#allocation6 + $0x68] sm:$0xff]
    %v1171 = vld [vmem:[#allocation6 + $0x70] sm:$0xff]
    %v1172 = vld [vmem:[#allocation6 + $0x78] sm:$0xff]
    %1173 = vmatprep.subr.mxu0 0.0
    %1174 = vmatpush1.xpose.msra.mxu0 %v762
    %1175 = vmatprep.subr.mxu0 0.0
    %1176 = vmatpush1.xpose.msra.mxu0 0.0
    %1177 = vmatprep.subr.mxu0 0.0
    %1178 = vmatpush1.xpose.msra.mxu0 0.0
    %1179 = vmatprep.subr.mxu0 0.0
    %1180 = vmatpush1.xpose.msra.mxu0 0.0
    %1181 = vmatprep.subr.mxu0 0.0
    %1182 = vmatpush1.xpose.msra.mxu0 0.0
    %1183 = vmatprep.subr.mxu0 0.0
    %1184 = vmatpush1.xpose.msra.mxu0 0.0
    %1185 = vmatprep.subr.mxu0 0.0
    %1186 = vmatpush1.xpose.msra.mxu0 0.0
    %1187 = vmatprep.subr.mxu0 0.0
    %1188 = vmatpush1.xpose.msra.mxu0 0.0
    %1189 = vmatprep.subr.mxu0 0.0
    %1190 = vmatpush1.xpose.msra.mxu0 0.0
    %1191 = vmatprep.subr.mxu0 0.0
    %1192 = vmatpush1.xpose.msra.mxu0 0.0
    %1193 = vmatprep.subr.mxu0 0.0
    %1194 = vmatpush1.xpose.msra.mxu0 0.0
    %1195 = vmatprep.subr.mxu0 0.0
    %1196 = vmatpush1.xpose.msra.mxu0 0.0
    %1197 = vmatprep.subr.mxu0 0.0
    %1198 = vmatpush1.xpose.msra.mxu0 0.0
    %1199 = vmatprep.subr.mxu0 0.0
    %1200 = vmatpush1.xpose.msra.mxu0 0.0
    %1201 = vmatprep.subr.mxu0 0.0
    %1202 = vmatpush1.xpose.msra.mxu0 0.0
    %1203 = vmatprep.subr.mxu0 0.0
    %1204 = vmatpush1.xpose.msra.mxu0 0.0
    %1205 = vmatprep.subr.mxu0 0.0
    %1206 = vmatpush1.xpose.msra.mxu0 0.0
    %1207 = vmatprep.subr.mxu0 0.0
    %1208 = vmatpush1.xpose.msra.mxu0 0.0
    %1209 = vmatprep.subr.mxu0 0.0
    %1210 = vmatpush1.xpose.msra.mxu0 0.0
    %1211 = vmatprep.subr.mxu0 0.0
    %1212 = vmatpush1.xpose.msra.mxu0 0.0
    %1213 = vmatprep.subr.mxu0 0.0
    %1214 = vmatpush1.xpose.msra.mxu0 0.0
    %1215 = vmatprep.subr.mxu0 0.0
    %1216 = vmatpush1.xpose.msra.mxu0 0.0
    %1217 = vmatprep.subr.mxu0 0.0
    %1218 = vmatpush1.xpose.msra.mxu0 0.0
    %1219 = vmatprep.subr.mxu0 0.0
    %1220 = vmatpush1.xpose.msra.mxu0 0.0
    %1221 = vmatprep.subr.mxu0 0.0
    %1222 = vmatpush1.xpose.msra.mxu0 0.0
    %1223 = vmatprep.subr.mxu0 0.0
    %1224 = vmatpush1.xpose.msra.mxu0 0.0
    %1225 = vmatprep.subr.mxu0 0.0
    %1226 = vmatpush1.xpose.msra.mxu0 0.0
    %1227 = vmatprep.subr.mxu0 0.0
    %1228 = vmatpush1.xpose.msra.mxu0 0.0
    %1229 = vmatprep.subr.mxu0 0.0
    %1230 = vmatpush1.xpose.msra.mxu0 0.0
    %1231 = vmatprep.subr.mxu0 0.0
    %1232 = vmatpush1.xpose.msra.mxu0 0.0
    %1233 = vmatprep.subr.mxu0 0.0
    %1234 = vmatpush1.xpose.msra.mxu0 0.0
    %1235 = vmatprep.subr.mxu0 0.0
    %1236 = vmatpush1.xpose.msra.mxu0 0.0
    %1237 = vmatprep.mubr.f32.mxu0 0.0
    %1238 = vmatmul.mubr.f32.gmra.mrb[0].mxu0 %v608
    %v1239 = vpop.f32.mrb[0].mxu0
    %v1240 = vadd.f32 0.0, %v1239
    %v1241 = vpop.f32.mrb[0].mxu0
    %1242 = vdwg.mxu0
    %v1243 = vmul.f32 %v1240, 0.35355338
    %v1244 = vsel %vm1072, %v1243, -inf
    %1245 = vmax.xlane.f32.xlu0 %v1244
    %v1246 = vpop.xlane.xlu0 %1245
    %v1247 = vsub.f32 %v1243, %v1246
    %v1248 = vmul.f32 %v1247, 1.442695
    %v1249 = vpow.pop %v1248
    %v1250 = vsel %vm1072, %v1249, 0.0
    %1251 = vadd.xlane.f32.xlu0 %v1250
    %v1252 = vpop.xlane.xlu0 %1251
    %v1253 = vrcp.pop %v1252
    %v1254 = vmul.f32 %v1249, %v1253
    %v1256 = vsel %vm1072, %v1254, 0
    %1258 = vmatprep.subr.mxu0 0.0
    %1259 = vmatpush1.msra.mxu0 %v916
    %1260 = vmatprep.subr.mxu0 0.0
    %1261 = vmatpush1.msra.mxu0 0.0
    %1262 = vmatprep.subr.mxu0 0.0
    %1263 = vmatpush1.msra.mxu0 0.0
    %1264 = vmatprep.subr.mxu0 0.0
    %1265 = vmatpush1.msra.mxu0 0.0
    %1266 = vmatprep.subr.mxu0 0.0
    %1267 = vmatpush1.msra.mxu0 0.0
    %1268 = vmatprep.subr.mxu0 0.0
    %1269 = vmatpush1.msra.mxu0 0.0
    %1270 = vmatprep.subr.mxu0 0.0
    %1271 = vmatpush1.msra.mxu0 0.0
    %1272 = vmatprep.subr.mxu0 0.0
    %1273 = vmatpush1.msra.mxu0 0.0
    %1274 = vmatprep.subr.mxu0 0.0
    %1275 = vmatpush1.msra.mxu0 0.0
    %1276 = vmatprep.subr.mxu0 0.0
    %1277 = vmatpush1.msra.mxu0 0.0
    %1278 = vmatprep.subr.mxu0 0.0
    %1279 = vmatpush1.msra.mxu0 0.0
    %1280 = vmatprep.subr.mxu0 0.0
    %1281 = vmatpush1.msra.mxu0 0.0
    %1282 = vmatprep.subr.mxu0 0.0
    %1283 = vmatpush1.msra.mxu0 0.0
    %1284 = vmatprep.subr.mxu0 0.0
    %1285 = vmatpush1.msra.mxu0 0.0
    %1286 = vmatprep.subr.mxu0 0.0
    %1287 = vmatpush1.msra.mxu0 0.0
    %1288 = vmatprep.subr.mxu0 0.0
    %1289 = vmatpush1.msra.mxu0 0.0
    %1290 = vmatprep.subr.mxu0 0.0
    %1291 = vmatpush1.msra.mxu0 0.0
    %1292 = vmatprep.subr.mxu0 0.0
    %1293 = vmatpush1.msra.mxu0 0.0
    %1294 = vmatprep.subr.mxu0 0.0
    %1295 = vmatpush1.msra.mxu0 0.0
    %1296 = vmatprep.subr.mxu0 0.0
    %1297 = vmatpush1.msra.mxu0 0.0
    %1298 = vmatprep.subr.mxu0 0.0
    %1299 = vmatpush1.msra.mxu0 0.0
    %1300 = vmatprep.subr.mxu0 0.0
    %1301 = vmatpush1.msra.mxu0 0.0
    %1302 = vmatprep.subr.mxu0 0.0
    %1303 = vmatpush1.msra.mxu0 0.0
    %1304 = vmatprep.subr.mxu0 0.0
    %1305 = vmatpush1.msra.mxu0 0.0
    %1306 = vmatprep.subr.mxu0 0.0
    %1307 = vmatpush1.msra.mxu0 0.0
    %1308 = vmatprep.subr.mxu0 0.0
    %1309 = vmatpush1.msra.mxu0 0.0
    %1310 = vmatprep.subr.mxu0 0.0
    %1311 = vmatpush1.msra.mxu0 0.0
    %1312 = vmatprep.subr.mxu0 0.0
    %1313 = vmatpush1.msra.mxu0 0.0
    %1314 = vmatprep.subr.mxu0 0.0
    %1315 = vmatpush1.msra.mxu0 0.0
    %1316 = vmatprep.subr.mxu0 0.0
    %1317 = vmatpush1.msra.mxu0 0.0
    %1318 = vmatprep.subr.mxu0 0.0
    %1319 = vmatpush1.msra.mxu0 0.0
    %1320 = vmatprep.subr.mxu0 0.0
    %1321 = vmatpush1.msra.mxu0 0.0
    %1322 = vmatprep.mubr.f32.mxu0 0.0
    %1323 = vmatmul.mubr.f32.gmra.mrb[0].mxu0 %v1256
    %v1324 = vpop.f32.mrb[0].mxu0
    %v1325 = vadd.f32 0.0, %v1324
    %v1326 = vpop.f32.mrb[0].mxu0
    %1327 = vdwg.mxu0
    %s1328 = scalar_lea.vmem [#allocation6], 128
    %v1329 = vld [vmem:[%s1328] sm:$0xff]
    %v1330 = vld [vmem:[%s1328 + $0x8] sm:$0xff]
    %v1331 = vld [vmem:[%s1328 + $0x10] sm:$0xff]
    %v1332 = vld [vmem:[%s1328 + $0x18] sm:$0xff]
    %v1333 = vld [vmem:[%s1328 + $0x20] sm:$0xff]
    %v1334 = vld [vmem:[%s1328 + $0x28] sm:$0xff]
    %v1335 = vld [vmem:[%s1328 + $0x30] sm:$0xff]
    %v1336 = vld [vmem:[%s1328 + $0x38] sm:$0xff]
    %v1337 = vld [vmem:[%s1328 + $0x40] sm:$0xff]
    %v1338 = vld [vmem:[%s1328 + $0x48] sm:$0xff]
    %v1339 = vld [vmem:[%s1328 + $0x50] sm:$0xff]
    %v1340 = vld [vmem:[%s1328 + $0x58] sm:$0xff]
    %v1341 = vld [vmem:[%s1328 + $0x60] sm:$0xff]
    %v1342 = vld [vmem:[%s1328 + $0x68] sm:$0xff]
    %v1343 = vld [vmem:[%s1328 + $0x70] sm:$0xff]
    %v1344 = vld [vmem:[%s1328 + $0x78] sm:$0xff]
    %1345 = vmatprep.subr.mxu0 0.0
    %1346 = vmatpush1.msra.mxu0 %v1329
    %1347 = vmatprep.subr.mxu0 0.0
    %1348 = vmatpush1.msra.mxu0 %v1330
    %1349 = vmatprep.subr.mxu0 0.0
    %1350 = vmatpush1.msra.mxu0 %v1331
    %1351 = vmatprep.subr.mxu0 0.0
    %1352 = vmatpush1.msra.mxu0 %v1332
    %1353 = vmatprep.subr.mxu0 0.0
    %1354 = vmatpush1.msra.mxu0 %v1333
    %1355 = vmatprep.subr.mxu0 0.0
    %1356 = vmatpush1.msra.mxu0 %v1334
    %1357 = vmatprep.subr.mxu0 0.0
    %1358 = vmatpush1.msra.mxu0 %v1335
    %1359 = vmatprep.subr.mxu0 0.0
    %1360 = vmatpush1.msra.mxu0 %v1336
    %1361 = vmatprep.subr.mxu0 0.0
    %1362 = vmatpush1.msra.mxu0 %v1337
    %1363 = vmatprep.subr.mxu0 0.0
    %1364 = vmatpush1.msra.mxu0 %v1338
    %1365 = vmatprep.subr.mxu0 0.0
    %1366 = vmatpush1.msra.mxu0 %v1339
    %1367 = vmatprep.subr.mxu0 0.0
    %1368 = vmatpush1.msra.mxu0 %v1340
    %1369 = vmatprep.subr.mxu0 0.0
    %1370 = vmatpush1.msra.mxu0 %v1341
    %1371 = vmatprep.subr.mxu0 0.0
    %1372 = vmatpush1.msra.mxu0 %v1342
    %1373 = vmatprep.subr.mxu0 0.0
    %1374 = vmatpush1.msra.mxu0 %v1343
    %1375 = vmatprep.subr.mxu0 0.0
    %1376 = vmatpush1.msra.mxu0 %v1344
    %1377 = vmatprep.subr.mxu0 0.0
    %1378 = vmatpush1.msra.mxu0 0.0
    %1379 = vmatprep.subr.mxu0 0.0
    %1380 = vmatpush1.msra.mxu0 0.0
    %1381 = vmatprep.subr.mxu0 0.0
    %1382 = vmatpush1.msra.mxu0 0.0
    %1383 = vmatprep.subr.mxu0 0.0
    %1384 = vmatpush1.msra.mxu0 0.0
    %1385 = vmatprep.subr.mxu0 0.0
    %1386 = vmatpush1.msra.mxu0 0.0
    %1387 = vmatprep.subr.mxu0 0.0
    %1388 = vmatpush1.msra.mxu0 0.0
    %1389 = vmatprep.subr.mxu0 0.0
    %1390 = vmatpush1.msra.mxu0 0.0
    %1391 = vmatprep.subr.mxu0 0.0
    %1392 = vmatpush1.msra.mxu0 0.0
    %1393 = vmatprep.subr.mxu0 0.0
    %1394 = vmatpush1.msra.mxu0 0.0
    %1395 = vmatprep.subr.mxu0 0.0
    %1396 = vmatpush1.msra.mxu0 0.0
    %1397 = vmatprep.subr.mxu0 0.0
    %1398 = vmatpush1.msra.mxu0 0.0
    %1399 = vmatprep.subr.mxu0 0.0
    %1400 = vmatpush1.msra.mxu0 0.0
    %1401 = vmatprep.subr.mxu0 0.0
    %1402 = vmatpush1.msra.mxu0 0.0
    %1403 = vmatprep.subr.mxu0 0.0
    %1404 = vmatpush1.msra.mxu0 0.0
    %1405 = vmatprep.subr.mxu0 0.0
    %1406 = vmatpush1.msra.mxu0 0.0
    %1407 = vmatprep.subr.mxu0 0.0
    %1408 = vmatpush1.msra.mxu0 0.0
    %1409 = vmatprep.mubr.f32.mxu0 0.0
    %1410 = vmatmul.mubr.f32.gmra.mrb[0].mxu0 %v1325
    %v1411 = vpop.f32.mrb[0].mxu0
    %v1412 = vadd.f32 0.0, %v1411
    %v1413 = vpop.f32.mrb[0].mxu0
    %1414 = vdwg.mxu0
    %1415 = vmatprep.subr.mxu0 0.0
    %1416 = vmatpush1.msra.mxu0 %v1157
    %1417 = vmatprep.subr.mxu0 0.0
    %1418 = vmatpush1.msra.mxu0 %v1158
    %1419 = vmatprep.subr.mxu0 0.0
    %1420 = vmatpush1.msra.mxu0 %v1159
    %1421 = vmatprep.subr.mxu0 0.0
    %1422 = vmatpush1.msra.mxu0 %v1160
    %1423 = vmatprep.subr.mxu0 0.0
    %1424 = vmatpush1.msra.mxu0 %v1161
    %1425 = vmatprep.subr.mxu0 0.0
    %1426 = vmatpush1.msra.mxu0 %v1162
    %1427 = vmatprep.subr.mxu0 0.0
    %1428 = vmatpush1.msra.mxu0 %v1163
    %1429 = vmatprep.subr.mxu0 0.0
    %1430 = vmatpush1.msra.mxu0 %v1164
    %1431 = vmatprep.subr.mxu0 0.0
    %1432 = vmatpush1.msra.mxu0 %v1165
    %1433 = vmatprep.subr.mxu0 0.0
    %1434 = vmatpush1.msra.mxu0 %v1166
    %1435 = vmatprep.subr.mxu0 0.0
    %1436 = vmatpush1.msra.mxu0 %v1167
    %1437 = vmatprep.subr.mxu0 0.0
    %1438 = vmatpush1.msra.mxu0 %v1168
    %1439 = vmatprep.subr.mxu0 0.0
    %1440 = vmatpush1.msra.mxu0 %v1169
    %1441 = vmatprep.subr.mxu0 0.0
    %1442 = vmatpush1.msra.mxu0 %v1170
    %1443 = vmatprep.subr.mxu0 0.0
    %1444 = vmatpush1.msra.mxu0 %v1171
    %1445 = vmatprep.subr.mxu0 0.0
    %1446 = vmatpush1.msra.mxu0 %v1172
    %1447 = vmatprep.subr.mxu0 0.0
    %1448 = vmatpush1.msra.mxu0 0.0
    %1449 = vmatprep.subr.mxu0 0.0
    %1450 = vmatpush1.msra.mxu0 0.0
    %1451 = vmatprep.subr.mxu0 0.0
    %1452 = vmatpush1.msra.mxu0 0.0
    %1453 = vmatprep.subr.mxu0 0.0
    %1454 = vmatpush1.msra.mxu0 0.0
    %1455 = vmatprep.subr.mxu0 0.0
    %1456 = vmatpush1.msra.mxu0 0.0
    %1457 = vmatprep.subr.mxu0 0.0
    %1458 = vmatpush1.msra.mxu0 0.0
    %1459 = vmatprep.subr.mxu0 0.0
    %1460 = vmatpush1.msra.mxu0 0.0
    %1461 = vmatprep.subr.mxu0 0.0
    %1462 = vmatpush1.msra.mxu0 0.0
    %1463 = vmatprep.subr.mxu0 0.0
    %1464 = vmatpush1.msra.mxu0 0.0
    %1465 = vmatprep.subr.mxu0 0.0
    %1466 = vmatpush1.msra.mxu0 0.0
    %1467 = vmatprep.subr.mxu0 0.0
    %1468 = vmatpush1.msra.mxu0 0.0
    %1469 = vmatprep.subr.mxu0 0.0
    %1470 = vmatpush1.msra.mxu0 0.0
    %1471 = vmatprep.subr.mxu0 0.0
    %1472 = vmatpush1.msra.mxu0 0.0
    %1473 = vmatprep.subr.mxu0 0.0
    %1474 = vmatpush1.msra.mxu0 0.0
    %1475 = vmatprep.subr.mxu0 0.0
    %1476 = vmatpush1.msra.mxu0 0.0
    %1477 = vmatprep.subr.mxu0 0.0
    %1478 = vmatpush1.msra.mxu0 0.0
    %1479 = vmatprep.mubr.f32.mxu0 0.0
    %1480 = vmatmul.mubr.f32.gmra.mrb[0].mxu0 %v1154
    %v1481 = vpop.f32.mrb[0].mxu0
    %v1482 = vadd.f32 %v1412, %v1481
    %v1483 = vpop.f32.mrb[0].mxu0
    %1484 = vdwg.mxu0
    %1485 = vmatprep.subr.mxu0 0.0
    %1486 = vmatpush1.xpose.msra.mxu0 %v837
    %1487 = vmatprep.subr.mxu0 0.0
    %1488 = vmatpush1.xpose.msra.mxu0 0.0
    %1489 = vmatprep.subr.mxu0 0.0
    %1490 = vmatpush1.xpose.msra.mxu0 0.0
    %1491 = vmatprep.subr.mxu0 0.0
    %1492 = vmatpush1.xpose.msra.mxu0 0.0
    %1493 = vmatprep.subr.mxu0 0.0
    %1494 = vmatpush1.xpose.msra.mxu0 0.0
    %1495 = vmatprep.subr.mxu0 0.0
    %1496 = vmatpush1.xpose.msra.mxu0 0.0
    %1497 = vmatprep.subr.mxu0 0.0
    %1498 = vmatpush1.xpose.msra.mxu0 0.0
    %1499 = vmatprep.subr.mxu0 0.0
    %1500 = vmatpush1.xpose.msra.mxu0 0.0
    %1501 = vmatprep.subr.mxu0 0.0
    %1502 = vmatpush1.xpose.msra.mxu0 0.0
    %1503 = vmatprep.subr.mxu0 0.0
    %1504 = vmatpush1.xpose.msra.mxu0 0.0
    %1505 = vmatprep.subr.mxu0 0.0
    %1506 = vmatpush1.xpose.msra.mxu0 0.0
    %1507 = vmatprep.subr.mxu0 0.0
    %1508 = vmatpush1.xpose.msra.mxu0 0.0
    %1509 = vmatprep.subr.mxu0 0.0
    %1510 = vmatpush1.xpose.msra.mxu0 0.0
    %1511 = vmatprep.subr.mxu0 0.0
    %1512 = vmatpush1.xpose.msra.mxu0 0.0
    %1513 = vmatprep.subr.mxu0 0.0
    %1514 = vmatpush1.xpose.msra.mxu0 0.0
    %1515 = vmatprep.subr.mxu0 0.0
    %1516 = vmatpush1.xpose.msra.mxu0 0.0
    %1517 = vmatprep.subr.mxu0 0.0
    %1518 = vmatpush1.xpose.msra.mxu0 0.0
    %1519 = vmatprep.subr.mxu0 0.0
    %1520 = vmatpush1.xpose.msra.mxu0 0.0
    %1521 = vmatprep.subr.mxu0 0.0
    %1522 = vmatpush1.xpose.msra.mxu0 0.0
    %1523 = vmatprep.subr.mxu0 0.0
    %1524 = vmatpush1.xpose.msra.mxu0 0.0
    %1525 = vmatprep.subr.mxu0 0.0
    %1526 = vmatpush1.xpose.msra.mxu0 0.0
    %1527 = vmatprep.subr.mxu0 0.0
    %1528 = vmatpush1.xpose.msra.mxu0 0.0
    %1529 = vmatprep.subr.mxu0 0.0
    %1530 = vmatpush1.xpose.msra.mxu0 0.0
    %1531 = vmatprep.subr.mxu0 0.0
    %1532 = vmatpush1.xpose.msra.mxu0 0.0
    %1533 = vmatprep.subr.mxu0 0.0
    %1534 = vmatpush1.xpose.msra.mxu0 0.0
    %1535 = vmatprep.subr.mxu0 0.0
    %1536 = vmatpush1.xpose.msra.mxu0 0.0
    %1537 = vmatprep.subr.mxu0 0.0
    %1538 = vmatpush1.xpose.msra.mxu0 0.0
    %1539 = vmatprep.subr.mxu0 0.0
    %1540 = vmatpush1.xpose.msra.mxu0 0.0
    %1541 = vmatprep.subr.mxu0 0.0
    %1542 = vmatpush1.xpose.msra.mxu0 0.0
    %1543 = vmatprep.subr.mxu0 0.0
    %1544 = vmatpush1.xpose.msra.mxu0 0.0
    %1545 = vmatprep.subr.mxu0 0.0
    %1546 = vmatpush1.xpose.msra.mxu0 0.0
    %1547 = vmatprep.subr.mxu0 0.0
    %1548 = vmatpush1.xpose.msra.mxu0 0.0
    %1549 = vmatprep.mubr.f32.mxu0 0.0
    %1550 = vmatmul.mubr.f32.gmra.mrb[0].mxu0 %v683
    %v1551 = vpop.f32.mrb[0].mxu0
    %v1552 = vadd.f32 0.0, %v1551
    %v1553 = vpop.f32.mrb[0].mxu0
    %1554 = vdwg.mxu0
    %v1555 = vmul.f32 %v1552, 0.35355338
    %v1556 = vsel %vm1072, %v1555, -inf
    %1557 = vmax.xlane.f32.xlu0 %v1556
    %v1558 = vpop.xlane.xlu0 %1557
    %v1559 = vsub.f32 %v1555, %v1558
    %v1560 = vmul.f32 %v1559, 1.442695
    %v1561 = vpow.pop %v1560
    %v1562 = vsel %vm1072, %v1561, 0.0
    %1563 = vadd.xlane.f32.xlu0 %v1562
    %v1564 = vpop.xlane.xlu0 %1563
    %v1565 = vrcp.pop %v1564
    %v1566 = vmul.f32 %v1561, %v1565
    %v1568 = vsel %vm1072, %v1566, 0
    %1570 = vmatprep.subr.mxu0 0.0
    %1571 = vmatpush1.msra.mxu0 %v991
    %1572 = vmatprep.subr.mxu0 0.0
    %1573 = vmatpush1.msra.mxu0 0.0
    %1574 = vmatprep.subr.mxu0 0.0
    %1575 = vmatpush1.msra.mxu0 0.0
    %1576 = vmatprep.subr.mxu0 0.0
    %1577 = vmatpush1.msra.mxu0 0.0
    %1578 = vmatprep.subr.mxu0 0.0
    %1579 = vmatpush1.msra.mxu0 0.0
    %1580 = vmatprep.subr.mxu0 0.0
    %1581 = vmatpush1.msra.mxu0 0.0
    %1582 = vmatprep.subr.mxu0 0.0
    %1583 = vmatpush1.msra.mxu0 0.0
    %1584 = vmatprep.subr.mxu0 0.0
    %1585 = vmatpush1.msra.mxu0 0.0
    %1586 = vmatprep.subr.mxu0 0.0
    %1587 = vmatpush1.msra.mxu0 0.0
    %1588 = vmatprep.subr.mxu0 0.0
    %1589 = vmatpush1.msra.mxu0 0.0
    %1590 = vmatprep.subr.mxu0 0.0
    %1591 = vmatpush1.msra.mxu0 0.0
    %1592 = vmatprep.subr.mxu0 0.0
    %1593 = vmatpush1.msra.mxu0 0.0
    %1594 = vmatprep.subr.mxu0 0.0
    %1595 = vmatpush1.msra.mxu0 0.0
    %1596 = vmatprep.subr.mxu0 0.0
    %1597 = vmatpush1.msra.mxu0 0.0
    %1598 = vmatprep.subr.mxu0 0.0
    %1599 = vmatpush1.msra.mxu0 0.0
    %1600 = vmatprep.subr.mxu0 0.0
    %1601 = vmatpush1.msra.mxu0 0.0
    %1602 = vmatprep.subr.mxu0 0.0
    %1603 = vmatpush1.msra.mxu0 0.0
    %1604 = vmatprep.subr.mxu0 0.0
    %1605 = vmatpush1.msra.mxu0 0.0
    %1606 = vmatprep.subr.mxu0 0.0
    %1607 = vmatpush1.msra.mxu0 0.0
    %1608 = vmatprep.subr.mxu0 0.0
    %1609 = vmatpush1.msra.mxu0 0.0
    %1610 = vmatprep.subr.mxu0 0.0
    %1611 = vmatpush1.msra.mxu0 0.0
    %1612 = vmatprep.subr.mxu0 0.0
    %1613 = vmatpush1.msra.mxu0 0.0
    %1614 = vmatprep.subr.mxu0 0.0
    %1615 = vmatpush1.msra.mxu0 0.0
    %1616 = vmatprep.subr.mxu0 0.0
    %1617 = vmatpush1.msra.mxu0 0.0
    %1618 = vmatprep.subr.mxu0 0.0
    %1619 = vmatpush1.msra.mxu0 0.0
    %1620 = vmatprep.subr.mxu0 0.0
    %1621 = vmatpush1.msra.mxu0 0.0
    %1622 = vmatprep.subr.mxu0 0.0
    %1623 = vmatpush1.msra.mxu0 0.0
    %1624 = vmatprep.subr.mxu0 0.0
    %1625 = vmatpush1.msra.mxu0 0.0
    %1626 = vmatprep.subr.mxu0 0.0
    %1627 = vmatpush1.msra.mxu0 0.0
    %1628 = vmatprep.subr.mxu0 0.0
    %1629 = vmatpush1.msra.mxu0 0.0
    %1630 = vmatprep.subr.mxu0 0.0
    %1631 = vmatpush1.msra.mxu0 0.0
    %1632 = vmatprep.subr.mxu0 0.0
    %1633 = vmatpush1.msra.mxu0 0.0
    %1634 = vmatprep.mubr.f32.mxu0 0.0
    %1635 = vmatmul.mubr.f32.gmra.mrb[0].mxu0 %v1568
    %v1636 = vpop.f32.mrb[0].mxu0
    %v1637 = vadd.f32 0.0, %v1636
    %v1638 = vpop.f32.mrb[0].mxu0
    %1639 = vdwg.mxu0
    %s1640 = scalar_lea.vmem [#allocation6], 256
    %v1641 = vld [vmem:[%s1640] sm:$0xff]
    %v1642 = vld [vmem:[%s1640 + $0x8] sm:$0xff]
    %v1643 = vld [vmem:[%s1640 + $0x10] sm:$0xff]
    %v1644 = vld [vmem:[%s1640 + $0x18] sm:$0xff]
    %v1645 = vld [vmem:[%s1640 + $0x20] sm:$0xff]
    %v1646 = vld [vmem:[%s1640 + $0x28] sm:$0xff]
    %v1647 = vld [vmem:[%s1640 + $0x30] sm:$0xff]
    %v1648 = vld [vmem:[%s1640 + $0x38] sm:$0xff]
    %v1649 = vld [vmem:[%s1640 + $0x40] sm:$0xff]
    %v1650 = vld [vmem:[%s1640 + $0x48] sm:$0xff]
    %v1651 = vld [vmem:[%s1640 + $0x50] sm:$0xff]
    %v1652 = vld [vmem:[%s1640 + $0x58] sm:$0xff]
    %v1653 = vld [vmem:[%s1640 + $0x60] sm:$0xff]
    %v1654 = vld [vmem:[%s1640 + $0x68] sm:$0xff]
    %v1655 = vld [vmem:[%s1640 + $0x70] sm:$0xff]
    %v1656 = vld [vmem:[%s1640 + $0x78] sm:$0xff]
    %1657 = vmatprep.subr.mxu0 0.0
    %1658 = vmatpush1.msra.mxu0 %v1641
    %1659 = vmatprep.subr.mxu0 0.0
    %1660 = vmatpush1.msra.mxu0 %v1642
    %1661 = vmatprep.subr.mxu0 0.0
    %1662 = vmatpush1.msra.mxu0 %v1643
    %1663 = vmatprep.subr.mxu0 0.0
    %1664 = vmatpush1.msra.mxu0 %v1644
    %1665 = vmatprep.subr.mxu0 0.0
    %1666 = vmatpush1.msra.mxu0 %v1645
    %1667 = vmatprep.subr.mxu0 0.0
    %1668 = vmatpush1.msra.mxu0 %v1646
    %1669 = vmatprep.subr.mxu0 0.0
    %1670 = vmatpush1.msra.mxu0 %v1647
    %1671 = vmatprep.subr.mxu0 0.0
    %1672 = vmatpush1.msra.mxu0 %v1648
    %1673 = vmatprep.subr.mxu0 0.0
    %1674 = vmatpush1.msra.mxu0 %v1649
    %1675 = vmatprep.subr.mxu0 0.0
    %1676 = vmatpush1.msra.mxu0 %v1650
    %1677 = vmatprep.subr.mxu0 0.0
    %1678 = vmatpush1.msra.mxu0 %v1651
    %1679 = vmatprep.subr.mxu0 0.0
    %1680 = vmatpush1.msra.mxu0 %v1652
    %1681 = vmatprep.subr.mxu0 0.0
    %1682 = vmatpush1.msra.mxu0 %v1653
    %1683 = vmatprep.subr.mxu0 0.0
    %1684 = vmatpush1.msra.mxu0 %v1654
    %1685 = vmatprep.subr.mxu0 0.0
    %1686 = vmatpush1.msra.mxu0 %v1655
    %1687 = vmatprep.subr.mxu0 0.0
    %1688 = vmatpush1.msra.mxu0 %v1656
    %1689 = vmatprep.subr.mxu0 0.0
    %1690 = vmatpush1.msra.mxu0 0.0
    %1691 = vmatprep.subr.mxu0 0.0
    %1692 = vmatpush1.msra.mxu0 0.0
    %1693 = vmatprep.subr.mxu0 0.0
    %1694 = vmatpush1.msra.mxu0 0.0
    %1695 = vmatprep.subr.mxu0 0.0
    %1696 = vmatpush1.msra.mxu0 0.0
    %1697 = vmatprep.subr.mxu0 0.0
    %1698 = vmatpush1.msra.mxu0 0.0
    %1699 = vmatprep.subr.mxu0 0.0
    %1700 = vmatpush1.msra.mxu0 0.0
    %1701 = vmatprep.subr.mxu0 0.0
    %1702 = vmatpush1.msra.mxu0 0.0
    %1703 = vmatprep.subr.mxu0 0.0
    %1704 = vmatpush1.msra.mxu0 0.0
    %1705 = vmatprep.subr.mxu0 0.0
    %1706 = vmatpush1.msra.mxu0 0.0
    %1707 = vmatprep.subr.mxu0 0.0
    %1708 = vmatpush1.msra.mxu0 0.0
    %1709 = vmatprep.subr.mxu0 0.0
    %1710 = vmatpush1.msra.mxu0 0.0
    %1711 = vmatprep.subr.mxu0 0.0
    %1712 = vmatpush1.msra.mxu0 0.0
    %1713 = vmatprep.subr.mxu0 0.0
    %1714 = vmatpush1.msra.mxu0 0.0
    %1715 = vmatprep.subr.mxu0 0.0
    %1716 = vmatpush1.msra.mxu0 0.0
    %1717 = vmatprep.subr.mxu0 0.0
    %1718 = vmatpush1.msra.mxu0 0.0
    %1719 = vmatprep.subr.mxu0 0.0
    %1720 = vmatpush1.msra.mxu0 0.0
    %1721 = vmatprep.mubr.f32.mxu0 0.0
    %1722 = vmatmul.mubr.f32.gmra.mrb[0].mxu0 %v1637
    %v1723 = vpop.f32.mrb[0].mxu0
    %v1724 = vadd.f32 0.0, %v1723
    %v1725 = vpop.f32.mrb[0].mxu0
    %1726 = vdwg.mxu0
    %v1727 = vadd.f32 %v1482, %v1724
    %1728 = vmatprep.subr.mxu0 0.0
    %1729 = vmatpush1.xpose.msra.mxu0 %v839
    %1730 = vmatprep.subr.mxu0 0.0
    %1731 = vmatpush1.xpose.msra.mxu0 0.0
    %1732 = vmatprep.subr.mxu0 0.0
    %1733 = vmatpush1.xpose.msra.mxu0 0.0
    %1734 = vmatprep.subr.mxu0 0.0
    %1735 = vmatpush1.xpose.msra.mxu0 0.0
    %1736 = vmatprep.subr.mxu0 0.0
    %1737 = vmatpush1.xpose.msra.mxu0 0.0
    %1738 = vmatprep.subr.mxu0 0.0
    %1739 = vmatpush1.xpose.msra.mxu0 0.0
    %1740 = vmatprep.subr.mxu0 0.0
    %1741 = vmatpush1.xpose.msra.mxu0 0.0
    %1742 = vmatprep.subr.mxu0 0.0
    %1743 = vmatpush1.xpose.msra.mxu0 0.0
    %1744 = vmatprep.subr.mxu0 0.0
    %1745 = vmatpush1.xpose.msra.mxu0 0.0
    %1746 = vmatprep.subr.mxu0 0.0
    %1747 = vmatpush1.xpose.msra.mxu0 0.0
    %1748 = vmatprep.subr.mxu0 0.0
    %1749 = vmatpush1.xpose.msra.mxu0 0.0
    %1750 = vmatprep.subr.mxu0 0.0
    %1751 = vmatpush1.xpose.msra.mxu0 0.0
    %1752 = vmatprep.subr.mxu0 0.0
    %1753 = vmatpush1.xpose.msra.mxu0 0.0
    %1754 = vmatprep.subr.mxu0 0.0
    %1755 = vmatpush1.xpose.msra.mxu0 0.0
    %1756 = vmatprep.subr.mxu0 0.0
    %1757 = vmatpush1.xpose.msra.mxu0 0.0
    %1758 = vmatprep.subr.mxu0 0.0
    %1759 = vmatpush1.xpose.msra.mxu0 0.0
    %1760 = vmatprep.subr.mxu0 0.0
    %1761 = vmatpush1.xpose.msra.mxu0 0.0
    %1762 = vmatprep.subr.mxu0 0.0
    %1763 = vmatpush1.xpose.msra.mxu0 0.0
    %1764 = vmatprep.subr.mxu0 0.0
    %1765 = vmatpush1.xpose.msra.mxu0 0.0
    %1766 = vmatprep.subr.mxu0 0.0
    %1767 = vmatpush1.xpose.msra.mxu0 0.0
    %1768 = vmatprep.subr.mxu0 0.0
    %1769 = vmatpush1.xpose.msra.mxu0 0.0
    %1770 = vmatprep.subr.mxu0 0.0
    %1771 = vmatpush1.xpose.msra.mxu0 0.0
    %1772 = vmatprep.subr.mxu0 0.0
    %1773 = vmatpush1.xpose.msra.mxu0 0.0
    %1774 = vmatprep.subr.mxu0 0.0
    %1775 = vmatpush1.xpose.msra.mxu0 0.0
    %1776 = vmatprep.subr.mxu0 0.0
    %1777 = vmatpush1.xpose.msra.mxu0 0.0
    %1778 = vmatprep.subr.mxu0 0.0
    %1779 = vmatpush1.xpose.msra.mxu0 0.0
    %1780 = vmatprep.subr.mxu0 0.0
    %1781 = vmatpush1.xpose.msra.mxu0 0.0
    %1782 = vmatprep.subr.mxu0 0.0
    %1783 = vmatpush1.xpose.msra.mxu0 0.0
    %1784 = vmatprep.subr.mxu0 0.0
    %1785 = vmatpush1.xpose.msra.mxu0 0.0
    %1786 = vmatprep.subr.mxu0 0.0
    %1787 = vmatpush1.xpose.msra.mxu0 0.0
    %1788 = vmatprep.subr.mxu0 0.0
    %1789 = vmatpush1.xpose.msra.mxu0 0.0
    %1790 = vmatprep.subr.mxu0 0.0
    %1791 = vmatpush1.xpose.msra.mxu0 0.0
    %1792 = vmatprep.mubr.f32.mxu0 0.0
    %1793 = vmatmul.mubr.f32.gmra.mrb[0].mxu0 %v685
    %v1794 = vpop.f32.mrb[0].mxu0
    %v1795 = vadd.f32 0.0, %v1794
    %v1796 = vpop.f32.mrb[0].mxu0
    %1797 = vdwg.mxu0
    %v1798 = vmul.f32 %v1795, 0.35355338
    %v1799 = vsel %vm1072, %v1798, -inf
    %1800 = vmax.xlane.f32.xlu0 %v1799
    %v1801 = vpop.xlane.xlu0 %1800
    %v1802 = vsub.f32 %v1798, %v1801
    %v1803 = vmul.f32 %v1802, 1.442695
    %v1804 = vpow.pop %v1803
    %v1805 = vsel %vm1072, %v1804, 0.0
    %1806 = vadd.xlane.f32.xlu0 %v1805
    %v1807 = vpop.xlane.xlu0 %1806
    %v1808 = vrcp.pop %v1807
    %v1809 = vmul.f32 %v1804, %v1808
    %v1811 = vsel %vm1072, %v1809, 0
    %1813 = vmatprep.subr.mxu0 0.0
    %1814 = vmatpush1.msra.mxu0 %v993
    %1815 = vmatprep.subr.mxu0 0.0
    %1816 = vmatpush1.msra.mxu0 0.0
    %1817 = vmatprep.subr.mxu0 0.0
    %1818 = vmatpush1.msra.mxu0 0.0
    %1819 = vmatprep.subr.mxu0 0.0
    %1820 = vmatpush1.msra.mxu0 0.0
    %1821 = vmatprep.subr.mxu0 0.0
    %1822 = vmatpush1.msra.mxu0 0.0
    %1823 = vmatprep.subr.mxu0 0.0
    %1824 = vmatpush1.msra.mxu0 0.0
    %1825 = vmatprep.subr.mxu0 0.0
    %1826 = vmatpush1.msra.mxu0 0.0
    %1827 = vmatprep.subr.mxu0 0.0
    %1828 = vmatpush1.msra.mxu0 0.0
    %1829 = vmatprep.subr.mxu0 0.0
    %1830 = vmatpush1.msra.mxu0 0.0
    %1831 = vmatprep.subr.mxu0 0.0
    %1832 = vmatpush1.msra.mxu0 0.0
    %1833 = vmatprep.subr.mxu0 0.0
    %1834 = vmatpush1.msra.mxu0 0.0
    %1835 = vmatprep.subr.mxu0 0.0
    %1836 = vmatpush1.msra.mxu0 0.0
    %1837 = vmatprep.subr.mxu0 0.0
    %1838 = vmatpush1.msra.mxu0 0.0
    %1839 = vmatprep.subr.mxu0 0.0
    %1840 = vmatpush1.msra.mxu0 0.0
    %1841 = vmatprep.subr.mxu0 0.0
    %1842 = vmatpush1.msra.mxu0 0.0
    %1843 = vmatprep.subr.mxu0 0.0
    %1844 = vmatpush1.msra.mxu0 0.0
    %1845 = vmatprep.subr.mxu0 0.0
    %1846 = vmatpush1.msra.mxu0 0.0
    %1847 = vmatprep.subr.mxu0 0.0
    %1848 = vmatpush1.msra.mxu0 0.0
    %1849 = vmatprep.subr.mxu0 0.0
    %1850 = vmatpush1.msra.mxu0 0.0
    %1851 = vmatprep.subr.mxu0 0.0
    %1852 = vmatpush1.msra.mxu0 0.0
    %1853 = vmatprep.subr.mxu0 0.0
    %1854 = vmatpush1.msra.mxu0 0.0
    %1855 = vmatprep.subr.mxu0 0.0
    %1856 = vmatpush1.msra.mxu0 0.0
    %1857 = vmatprep.subr.mxu0 0.0
    %1858 = vmatpush1.msra.mxu0 0.0
    %1859 = vmatprep.subr.mxu0 0.0
    %1860 = vmatpush1.msra.mxu0 0.0
    %1861 = vmatprep.subr.mxu0 0.0
    %1862 = vmatpush1.msra.mxu0 0.0
    %1863 = vmatprep.subr.mxu0 0.0
    %1864 = vmatpush1.msra.mxu0 0.0
    %1865 = vmatprep.subr.mxu0 0.0
    %1866 = vmatpush1.msra.mxu0 0.0
    %1867 = vmatprep.subr.mxu0 0.0
    %1868 = vmatpush1.msra.mxu0 0.0
    %1869 = vmatprep.subr.mxu0 0.0
    %1870 = vmatpush1.msra.mxu0 0.0
    %1871 = vmatprep.subr.mxu0 0.0
    %1872 = vmatpush1.msra.mxu0 0.0
    %1873 = vmatprep.subr.mxu0 0.0
    %1874 = vmatpush1.msra.mxu0 0.0
    %1875 = vmatprep.subr.mxu0 0.0
    %1876 = vmatpush1.msra.mxu0 0.0
    %1877 = vmatprep.mubr.f32.mxu0 0.0
    %1878 = vmatmul.mubr.f32.gmra.mrb[0].mxu0 %v1811
    %v1879 = vpop.f32.mrb[0].mxu0
    %v1880 = vadd.f32 0.0, %v1879
    %v1881 = vpop.f32.mrb[0].mxu0
    %1882 = vdwg.mxu0
    %s1883 = scalar_lea.vmem [#allocation6], 384
    %v1884 = vld [vmem:[%s1883] sm:$0xff]
    %v1885 = vld [vmem:[%s1883 + $0x8] sm:$0xff]
    %v1886 = vld [vmem:[%s1883 + $0x10] sm:$0xff]
    %v1887 = vld [vmem:[%s1883 + $0x18] sm:$0xff]
    %v1888 = vld [vmem:[%s1883 + $0x20] sm:$0xff]
    %v1889 = vld [vmem:[%s1883 + $0x28] sm:$0xff]
    %v1890 = vld [vmem:[%s1883 + $0x30] sm:$0xff]
    %v1891 = vld [vmem:[%s1883 + $0x38] sm:$0xff]
    %v1892 = vld [vmem:[%s1883 + $0x40] sm:$0xff]
    %v1893 = vld [vmem:[%s1883 + $0x48] sm:$0xff]
    %v1894 = vld [vmem:[%s1883 + $0x50] sm:$0xff]
    %v1895 = vld [vmem:[%s1883 + $0x58] sm:$0xff]
    %v1896 = vld [vmem:[%s1883 + $0x60] sm:$0xff]
    %v1897 = vld [vmem:[%s1883 + $0x68] sm:$0xff]
    %v1898 = vld [vmem:[%s1883 + $0x70] sm:$0xff]
    %v1899 = vld [vmem:[%s1883 + $0x78] sm:$0xff]
    %1900 = vmatprep.subr.mxu0 0.0
    %1901 = vmatpush1.msra.mxu0 %v1884
    %1902 = vmatprep.subr.mxu0 0.0
    %1903 = vmatpush1.msra.mxu0 %v1885
    %1904 = vmatprep.subr.mxu0 0.0
    %1905 = vmatpush1.msra.mxu0 %v1886
    %1906 = vmatprep.subr.mxu0 0.0
    %1907 = vmatpush1.msra.mxu0 %v1887
    %1908 = vmatprep.subr.mxu0 0.0
    %1909 = vmatpush1.msra.mxu0 %v1888
    %1910 = vmatprep.subr.mxu0 0.0
    %1911 = vmatpush1.msra.mxu0 %v1889
    %1912 = vmatprep.subr.mxu0 0.0
    %1913 = vmatpush1.msra.mxu0 %v1890
    %1914 = vmatprep.subr.mxu0 0.0
    %1915 = vmatpush1.msra.mxu0 %v1891
    %1916 = vmatprep.subr.mxu0 0.0
    %1917 = vmatpush1.msra.mxu0 %v1892
    %1918 = vmatprep.subr.mxu0 0.0
    %1919 = vmatpush1.msra.mxu0 %v1893
    %1920 = vmatprep.subr.mxu0 0.0
    %1921 = vmatpush1.msra.mxu0 %v1894
    %1922 = vmatprep.subr.mxu0 0.0
    %1923 = vmatpush1.msra.mxu0 %v1895
    %1924 = vmatprep.subr.mxu0 0.0
    %1925 = vmatpush1.msra.mxu0 %v1896
    %1926 = vmatprep.subr.mxu0 0.0
    %1927 = vmatpush1.msra.mxu0 %v1897
    %1928 = vmatprep.subr.mxu0 0.0
    %1929 = vmatpush1.msra.mxu0 %v1898
    %1930 = vmatprep.subr.mxu0 0.0
    %1931 = vmatpush1.msra.mxu0 %v1899
    %1932 = vmatprep.subr.mxu0 0.0
    %1933 = vmatpush1.msra.mxu0 0.0
    %1934 = vmatprep.subr.mxu0 0.0
    %1935 = vmatpush1.msra.mxu0 0.0
    %1936 = vmatprep.subr.mxu0 0.0
    %1937 = vmatpush1.msra.mxu0 0.0
    %1938 = vmatprep.subr.mxu0 0.0
    %1939 = vmatpush1.msra.mxu0 0.0
    %1940 = vmatprep.subr.mxu0 0.0
    %1941 = vmatpush1.msra.mxu0 0.0
    %1942 = vmatprep.subr.mxu0 0.0
    %1943 = vmatpush1.msra.mxu0 0.0
    %1944 = vmatprep.subr.mxu0 0.0
    %1945 = vmatpush1.msra.mxu0 0.0
    %1946 = vmatprep.subr.mxu0 0.0
    %1947 = vmatpush1.msra.mxu0 0.0
    %1948 = vmatprep.subr.mxu0 0.0
    %1949 = vmatpush1.msra.mxu0 0.0
    %1950 = vmatprep.subr.mxu0 0.0
    %1951 = vmatpush1.msra.mxu0 0.0
    %1952 = vmatprep.subr.mxu0 0.0
    %1953 = vmatpush1.msra.mxu0 0.0
    %1954 = vmatprep.subr.mxu0 0.0
    %1955 = vmatpush1.msra.mxu0 0.0
    %1956 = vmatprep.subr.mxu0 0.0
    %1957 = vmatpush1.msra.mxu0 0.0
    %1958 = vmatprep.subr.mxu0 0.0
    %1959 = vmatpush1.msra.mxu0 0.0
    %1960 = vmatprep.subr.mxu0 0.0
    %1961 = vmatpush1.msra.mxu0 0.0
    %1962 = vmatprep.subr.mxu0 0.0
    %1963 = vmatpush1.msra.mxu0 0.0
    %1964 = vmatprep.mubr.f32.mxu0 0.0
    %1965 = vmatmul.mubr.f32.gmra.mrb[0].mxu0 %v1880
    %v1966 = vpop.f32.mrb[0].mxu0
    %v1967 = vadd.f32 0.0, %v1966
    %v1968 = vpop.f32.mrb[0].mxu0
    %1969 = vdwg.mxu0
    %v1970 = vadd.f32 %v1727, %v1967
    %1971 = vmatprep.subr.mxu0 0.0
    %1972 = vmatpush1.xpose.msra.mxu0 %v766
    %1973 = vmatprep.subr.mxu0 0.0
    %1974 = vmatpush1.xpose.msra.mxu0 0.0
    %1975 = vmatprep.subr.mxu0 0.0
    %1976 = vmatpush1.xpose.msra.mxu0 0.0
    %1977 = vmatprep.subr.mxu0 0.0
    %1978 = vmatpush1.xpose.msra.mxu0 0.0
    %1979 = vmatprep.subr.mxu0 0.0
    %1980 = vmatpush1.xpose.msra.mxu0 0.0
    %1981 = vmatprep.subr.mxu0 0.0
    %1982 = vmatpush1.xpose.msra.mxu0 0.0
    %1983 = vmatprep.subr.mxu0 0.0
    %1984 = vmatpush1.xpose.msra.mxu0 0.0
    %1985 = vmatprep.subr.mxu0 0.0
    %1986 = vmatpush1.xpose.msra.mxu0 0.0
    %1987 = vmatprep.subr.mxu0 0.0
    %1988 = vmatpush1.xpose.msra.mxu0 0.0
    %1989 = vmatprep.subr.mxu0 0.0
    %1990 = vmatpush1.xpose.msra.mxu0 0.0
    %1991 = vmatprep.subr.mxu0 0.0
    %1992 = vmatpush1.xpose.msra.mxu0 0.0
    %1993 = vmatprep.subr.mxu0 0.0
    %1994 = vmatpush1.xpose.msra.mxu0 0.0
    %1995 = vmatprep.subr.mxu0 0.0
    %1996 = vmatpush1.xpose.msra.mxu0 0.0
    %1997 = vmatprep.subr.mxu0 0.0
    %1998 = vmatpush1.xpose.msra.mxu0 0.0
    %1999 = vmatprep.subr.mxu0 0.0
    %2000 = vmatpush1.xpose.msra.mxu0 0.0
    %2001 = vmatprep.subr.mxu0 0.0
    %2002 = vmatpush1.xpose.msra.mxu0 0.0
    %2003 = vmatprep.subr.mxu0 0.0
    %2004 = vmatpush1.xpose.msra.mxu0 0.0
    %2005 = vmatprep.subr.mxu0 0.0
    %2006 = vmatpush1.xpose.msra.mxu0 0.0
    %2007 = vmatprep.subr.mxu0 0.0
    %2008 = vmatpush1.xpose.msra.mxu0 0.0
    %2009 = vmatprep.subr.mxu0 0.0
    %2010 = vmatpush1.xpose.msra.mxu0 0.0
    %2011 = vmatprep.subr.mxu0 0.0
    %2012 = vmatpush1.xpose.msra.mxu0 0.0
    %2013 = vmatprep.subr.mxu0 0.0
    %2014 = vmatpush1.xpose.msra.mxu0 0.0
    %2015 = vmatprep.subr.mxu0 0.0
    %2016 = vmatpush1.xpose.msra.mxu0 0.0
    %2017 = vmatprep.subr.mxu0 0.0
    %2018 = vmatpush1.xpose.msra.mxu0 0.0
    %2019 = vmatprep.subr.mxu0 0.0
    %2020 = vmatpush1.xpose.msra.mxu0 0.0
    %2021 = vmatprep.subr.mxu0 0.0
    %2022 = vmatpush1.xpose.msra.mxu0 0.0
    %2023 = vmatprep.subr.mxu0 0.0
    %2024 = vmatpush1.xpose.msra.mxu0 0.0
    %2025 = vmatprep.subr.mxu0 0.0
    %2026 = vmatpush1.xpose.msra.mxu0 0.0
    %2027 = vmatprep.subr.mxu0 0.0
    %2028 = vmatpush1.xpose.msra.mxu0 0.0
    %2029 = vmatprep.subr.mxu0 0.0
    %2030 = vmatpush1.xpose.msra.mxu0 0.0
    %2031 = vmatprep.subr.mxu0 0.0
    %2032 = vmatpush1.xpose.msra.mxu0 0.0
    %2033 = vmatprep.subr.mxu0 0.0
    %2034 = vmatpush1.xpose.msra.mxu0 0.0
    %2035 = vmatprep.mubr.f32.mxu0 0.0
    %2036 = vmatmul.mubr.f32.gmra.mrb[0].mxu0 %v612
    %v2037 = vpop.f32.mrb[0].mxu0
    %v2038 = vadd.f32 0.0, %v2037
    %v2039 = vpop.f32.mrb[0].mxu0
    %2040 = vdwg.mxu0
    %v2041 = vmul.f32 %v2038, 0.35355338
    %v2042 = vsel %vm1072, %v2041, -inf
    %2043 = vmax.xlane.f32.xlu0 %v2042
    %v2044 = vpop.xlane.xlu0 %2043
    %v2045 = vsub.f32 %v2041, %v2044
    %v2046 = vmul.f32 %v2045, 1.442695
    %v2047 = vpow.pop %v2046
    %v2048 = vsel %vm1072, %v2047, 0.0
    %2049 = vadd.xlane.f32.xlu0 %v2048
    %v2050 = vpop.xlane.xlu0 %2049
    %v2051 = vrcp.pop %v2050
    %v2052 = vmul.f32 %v2047, %v2051
    %v2054 = vsel %vm1072, %v2052, 0
    %2056 = vmatprep.subr.mxu0 0.0
    %2057 = vmatpush1.msra.mxu0 %v920
    %2058 = vmatprep.subr.mxu0 0.0
    %2059 = vmatpush1.msra.mxu0 0.0
    %2060 = vmatprep.subr.mxu0 0.0
    %2061 = vmatpush1.msra.mxu0 0.0
    %2062 = vmatprep.subr.mxu0 0.0
    %2063 = vmatpush1.msra.mxu0 0.0
    %2064 = vmatprep.subr.mxu0 0.0
    %2065 = vmatpush1.msra.mxu0 0.0
    %2066 = vmatprep.subr.mxu0 0.0
    %2067 = vmatpush1.msra.mxu0 0.0
    %2068 = vmatprep.subr.mxu0 0.0
    %2069 = vmatpush1.msra.mxu0 0.0
    %2070 = vmatprep.subr.mxu0 0.0
    %2071 = vmatpush1.msra.mxu0 0.0
    %2072 = vmatprep.subr.mxu0 0.0
    %2073 = vmatpush1.msra.mxu0 0.0
    %2074 = vmatprep.subr.mxu0 0.0
    %2075 = vmatpush1.msra.mxu0 0.0
    %2076 = vmatprep.subr.mxu0 0.0
    %2077 = vmatpush1.msra.mxu0 0.0
    %2078 = vmatprep.subr.mxu0 0.0
    %2079 = vmatpush1.msra.mxu0 0.0
    %2080 = vmatprep.subr.mxu0 0.0
    %2081 = vmatpush1.msra.mxu0 0.0
    %2082 = vmatprep.subr.mxu0 0.0
    %2083 = vmatpush1.msra.mxu0 0.0
    %2084 = vmatprep.subr.mxu0 0.0
    %2085 = vmatpush1.msra.mxu0 0.0
    %2086 = vmatprep.subr.mxu0 0.0
    %2087 = vmatpush1.msra.mxu0 0.0
    %2088 = vmatprep.subr.mxu0 0.0
    %2089 = vmatpush1.msra.mxu0 0.0
    %2090 = vmatprep.subr.mxu0 0.0
    %2091 = vmatpush1.msra.mxu0 0.0
    %2092 = vmatprep.subr.mxu0 0.0
    %2093 = vmatpush1.msra.mxu0 0.0
    %2094 = vmatprep.subr.mxu0 0.0
    %2095 = vmatpush1.msra.mxu0 0.0
    %2096 = vmatprep.subr.mxu0 0.0
    %2097 = vmatpush1.msra.mxu0 0.0
    %2098 = vmatprep.subr.mxu0 0.0
    %2099 = vmatpush1.msra.mxu0 0.0
    %2100 = vmatprep.subr.mxu0 0.0
    %2101 = vmatpush1.msra.mxu0 0.0
    %2102 = vmatprep.subr.mxu0 0.0
    %2103 = vmatpush1.msra.mxu0 0.0
    %2104 = vmatprep.subr.mxu0 0.0
    %2105 = vmatpush1.msra.mxu0 0.0
    %2106 = vmatprep.subr.mxu0 0.0
    %2107 = vmatpush1.msra.mxu0 0.0
    %2108 = vmatprep.subr.mxu0 0.0
    %2109 = vmatpush1.msra.mxu0 0.0
    %2110 = vmatprep.subr.mxu0 0.0
    %2111 = vmatpush1.msra.mxu0 0.0
    %2112 = vmatprep.subr.mxu0 0.0
    %2113 = vmatpush1.msra.mxu0 0.0
    %2114 = vmatprep.subr.mxu0 0.0
    %2115 = vmatpush1.msra.mxu0 0.0
    %2116 = vmatprep.subr.mxu0 0.0
    %2117 = vmatpush1.msra.mxu0 0.0
    %2118 = vmatprep.subr.mxu0 0.0
    %2119 = vmatpush1.msra.mxu0 0.0
    %2120 = vmatprep.mubr.f32.mxu0 0.0
    %2121 = vmatmul.mubr.f32.gmra.mrb[0].mxu0 %v2054
    %v2122 = vpop.f32.mrb[0].mxu0
    %v2123 = vadd.f32 0.0, %v2122
    %v2124 = vpop.f32.mrb[0].mxu0
    %2125 = vdwg.mxu0
    %2126 = vmatprep.subr.mxu0 0.0
    %2127 = vmatpush1.xpose.msra.mxu0 %v768
    %2128 = vmatprep.subr.mxu0 0.0
    %2129 = vmatpush1.xpose.msra.mxu0 0.0
    %2130 = vmatprep.subr.mxu0 0.0
    %2131 = vmatpush1.xpose.msra.mxu0 0.0
    %2132 = vmatprep.subr.mxu0 0.0
    %2133 = vmatpush1.xpose.msra.mxu0 0.0
    %2134 = vmatprep.subr.mxu0 0.0
    %2135 = vmatpush1.xpose.msra.mxu0 0.0
    %2136 = vmatprep.subr.mxu0 0.0
    %2137 = vmatpush1.xpose.msra.mxu0 0.0
    %2138 = vmatprep.subr.mxu0 0.0
    %2139 = vmatpush1.xpose.msra.mxu0 0.0
    %2140 = vmatprep.subr.mxu0 0.0
    %2141 = vmatpush1.xpose.msra.mxu0 0.0
    %2142 = vmatprep.subr.mxu0 0.0
    %2143 = vmatpush1.xpose.msra.mxu0 0.0
    %2144 = vmatprep.subr.mxu0 0.0
    %2145 = vmatpush1.xpose.msra.mxu0 0.0
    %2146 = vmatprep.subr.mxu0 0.0
    %2147 = vmatpush1.xpose.msra.mxu0 0.0
    %2148 = vmatprep.subr.mxu0 0.0
    %2149 = vmatpush1.xpose.msra.mxu0 0.0
    %2150 = vmatprep.subr.mxu0 0.0
    %2151 = vmatpush1.xpose.msra.mxu0 0.0
    %2152 = vmatprep.subr.mxu0 0.0
    %2153 = vmatpush1.xpose.msra.mxu0 0.0
    %2154 = vmatprep.subr.mxu0 0.0
    %2155 = vmatpush1.xpose.msra.mxu0 0.0
    %2156 = vmatprep.subr.mxu0 0.0
    %2157 = vmatpush1.xpose.msra.mxu0 0.0
    %2158 = vmatprep.subr.mxu0 0.0
    %2159 = vmatpush1.xpose.msra.mxu0 0.0
    %2160 = vmatprep.subr.mxu0 0.0
    %2161 = vmatpush1.xpose.msra.mxu0 0.0
    %2162 = vmatprep.subr.mxu0 0.0
    %2163 = vmatpush1.xpose.msra.mxu0 0.0
    %2164 = vmatprep.subr.mxu0 0.0
    %2165 = vmatpush1.xpose.msra.mxu0 0.0
    %2166 = vmatprep.subr.mxu0 0.0
    %2167 = vmatpush1.xpose.msra.mxu0 0.0
    %2168 = vmatprep.subr.mxu0 0.0
    %2169 = vmatpush1.xpose.msra.mxu0 0.0
    %2170 = vmatprep.subr.mxu0 0.0
    %2171 = vmatpush1.xpose.msra.mxu0 0.0
    %2172 = vmatprep.subr.mxu0 0.0
    %2173 = vmatpush1.xpose.msra.mxu0 0.0
    %2174 = vmatprep.subr.mxu0 0.0
    %2175 = vmatpush1.xpose.msra.mxu0 0.0
    %2176 = vmatprep.subr.mxu0 0.0
    %2177 = vmatpush1.xpose.msra.mxu0 0.0
    %2178 = vmatprep.subr.mxu0 0.0
    %2179 = vmatpush1.xpose.msra.mxu0 0.0
    %2180 = vmatprep.subr.mxu0 0.0
    %2181 = vmatpush1.xpose.msra.mxu0 0.0
    %2182 = vmatprep.subr.mxu0 0.0
    %2183 = vmatpush1.xpose.msra.mxu0 0.0
    %2184 = vmatprep.subr.mxu0 0.0
    %2185 = vmatpush1.xpose.msra.mxu0 0.0
    %2186 = vmatprep.subr.mxu0 0.0
    %2187 = vmatpush1.xpose.msra.mxu0 0.0
    %2188 = vmatprep.subr.mxu0 0.0
    %2189 = vmatpush1.xpose.msra.mxu0 0.0
    %2190 = vmatprep.mubr.f32.mxu0 0.0
    %2191 = vmatmul.mubr.f32.gmra.mrb[0].mxu0 %v614
    %v2192 = vpop.f32.mrb[0].mxu0
    %v2193 = vadd.f32 0.0, %v2192
    %v2194 = vpop.f32.mrb[0].mxu0
    %2195 = vdwg.mxu0
    %v2196 = vmul.f32 %v2193, 0.35355338
    %v2197 = vsel %vm1072, %v2196, -inf
    %2198 = vmax.xlane.f32.xlu0 %v2197
    %v2199 = vpop.xlane.xlu0 %2198
    %v2200 = vsub.f32 %v2196, %v2199
    %v2201 = vmul.f32 %v2200, 1.442695
    %v2202 = vpow.pop %v2201
    %v2203 = vsel %vm1072, %v2202, 0.0
    %2204 = vadd.xlane.f32.xlu0 %v2203
    %v2205 = vpop.xlane.xlu0 %2204
    %v2206 = vrcp.pop %v2205
    %v2207 = vmul.f32 %v2202, %v2206
    %v2209 = vsel %vm1072, %v2207, 0
    %2211 = vmatprep.subr.mxu0 0.0
    %2212 = vmatpush1.msra.mxu0 %v922
    %2213 = vmatprep.subr.mxu0 0.0
    %2214 = vmatpush1.msra.mxu0 0.0
    %2215 = vmatprep.subr.mxu0 0.0
    %2216 = vmatpush1.msra.mxu0 0.0
    %2217 = vmatprep.subr.mxu0 0.0
    %2218 = vmatpush1.msra.mxu0 0.0
    %2219 = vmatprep.subr.mxu0 0.0
    %2220 = vmatpush1.msra.mxu0 0.0
    %2221 = vmatprep.subr.mxu0 0.0
    %2222 = vmatpush1.msra.mxu0 0.0
    %2223 = vmatprep.subr.mxu0 0.0
    %2224 = vmatpush1.msra.mxu0 0.0
    %2225 = vmatprep.subr.mxu0 0.0
    %2226 = vmatpush1.msra.mxu0 0.0
    %2227 = vmatprep.subr.mxu0 0.0
    %2228 = vmatpush1.msra.mxu0 0.0
    %2229 = vmatprep.subr.mxu0 0.0
    %2230 = vmatpush1.msra.mxu0 0.0
    %2231 = vmatprep.subr.mxu0 0.0
    %2232 = vmatpush1.msra.mxu0 0.0
    %2233 = vmatprep.subr.mxu0 0.0
    %2234 = vmatpush1.msra.mxu0 0.0
    %2235 = vmatprep.subr.mxu0 0.0
    %2236 = vmatpush1.msra.mxu0 0.0
    %2237 = vmatprep.subr.mxu0 0.0
    %2238 = vmatpush1.msra.mxu0 0.0
    %2239 = vmatprep.subr.mxu0 0.0
    %2240 = vmatpush1.msra.mxu0 0.0
    %2241 = vmatprep.subr.mxu0 0.0
    %2242 = vmatpush1.msra.mxu0 0.0
    %2243 = vmatprep.subr.mxu0 0.0
    %2244 = vmatpush1.msra.mxu0 0.0
    %2245 = vmatprep.subr.mxu0 0.0
    %2246 = vmatpush1.msra.mxu0 0.0
    %2247 = vmatprep.subr.mxu0 0.0
    %2248 = vmatpush1.msra.mxu0 0.0
    %2249 = vmatprep.subr.mxu0 0.0
    %2250 = vmatpush1.msra.mxu0 0.0
    %2251 = vmatprep.subr.mxu0 0.0
    %2252 = vmatpush1.msra.mxu0 0.0
    %2253 = vmatprep.subr.mxu0 0.0
    %2254 = vmatpush1.msra.mxu0 0.0
    %2255 = vmatprep.subr.mxu0 0.0
    %2256 = vmatpush1.msra.mxu0 0.0
    %2257 = vmatprep.subr.mxu0 0.0
    %2258 = vmatpush1.msra.mxu0 0.0
    %2259 = vmatprep.subr.mxu0 0.0
    %2260 = vmatpush1.msra.mxu0 0.0
    %2261 = vmatprep.subr.mxu0 0.0
    %2262 = vmatpush1.msra.mxu0 0.0
    %2263 = vmatprep.subr.mxu0 0.0
    %2264 = vmatpush1.msra.mxu0 0.0
    %2265 = vmatprep.subr.mxu0 0.0
    %2266 = vmatpush1.msra.mxu0 0.0
    %2267 = vmatprep.subr.mxu0 0.0
    %2268 = vmatpush1.msra.mxu0 0.0
    %2269 = vmatprep.subr.mxu0 0.0
    %2270 = vmatpush1.msra.mxu0 0.0
    %2271 = vmatprep.subr.mxu0 0.0
    %2272 = vmatpush1.msra.mxu0 0.0
    %2273 = vmatprep.subr.mxu0 0.0
    %2274 = vmatpush1.msra.mxu0 0.0
    %2275 = vmatprep.mubr.f32.mxu0 0.0
    %2276 = vmatmul.mubr.f32.gmra.mrb[0].mxu0 %v2209
    %v2277 = vpop.f32.mrb[0].mxu0
    %v2278 = vadd.f32 0.0, %v2277
    %v2279 = vpop.f32.mrb[0].mxu0
    %2280 = vdwg.mxu0
    %2281 = vmatprep.subr.mxu0 0.0
    %2282 = vmatpush1.msra.mxu0 %v1329
    %2283 = vmatprep.subr.mxu0 0.0
    %2284 = vmatpush1.msra.mxu0 %v1330
    %2285 = vmatprep.subr.mxu0 0.0
    %2286 = vmatpush1.msra.mxu0 %v1331
    %2287 = vmatprep.subr.mxu0 0.0
    %2288 = vmatpush1.msra.mxu0 %v1332
    %2289 = vmatprep.subr.mxu0 0.0
    %2290 = vmatpush1.msra.mxu0 %v1333
    %2291 = vmatprep.subr.mxu0 0.0
    %2292 = vmatpush1.msra.mxu0 %v1334
    %2293 = vmatprep.subr.mxu0 0.0
    %2294 = vmatpush1.msra.mxu0 %v1335
    %2295 = vmatprep.subr.mxu0 0.0
    %2296 = vmatpush1.msra.mxu0 %v1336
    %2297 = vmatprep.subr.mxu0 0.0
    %2298 = vmatpush1.msra.mxu0 %v1337
    %2299 = vmatprep.subr.mxu0 0.0
    %2300 = vmatpush1.msra.mxu0 %v1338
    %2301 = vmatprep.subr.mxu0 0.0
    %2302 = vmatpush1.msra.mxu0 %v1339
    %2303 = vmatprep.subr.mxu0 0.0
    %2304 = vmatpush1.msra.mxu0 %v1340
    %2305 = vmatprep.subr.mxu0 0.0
    %2306 = vmatpush1.msra.mxu0 %v1341
    %2307 = vmatprep.subr.mxu0 0.0
    %2308 = vmatpush1.msra.mxu0 %v1342
    %2309 = vmatprep.subr.mxu0 0.0
    %2310 = vmatpush1.msra.mxu0 %v1343
    %2311 = vmatprep.subr.mxu0 0.0
    %2312 = vmatpush1.msra.mxu0 %v1344
    %2313 = vmatprep.subr.mxu0 0.0
    %2314 = vmatpush1.msra.mxu0 0.0
    %2315 = vmatprep.subr.mxu0 0.0
    %2316 = vmatpush1.msra.mxu0 0.0
    %2317 = vmatprep.subr.mxu0 0.0
    %2318 = vmatpush1.msra.mxu0 0.0
    %2319 = vmatprep.subr.mxu0 0.0
    %2320 = vmatpush1.msra.mxu0 0.0
    %2321 = vmatprep.subr.mxu0 0.0
    %2322 = vmatpush1.msra.mxu0 0.0
    %2323 = vmatprep.subr.mxu0 0.0
    %2324 = vmatpush1.msra.mxu0 0.0
    %2325 = vmatprep.subr.mxu0 0.0
    %2326 = vmatpush1.msra.mxu0 0.0
    %2327 = vmatprep.subr.mxu0 0.0
    %2328 = vmatpush1.msra.mxu0 0.0
    %2329 = vmatprep.subr.mxu0 0.0
    %2330 = vmatpush1.msra.mxu0 0.0
    %2331 = vmatprep.subr.mxu0 0.0
    %2332 = vmatpush1.msra.mxu0 0.0
    %2333 = vmatprep.subr.mxu0 0.0
    %2334 = vmatpush1.msra.mxu0 0.0
    %2335 = vmatprep.subr.mxu0 0.0
    %2336 = vmatpush1.msra.mxu0 0.0
    %2337 = vmatprep.subr.mxu0 0.0
    %2338 = vmatpush1.msra.mxu0 0.0
    %2339 = vmatprep.subr.mxu0 0.0
    %2340 = vmatpush1.msra.mxu0 0.0
    %2341 = vmatprep.subr.mxu0 0.0
    %2342 = vmatpush1.msra.mxu0 0.0
    %2343 = vmatprep.subr.mxu0 0.0
    %2344 = vmatpush1.msra.mxu0 0.0
    %2345 = vmatprep.mubr.f32.mxu0 0.0
    %2346 = vmatmul.mubr.f32.gmra.mrb[0].mxu0 %v2278
    %v2347 = vpop.f32.mrb[0].mxu0
    %v2348 = vadd.f32 0.0, %v2347
    %v2349 = vpop.f32.mrb[0].mxu0
    %2350 = vdwg.mxu0
    %2351 = vmatprep.subr.mxu0 0.0
    %2352 = vmatpush1.msra.mxu0 %v1157
    %2353 = vmatprep.subr.mxu0 0.0
    %2354 = vmatpush1.msra.mxu0 %v1158
    %2355 = vmatprep.subr.mxu0 0.0
    %2356 = vmatpush1.msra.mxu0 %v1159
    %2357 = vmatprep.subr.mxu0 0.0
    %2358 = vmatpush1.msra.mxu0 %v1160
    %2359 = vmatprep.subr.mxu0 0.0
    %2360 = vmatpush1.msra.mxu0 %v1161
    %2361 = vmatprep.subr.mxu0 0.0
    %2362 = vmatpush1.msra.mxu0 %v1162
    %2363 = vmatprep.subr.mxu0 0.0
    %2364 = vmatpush1.msra.mxu0 %v1163
    %2365 = vmatprep.subr.mxu0 0.0
    %2366 = vmatpush1.msra.mxu0 %v1164
    %2367 = vmatprep.subr.mxu0 0.0
    %2368 = vmatpush1.msra.mxu0 %v1165
    %2369 = vmatprep.subr.mxu0 0.0
    %2370 = vmatpush1.msra.mxu0 %v1166
    %2371 = vmatprep.subr.mxu0 0.0
    %2372 = vmatpush1.msra.mxu0 %v1167
    %2373 = vmatprep.subr.mxu0 0.0
    %2374 = vmatpush1.msra.mxu0 %v1168
    %2375 = vmatprep.subr.mxu0 0.0
    %2376 = vmatpush1.msra.mxu0 %v1169
    %2377 = vmatprep.subr.mxu0 0.0
    %2378 = vmatpush1.msra.mxu0 %v1170
    %2379 = vmatprep.subr.mxu0 0.0
    %2380 = vmatpush1.msra.mxu0 %v1171
    %2381 = vmatprep.subr.mxu0 0.0
    %2382 = vmatpush1.msra.mxu0 %v1172
    %2383 = vmatprep.subr.mxu0 0.0
    %2384 = vmatpush1.msra.mxu0 0.0
    %2385 = vmatprep.subr.mxu0 0.0
    %2386 = vmatpush1.msra.mxu0 0.0
    %2387 = vmatprep.subr.mxu0 0.0
    %2388 = vmatpush1.msra.mxu0 0.0
    %2389 = vmatprep.subr.mxu0 0.0
    %2390 = vmatpush1.msra.mxu0 0.0
    %2391 = vmatprep.subr.mxu0 0.0
    %2392 = vmatpush1.msra.mxu0 0.0
    %2393 = vmatprep.subr.mxu0 0.0
    %2394 = vmatpush1.msra.mxu0 0.0
    %2395 = vmatprep.subr.mxu0 0.0
    %2396 = vmatpush1.msra.mxu0 0.0
    %2397 = vmatprep.subr.mxu0 0.0
    %2398 = vmatpush1.msra.mxu0 0.0
    %2399 = vmatprep.subr.mxu0 0.0
    %2400 = vmatpush1.msra.mxu0 0.0
    %2401 = vmatprep.subr.mxu0 0.0
    %2402 = vmatpush1.msra.mxu0 0.0
    %2403 = vmatprep.subr.mxu0 0.0
    %2404 = vmatpush1.msra.mxu0 0.0
    %2405 = vmatprep.subr.mxu0 0.0
    %2406 = vmatpush1.msra.mxu0 0.0
    %2407 = vmatprep.subr.mxu0 0.0
    %2408 = vmatpush1.msra.mxu0 0.0
    %2409 = vmatprep.subr.mxu0 0.0
    %2410 = vmatpush1.msra.mxu0 0.0
    %2411 = vmatprep.subr.mxu0 0.0
    %2412 = vmatpush1.msra.mxu0 0.0
    %2413 = vmatprep.subr.mxu0 0.0
    %2414 = vmatpush1.msra.mxu0 0.0
    %2415 = vmatprep.mubr.f32.mxu0 0.0
    %2416 = vmatmul.mubr.f32.gmra.mrb[0].mxu0 %v2123
    %v2417 = vpop.f32.mrb[0].mxu0
    %v2418 = vadd.f32 %v2348, %v2417
    %v2419 = vpop.f32.mrb[0].mxu0
    %2420 = vdwg.mxu0
    %2421 = vmatprep.subr.mxu0 0.0
    %2422 = vmatpush1.xpose.msra.mxu0 %v843
    %2423 = vmatprep.subr.mxu0 0.0
    %2424 = vmatpush1.xpose.msra.mxu0 0.0
    %2425 = vmatprep.subr.mxu0 0.0
    %2426 = vmatpush1.xpose.msra.mxu0 0.0
    %2427 = vmatprep.subr.mxu0 0.0
    %2428 = vmatpush1.xpose.msra.mxu0 0.0
    %2429 = vmatprep.subr.mxu0 0.0
    %2430 = vmatpush1.xpose.msra.mxu0 0.0
    %2431 = vmatprep.subr.mxu0 0.0
    %2432 = vmatpush1.xpose.msra.mxu0 0.0
    %2433 = vmatprep.subr.mxu0 0.0
    %2434 = vmatpush1.xpose.msra.mxu0 0.0
    %2435 = vmatprep.subr.mxu0 0.0
    %2436 = vmatpush1.xpose.msra.mxu0 0.0
    %2437 = vmatprep.subr.mxu0 0.0
    %2438 = vmatpush1.xpose.msra.mxu0 0.0
    %2439 = vmatprep.subr.mxu0 0.0
    %2440 = vmatpush1.xpose.msra.mxu0 0.0
    %2441 = vmatprep.subr.mxu0 0.0
    %2442 = vmatpush1.xpose.msra.mxu0 0.0
    %2443 = vmatprep.subr.mxu0 0.0
    %2444 = vmatpush1.xpose.msra.mxu0 0.0
    %2445 = vmatprep.subr.mxu0 0.0
    %2446 = vmatpush1.xpose.msra.mxu0 0.0
    %2447 = vmatprep.subr.mxu0 0.0
    %2448 = vmatpush1.xpose.msra.mxu0 0.0
    %2449 = vmatprep.subr.mxu0 0.0
    %2450 = vmatpush1.xpose.msra.mxu0 0.0
    %2451 = vmatprep.subr.mxu0 0.0
    %2452 = vmatpush1.xpose.msra.mxu0 0.0
    %2453 = vmatprep.subr.mxu0 0.0
    %2454 = vmatpush1.xpose.msra.mxu0 0.0
    %2455 = vmatprep.subr.mxu0 0.0
    %2456 = vmatpush1.xpose.msra.mxu0 0.0
    %2457 = vmatprep.subr.mxu0 0.0
    %2458 = vmatpush1.xpose.msra.mxu0 0.0
    %2459 = vmatprep.subr.mxu0 0.0
    %2460 = vmatpush1.xpose.msra.mxu0 0.0
    %2461 = vmatprep.subr.mxu0 0.0
    %2462 = vmatpush1.xpose.msra.mxu0 0.0
    %2463 = vmatprep.subr.mxu0 0.0
    %2464 = vmatpush1.xpose.msra.mxu0 0.0
    %2465 = vmatprep.subr.mxu0 0.0
    %2466 = vmatpush1.xpose.msra.mxu0 0.0
    %2467 = vmatprep.subr.mxu0 0.0
    %2468 = vmatpush1.xpose.msra.mxu0 0.0
    %2469 = vmatprep.subr.mxu0 0.0
    %2470 = vmatpush1.xpose.msra.mxu0 0.0
    %2471 = vmatprep.subr.mxu0 0.0
    %2472 = vmatpush1.xpose.msra.mxu0 0.0
    %2473 = vmatprep.subr.mxu0 0.0
    %2474 = vmatpush1.xpose.msra.mxu0 0.0
    %2475 = vmatprep.subr.mxu0 0.0
    %2476 = vmatpush1.xpose.msra.mxu0 0.0
    %2477 = vmatprep.subr.mxu0 0.0
    %2478 = vmatpush1.xpose.msra.mxu0 0.0
    %2479 = vmatprep.subr.mxu0 0.0
    %2480 = vmatpush1.xpose.msra.mxu0 0.0
    %2481 = vmatprep.subr.mxu0 0.0
    %2482 = vmatpush1.xpose.msra.mxu0 0.0
    %2483 = vmatprep.subr.mxu0 0.0
    %2484 = vmatpush1.xpose.msra.mxu0 0.0
    %2485 = vmatprep.mubr.f32.mxu0 0.0
    %2486 = vmatmul.mubr.f32.gmra.mrb[0].mxu0 %v689
    %v2487 = vpop.f32.mrb[0].mxu0
    %v2488 = vadd.f32 0.0, %v2487
    %v2489 = vpop.f32.mrb[0].mxu0
    %2490 = vdwg.mxu0
    %v2491 = vmul.f32 %v2488, 0.35355338
    %v2492 = vsel %vm1072, %v2491, -inf
    %2493 = vmax.xlane.f32.xlu0 %v2492
    %v2494 = vpop.xlane.xlu0 %2493
    %v2495 = vsub.f32 %v2491, %v2494
    %v2496 = vmul.f32 %v2495, 1.442695
    %v2497 = vpow.pop %v2496
    %v2498 = vsel %vm1072, %v2497, 0.0
    %2499 = vadd.xlane.f32.xlu0 %v2498
    %v2500 = vpop.xlane.xlu0 %2499
    %v2501 = vrcp.pop %v2500
    %v2502 = vmul.f32 %v2497, %v2501
    %v2504 = vsel %vm1072, %v2502, 0
    %2506 = vmatprep.subr.mxu0 0.0
    %2507 = vmatpush1.msra.mxu0 %v997
    %2508 = vmatprep.subr.mxu0 0.0
    %2509 = vmatpush1.msra.mxu0 0.0
    %2510 = vmatprep.subr.mxu0 0.0
    %2511 = vmatpush1.msra.mxu0 0.0
    %2512 = vmatprep.subr.mxu0 0.0
    %2513 = vmatpush1.msra.mxu0 0.0
    %2514 = vmatprep.subr.mxu0 0.0
    %2515 = vmatpush1.msra.mxu0 0.0
    %2516 = vmatprep.subr.mxu0 0.0
    %2517 = vmatpush1.msra.mxu0 0.0
    %2518 = vmatprep.subr.mxu0 0.0
    %2519 = vmatpush1.msra.mxu0 0.0
    %2520 = vmatprep.subr.mxu0 0.0
    %2521 = vmatpush1.msra.mxu0 0.0
    %2522 = vmatprep.subr.mxu0 0.0
    %2523 = vmatpush1.msra.mxu0 0.0
    %2524 = vmatprep.subr.mxu0 0.0
    %2525 = vmatpush1.msra.mxu0 0.0
    %2526 = vmatprep.subr.mxu0 0.0
    %2527 = vmatpush1.msra.mxu0 0.0
    %2528 = vmatprep.subr.mxu0 0.0
    %2529 = vmatpush1.msra.mxu0 0.0
    %2530 = vmatprep.subr.mxu0 0.0
    %2531 = vmatpush1.msra.mxu0 0.0
    %2532 = vmatprep.subr.mxu0 0.0
    %2533 = vmatpush1.msra.mxu0 0.0
    %2534 = vmatprep.subr.mxu0 0.0
    %2535 = vmatpush1.msra.mxu0 0.0
    %2536 = vmatprep.subr.mxu0 0.0
    %2537 = vmatpush1.msra.mxu0 0.0
    %2538 = vmatprep.subr.mxu0 0.0
    %2539 = vmatpush1.msra.mxu0 0.0
    %2540 = vmatprep.subr.mxu0 0.0
    %2541 = vmatpush1.msra.mxu0 0.0
    %2542 = vmatprep.subr.mxu0 0.0
    %2543 = vmatpush1.msra.mxu0 0.0
    %2544 = vmatprep.subr.mxu0 0.0
    %2545 = vmatpush1.msra.mxu0 0.0
    %2546 = vmatprep.subr.mxu0 0.0
    %2547 = vmatpush1.msra.mxu0 0.0
    %2548 = vmatprep.subr.mxu0 0.0
    %2549 = vmatpush1.msra.mxu0 0.0
    %2550 = vmatprep.subr.mxu0 0.0
    %2551 = vmatpush1.msra.mxu0 0.0
    %2552 = vmatprep.subr.mxu0 0.0
    %2553 = vmatpush1.msra.mxu0 0.0
    %2554 = vmatprep.subr.mxu0 0.0
    %2555 = vmatpush1.msra.mxu0 0.0
    %2556 = vmatprep.subr.mxu0 0.0
    %2557 = vmatpush1.msra.mxu0 0.0
    %2558 = vmatprep.subr.mxu0 0.0
    %2559 = vmatpush1.msra.mxu0 0.0
    %2560 = vmatprep.subr.mxu0 0.0
    %2561 = vmatpush1.msra.mxu0 0.0
    %2562 = vmatprep.subr.mxu0 0.0
    %2563 = vmatpush1.msra.mxu0 0.0
    %2564 = vmatprep.subr.mxu0 0.0
    %2565 = vmatpush1.msra.mxu0 0.0
    %2566 = vmatprep.subr.mxu0 0.0
    %2567 = vmatpush1.msra.mxu0 0.0
    %2568 = vmatprep.subr.mxu0 0.0
    %2569 = vmatpush1.msra.mxu0 0.0
    %2570 = vmatprep.mubr.f32.mxu0 0.0
    %2571 = vmatmul.mubr.f32.gmra.mrb[0].mxu0 %v2504
    %v2572 = vpop.f32.mrb[0].mxu0
    %v2573 = vadd.f32 0.0, %v2572
    %v2574 = vpop.f32.mrb[0].mxu0
    %2575 = vdwg.mxu0
    %2576 = vmatprep.subr.mxu0 0.0
    %2577 = vmatpush1.msra.mxu0 %v1641
    %2578 = vmatprep.subr.mxu0 0.0
    %2579 = vmatpush1.msra.mxu0 %v1642
    %2580 = vmatprep.subr.mxu0 0.0
    %2581 = vmatpush1.msra.mxu0 %v1643
    %2582 = vmatprep.subr.mxu0 0.0
    %2583 = vmatpush1.msra.mxu0 %v1644
    %2584 = vmatprep.subr.mxu0 0.0
    %2585 = vmatpush1.msra.mxu0 %v1645
    %2586 = vmatprep.subr.mxu0 0.0
    %2587 = vmatpush1.msra.mxu0 %v1646
    %2588 = vmatprep.subr.mxu0 0.0
    %2589 = vmatpush1.msra.mxu0 %v1647
    %2590 = vmatprep.subr.mxu0 0.0
    %2591 = vmatpush1.msra.mxu0 %v1648
    %2592 = vmatprep.subr.mxu0 0.0
    %2593 = vmatpush1.msra.mxu0 %v1649
    %2594 = vmatprep.subr.mxu0 0.0
    %2595 = vmatpush1.msra.mxu0 %v1650
    %2596 = vmatprep.subr.mxu0 0.0
    %2597 = vmatpush1.msra.mxu0 %v1651
    %2598 = vmatprep.subr.mxu0 0.0
    %2599 = vmatpush1.msra.mxu0 %v1652
    %2600 = vmatprep.subr.mxu0 0.0
    %2601 = vmatpush1.msra.mxu0 %v1653
    %2602 = vmatprep.subr.mxu0 0.0
    %2603 = vmatpush1.msra.mxu0 %v1654
    %2604 = vmatprep.subr.mxu0 0.0
    %2605 = vmatpush1.msra.mxu0 %v1655
    %2606 = vmatprep.subr.mxu0 0.0
    %2607 = vmatpush1.msra.mxu0 %v1656
    %2608 = vmatprep.subr.mxu0 0.0
    %2609 = vmatpush1.msra.mxu0 0.0
    %2610 = vmatprep.subr.mxu0 0.0
    %2611 = vmatpush1.msra.mxu0 0.0
    %2612 = vmatprep.subr.mxu0 0.0
    %2613 = vmatpush1.msra.mxu0 0.0
    %2614 = vmatprep.subr.mxu0 0.0
    %2615 = vmatpush1.msra.mxu0 0.0
    %2616 = vmatprep.subr.mxu0 0.0
    %2617 = vmatpush1.msra.mxu0 0.0
    %2618 = vmatprep.subr.mxu0 0.0
    %2619 = vmatpush1.msra.mxu0 0.0
    %2620 = vmatprep.subr.mxu0 0.0
    %2621 = vmatpush1.msra.mxu0 0.0
    %2622 = vmatprep.subr.mxu0 0.0
    %2623 = vmatpush1.msra.mxu0 0.0
    %2624 = vmatprep.subr.mxu0 0.0
    %2625 = vmatpush1.msra.mxu0 0.0
    %2626 = vmatprep.subr.mxu0 0.0
    %2627 = vmatpush1.msra.mxu0 0.0
    %2628 = vmatprep.subr.mxu0 0.0
    %2629 = vmatpush1.msra.mxu0 0.0
    %2630 = vmatprep.subr.mxu0 0.0
    %2631 = vmatpush1.msra.mxu0 0.0
    %2632 = vmatprep.subr.mxu0 0.0
    %2633 = vmatpush1.msra.mxu0 0.0
    %2634 = vmatprep.subr.mxu0 0.0
    %2635 = vmatpush1.msra.mxu0 0.0
    %2636 = vmatprep.subr.mxu0 0.0
    %2637 = vmatpush1.msra.mxu0 0.0
    %2638 = vmatprep.subr.mxu0 0.0
    %2639 = vmatpush1.msra.mxu0 0.0
    %2640 = vmatprep.mubr.f32.mxu0 0.0
    %2641 = vmatmul.mubr.f32.gmra.mrb[0].mxu0 %v2573
    %v2642 = vpop.f32.mrb[0].mxu0
    %v2643 = vadd.f32 0.0, %v2642
    %v2644 = vpop.f32.mrb[0].mxu0
    %2645 = vdwg.mxu0
    %v2646 = vadd.f32 %v2418, %v2643
    %2647 = vmatprep.subr.mxu0 0.0
    %2648 = vmatpush1.xpose.msra.mxu0 %v845
    %2649 = vmatprep.subr.mxu0 0.0
    %2650 = vmatpush1.xpose.msra.mxu0 0.0
    %2651 = vmatprep.subr.mxu0 0.0
    %2652 = vmatpush1.xpose.msra.mxu0 0.0
    %2653 = vmatprep.subr.mxu0 0.0
    %2654 = vmatpush1.xpose.msra.mxu0 0.0
    %2655 = vmatprep.subr.mxu0 0.0
    %2656 = vmatpush1.xpose.msra.mxu0 0.0
    %2657 = vmatprep.subr.mxu0 0.0
    %2658 = vmatpush1.xpose.msra.mxu0 0.0
    %2659 = vmatprep.subr.mxu0 0.0
    %2660 = vmatpush1.xpose.msra.mxu0 0.0
    %2661 = vmatprep.subr.mxu0 0.0
    %2662 = vmatpush1.xpose.msra.mxu0 0.0
    %2663 = vmatprep.subr.mxu0 0.0
    %2664 = vmatpush1.xpose.msra.mxu0 0.0
    %2665 = vmatprep.subr.mxu0 0.0
    %2666 = vmatpush1.xpose.msra.mxu0 0.0
    %2667 = vmatprep.subr.mxu0 0.0
    %2668 = vmatpush1.xpose.msra.mxu0 0.0
    %2669 = vmatprep.subr.mxu0 0.0
    %2670 = vmatpush1.xpose.msra.mxu0 0.0
    %2671 = vmatprep.subr.mxu0 0.0
    %2672 = vmatpush1.xpose.msra.mxu0 0.0
    %2673 = vmatprep.subr.mxu0 0.0
    %2674 = vmatpush1.xpose.msra.mxu0 0.0
    %2675 = vmatprep.subr.mxu0 0.0
    %2676 = vmatpush1.xpose.msra.mxu0 0.0
    %2677 = vmatprep.subr.mxu0 0.0
    %2678 = vmatpush1.xpose.msra.mxu0 0.0
    %2679 = vmatprep.subr.mxu0 0.0
    %2680 = vmatpush1.xpose.msra.mxu0 0.0
    %2681 = vmatprep.subr.mxu0 0.0
    %2682 = vmatpush1.xpose.msra.mxu0 0.0
    %2683 = vmatprep.subr.mxu0 0.0
    %2684 = vmatpush1.xpose.msra.mxu0 0.0
    %2685 = vmatprep.subr.mxu0 0.0
    %2686 = vmatpush1.xpose.msra.mxu0 0.0
    %2687 = vmatprep.subr.mxu0 0.0
    %2688 = vmatpush1.xpose.msra.mxu0 0.0
    %2689 = vmatprep.subr.mxu0 0.0
    %2690 = vmatpush1.xpose.msra.mxu0 0.0
    %2691 = vmatprep.subr.mxu0 0.0
    %2692 = vmatpush1.xpose.msra.mxu0 0.0
    %2693 = vmatprep.subr.mxu0 0.0
    %2694 = vmatpush1.xpose.msra.mxu0 0.0
    %2695 = vmatprep.subr.mxu0 0.0
    %2696 = vmatpush1.xpose.msra.mxu0 0.0
    %2697 = vmatprep.subr.mxu0 0.0
    %2698 = vmatpush1.xpose.msra.mxu0 0.0
    %2699 = vmatprep.subr.mxu0 0.0
    %2700 = vmatpush1.xpose.msra.mxu0 0.0
    %2701 = vmatprep.subr.mxu0 0.0
    %2702 = vmatpush1.xpose.msra.mxu0 0.0
    %2703 = vmatprep.subr.mxu0 0.0
    %2704 = vmatpush1.xpose.msra.mxu0 0.0
    %2705 = vmatprep.subr.mxu0 0.0
    %2706 = vmatpush1.xpose.msra.mxu0 0.0
    %2707 = vmatprep.subr.mxu0 0.0
    %2708 = vmatpush1.xpose.msra.mxu0 0.0
    %2709 = vmatprep.subr.mxu0 0.0
    %2710 = vmatpush1.xpose.msra.mxu0 0.0
    %2711 = vmatprep.mubr.f32.mxu0 0.0
    %2712 = vmatmul.mubr.f32.gmra.mrb[0].mxu0 %v691
    %v2713 = vpop.f32.mrb[0].mxu0
    %v2714 = vadd.f32 0.0, %v2713
    %v2715 = vpop.f32.mrb[0].mxu0
    %2716 = vdwg.mxu0
    %v2717 = vmul.f32 %v2714, 0.35355338
    %v2718 = vsel %vm1072, %v2717, -inf
    %2719 = vmax.xlane.f32.xlu0 %v2718
    %v2720 = vpop.xlane.xlu0 %2719
    %v2721 = vsub.f32 %v2717, %v2720
    %v2722 = vmul.f32 %v2721, 1.442695
    %v2723 = vpow.pop %v2722
    %v2724 = vsel %vm1072, %v2723, 0.0
    %2725 = vadd.xlane.f32.xlu0 %v2724
    %v2726 = vpop.xlane.xlu0 %2725
    %v2727 = vrcp.pop %v2726
    %v2728 = vmul.f32 %v2723, %v2727
    %v2730 = vsel %vm1072, %v2728, 0
    %2732 = vmatprep.subr.mxu0 0.0
    %2733 = vmatpush1.msra.mxu0 %v999
    %2734 = vmatprep.subr.mxu0 0.0
    %2735 = vmatpush1.msra.mxu0 0.0
    %2736 = vmatprep.subr.mxu0 0.0
    %2737 = vmatpush1.msra.mxu0 0.0
    %2738 = vmatprep.subr.mxu0 0.0
    %2739 = vmatpush1.msra.mxu0 0.0
    %2740 = vmatprep.subr.mxu0 0.0
    %2741 = vmatpush1.msra.mxu0 0.0
    %2742 = vmatprep.subr.mxu0 0.0
    %2743 = vmatpush1.msra.mxu0 0.0
    %2744 = vmatprep.subr.mxu0 0.0
    %2745 = vmatpush1.msra.mxu0 0.0
    %2746 = vmatprep.subr.mxu0 0.0
    %2747 = vmatpush1.msra.mxu0 0.0
    %2748 = vmatprep.subr.mxu0 0.0
    %2749 = vmatpush1.msra.mxu0 0.0
    %2750 = vmatprep.subr.mxu0 0.0
    %2751 = vmatpush1.msra.mxu0 0.0
    %2752 = vmatprep.subr.mxu0 0.0
    %2753 = vmatpush1.msra.mxu0 0.0
    %2754 = vmatprep.subr.mxu0 0.0
    %2755 = vmatpush1.msra.mxu0 0.0
    %2756 = vmatprep.subr.mxu0 0.0
    %2757 = vmatpush1.msra.mxu0 0.0
    %2758 = vmatprep.subr.mxu0 0.0
    %2759 = vmatpush1.msra.mxu0 0.0
    %2760 = vmatprep.subr.mxu0 0.0
    %2761 = vmatpush1.msra.mxu0 0.0
    %2762 = vmatprep.subr.mxu0 0.0
    %2763 = vmatpush1.msra.mxu0 0.0
    %2764 = vmatprep.subr.mxu0 0.0
    %2765 = vmatpush1.msra.mxu0 0.0
    %2766 = vmatprep.subr.mxu0 0.0
    %2767 = vmatpush1.msra.mxu0 0.0
    %2768 = vmatprep.subr.mxu0 0.0
    %2769 = vmatpush1.msra.mxu0 0.0
    %2770 = vmatprep.subr.mxu0 0.0
    %2771 = vmatpush1.msra.mxu0 0.0
    %2772 = vmatprep.subr.mxu0 0.0
    %2773 = vmatpush1.msra.mxu0 0.0
    %2774 = vmatprep.subr.mxu0 0.0
    %2775 = vmatpush1.msra.mxu0 0.0
    %2776 = vmatprep.subr.mxu0 0.0
    %2777 = vmatpush1.msra.mxu0 0.0
    %2778 = vmatprep.subr.mxu0 0.0
    %2779 = vmatpush1.msra.mxu0 0.0
    %2780 = vmatprep.subr.mxu0 0.0
    %2781 = vmatpush1.msra.mxu0 0.0
    %2782 = vmatprep.subr.mxu0 0.0
    %2783 = vmatpush1.msra.mxu0 0.0
    %2784 = vmatprep.subr.mxu0 0.0
    %2785 = vmatpush1.msra.mxu0 0.0
    %2786 = vmatprep.subr.mxu0 0.0
    %2787 = vmatpush1.msra.mxu0 0.0
    %2788 = vmatprep.subr.mxu0 0.0
    %2789 = vmatpush1.msra.mxu0 0.0
    %2790 = vmatprep.subr.mxu0 0.0
    %2791 = vmatpush1.msra.mxu0 0.0
    %2792 = vmatprep.subr.mxu0 0.0
    %2793 = vmatpush1.msra.mxu0 0.0
    %2794 = vmatprep.subr.mxu0 0.0
    %2795 = vmatpush1.msra.mxu0 0.0
    %2796 = vmatprep.mubr.f32.mxu0 0.0
    %2797 = vmatmul.mubr.f32.gmra.mrb[0].mxu0 %v2730
    %v2798 = vpop.f32.mrb[0].mxu0
    %v2799 = vadd.f32 0.0, %v2798
    %v2800 = vpop.f32.mrb[0].mxu0
    %2801 = vdwg.mxu0
    %2802 = vmatprep.subr.mxu0 0.0
    %2803 = vmatpush1.msra.mxu0 %v1884
    %2804 = vmatprep.subr.mxu0 0.0
    %2805 = vmatpush1.msra.mxu0 %v1885
    %2806 = vmatprep.subr.mxu0 0.0
    %2807 = vmatpush1.msra.mxu0 %v1886
    %2808 = vmatprep.subr.mxu0 0.0
    %2809 = vmatpush1.msra.mxu0 %v1887
    %2810 = vmatprep.subr.mxu0 0.0
    %2811 = vmatpush1.msra.mxu0 %v1888
    %2812 = vmatprep.subr.mxu0 0.0
    %2813 = vmatpush1.msra.mxu0 %v1889
    %2814 = vmatprep.subr.mxu0 0.0
    %2815 = vmatpush1.msra.mxu0 %v1890
    %2816 = vmatprep.subr.mxu0 0.0
    %2817 = vmatpush1.msra.mxu0 %v1891
    %2818 = vmatprep.subr.mxu0 0.0
    %2819 = vmatpush1.msra.mxu0 %v1892
    %2820 = vmatprep.subr.mxu0 0.0
    %2821 = vmatpush1.msra.mxu0 %v1893
    %2822 = vmatprep.subr.mxu0 0.0
    %2823 = vmatpush1.msra.mxu0 %v1894
    %2824 = vmatprep.subr.mxu0 0.0
    %2825 = vmatpush1.msra.mxu0 %v1895
    %2826 = vmatprep.subr.mxu0 0.0
    %2827 = vmatpush1.msra.mxu0 %v1896
    %2828 = vmatprep.subr.mxu0 0.0
    %2829 = vmatpush1.msra.mxu0 %v1897
    %2830 = vmatprep.subr.mxu0 0.0
    %2831 = vmatpush1.msra.mxu0 %v1898
    %2832 = vmatprep.subr.mxu0 0.0
    %2833 = vmatpush1.msra.mxu0 %v1899
    %2834 = vmatprep.subr.mxu0 0.0
    %2835 = vmatpush1.msra.mxu0 0.0
    %2836 = vmatprep.subr.mxu0 0.0
    %2837 = vmatpush1.msra.mxu0 0.0
    %2838 = vmatprep.subr.mxu0 0.0
    %2839 = vmatpush1.msra.mxu0 0.0
    %2840 = vmatprep.subr.mxu0 0.0
    %2841 = vmatpush1.msra.mxu0 0.0
    %2842 = vmatprep.subr.mxu0 0.0
    %2843 = vmatpush1.msra.mxu0 0.0
    %2844 = vmatprep.subr.mxu0 0.0
    %2845 = vmatpush1.msra.mxu0 0.0
    %2846 = vmatprep.subr.mxu0 0.0
    %2847 = vmatpush1.msra.mxu0 0.0
    %2848 = vmatprep.subr.mxu0 0.0
    %2849 = vmatpush1.msra.mxu0 0.0
    %2850 = vmatprep.subr.mxu0 0.0
    %2851 = vmatpush1.msra.mxu0 0.0
    %2852 = vmatprep.subr.mxu0 0.0
    %2853 = vmatpush1.msra.mxu0 0.0
    %2854 = vmatprep.subr.mxu0 0.0
    %2855 = vmatpush1.msra.mxu0 0.0
    %2856 = vmatprep.subr.mxu0 0.0
    %2857 = vmatpush1.msra.mxu0 0.0
    %2858 = vmatprep.subr.mxu0 0.0
    %2859 = vmatpush1.msra.mxu0 0.0
    %2860 = vmatprep.subr.mxu0 0.0
    %2861 = vmatpush1.msra.mxu0 0.0
    %2862 = vmatprep.subr.mxu0 0.0
    %2863 = vmatpush1.msra.mxu0 0.0
    %2864 = vmatprep.subr.mxu0 0.0
    %2865 = vmatpush1.msra.mxu0 0.0
    %2866 = vmatprep.mubr.f32.mxu0 0.0
    %2867 = vmatmul.mubr.f32.gmra.mrb[0].mxu0 %v2799
    %v2868 = vpop.f32.mrb[0].mxu0
    %v2869 = vadd.f32 0.0, %v2868
    %v2870 = vpop.f32.mrb[0].mxu0
    %2871 = vdwg.mxu0
    %v2872 = vadd.f32 %v2646, %v2869
    %v2873 = vld [vmem:[#allocation7] sm:$0x1]
    %v2875 = vlaneseq
    %v2876 = vshrl.u32 %v2875, 7
    %v2877 = vsub.s32 0, %v2876
    %v2878 = vrot.slane %v2873, %v2877
    %v2880 = vadd.f32 %v1970, %v2878
    %v2881 = vadd.f32 %v2872, %v2878
    %v2882 = vadd.f32 %v281, %v2880
    %v2883 = vadd.f32 %v282, %v2881
    %v2884 = vld [vmem:[#allocation9] sm:$0x1]
    %v2885 = vld [vmem:[#allocation10] sm:$0x1]
    %2886 = vadd.xlane.f32.xlu0 %v2882
    %v2887 = vpop.xlane.xlu0 %2886
    %2888 = vadd.xlane.f32.xlu0 %v2883
    %v2889 = vpop.xlane.xlu0 %2888
    %v2890 = vmul.f32 %v2887, 0.03125
    %v2891 = vmul.f32 %v2889, 0.03125
    %v2892 = vsub.f32 %v2882, %v2890
    %v2893 = vsub.f32 %v2883, %v2891
    %v2894 = vmul.f32 %v2892, %v274
    %v2895 = vmul.f32 %v2893, %v274
    %v2896 = vmul.f32 %v2894, %v2894
    %v2897 = vmul.f32 %v2895, %v2895
    %2898 = vadd.xlane.f32.xlu0 %v2896
    %v2899 = vpop.xlane.xlu0 %2898
    %2900 = vadd.xlane.f32.xlu0 %v2897
    %v2901 = vpop.xlane.xlu0 %2900
    %v2902 = vmul.f32 %v2899, 0.03125
    %v2903 = vmul.f32 %v2901, 0.03125
    %v2904 = vadd.f32 %v2902, 1e-05
    %v2905 = vadd.f32 %v2903, 1e-05
    %v2906 = vrsqrt.pop %v2904
    %v2907 = vrsqrt.pop %v2905
    %v2908 = vmul.f32 %v2894, %v2906
    %v2909 = vmul.f32 %v2895, %v2907
    %v2911 = vlaneseq
    %v2912 = vshrl.u32 %v2911, 7
    %v2913 = vsub.s32 0, %v2912
    %v2914 = vrot.slane %v2884, %v2913
    %v2916 = vmul.f32 %v2908, %v2914
    %v2917 = vmul.f32 %v2909, %v2914
    %v2919 = vlaneseq
    %v2920 = vshrl.u32 %v2919, 7
    %v2921 = vsub.s32 0, %v2920
    %v2922 = vrot.slane %v2885, %v2921
    %v2924 = vadd.f32 %v2916, %v2922
    %v2925 = vadd.f32 %v2917, %v2922
    %v2926 = vld [vmem:[#allocation12] sm:$0xff]
    %v2927 = vld [vmem:[#allocation12 + $0x8] sm:$0xff]
    %v2928 = vld [vmem:[#allocation12 + $0x10] sm:$0xff]
    %v2929 = vld [vmem:[#allocation12 + $0x18] sm:$0xff]
    %v2930 = vld [vmem:[#allocation12 + $0x20] sm:$0xff]
    %v2931 = vld [vmem:[#allocation12 + $0x28] sm:$0xff]
    %v2932 = vld [vmem:[#allocation12 + $0x30] sm:$0xff]
    %v2933 = vld [vmem:[#allocation12 + $0x38] sm:$0xff]
    %v2934 = vld [vmem:[#allocation12 + $0x40] sm:$0xff]
    %v2935 = vld [vmem:[#allocation12 + $0x48] sm:$0xff]
    %v2936 = vld [vmem:[#allocation12 + $0x50] sm:$0xff]
    %v2937 = vld [vmem:[#allocation12 + $0x58] sm:$0xff]
    %v2938 = vld [vmem:[#allocation12 + $0x60] sm:$0xff]
    %v2939 = vld [vmem:[#allocation12 + $0x68] sm:$0xff]
    %v2940 = vld [vmem:[#allocation12 + $0x70] sm:$0xff]
    %v2941 = vld [vmem:[#allocation12 + $0x78] sm:$0xff]
    %v2942 = vld [vmem:[#allocation13] sm:$0x1]
    %v2944 = vlaneseq
    %v2945 = vshrl.u32 %v2944, 7
    %v2946 = vsub.s32 0, %v2945
    %v2947 = vrot.slane %v2942, %v2946
    %2949 = vmatprep.subr.mxu0 0.0
    %2950 = vmatpush1.msra.mxu0 %v2926
    %2951 = vmatprep.subr.mxu0 0.0
    %2952 = vmatpush1.msra.mxu0 %v2927
    %2953 = vmatprep.subr.mxu0 0.0
    %2954 = vmatpush1.msra.mxu0 %v2928
    %2955 = vmatprep.subr.mxu0 0.0
    %2956 = vmatpush1.msra.mxu0 %v2929
    %2957 = vmatprep.subr.mxu0 0.0
    %2958 = vmatpush1.msra.mxu0 %v2930
    %2959 = vmatprep.subr.mxu0 0.0
    %2960 = vmatpush1.msra.mxu0 %v2931
    %2961 = vmatprep.subr.mxu0 0.0
    %2962 = vmatpush1.msra.mxu0 %v2932
    %2963 = vmatprep.subr.mxu0 0.0
    %2964 = vmatpush1.msra.mxu0 %v2933
    %2965 = vmatprep.subr.mxu0 0.0
    %2966 = vmatpush1.msra.mxu0 %v2934
    %2967 = vmatprep.subr.mxu0 0.0
    %2968 = vmatpush1.msra.mxu0 %v2935
    %2969 = vmatprep.subr.mxu0 0.0
    %2970 = vmatpush1.msra.mxu0 %v2936
    %2971 = vmatprep.subr.mxu0 0.0
    %2972 = vmatpush1.msra.mxu0 %v2937
    %2973 = vmatprep.subr.mxu0 0.0
    %2974 = vmatpush1.msra.mxu0 %v2938
    %2975 = vmatprep.subr.mxu0 0.0
    %2976 = vmatpush1.msra.mxu0 %v2939
    %2977 = vmatprep.subr.mxu0 0.0
    %2978 = vmatpush1.msra.mxu0 %v2940
    %2979 = vmatprep.subr.mxu0 0.0
    %2980 = vmatpush1.msra.mxu0 %v2941
    %2981 = vmatprep.subr.mxu0 0.0
    %2982 = vmatpush1.msra.mxu0 0.0
    %2983 = vmatprep.subr.mxu0 0.0
    %2984 = vmatpush1.msra.mxu0 0.0
    %2985 = vmatprep.subr.mxu0 0.0
    %2986 = vmatpush1.msra.mxu0 0.0
    %2987 = vmatprep.subr.mxu0 0.0
    %2988 = vmatpush1.msra.mxu0 0.0
    %2989 = vmatprep.subr.mxu0 0.0
    %2990 = vmatpush1.msra.mxu0 0.0
    %2991 = vmatprep.subr.mxu0 0.0
    %2992 = vmatpush1.msra.mxu0 0.0
    %2993 = vmatprep.subr.mxu0 0.0
    %2994 = vmatpush1.msra.mxu0 0.0
    %2995 = vmatprep.subr.mxu0 0.0
    %2996 = vmatpush1.msra.mxu0 0.0
    %2997 = vmatprep.subr.mxu0 0.0
    %2998 = vmatpush1.msra.mxu0 0.0
    %2999 = vmatprep.subr.mxu0 0.0
    %3000 = vmatpush1.msra.mxu0 0.0
    %3001 = vmatprep.subr.mxu0 0.0
    %3002 = vmatpush1.msra.mxu0 0.0
    %3003 = vmatprep.subr.mxu0 0.0
    %3004 = vmatpush1.msra.mxu0 0.0
    %3005 = vmatprep.subr.mxu0 0.0
    %3006 = vmatpush1.msra.mxu0 0.0
    %3007 = vmatprep.subr.mxu0 0.0
    %3008 = vmatpush1.msra.mxu0 0.0
    %3009 = vmatprep.subr.mxu0 0.0
    %3010 = vmatpush1.msra.mxu0 0.0
    %3011 = vmatprep.subr.mxu0 0.0
    %3012 = vmatpush1.msra.mxu0 0.0
    %3013 = vmatprep.mubr.f32.mxu0 0.0
    %3014 = vmatmul.mubr.f32.gmra.mrb[0].mxu0 %v2924
    %v3015 = vpop.f32.mrb[0].mxu0
    %v3016 = vadd.f32 %v2947, %v3015
    %v3017 = vpop.f32.mrb[0].mxu0
    %3018 = vmatprep.mubr.f32.mxu0 0.0
    %3019 = vmatmul.mubr.f32.gmra.mrb[0].mxu0 %v2925
    %v3020 = vpop.f32.mrb[0].mxu0
    %v3021 = vadd.f32 %v2947, %v3020
    %v3022 = vpop.f32.mrb[0].mxu0
    %3023 = vdwg.mxu0
    %v3024 = vmax.f32 %v3016, 0.0
    %v3025 = vmax.f32 %v3021, 0.0
    %v3026 = vld [vmem:[#allocation15] sm:$0xff]
    %v3027 = vld [vmem:[#allocation15 + $0x8] sm:$0xff]
    %v3028 = vld [vmem:[#allocation15 + $0x10] sm:$0xff]
    %v3029 = vld [vmem:[#allocation15 + $0x18] sm:$0xff]
    %v3030 = vld [vmem:[#allocation15 + $0x20] sm:$0xff]
    %v3031 = vld [vmem:[#allocation15 + $0x28] sm:$0xff]
    %v3032 = vld [vmem:[#allocation15 + $0x30] sm:$0xff]
    %v3033 = vld [vmem:[#allocation15 + $0x38] sm:$0xff]
    %v3034 = vld [vmem:[#allocation15 + $0x40] sm:$0xff]
    %v3035 = vld [vmem:[#allocation15 + $0x48] sm:$0xff]
    %v3036 = vld [vmem:[#allocation15 + $0x50] sm:$0xff]
    %v3037 = vld [vmem:[#allocation15 + $0x58] sm:$0xff]
    %v3038 = vld [vmem:[#allocation15 + $0x60] sm:$0xff]
    %v3039 = vld [vmem:[#allocation15 + $0x68] sm:$0xff]
    %v3040 = vld [vmem:[#allocation15 + $0x70] sm:$0xff]
    %v3041 = vld [vmem:[#allocation15 + $0x78] sm:$0xff]
    %v3042 = vld [vmem:[#allocation16] sm:$0x1]
    %v3044 = vlaneseq
    %v3045 = vshrl.u32 %v3044, 7
    %v3046 = vsub.s32 0, %v3045
    %v3047 = vrot.slane %v3042, %v3046
    %3049 = vmatprep.subr.mxu0 0.0
    %3050 = vmatpush1.msra.mxu0 %v3026
    %3051 = vmatprep.subr.mxu0 0.0
    %3052 = vmatpush1.msra.mxu0 %v3027
    %3053 = vmatprep.subr.mxu0 0.0
    %3054 = vmatpush1.msra.mxu0 %v3028
    %3055 = vmatprep.subr.mxu0 0.0
    %3056 = vmatpush1.msra.mxu0 %v3029
    %3057 = vmatprep.subr.mxu0 0.0
    %3058 = vmatpush1.msra.mxu0 %v3030
    %3059 = vmatprep.subr.mxu0 0.0
    %3060 = vmatpush1.msra.mxu0 %v3031
    %3061 = vmatprep.subr.mxu0 0.0
    %3062 = vmatpush1.msra.mxu0 %v3032
    %3063 = vmatprep.subr.mxu0 0.0
    %3064 = vmatpush1.msra.mxu0 %v3033
    %3065 = vmatprep.subr.mxu0 0.0
    %3066 = vmatpush1.msra.mxu0 %v3034
    %3067 = vmatprep.subr.mxu0 0.0
    %3068 = vmatpush1.msra.mxu0 %v3035
    %3069 = vmatprep.subr.mxu0 0.0
    %3070 = vmatpush1.msra.mxu0 %v3036
    %3071 = vmatprep.subr.mxu0 0.0
    %3072 = vmatpush1.msra.mxu0 %v3037
    %3073 = vmatprep.subr.mxu0 0.0
    %3074 = vmatpush1.msra.mxu0 %v3038
    %3075 = vmatprep.subr.mxu0 0.0
    %3076 = vmatpush1.msra.mxu0 %v3039
    %3077 = vmatprep.subr.mxu0 0.0
    %3078 = vmatpush1.msra.mxu0 %v3040
    %3079 = vmatprep.subr.mxu0 0.0
    %3080 = vmatpush1.msra.mxu0 %v3041
    %3081 = vmatprep.subr.mxu0 0.0
    %3082 = vmatpush1.msra.mxu0 0.0
    %3083 = vmatprep.subr.mxu0 0.0
    %3084 = vmatpush1.msra.mxu0 0.0
    %3085 = vmatprep.subr.mxu0 0.0
    %3086 = vmatpush1.msra.mxu0 0.0
    %3087 = vmatprep.subr.mxu0 0.0
    %3088 = vmatpush1.msra.mxu0 0.0
    %3089 = vmatprep.subr.mxu0 0.0
    %3090 = vmatpush1.msra.mxu0 0.0
    %3091 = vmatprep.subr.mxu0 0.0
    %3092 = vmatpush1.msra.mxu0 0.0
    %3093 = vmatprep.subr.mxu0 0.0
    %3094 = vmatpush1.msra.mxu0 0.0
    %3095 = vmatprep.subr.mxu0 0.0
    %3096 = vmatpush1.msra.mxu0 0.0
    %3097 = vmatprep.subr.mxu0 0.0
    %3098 = vmatpush1.msra.mxu0 0.0
    %3099 = vmatprep.subr.mxu0 0.0
    %3100 = vmatpush1.msra.mxu0 0.0
    %3101 = vmatprep.subr.mxu0 0.0
    %3102 = vmatpush1.msra.mxu0 0.0
    %3103 = vmatprep.subr.mxu0 0.0
    %3104 = vmatpush1.msra.mxu0 0.0
    %3105 = vmatprep.subr.mxu0 0.0
    %3106 = vmatpush1.msra.mxu0 0.0
    %3107 = vmatprep.subr.mxu0 0.0
    %3108 = vmatpush1.msra.mxu0 0.0
    %3109 = vmatprep.subr.mxu0 0.0
    %3110 = vmatpush1.msra.mxu0 0.0
    %3111 = vmatprep.subr.mxu0 0.0
    %3112 = vmatpush1.msra.mxu0 0.0
    %3113 = vmatprep.mubr.f32.mxu0 0.0
    %3114 = vmatmul.mubr.f32.gmra.mrb[0].mxu0 %v3024
    %v3115 = vpop.f32.mrb[0].mxu0
    %v3116 = vadd.f32 %v3047, %v3115
    %v3117 = vpop.f32.mrb[0].mxu0
    %3118 = vmatprep.mubr.f32.mxu0 0.0
    %3119 = vmatmul.mubr.f32.gmra.mrb[0].mxu0 %v3025
    %v3120 = vpop.f32.mrb[0].mxu0
    %v3121 = vadd.f32 %v3047, %v3120
    %v3122 = vpop.f32.mrb[0].mxu0
    %3123 = vdwg.mxu0
    %v3124 = vadd.f32 %v2924, %v3116
    %v3125 = vadd.f32 %v2925, %v3121
    %v3126 = vld [vmem:[#allocation18] sm:$0x1]
    %v3127 = vld [vmem:[#allocation19] sm:$0x1]
    %3128 = vadd.xlane.f32.xlu0 %v3124
    %v3129 = vpop.xlane.xlu0 %3128
    %3130 = vadd.xlane.f32.xlu0 %v3125
    %v3131 = vpop.xlane.xlu0 %3130
    %v3132 = vmul.f32 %v3129, 0.03125
    %v3133 = vmul.f32 %v3131, 0.03125
    %v3134 = vsub.f32 %v3124, %v3132
    %v3135 = vsub.f32 %v3125, %v3133
    %v3136 = vmul.f32 %v3134, %v274
    %v3137 = vmul.f32 %v3135, %v274
    %v3138 = vmul.f32 %v3136, %v3136
    %v3139 = vmul.f32 %v3137, %v3137
    %3140 = vadd.xlane.f32.xlu0 %v3138
    %v3141 = vpop.xlane.xlu0 %3140
    %3142 = vadd.xlane.f32.xlu0 %v3139
    %v3143 = vpop.xlane.xlu0 %3142
    %v3144 = vmul.f32 %v3141, 0.03125
    %v3145 = vmul.f32 %v3143, 0.03125
    %v3146 = vadd.f32 %v3144, 1e-05
    %v3147 = vadd.f32 %v3145, 1e-05
    %v3148 = vrsqrt.pop %v3146
    %v3149 = vrsqrt.pop %v3147
    %v3150 = vmul.f32 %v3136, %v3148
    %v3151 = vmul.f32 %v3137, %v3149
    %v3153 = vlaneseq
    %v3154 = vshrl.u32 %v3153, 7
    %v3155 = vsub.s32 0, %v3154
    %v3156 = vrot.slane %v3126, %v3155
    %v3158 = vmul.f32 %v3150, %v3156
    %v3159 = vmul.f32 %v3151, %v3156
    %v3161 = vlaneseq
    %v3162 = vshrl.u32 %v3161, 7
    %v3163 = vsub.s32 0, %v3162
    %v3164 = vrot.slane %v3127, %v3163
    %v3166 = vadd.f32 %v3158, %v3164
    %v3167 = vadd.f32 %v3159, %v3164
    %s3168 = scalar_lea.vmem [#allocation2], 1536
    %v3169 = vld [vmem:[%s3168] sm:$0xff]
    %v3170 = vld [vmem:[%s3168 + $0x8] sm:$0xff]
    %v3171 = vld [vmem:[%s3168 + $0x10] sm:$0xff]
    %v3172 = vld [vmem:[%s3168 + $0x18] sm:$0xff]
    %v3173 = vld [vmem:[%s3168 + $0x20] sm:$0xff]
    %v3174 = vld [vmem:[%s3168 + $0x28] sm:$0xff]
    %v3175 = vld [vmem:[%s3168 + $0x30] sm:$0xff]
    %v3176 = vld [vmem:[%s3168 + $0x38] sm:$0xff]
    %v3177 = vld [vmem:[%s3168 + $0x40] sm:$0xff]
    %v3178 = vld [vmem:[%s3168 + $0x48] sm:$0xff]
    %v3179 = vld [vmem:[%s3168 + $0x50] sm:$0xff]
    %v3180 = vld [vmem:[%s3168 + $0x58] sm:$0xff]
    %v3181 = vld [vmem:[%s3168 + $0x60] sm:$0xff]
    %v3182 = vld [vmem:[%s3168 + $0x68] sm:$0xff]
    %v3183 = vld [vmem:[%s3168 + $0x70] sm:$0xff]
    %v3184 = vld [vmem:[%s3168 + $0x78] sm:$0xff]
    %v3185 = vld [vmem:[%s3168 + $0x80] sm:$0xff]
    %v3186 = vld [vmem:[%s3168 + $0x88] sm:$0xff]
    %v3187 = vld [vmem:[%s3168 + $0x90] sm:$0xff]
    %v3188 = vld [vmem:[%s3168 + $0x98] sm:$0xff]
    %v3189 = vld [vmem:[%s3168 + $0xa0] sm:$0xff]
    %v3190 = vld [vmem:[%s3168 + $0xa8] sm:$0xff]
    %v3191 = vld [vmem:[%s3168 + $0xb0] sm:$0xff]
    %v3192 = vld [vmem:[%s3168 + $0xb8] sm:$0xff]
    %v3193 = vld [vmem:[%s3168 + $0xc0] sm:$0xff]
    %v3194 = vld [vmem:[%s3168 + $0xc8] sm:$0xff]
    %v3195 = vld [vmem:[%s3168 + $0xd0] sm:$0xff]
    %v3196 = vld [vmem:[%s3168 + $0xd8] sm:$0xff]
    %v3197 = vld [vmem:[%s3168 + $0xe0] sm:$0xff]
    %v3198 = vld [vmem:[%s3168 + $0xe8] sm:$0xff]
    %v3199 = vld [vmem:[%s3168 + $0xf0] sm:$0xff]
    %v3200 = vld [vmem:[%s3168 + $0xf8] sm:$0xff]
    %v3201 = vld [vmem:[%s3168 + $0x100] sm:$0xff]
    %v3202 = vld [vmem:[%s3168 + $0x108] sm:$0xff]
    %v3203 = vld [vmem:[%s3168 + $0x110] sm:$0xff]
    %v3204 = vld [vmem:[%s3168 + $0x118] sm:$0xff]
    %v3205 = vld [vmem:[%s3168 + $0x120] sm:$0xff]
    %v3206 = vld [vmem:[%s3168 + $0x128] sm:$0xff]
    %v3207 = vld [vmem:[%s3168 + $0x130] sm:$0xff]
    %v3208 = vld [vmem:[%s3168 + $0x138] sm:$0xff]
    %v3209 = vld [vmem:[%s3168 + $0x140] sm:$0xff]
    %v3210 = vld [vmem:[%s3168 + $0x148] sm:$0xff]
    %v3211 = vld [vmem:[%s3168 + $0x150] sm:$0xff]
    %v3212 = vld [vmem:[%s3168 + $0x158] sm:$0xff]
    %v3213 = vld [vmem:[%s3168 + $0x160] sm:$0xff]
    %v3214 = vld [vmem:[%s3168 + $0x168] sm:$0xff]
    %v3215 = vld [vmem:[%s3168 + $0x170] sm:$0xff]
    %v3216 = vld [vmem:[%s3168 + $0x178] sm:$0xff]
    %v3217 = vld [vmem:[%s3168 + $0x180] sm:$0xff]
    %v3218 = vld [vmem:[%s3168 + $0x188] sm:$0xff]
    %v3219 = vld [vmem:[%s3168 + $0x190] sm:$0xff]
    %v3220 = vld [vmem:[%s3168 + $0x198] sm:$0xff]
    %v3221 = vld [vmem:[%s3168 + $0x1a0] sm:$0xff]
    %v3222 = vld [vmem:[%s3168 + $0x1a8] sm:$0xff]
    %v3223 = vld [vmem:[%s3168 + $0x1b0] sm:$0xff]
    %v3224 = vld [vmem:[%s3168 + $0x1b8] sm:$0xff]
    %v3225 = vld [vmem:[%s3168 + $0x1c0] sm:$0xff]
    %v3226 = vld [vmem:[%s3168 + $0x1c8] sm:$0xff]
    %v3227 = vld [vmem:[%s3168 + $0x1d0] sm:$0xff]
    %v3228 = vld [vmem:[%s3168 + $0x1d8] sm:$0xff]
    %v3229 = vld [vmem:[%s3168 + $0x1e0] sm:$0xff]
    %v3230 = vld [vmem:[%s3168 + $0x1e8] sm:$0xff]
    %v3231 = vld [vmem:[%s3168 + $0x1f0] sm:$0xff]
    %v3232 = vld [vmem:[%s3168 + $0x1f8] sm:$0xff]
    %v3233 = vld [vmem:[%s3168 + $0x200] sm:$0xff]
    %v3234 = vld [vmem:[%s3168 + $0x208] sm:$0xff]
    %v3235 = vld [vmem:[%s3168 + $0x210] sm:$0xff]
    %v3236 = vld [vmem:[%s3168 + $0x218] sm:$0xff]
    %v3237 = vld [vmem:[%s3168 + $0x220] sm:$0xff]
    %v3238 = vld [vmem:[%s3168 + $0x228] sm:$0xff]
    %v3239 = vld [vmem:[%s3168 + $0x230] sm:$0xff]
    %v3240 = vld [vmem:[%s3168 + $0x238] sm:$0xff]
    %v3241 = vld [vmem:[%s3168 + $0x240] sm:$0xff]
    %v3242 = vld [vmem:[%s3168 + $0x248] sm:$0xff]
    %v3243 = vld [vmem:[%s3168 + $0x250] sm:$0xff]
    %v3244 = vld [vmem:[%s3168 + $0x258] sm:$0xff]
    %v3245 = vld [vmem:[%s3168 + $0x260] sm:$0xff]
    %v3246 = vld [vmem:[%s3168 + $0x268] sm:$0xff]
    %v3247 = vld [vmem:[%s3168 + $0x270] sm:$0xff]
    %v3248 = vld [vmem:[%s3168 + $0x278] sm:$0xff]
    %v3249 = vld [vmem:[%s3168 + $0x280] sm:$0xff]
    %v3250 = vld [vmem:[%s3168 + $0x288] sm:$0xff]
    %v3251 = vld [vmem:[%s3168 + $0x290] sm:$0xff]
    %v3252 = vld [vmem:[%s3168 + $0x298] sm:$0xff]
    %v3253 = vld [vmem:[%s3168 + $0x2a0] sm:$0xff]
    %v3254 = vld [vmem:[%s3168 + $0x2a8] sm:$0xff]
    %v3255 = vld [vmem:[%s3168 + $0x2b0] sm:$0xff]
    %v3256 = vld [vmem:[%s3168 + $0x2b8] sm:$0xff]
    %v3257 = vld [vmem:[%s3168 + $0x2c0] sm:$0xff]
    %v3258 = vld [vmem:[%s3168 + $0x2c8] sm:$0xff]
    %v3259 = vld [vmem:[%s3168 + $0x2d0] sm:$0xff]
    %v3260 = vld [vmem:[%s3168 + $0x2d8] sm:$0xff]
    %v3261 = vld [vmem:[%s3168 + $0x2e0] sm:$0xff]
    %v3262 = vld [vmem:[%s3168 + $0x2e8] sm:$0xff]
    %v3263 = vld [vmem:[%s3168 + $0x2f0] sm:$0xff]
    %v3264 = vld [vmem:[%s3168 + $0x2f8] sm:$0xff]
    %v3265 = vld [vmem:[%s3168 + $0x300] sm:$0xff]
    %v3266 = vld [vmem:[%s3168 + $0x308] sm:$0xff]
    %v3267 = vld [vmem:[%s3168 + $0x310] sm:$0xff]
    %v3268 = vld [vmem:[%s3168 + $0x318] sm:$0xff]
    %v3269 = vld [vmem:[%s3168 + $0x320] sm:$0xff]
    %v3270 = vld [vmem:[%s3168 + $0x328] sm:$0xff]
    %v3271 = vld [vmem:[%s3168 + $0x330] sm:$0xff]
    %v3272 = vld [vmem:[%s3168 + $0x338] sm:$0xff]
    %v3273 = vld [vmem:[%s3168 + $0x340] sm:$0xff]
    %v3274 = vld [vmem:[%s3168 + $0x348] sm:$0xff]
    %v3275 = vld [vmem:[%s3168 + $0x350] sm:$0xff]
    %v3276 = vld [vmem:[%s3168 + $0x358] sm:$0xff]
    %v3277 = vld [vmem:[%s3168 + $0x360] sm:$0xff]
    %v3278 = vld [vmem:[%s3168 + $0x368] sm:$0xff]
    %v3279 = vld [vmem:[%s3168 + $0x370] sm:$0xff]
    %v3280 = vld [vmem:[%s3168 + $0x378] sm:$0xff]
    %v3281 = vld [vmem:[%s3168 + $0x380] sm:$0xff]
    %v3282 = vld [vmem:[%s3168 + $0x388] sm:$0xff]
    %v3283 = vld [vmem:[%s3168 + $0x390] sm:$0xff]
    %v3284 = vld [vmem:[%s3168 + $0x398] sm:$0xff]
    %v3285 = vld [vmem:[%s3168 + $0x3a0] sm:$0xff]
    %v3286 = vld [vmem:[%s3168 + $0x3a8] sm:$0xff]
    %v3287 = vld [vmem:[%s3168 + $0x3b0] sm:$0xff]
    %v3288 = vld [vmem:[%s3168 + $0x3b8] sm:$0xff]
    %v3289 = vld [vmem:[%s3168 + $0x3c0] sm:$0xff]
    %v3290 = vld [vmem:[%s3168 + $0x3c8] sm:$0xff]
    %v3291 = vld [vmem:[%s3168 + $0x3d0] sm:$0xff]
    %v3292 = vld [vmem:[%s3168 + $0x3d8] sm:$0xff]
    %v3293 = vld [vmem:[%s3168 + $0x3e0] sm:$0xff]
    %v3294 = vld [vmem:[%s3168 + $0x3e8] sm:$0xff]
    %v3295 = vld [vmem:[%s3168 + $0x3f0] sm:$0xff]
    %v3296 = vld [vmem:[%s3168 + $0x3f8] sm:$0xff]
    %v3297 = vld [vmem:[%s3168 + $0x400] sm:$0xff]
    %v3298 = vld [vmem:[%s3168 + $0x408] sm:$0xff]
    %v3299 = vld [vmem:[%s3168 + $0x410] sm:$0xff]
    %v3300 = vld [vmem:[%s3168 + $0x418] sm:$0xff]
    %v3301 = vld [vmem:[%s3168 + $0x420] sm:$0xff]
    %v3302 = vld [vmem:[%s3168 + $0x428] sm:$0xff]
    %v3303 = vld [vmem:[%s3168 + $0x430] sm:$0xff]
    %v3304 = vld [vmem:[%s3168 + $0x438] sm:$0xff]
    %v3305 = vld [vmem:[%s3168 + $0x440] sm:$0xff]
    %v3306 = vld [vmem:[%s3168 + $0x448] sm:$0xff]
    %v3307 = vld [vmem:[%s3168 + $0x450] sm:$0xff]
    %v3308 = vld [vmem:[%s3168 + $0x458] sm:$0xff]
    %v3309 = vld [vmem:[%s3168 + $0x460] sm:$0xff]
    %v3310 = vld [vmem:[%s3168 + $0x468] sm:$0xff]
    %v3311 = vld [vmem:[%s3168 + $0x470] sm:$0xff]
    %v3312 = vld [vmem:[%s3168 + $0x478] sm:$0xff]
    %v3313 = vld [vmem:[%s3168 + $0x480] sm:$0xff]
    %v3314 = vld [vmem:[%s3168 + $0x488] sm:$0xff]
    %v3315 = vld [vmem:[%s3168 + $0x490] sm:$0xff]
    %v3316 = vld [vmem:[%s3168 + $0x498] sm:$0xff]
    %v3317 = vld [vmem:[%s3168 + $0x4a0] sm:$0xff]
    %v3318 = vld [vmem:[%s3168 + $0x4a8] sm:$0xff]
    %v3319 = vld [vmem:[%s3168 + $0x4b0] sm:$0xff]
    %v3320 = vld [vmem:[%s3168 + $0x4b8] sm:$0xff]
    %v3321 = vld [vmem:[%s3168 + $0x4c0] sm:$0xff]
    %v3322 = vld [vmem:[%s3168 + $0x4c8] sm:$0xff]
    %v3323 = vld [vmem:[%s3168 + $0x4d0] sm:$0xff]
    %v3324 = vld [vmem:[%s3168 + $0x4d8] sm:$0xff]
    %v3325 = vld [vmem:[%s3168 + $0x4e0] sm:$0xff]
    %v3326 = vld [vmem:[%s3168 + $0x4e8] sm:$0xff]
    %v3327 = vld [vmem:[%s3168 + $0x4f0] sm:$0xff]
    %v3328 = vld [vmem:[%s3168 + $0x4f8] sm:$0xff]
    %v3329 = vld [vmem:[%s3168 + $0x500] sm:$0xff]
    %v3330 = vld [vmem:[%s3168 + $0x508] sm:$0xff]
    %v3331 = vld [vmem:[%s3168 + $0x510] sm:$0xff]
    %v3332 = vld [vmem:[%s3168 + $0x518] sm:$0xff]
    %v3333 = vld [vmem:[%s3168 + $0x520] sm:$0xff]
    %v3334 = vld [vmem:[%s3168 + $0x528] sm:$0xff]
    %v3335 = vld [vmem:[%s3168 + $0x530] sm:$0xff]
    %v3336 = vld [vmem:[%s3168 + $0x538] sm:$0xff]
    %v3337 = vld [vmem:[%s3168 + $0x540] sm:$0xff]
    %v3338 = vld [vmem:[%s3168 + $0x548] sm:$0xff]
    %v3339 = vld [vmem:[%s3168 + $0x550] sm:$0xff]
    %v3340 = vld [vmem:[%s3168 + $0x558] sm:$0xff]
    %v3341 = vld [vmem:[%s3168 + $0x560] sm:$0xff]
    %v3342 = vld [vmem:[%s3168 + $0x568] sm:$0xff]
    %v3343 = vld [vmem:[%s3168 + $0x570] sm:$0xff]
    %v3344 = vld [vmem:[%s3168 + $0x578] sm:$0xff]
    %v3345 = vld [vmem:[%s3168 + $0x580] sm:$0xff]
    %v3346 = vld [vmem:[%s3168 + $0x588] sm:$0xff]
    %v3347 = vld [vmem:[%s3168 + $0x590] sm:$0xff]
    %v3348 = vld [vmem:[%s3168 + $0x598] sm:$0xff]
    %v3349 = vld [vmem:[%s3168 + $0x5a0] sm:$0xff]
    %v3350 = vld [vmem:[%s3168 + $0x5a8] sm:$0xff]
    %v3351 = vld [vmem:[%s3168 + $0x5b0] sm:$0xff]
    %v3352 = vld [vmem:[%s3168 + $0x5b8] sm:$0xff]
    %v3353 = vld [vmem:[%s3168 + $0x5c0] sm:$0xff]
    %v3354 = vld [vmem:[%s3168 + $0x5c8] sm:$0xff]
    %v3355 = vld [vmem:[%s3168 + $0x5d0] sm:$0xff]
    %v3356 = vld [vmem:[%s3168 + $0x5d8] sm:$0xff]
    %v3357 = vld [vmem:[%s3168 + $0x5e0] sm:$0xff]
    %v3358 = vld [vmem:[%s3168 + $0x5e8] sm:$0xff]
    %v3359 = vld [vmem:[%s3168 + $0x5f0] sm:$0xff]
    %v3360 = vld [vmem:[%s3168 + $0x5f8] sm:$0xff]
    %s3361 = scalar_lea.vmem [#allocation4], 12
    %v3362 = vld [vmem:[%s3361] sm:$0xff]
    %v3363 = vld [vmem:[%s3361 + $0x8] sm:$0xf]
    %v3366 = vlaneseq
    %v3367 = vshrl.u32 %v3366, 7
    %v3368 = vsub.s32 0, %v3367
    %v3369 = vrot.slane %v3362, %v3368
    %v3370 = vlaneseq
    %v3371 = vshrl.u32 %v3370, 7
    %v3372 = vsub.s32 1, %v3371
    %v3373 = vrot.slane %v3362, %v3372
    %v3374 = vlaneseq
    %v3375 = vshrl.u32 %v3374, 7
    %v3376 = vsub.s32 2, %v3375
    %v3377 = vrot.slane %v3362, %v3376
    %v3378 = vlaneseq
    %v3379 = vshrl.u32 %v3378, 7
    %v3380 = vsub.s32 3, %v3379
    %v3381 = vrot.slane %v3362, %v3380
    %v3382 = vlaneseq
    %v3383 = vshrl.u32 %v3382, 7
    %v3384 = vsub.s32 4, %v3383
    %v3385 = vrot.slane %v3362, %v3384
    %v3386 = vlaneseq
    %v3387 = vshrl.u32 %v3386, 7
    %v3388 = vsub.s32 5, %v3387
    %v3389 = vrot.slane %v3362, %v3388
    %v3390 = vlaneseq
    %v3391 = vshrl.u32 %v3390, 7
    %v3392 = vsub.s32 6, %v3391
    %v3393 = vrot.slane %v3362, %v3392
    %v3394 = vlaneseq
    %v3395 = vshrl.u32 %v3394, 7
    %v3396 = vsub.s32 7, %v3395
    %v3397 = vrot.slane %v3362, %v3396
    %v3398 = vlaneseq
    %v3399 = vshrl.u32 %v3398, 7
    %v3400 = vsub.s32 0, %v3399
    %v3401 = vrot.slane %v3363, %v3400
    %v3402 = vlaneseq
    %v3403 = vshrl.u32 %v3402, 7
    %v3404 = vsub.s32 1, %v3403
    %v3405 = vrot.slane %v3363, %v3404
    %v3406 = vlaneseq
    %v3407 = vshrl.u32 %v3406, 7
    %v3408 = vsub.s32 2, %v3407
    %v3409 = vrot.slane %v3363, %v3408
    %v3410 = vlaneseq
    %v3411 = vshrl.u32 %v3410, 7
    %v3412 = vsub.s32 3, %v3411
    %v3413 = vrot.slane %v3363, %v3412
    %3426 = vmatprep.subr.mxu0 %v3170
    %3427 = vmatpush1.msra.mxu0 %v3169
    %3428 = vmatprep.subr.mxu0 %v3182
    %3429 = vmatpush1.msra.mxu0 %v3181
    %3430 = vmatprep.subr.mxu0 %v3194
    %3431 = vmatpush1.msra.mxu0 %v3193
    %3432 = vmatprep.subr.mxu0 %v3206
    %3433 = vmatpush1.msra.mxu0 %v3205
    %3434 = vmatprep.subr.mxu0 %v3218
    %3435 = vmatpush1.msra.mxu0 %v3217
    %3436 = vmatprep.subr.mxu0 %v3230
    %3437 = vmatpush1.msra.mxu0 %v3229
    %3438 = vmatprep.subr.mxu0 %v3242
    %3439 = vmatpush1.msra.mxu0 %v3241
    %3440 = vmatprep.subr.mxu0 %v3254
    %3441 = vmatpush1.msra.mxu0 %v3253
    %3442 = vmatprep.subr.mxu0 %v3266
    %3443 = vmatpush1.msra.mxu0 %v3265
    %3444 = vmatprep.subr.mxu0 %v3278
    %3445 = vmatpush1.msra.mxu0 %v3277
    %3446 = vmatprep.subr.mxu0 %v3290
    %3447 = vmatpush1.msra.mxu0 %v3289
    %3448 = vmatprep.subr.mxu0 %v3302
    %3449 = vmatpush1.msra.mxu0 %v3301
    %3450 = vmatprep.subr.mxu0 %v3314
    %3451 = vmatpush1.msra.mxu0 %v3313
    %3452 = vmatprep.subr.mxu0 %v3326
    %3453 = vmatpush1.msra.mxu0 %v3325
    %3454 = vmatprep.subr.mxu0 %v3338
    %3455 = vmatpush1.msra.mxu0 %v3337
    %3456 = vmatprep.subr.mxu0 %v3350
    %3457 = vmatpush1.msra.mxu0 %v3349
    %3458 = vmatprep.subr.mxu0 0.0
    %3459 = vmatpush1.msra.mxu0 0.0
    %3460 = vmatprep.subr.mxu0 0.0
    %3461 = vmatpush1.msra.mxu0 0.0
    %3462 = vmatprep.subr.mxu0 0.0
    %3463 = vmatpush1.msra.mxu0 0.0
    %3464 = vmatprep.subr.mxu0 0.0
    %3465 = vmatpush1.msra.mxu0 0.0
    %3466 = vmatprep.subr.mxu0 0.0
    %3467 = vmatpush1.msra.mxu0 0.0
    %3468 = vmatprep.subr.mxu0 0.0
    %3469 = vmatpush1.msra.mxu0 0.0
    %3470 = vmatprep.subr.mxu0 0.0
    %3471 = vmatpush1.msra.mxu0 0.0
    %3472 = vmatprep.subr.mxu0 0.0
    %3473 = vmatpush1.msra.mxu0 0.0
    %3474 = vmatprep.subr.mxu0 0.0
    %3475 = vmatpush1.msra.mxu0 0.0
    %3476 = vmatprep.subr.mxu0 0.0
    %3477 = vmatpush1.msra.mxu0 0.0
    %3478 = vmatprep.subr.mxu0 0.0
    %3479 = vmatpush1.msra.mxu0 0.0
    %3480 = vmatprep.subr.mxu0 0.0
    %3481 = vmatpush1.msra.mxu0 0.0
    %3482 = vmatprep.subr.mxu0 0.0
    %3483 = vmatpush1.msra.mxu0 0.0
    %3484 = vmatprep.subr.mxu0 0.0
    %3485 = vmatpush1.msra.mxu0 0.0
    %3486 = vmatprep.subr.mxu0 0.0
    %3487 = vmatpush1.msra.mxu0 0.0
    %3488 = vmatprep.subr.mxu0 0.0
    %3489 = vmatpush1.msra.mxu0 0.0
    %3490 = vmatprep.mubr.f32.mxu0 0.0
    %3491 = vmatmul.mubr.f32.gmra.mrb[0].mxu0 %v3166
    %v3492 = vpop.f32.mrb[0].mxu0
    %v3493 = vadd.f32 %v3369, %v3492
    %v3494 = vpop.f32.mrb[0].mxu0
    %v3495 = vadd.f32 %v3373, %v3494
    %3496 = vmatprep.mubr.f32.mxu0 0.0
    %3497 = vmatmul.mubr.f32.gmra.mrb[0].mxu0 %v3167
    %v3498 = vpop.f32.mrb[0].mxu0
    %v3499 = vadd.f32 %v3369, %v3498
    %v3500 = vpop.f32.mrb[0].mxu0
    %v3501 = vadd.f32 %v3373, %v3500
    %3502 = vdwg.mxu0
    %3503 = vmatprep.subr.mxu0 %v3172
    %3504 = vmatpush1.msra.mxu0 %v3171
    %3505 = vmatprep.subr.mxu0 %v3184
    %3506 = vmatpush1.msra.mxu0 %v3183
    %3507 = vmatprep.subr.mxu0 %v3196
    %3508 = vmatpush1.msra.mxu0 %v3195
    %3509 = vmatprep.subr.mxu0 %v3208
    %3510 = vmatpush1.msra.mxu0 %v3207
    %3511 = vmatprep.subr.mxu0 %v3220
    %3512 = vmatpush1.msra.mxu0 %v3219
    %3513 = vmatprep.subr.mxu0 %v3232
    %3514 = vmatpush1.msra.mxu0 %v3231
    %3515 = vmatprep.subr.mxu0 %v3244
    %3516 = vmatpush1.msra.mxu0 %v3243
    %3517 = vmatprep.subr.mxu0 %v3256
    %3518 = vmatpush1.msra.mxu0 %v3255
    %3519 = vmatprep.subr.mxu0 %v3268
    %3520 = vmatpush1.msra.mxu0 %v3267
    %3521 = vmatprep.subr.mxu0 %v3280
    %3522 = vmatpush1.msra.mxu0 %v3279
    %3523 = vmatprep.subr.mxu0 %v3292
    %3524 = vmatpush1.msra.mxu0 %v3291
    %3525 = vmatprep.subr.mxu0 %v3304
    %3526 = vmatpush1.msra.mxu0 %v3303
    %3527 = vmatprep.subr.mxu0 %v3316
    %3528 = vmatpush1.msra.mxu0 %v3315
    %3529 = vmatprep.subr.mxu0 %v3328
    %3530 = vmatpush1.msra.mxu0 %v3327
    %3531 = vmatprep.subr.mxu0 %v3340
    %3532 = vmatpush1.msra.mxu0 %v3339
    %3533 = vmatprep.subr.mxu0 %v3352
    %3534 = vmatpush1.msra.mxu0 %v3351
    %3535 = vmatprep.subr.mxu0 0.0
    %3536 = vmatpush1.msra.mxu0 0.0
    %3537 = vmatprep.subr.mxu0 0.0
    %3538 = vmatpush1.msra.mxu0 0.0
    %3539 = vmatprep.subr.mxu0 0.0
    %3540 = vmatpush1.msra.mxu0 0.0
    %3541 = vmatprep.subr.mxu0 0.0
    %3542 = vmatpush1.msra.mxu0 0.0
    %3543 = vmatprep.subr.mxu0 0.0
    %3544 = vmatpush1.msra.mxu0 0.0
    %3545 = vmatprep.subr.mxu0 0.0
    %3546 = vmatpush1.msra.mxu0 0.0
    %3547 = vmatprep.subr.mxu0 0.0
    %3548 = vmatpush1.msra.mxu0 0.0
    %3549 = vmatprep.subr.mxu0 0.0
    %3550 = vmatpush1.msra.mxu0 0.0
    %3551 = vmatprep.subr.mxu0 0.0
    %3552 = vmatpush1.msra.mxu0 0.0
    %3553 = vmatprep.subr.mxu0 0.0
    %3554 = vmatpush1.msra.mxu0 0.0
    %3555 = vmatprep.subr.mxu0 0.0
    %3556 = vmatpush1.msra.mxu0 0.0
    %3557 = vmatprep.subr.mxu0 0.0
    %3558 = vmatpush1.msra.mxu0 0.0
    %3559 = vmatprep.subr.mxu0 0.0
    %3560 = vmatpush1.msra.mxu0 0.0
    %3561 = vmatprep.subr.mxu0 0.0
    %3562 = vmatpush1.msra.mxu0 0.0
    %3563 = vmatprep.subr.mxu0 0.0
    %3564 = vmatpush1.msra.mxu0 0.0
    %3565 = vmatprep.subr.mxu0 0.0
    %3566 = vmatpush1.msra.mxu0 0.0
    %3567 = vmatprep.mubr.f32.mxu0 0.0
    %3568 = vmatmul.mubr.f32.gmra.mrb[0].mxu0 %v3166
    %v3569 = vpop.f32.mrb[0].mxu0
    %v3570 = vadd.f32 %v3377, %v3569
    %v3571 = vpop.f32.mrb[0].mxu0
    %v3572 = vadd.f32 %v3381, %v3571
    %3573 = vmatprep.mubr.f32.mxu0 0.0
    %3574 = vmatmul.mubr.f32.gmra.mrb[0].mxu0 %v3167
    %v3575 = vpop.f32.mrb[0].mxu0
    %v3576 = vadd.f32 %v3377, %v3575
    %v3577 = vpop.f32.mrb[0].mxu0
    %v3578 = vadd.f32 %v3381, %v3577
    %3579 = vdwg.mxu0
    %3580 = vmatprep.subr.mxu0 %v3174
    %3581 = vmatpush1.msra.mxu0 %v3173
    %3582 = vmatprep.subr.mxu0 %v3186
    %3583 = vmatpush1.msra.mxu0 %v3185
    %3584 = vmatprep.subr.mxu0 %v3198
    %3585 = vmatpush1.msra.mxu0 %v3197
    %3586 = vmatprep.subr.mxu0 %v3210
    %3587 = vmatpush1.msra.mxu0 %v3209
    %3588 = vmatprep.subr.mxu0 %v3222
    %3589 = vmatpush1.msra.mxu0 %v3221
    %3590 = vmatprep.subr.mxu0 %v3234
    %3591 = vmatpush1.msra.mxu0 %v3233
    %3592 = vmatprep.subr.mxu0 %v3246
    %3593 = vmatpush1.msra.mxu0 %v3245
    %3594 = vmatprep.subr.mxu0 %v3258
    %3595 = vmatpush1.msra.mxu0 %v3257
    %3596 = vmatprep.subr.mxu0 %v3270
    %3597 = vmatpush1.msra.mxu0 %v3269
    %3598 = vmatprep.subr.mxu0 %v3282
    %3599 = vmatpush1.msra.mxu0 %v3281
    %3600 = vmatprep.subr.mxu0 %v3294
    %3601 = vmatpush1.msra.mxu0 %v3293
    %3602 = vmatprep.subr.mxu0 %v3306
    %3603 = vmatpush1.msra.mxu0 %v3305
    %3604 = vmatprep.subr.mxu0 %v3318
    %3605 = vmatpush1.msra.mxu0 %v3317
    %3606 = vmatprep.subr.mxu0 %v3330
    %3607 = vmatpush1.msra.mxu0 %v3329
    %3608 = vmatprep.subr.mxu0 %v3342
    %3609 = vmatpush1.msra.mxu0 %v3341
    %3610 = vmatprep.subr.mxu0 %v3354
    %3611 = vmatpush1.msra.mxu0 %v3353
    %3612 = vmatprep.subr.mxu0 0.0
    %3613 = vmatpush1.msra.mxu0 0.0
    %3614 = vmatprep.subr.mxu0 0.0
    %3615 = vmatpush1.msra.mxu0 0.0
    %3616 = vmatprep.subr.mxu0 0.0
    %3617 = vmatpush1.msra.mxu0 0.0
    %3618 = vmatprep.subr.mxu0 0.0
    %3619 = vmatpush1.msra.mxu0 0.0
    %3620 = vmatprep.subr.mxu0 0.0
    %3621 = vmatpush1.msra.mxu0 0.0
    %3622 = vmatprep.subr.mxu0 0.0
    %3623 = vmatpush1.msra.mxu0 0.0
    %3624 = vmatprep.subr.mxu0 0.0
    %3625 = vmatpush1.msra.mxu0 0.0
    %3626 = vmatprep.subr.mxu0 0.0
    %3627 = vmatpush1.msra.mxu0 0.0
    %3628 = vmatprep.subr.mxu0 0.0
    %3629 = vmatpush1.msra.mxu0 0.0
    %3630 = vmatprep.subr.mxu0 0.0
    %3631 = vmatpush1.msra.mxu0 0.0
    %3632 = vmatprep.subr.mxu0 0.0
    %3633 = vmatpush1.msra.mxu0 0.0
    %3634 = vmatprep.subr.mxu0 0.0
    %3635 = vmatpush1.msra.mxu0 0.0
    %3636 = vmatprep.subr.mxu0 0.0
    %3637 = vmatpush1.msra.mxu0 0.0
    %3638 = vmatprep.subr.mxu0 0.0
    %3639 = vmatpush1.msra.mxu0 0.0
    %3640 = vmatprep.subr.mxu0 0.0
    %3641 = vmatpush1.msra.mxu0 0.0
    %3642 = vmatprep.subr.mxu0 0.0
    %3643 = vmatpush1.msra.mxu0 0.0
    %3644 = vmatprep.mubr.f32.mxu0 0.0
    %3645 = vmatmul.mubr.f32.gmra.mrb[0].mxu0 %v3166
    %v3646 = vpop.f32.mrb[0].mxu0
    %v3647 = vadd.f32 %v3385, %v3646
    %v3648 = vpop.f32.mrb[0].mxu0
    %v3649 = vadd.f32 %v3389, %v3648
    %3650 = vmatprep.mubr.f32.mxu0 0.0
    %3651 = vmatmul.mubr.f32.gmra.mrb[0].mxu0 %v3167
    %v3652 = vpop.f32.mrb[0].mxu0
    %v3653 = vadd.f32 %v3385, %v3652
    %v3654 = vpop.f32.mrb[0].mxu0
    %v3655 = vadd.f32 %v3389, %v3654
    %3656 = vdwg.mxu0
    %3657 = vmatprep.subr.mxu0 %v3176
    %3658 = vmatpush1.msra.mxu0 %v3175
    %3659 = vmatprep.subr.mxu0 %v3188
    %3660 = vmatpush1.msra.mxu0 %v3187
    %3661 = vmatprep.subr.mxu0 %v3200
    %3662 = vmatpush1.msra.mxu0 %v3199
    %3663 = vmatprep.subr.mxu0 %v3212
    %3664 = vmatpush1.msra.mxu0 %v3211
    %3665 = vmatprep.subr.mxu0 %v3224
    %3666 = vmatpush1.msra.mxu0 %v3223
    %3667 = vmatprep.subr.mxu0 %v3236
    %3668 = vmatpush1.msra.mxu0 %v3235
    %3669 = vmatprep.subr.mxu0 %v3248
    %3670 = vmatpush1.msra.mxu0 %v3247
    %3671 = vmatprep.subr.mxu0 %v3260
    %3672 = vmatpush1.msra.mxu0 %v3259
    %3673 = vmatprep.subr.mxu0 %v3272
    %3674 = vmatpush1.msra.mxu0 %v3271
    %3675 = vmatprep.subr.mxu0 %v3284
    %3676 = vmatpush1.msra.mxu0 %v3283
    %3677 = vmatprep.subr.mxu0 %v3296
    %3678 = vmatpush1.msra.mxu0 %v3295
    %3679 = vmatprep.subr.mxu0 %v3308
    %3680 = vmatpush1.msra.mxu0 %v3307
    %3681 = vmatprep.subr.mxu0 %v3320
    %3682 = vmatpush1.msra.mxu0 %v3319
    %3683 = vmatprep.subr.mxu0 %v3332
    %3684 = vmatpush1.msra.mxu0 %v3331
    %3685 = vmatprep.subr.mxu0 %v3344
    %3686 = vmatpush1.msra.mxu0 %v3343
    %3687 = vmatprep.subr.mxu0 %v3356
    %3688 = vmatpush1.msra.mxu0 %v3355
    %3689 = vmatprep.subr.mxu0 0.0
    %3690 = vmatpush1.msra.mxu0 0.0
    %3691 = vmatprep.subr.mxu0 0.0
    %3692 = vmatpush1.msra.mxu0 0.0
    %3693 = vmatprep.subr.mxu0 0.0
    %3694 = vmatpush1.msra.mxu0 0.0
    %3695 = vmatprep.subr.mxu0 0.0
    %3696 = vmatpush1.msra.mxu0 0.0
    %3697 = vmatprep.subr.mxu0 0.0
    %3698 = vmatpush1.msra.mxu0 0.0
    %3699 = vmatprep.subr.mxu0 0.0
    %3700 = vmatpush1.msra.mxu0 0.0
    %3701 = vmatprep.subr.mxu0 0.0
    %3702 = vmatpush1.msra.mxu0 0.0
    %3703 = vmatprep.subr.mxu0 0.0
    %3704 = vmatpush1.msra.mxu0 0.0
    %3705 = vmatprep.subr.mxu0 0.0
    %3706 = vmatpush1.msra.mxu0 0.0
    %3707 = vmatprep.subr.mxu0 0.0
    %3708 = vmatpush1.msra.mxu0 0.0
    %3709 = vmatprep.subr.mxu0 0.0
    %3710 = vmatpush1.msra.mxu0 0.0
    %3711 = vmatprep.subr.mxu0 0.0
    %3712 = vmatpush1.msra.mxu0 0.0
    %3713 = vmatprep.subr.mxu0 0.0
    %3714 = vmatpush1.msra.mxu0 0.0
    %3715 = vmatprep.subr.mxu0 0.0
    %3716 = vmatpush1.msra.mxu0 0.0
    %3717 = vmatprep.subr.mxu0 0.0
    %3718 = vmatpush1.msra.mxu0 0.0
    %3719 = vmatprep.subr.mxu0 0.0
    %3720 = vmatpush1.msra.mxu0 0.0
    %3721 = vmatprep.mubr.f32.mxu0 0.0
    %3722 = vmatmul.mubr.f32.gmra.mrb[0].mxu0 %v3166
    %v3723 = vpop.f32.mrb[0].mxu0
    %v3724 = vadd.f32 %v3393, %v3723
    %v3725 = vpop.f32.mrb[0].mxu0
    %v3726 = vadd.f32 %v3397, %v3725
    %3727 = vmatprep.mubr.f32.mxu0 0.0
    %3728 = vmatmul.mubr.f32.gmra.mrb[0].mxu0 %v3167
    %v3729 = vpop.f32.mrb[0].mxu0
    %v3730 = vadd.f32 %v3393, %v3729
    %v3731 = vpop.f32.mrb[0].mxu0
    %v3732 = vadd.f32 %v3397, %v3731
    %3733 = vdwg.mxu0
    %3734 = vmatprep.subr.mxu0 %v3178
    %3735 = vmatpush1.msra.mxu0 %v3177
    %3736 = vmatprep.subr.mxu0 %v3190
    %3737 = vmatpush1.msra.mxu0 %v3189
    %3738 = vmatprep.subr.mxu0 %v3202
    %3739 = vmatpush1.msra.mxu0 %v3201
    %3740 = vmatprep.subr.mxu0 %v3214
    %3741 = vmatpush1.msra.mxu0 %v3213
    %3742 = vmatprep.subr.mxu0 %v3226
    %3743 = vmatpush1.msra.mxu0 %v3225
    %3744 = vmatprep.subr.mxu0 %v3238
    %3745 = vmatpush1.msra.mxu0 %v3237
    %3746 = vmatprep.subr.mxu0 %v3250
    %3747 = vmatpush1.msra.mxu0 %v3249
    %3748 = vmatprep.subr.mxu0 %v3262
    %3749 = vmatpush1.msra.mxu0 %v3261
    %3750 = vmatprep.subr.mxu0 %v3274
    %3751 = vmatpush1.msra.mxu0 %v3273
    %3752 = vmatprep.subr.mxu0 %v3286
    %3753 = vmatpush1.msra.mxu0 %v3285
    %3754 = vmatprep.subr.mxu0 %v3298
    %3755 = vmatpush1.msra.mxu0 %v3297
    %3756 = vmatprep.subr.mxu0 %v3310
    %3757 = vmatpush1.msra.mxu0 %v3309
    %3758 = vmatprep.subr.mxu0 %v3322
    %3759 = vmatpush1.msra.mxu0 %v3321
    %3760 = vmatprep.subr.mxu0 %v3334
    %3761 = vmatpush1.msra.mxu0 %v3333
    %3762 = vmatprep.subr.mxu0 %v3346
    %3763 = vmatpush1.msra.mxu0 %v3345
    %3764 = vmatprep.subr.mxu0 %v3358
    %3765 = vmatpush1.msra.mxu0 %v3357
    %3766 = vmatprep.subr.mxu0 0.0
    %3767 = vmatpush1.msra.mxu0 0.0
    %3768 = vmatprep.subr.mxu0 0.0
    %3769 = vmatpush1.msra.mxu0 0.0
    %3770 = vmatprep.subr.mxu0 0.0
    %3771 = vmatpush1.msra.mxu0 0.0
    %3772 = vmatprep.subr.mxu0 0.0
    %3773 = vmatpush1.msra.mxu0 0.0
    %3774 = vmatprep.subr.mxu0 0.0
    %3775 = vmatpush1.msra.mxu0 0.0
    %3776 = vmatprep.subr.mxu0 0.0
    %3777 = vmatpush1.msra.mxu0 0.0
    %3778 = vmatprep.subr.mxu0 0.0
    %3779 = vmatpush1.msra.mxu0 0.0
    %3780 = vmatprep.subr.mxu0 0.0
    %3781 = vmatpush1.msra.mxu0 0.0
    %3782 = vmatprep.subr.mxu0 0.0
    %3783 = vmatpush1.msra.mxu0 0.0
    %3784 = vmatprep.subr.mxu0 0.0
    %3785 = vmatpush1.msra.mxu0 0.0
    %3786 = vmatprep.subr.mxu0 0.0
    %3787 = vmatpush1.msra.mxu0 0.0
    %3788 = vmatprep.subr.mxu0 0.0
    %3789 = vmatpush1.msra.mxu0 0.0
    %3790 = vmatprep.subr.mxu0 0.0
    %3791 = vmatpush1.msra.mxu0 0.0
    %3792 = vmatprep.subr.mxu0 0.0
    %3793 = vmatpush1.msra.mxu0 0.0
    %3794 = vmatprep.subr.mxu0 0.0
    %3795 = vmatpush1.msra.mxu0 0.0
    %3796 = vmatprep.subr.mxu0 0.0
    %3797 = vmatpush1.msra.mxu0 0.0
    %3798 = vmatprep.mubr.f32.mxu0 0.0
    %3799 = vmatmul.mubr.f32.gmra.mrb[0].mxu0 %v3166
    %v3800 = vpop.f32.mrb[0].mxu0
    %v3801 = vadd.f32 %v3401, %v3800
    %v3802 = vpop.f32.mrb[0].mxu0
    %v3803 = vadd.f32 %v3405, %v3802
    %3804 = vmatprep.mubr.f32.mxu0 0.0
    %3805 = vmatmul.mubr.f32.gmra.mrb[0].mxu0 %v3167
    %v3806 = vpop.f32.mrb[0].mxu0
    %v3807 = vadd.f32 %v3401, %v3806
    %v3808 = vpop.f32.mrb[0].mxu0
    %v3809 = vadd.f32 %v3405, %v3808
    %3810 = vdwg.mxu0
    %3811 = vmatprep.subr.mxu0 %v3180
    %3812 = vmatpush1.msra.mxu0 %v3179
    %3813 = vmatprep.subr.mxu0 %v3192
    %3814 = vmatpush1.msra.mxu0 %v3191
    %3815 = vmatprep.subr.mxu0 %v3204
    %3816 = vmatpush1.msra.mxu0 %v3203
    %3817 = vmatprep.subr.mxu0 %v3216
    %3818 = vmatpush1.msra.mxu0 %v3215
    %3819 = vmatprep.subr.mxu0 %v3228
    %3820 = vmatpush1.msra.mxu0 %v3227
    %3821 = vmatprep.subr.mxu0 %v3240
    %3822 = vmatpush1.msra.mxu0 %v3239
    %3823 = vmatprep.subr.mxu0 %v3252
    %3824 = vmatpush1.msra.mxu0 %v3251
    %3825 = vmatprep.subr.mxu0 %v3264
    %3826 = vmatpush1.msra.mxu0 %v3263
    %3827 = vmatprep.subr.mxu0 %v3276
    %3828 = vmatpush1.msra.mxu0 %v3275
    %3829 = vmatprep.subr.mxu0 %v3288
    %3830 = vmatpush1.msra.mxu0 %v3287
    %3831 = vmatprep.subr.mxu0 %v3300
    %3832 = vmatpush1.msra.mxu0 %v3299
    %3833 = vmatprep.subr.mxu0 %v3312
    %3834 = vmatpush1.msra.mxu0 %v3311
    %3835 = vmatprep.subr.mxu0 %v3324
    %3836 = vmatpush1.msra.mxu0 %v3323
    %3837 = vmatprep.subr.mxu0 %v3336
    %3838 = vmatpush1.msra.mxu0 %v3335
    %3839 = vmatprep.subr.mxu0 %v3348
    %3840 = vmatpush1.msra.mxu0 %v3347
    %3841 = vmatprep.subr.mxu0 %v3360
    %3842 = vmatpush1.msra.mxu0 %v3359
    %3843 = vmatprep.subr.mxu0 0.0
    %3844 = vmatpush1.msra.mxu0 0.0
    %3845 = vmatprep.subr.mxu0 0.0
    %3846 = vmatpush1.msra.mxu0 0.0
    %3847 = vmatprep.subr.mxu0 0.0
    %3848 = vmatpush1.msra.mxu0 0.0
    %3849 = vmatprep.subr.mxu0 0.0
    %3850 = vmatpush1.msra.mxu0 0.0
    %3851 = vmatprep.subr.mxu0 0.0
    %3852 = vmatpush1.msra.mxu0 0.0
    %3853 = vmatprep.subr.mxu0 0.0
    %3854 = vmatpush1.msra.mxu0 0.0
    %3855 = vmatprep.subr.mxu0 0.0
    %3856 = vmatpush1.msra.mxu0 0.0
    %3857 = vmatprep.subr.mxu0 0.0
    %3858 = vmatpush1.msra.mxu0 0.0
    %3859 = vmatprep.subr.mxu0 0.0
    %3860 = vmatpush1.msra.mxu0 0.0
    %3861 = vmatprep.subr.mxu0 0.0
    %3862 = vmatpush1.msra.mxu0 0.0
    %3863 = vmatprep.subr.mxu0 0.0
    %3864 = vmatpush1.msra.mxu0 0.0
    %3865 = vmatprep.subr.mxu0 0.0
    %3866 = vmatpush1.msra.mxu0 0.0
    %3867 = vmatprep.subr.mxu0 0.0
    %3868 = vmatpush1.msra.mxu0 0.0
    %3869 = vmatprep.subr.mxu0 0.0
    %3870 = vmatpush1.msra.mxu0 0.0
    %3871 = vmatprep.subr.mxu0 0.0
    %3872 = vmatpush1.msra.mxu0 0.0
    %3873 = vmatprep.subr.mxu0 0.0
    %3874 = vmatpush1.msra.mxu0 0.0
    %3875 = vmatprep.mubr.f32.mxu0 0.0
    %3876 = vmatmul.mubr.f32.gmra.mrb[0].mxu0 %v3166
    %v3877 = vpop.f32.mrb[0].mxu0
    %v3878 = vadd.f32 %v3409, %v3877
    %v3879 = vpop.f32.mrb[0].mxu0
    %v3880 = vadd.f32 %v3413, %v3879
    %3881 = vmatprep.mubr.f32.mxu0 0.0
    %3882 = vmatmul.mubr.f32.gmra.mrb[0].mxu0 %v3167
    %v3883 = vpop.f32.mrb[0].mxu0
    %v3884 = vadd.f32 %v3409, %v3883
    %v3885 = vpop.f32.mrb[0].mxu0
    %v3886 = vadd.f32 %v3413, %v3885
    %3887 = vdwg.mxu0
    %3888 = vmatprep.subr.mxu0 0.0
    %3889 = vmatpush1.xpose.msra.mxu0 %v3647
    %3890 = vmatprep.subr.mxu0 0.0
    %3891 = vmatpush1.xpose.msra.mxu0 0.0
    %3892 = vmatprep.subr.mxu0 0.0
    %3893 = vmatpush1.xpose.msra.mxu0 0.0
    %3894 = vmatprep.subr.mxu0 0.0
    %3895 = vmatpush1.xpose.msra.mxu0 0.0
    %3896 = vmatprep.subr.mxu0 0.0
    %3897 = vmatpush1.xpose.msra.mxu0 0.0
    %3898 = vmatprep.subr.mxu0 0.0
    %3899 = vmatpush1.xpose.msra.mxu0 0.0
    %3900 = vmatprep.subr.mxu0 0.0
    %3901 = vmatpush1.xpose.msra.mxu0 0.0
    %3902 = vmatprep.subr.mxu0 0.0
    %3903 = vmatpush1.xpose.msra.mxu0 0.0
    %3904 = vmatprep.subr.mxu0 0.0
    %3905 = vmatpush1.xpose.msra.mxu0 0.0
    %3906 = vmatprep.subr.mxu0 0.0
    %3907 = vmatpush1.xpose.msra.mxu0 0.0
    %3908 = vmatprep.subr.mxu0 0.0
    %3909 = vmatpush1.xpose.msra.mxu0 0.0
    %3910 = vmatprep.subr.mxu0 0.0
    %3911 = vmatpush1.xpose.msra.mxu0 0.0
    %3912 = vmatprep.subr.mxu0 0.0
    %3913 = vmatpush1.xpose.msra.mxu0 0.0
    %3914 = vmatprep.subr.mxu0 0.0
    %3915 = vmatpush1.xpose.msra.mxu0 0.0
    %3916 = vmatprep.subr.mxu0 0.0
    %3917 = vmatpush1.xpose.msra.mxu0 0.0
    %3918 = vmatprep.subr.mxu0 0.0
    %3919 = vmatpush1.xpose.msra.mxu0 0.0
    %3920 = vmatprep.subr.mxu0 0.0
    %3921 = vmatpush1.xpose.msra.mxu0 0.0
    %3922 = vmatprep.subr.mxu0 0.0
    %3923 = vmatpush1.xpose.msra.mxu0 0.0
    %3924 = vmatprep.subr.mxu0 0.0
    %3925 = vmatpush1.xpose.msra.mxu0 0.0
    %3926 = vmatprep.subr.mxu0 0.0
    %3927 = vmatpush1.xpose.msra.mxu0 0.0
    %3928 = vmatprep.subr.mxu0 0.0
    %3929 = vmatpush1.xpose.msra.mxu0 0.0
    %3930 = vmatprep.subr.mxu0 0.0
    %3931 = vmatpush1.xpose.msra.mxu0 0.0
    %3932 = vmatprep.subr.mxu0 0.0
    %3933 = vmatpush1.xpose.msra.mxu0 0.0
    %3934 = vmatprep.subr.mxu0 0.0
    %3935 = vmatpush1.xpose.msra.mxu0 0.0
    %3936 = vmatprep.subr.mxu0 0.0
    %3937 = vmatpush1.xpose.msra.mxu0 0.0
    %3938 = vmatprep.subr.mxu0 0.0
    %3939 = vmatpush1.xpose.msra.mxu0 0.0
    %3940 = vmatprep.subr.mxu0 0.0
    %3941 = vmatpush1.xpose.msra.mxu0 0.0
    %3942 = vmatprep.subr.mxu0 0.0
    %3943 = vmatpush1.xpose.msra.mxu0 0.0
    %3944 = vmatprep.subr.mxu0 0.0
    %3945 = vmatpush1.xpose.msra.mxu0 0.0
    %3946 = vmatprep.subr.mxu0 0.0
    %3947 = vmatpush1.xpose.msra.mxu0 0.0
    %3948 = vmatprep.subr.mxu0 0.0
    %3949 = vmatpush1.xpose.msra.mxu0 0.0
    %3950 = vmatprep.subr.mxu0 0.0
    %3951 = vmatpush1.xpose.msra.mxu0 0.0
    %3952 = vmatprep.mubr.f32.mxu0 0.0
    %3953 = vmatmul.mubr.f32.gmra.mrb[0].mxu0 %v3493
    %v3954 = vpop.f32.mrb[0].mxu0
    %v3955 = vadd.f32 0.0, %v3954
    %v3956 = vpop.f32.mrb[0].mxu0
    %3957 = vdwg.mxu0
    %v3958 = vmul.f32 %v3955, 0.35355338
    %v3959 = vsel %vm1072, %v3958, -inf
    %3960 = vmax.xlane.f32.xlu0 %v3959
    %v3961 = vpop.xlane.xlu0 %3960
    %v3962 = vsub.f32 %v3958, %v3961
    %v3963 = vmul.f32 %v3962, 1.442695
    %v3964 = vpow.pop %v3963
    %v3965 = vsel %vm1072, %v3964, 0.0
    %3966 = vadd.xlane.f32.xlu0 %v3965
    %v3967 = vpop.xlane.xlu0 %3966
    %v3968 = vrcp.pop %v3967
    %v3969 = vmul.f32 %v3964, %v3968
    %v3971 = vsel %vm1072, %v3969, 0
    %3973 = vmatprep.subr.mxu0 0.0
    %3974 = vmatpush1.msra.mxu0 %v3801
    %3975 = vmatprep.subr.mxu0 0.0
    %3976 = vmatpush1.msra.mxu0 0.0
    %3977 = vmatprep.subr.mxu0 0.0
    %3978 = vmatpush1.msra.mxu0 0.0
    %3979 = vmatprep.subr.mxu0 0.0
    %3980 = vmatpush1.msra.mxu0 0.0
    %3981 = vmatprep.subr.mxu0 0.0
    %3982 = vmatpush1.msra.mxu0 0.0
    %3983 = vmatprep.subr.mxu0 0.0
    %3984 = vmatpush1.msra.mxu0 0.0
    %3985 = vmatprep.subr.mxu0 0.0
    %3986 = vmatpush1.msra.mxu0 0.0
    %3987 = vmatprep.subr.mxu0 0.0
    %3988 = vmatpush1.msra.mxu0 0.0
    %3989 = vmatprep.subr.mxu0 0.0
    %3990 = vmatpush1.msra.mxu0 0.0
    %3991 = vmatprep.subr.mxu0 0.0
    %3992 = vmatpush1.msra.mxu0 0.0
    %3993 = vmatprep.subr.mxu0 0.0
    %3994 = vmatpush1.msra.mxu0 0.0
    %3995 = vmatprep.subr.mxu0 0.0
    %3996 = vmatpush1.msra.mxu0 0.0
    %3997 = vmatprep.subr.mxu0 0.0
    %3998 = vmatpush1.msra.mxu0 0.0
    %3999 = vmatprep.subr.mxu0 0.0
    %4000 = vmatpush1.msra.mxu0 0.0
    %4001 = vmatprep.subr.mxu0 0.0
    %4002 = vmatpush1.msra.mxu0 0.0
    %4003 = vmatprep.subr.mxu0 0.0
    %4004 = vmatpush1.msra.mxu0 0.0
    %4005 = vmatprep.subr.mxu0 0.0
    %4006 = vmatpush1.msra.mxu0 0.0
    %4007 = vmatprep.subr.mxu0 0.0
    %4008 = vmatpush1.msra.mxu0 0.0
    %4009 = vmatprep.subr.mxu0 0.0
    %4010 = vmatpush1.msra.mxu0 0.0
    %4011 = vmatprep.subr.mxu0 0.0
    %4012 = vmatpush1.msra.mxu0 0.0
    %4013 = vmatprep.subr.mxu0 0.0
    %4014 = vmatpush1.msra.mxu0 0.0
    %4015 = vmatprep.subr.mxu0 0.0
    %4016 = vmatpush1.msra.mxu0 0.0
    %4017 = vmatprep.subr.mxu0 0.0
    %4018 = vmatpush1.msra.mxu0 0.0
    %4019 = vmatprep.subr.mxu0 0.0
    %4020 = vmatpush1.msra.mxu0 0.0
    %4021 = vmatprep.subr.mxu0 0.0
    %4022 = vmatpush1.msra.mxu0 0.0
    %4023 = vmatprep.subr.mxu0 0.0
    %4024 = vmatpush1.msra.mxu0 0.0
    %4025 = vmatprep.subr.mxu0 0.0
    %4026 = vmatpush1.msra.mxu0 0.0
    %4027 = vmatprep.subr.mxu0 0.0
    %4028 = vmatpush1.msra.mxu0 0.0
    %4029 = vmatprep.subr.mxu0 0.0
    %4030 = vmatpush1.msra.mxu0 0.0
    %4031 = vmatprep.subr.mxu0 0.0
    %4032 = vmatpush1.msra.mxu0 0.0
    %4033 = vmatprep.subr.mxu0 0.0
    %4034 = vmatpush1.msra.mxu0 0.0
    %4035 = vmatprep.subr.mxu0 0.0
    %4036 = vmatpush1.msra.mxu0 0.0
    %4037 = vmatprep.mubr.f32.mxu0 0.0
    %4038 = vmatmul.mubr.f32.gmra.mrb[0].mxu0 %v3971
    %v4039 = vpop.f32.mrb[0].mxu0
    %v4040 = vadd.f32 0.0, %v4039
    %v4041 = vpop.f32.mrb[0].mxu0
    %4042 = vdwg.mxu0
    %s4043 = scalar_lea.vmem [#allocation6], 512
    %v4044 = vld [vmem:[%s4043] sm:$0xff]
    %v4045 = vld [vmem:[%s4043 + $0x8] sm:$0xff]
    %v4046 = vld [vmem:[%s4043 + $0x10] sm:$0xff]
    %v4047 = vld [vmem:[%s4043 + $0x18] sm:$0xff]
    %v4048 = vld [vmem:[%s4043 + $0x20] sm:$0xff]
    %v4049 = vld [vmem:[%s4043 + $0x28] sm:$0xff]
    %v4050 = vld [vmem:[%s4043 + $0x30] sm:$0xff]
    %v4051 = vld [vmem:[%s4043 + $0x38] sm:$0xff]
    %v4052 = vld [vmem:[%s4043 + $0x40] sm:$0xff]
    %v4053 = vld [vmem:[%s4043 + $0x48] sm:$0xff]
    %v4054 = vld [vmem:[%s4043 + $0x50] sm:$0xff]
    %v4055 = vld [vmem:[%s4043 + $0x58] sm:$0xff]
    %v4056 = vld [vmem:[%s4043 + $0x60] sm:$0xff]
    %v4057 = vld [vmem:[%s4043 + $0x68] sm:$0xff]
    %v4058 = vld [vmem:[%s4043 + $0x70] sm:$0xff]
    %v4059 = vld [vmem:[%s4043 + $0x78] sm:$0xff]
    %4060 = vmatprep.subr.mxu0 0.0
    %4061 = vmatpush1.xpose.msra.mxu0 %v3649
    %4062 = vmatprep.subr.mxu0 0.0
    %4063 = vmatpush1.xpose.msra.mxu0 0.0
    %4064 = vmatprep.subr.mxu0 0.0
    %4065 = vmatpush1.xpose.msra.mxu0 0.0
    %4066 = vmatprep.subr.mxu0 0.0
    %4067 = vmatpush1.xpose.msra.mxu0 0.0
    %4068 = vmatprep.subr.mxu0 0.0
    %4069 = vmatpush1.xpose.msra.mxu0 0.0
    %4070 = vmatprep.subr.mxu0 0.0
    %4071 = vmatpush1.xpose.msra.mxu0 0.0
    %4072 = vmatprep.subr.mxu0 0.0
    %4073 = vmatpush1.xpose.msra.mxu0 0.0
    %4074 = vmatprep.subr.mxu0 0.0
    %4075 = vmatpush1.xpose.msra.mxu0 0.0
    %4076 = vmatprep.subr.mxu0 0.0
    %4077 = vmatpush1.xpose.msra.mxu0 0.0
    %4078 = vmatprep.subr.mxu0 0.0
    %4079 = vmatpush1.xpose.msra.mxu0 0.0
    %4080 = vmatprep.subr.mxu0 0.0
    %4081 = vmatpush1.xpose.msra.mxu0 0.0
    %4082 = vmatprep.subr.mxu0 0.0
    %4083 = vmatpush1.xpose.msra.mxu0 0.0
    %4084 = vmatprep.subr.mxu0 0.0
    %4085 = vmatpush1.xpose.msra.mxu0 0.0
    %4086 = vmatprep.subr.mxu0 0.0
    %4087 = vmatpush1.xpose.msra.mxu0 0.0
    %4088 = vmatprep.subr.mxu0 0.0
    %4089 = vmatpush1.xpose.msra.mxu0 0.0
    %4090 = vmatprep.subr.mxu0 0.0
    %4091 = vmatpush1.xpose.msra.mxu0 0.0
    %4092 = vmatprep.subr.mxu0 0.0
    %4093 = vmatpush1.xpose.msra.mxu0 0.0
    %4094 = vmatprep.subr.mxu0 0.0
    %4095 = vmatpush1.xpose.msra.mxu0 0.0
    %4096 = vmatprep.subr.mxu0 0.0
    %4097 = vmatpush1.xpose.msra.mxu0 0.0
    %4098 = vmatprep.subr.mxu0 0.0
    %4099 = vmatpush1.xpose.msra.mxu0 0.0
    %4100 = vmatprep.subr.mxu0 0.0
    %4101 = vmatpush1.xpose.msra.mxu0 0.0
    %4102 = vmatprep.subr.mxu0 0.0
    %4103 = vmatpush1.xpose.msra.mxu0 0.0
    %4104 = vmatprep.subr.mxu0 0.0
    %4105 = vmatpush1.xpose.msra.mxu0 0.0
    %4106 = vmatprep.subr.mxu0 0.0
    %4107 = vmatpush1.xpose.msra.mxu0 0.0
    %4108 = vmatprep.subr.mxu0 0.0
    %4109 = vmatpush1.xpose.msra.mxu0 0.0
    %4110 = vmatprep.subr.mxu0 0.0
    %4111 = vmatpush1.xpose.msra.mxu0 0.0
    %4112 = vmatprep.subr.mxu0 0.0
    %4113 = vmatpush1.xpose.msra.mxu0 0.0
    %4114 = vmatprep.subr.mxu0 0.0
    %4115 = vmatpush1.xpose.msra.mxu0 0.0
    %4116 = vmatprep.subr.mxu0 0.0
    %4117 = vmatpush1.xpose.msra.mxu0 0.0
    %4118 = vmatprep.subr.mxu0 0.0
    %4119 = vmatpush1.xpose.msra.mxu0 0.0
    %4120 = vmatprep.subr.mxu0 0.0
    %4121 = vmatpush1.xpose.msra.mxu0 0.0
    %4122 = vmatprep.subr.mxu0 0.0
    %4123 = vmatpush1.xpose.msra.mxu0 0.0
    %4124 = vmatprep.mubr.f32.mxu0 0.0
    %4125 = vmatmul.mubr.f32.gmra.mrb[0].mxu0 %v3495
    %v4126 = vpop.f32.mrb[0].mxu0
    %v4127 = vadd.f32 0.0, %v4126
    %v4128 = vpop.f32.mrb[0].mxu0
    %4129 = vdwg.mxu0
    %v4130 = vmul.f32 %v4127, 0.35355338
    %v4131 = vsel %vm1072, %v4130, -inf
    %4132 = vmax.xlane.f32.xlu0 %v4131
    %v4133 = vpop.xlane.xlu0 %4132
    %v4134 = vsub.f32 %v4130, %v4133
    %v4135 = vmul.f32 %v4134, 1.442695
    %v4136 = vpow.pop %v4135
    %v4137 = vsel %vm1072, %v4136, 0.0
    %4138 = vadd.xlane.f32.xlu0 %v4137
    %v4139 = vpop.xlane.xlu0 %4138
    %v4140 = vrcp.pop %v4139
    %v4141 = vmul.f32 %v4136, %v4140
    %v4143 = vsel %vm1072, %v4141, 0
    %4145 = vmatprep.subr.mxu0 0.0
    %4146 = vmatpush1.msra.mxu0 %v3803
    %4147 = vmatprep.subr.mxu0 0.0
    %4148 = vmatpush1.msra.mxu0 0.0
    %4149 = vmatprep.subr.mxu0 0.0
    %4150 = vmatpush1.msra.mxu0 0.0
    %4151 = vmatprep.subr.mxu0 0.0
    %4152 = vmatpush1.msra.mxu0 0.0
    %4153 = vmatprep.subr.mxu0 0.0
    %4154 = vmatpush1.msra.mxu0 0.0
    %4155 = vmatprep.subr.mxu0 0.0
    %4156 = vmatpush1.msra.mxu0 0.0
    %4157 = vmatprep.subr.mxu0 0.0
    %4158 = vmatpush1.msra.mxu0 0.0
    %4159 = vmatprep.subr.mxu0 0.0
    %4160 = vmatpush1.msra.mxu0 0.0
    %4161 = vmatprep.subr.mxu0 0.0
    %4162 = vmatpush1.msra.mxu0 0.0
    %4163 = vmatprep.subr.mxu0 0.0
    %4164 = vmatpush1.msra.mxu0 0.0
    %4165 = vmatprep.subr.mxu0 0.0
    %4166 = vmatpush1.msra.mxu0 0.0
    %4167 = vmatprep.subr.mxu0 0.0
    %4168 = vmatpush1.msra.mxu0 0.0
    %4169 = vmatprep.subr.mxu0 0.0
    %4170 = vmatpush1.msra.mxu0 0.0
    %4171 = vmatprep.subr.mxu0 0.0
    %4172 = vmatpush1.msra.mxu0 0.0
    %4173 = vmatprep.subr.mxu0 0.0
    %4174 = vmatpush1.msra.mxu0 0.0
    %4175 = vmatprep.subr.mxu0 0.0
    %4176 = vmatpush1.msra.mxu0 0.0
    %4177 = vmatprep.subr.mxu0 0.0
    %4178 = vmatpush1.msra.mxu0 0.0
    %4179 = vmatprep.subr.mxu0 0.0
    %4180 = vmatpush1.msra.mxu0 0.0
    %4181 = vmatprep.subr.mxu0 0.0
    %4182 = vmatpush1.msra.mxu0 0.0
    %4183 = vmatprep.subr.mxu0 0.0
    %4184 = vmatpush1.msra.mxu0 0.0
    %4185 = vmatprep.subr.mxu0 0.0
    %4186 = vmatpush1.msra.mxu0 0.0
    %4187 = vmatprep.subr.mxu0 0.0
    %4188 = vmatpush1.msra.mxu0 0.0
    %4189 = vmatprep.subr.mxu0 0.0
    %4190 = vmatpush1.msra.mxu0 0.0
    %4191 = vmatprep.subr.mxu0 0.0
    %4192 = vmatpush1.msra.mxu0 0.0
    %4193 = vmatprep.subr.mxu0 0.0
    %4194 = vmatpush1.msra.mxu0 0.0
    %4195 = vmatprep.subr.mxu0 0.0
    %4196 = vmatpush1.msra.mxu0 0.0
    %4197 = vmatprep.subr.mxu0 0.0
    %4198 = vmatpush1.msra.mxu0 0.0
    %4199 = vmatprep.subr.mxu0 0.0
    %4200 = vmatpush1.msra.mxu0 0.0
    %4201 = vmatprep.subr.mxu0 0.0
    %4202 = vmatpush1.msra.mxu0 0.0
    %4203 = vmatprep.subr.mxu0 0.0
    %4204 = vmatpush1.msra.mxu0 0.0
    %4205 = vmatprep.subr.mxu0 0.0
    %4206 = vmatpush1.msra.mxu0 0.0
    %4207 = vmatprep.subr.mxu0 0.0
    %4208 = vmatpush1.msra.mxu0 0.0
    %4209 = vmatprep.mubr.f32.mxu0 0.0
    %4210 = vmatmul.mubr.f32.gmra.mrb[0].mxu0 %v4143
    %v4211 = vpop.f32.mrb[0].mxu0
    %v4212 = vadd.f32 0.0, %v4211
    %v4213 = vpop.f32.mrb[0].mxu0
    %4214 = vdwg.mxu0
    %s4215 = scalar_lea.vmem [#allocation6], 640
    %v4216 = vld [vmem:[%s4215] sm:$0xff]
    %v4217 = vld [vmem:[%s4215 + $0x8] sm:$0xff]
    %v4218 = vld [vmem:[%s4215 + $0x10] sm:$0xff]
    %v4219 = vld [vmem:[%s4215 + $0x18] sm:$0xff]
    %v4220 = vld [vmem:[%s4215 + $0x20] sm:$0xff]
    %v4221 = vld [vmem:[%s4215 + $0x28] sm:$0xff]
    %v4222 = vld [vmem:[%s4215 + $0x30] sm:$0xff]
    %v4223 = vld [vmem:[%s4215 + $0x38] sm:$0xff]
    %v4224 = vld [vmem:[%s4215 + $0x40] sm:$0xff]
    %v4225 = vld [vmem:[%s4215 + $0x48] sm:$0xff]
    %v4226 = vld [vmem:[%s4215 + $0x50] sm:$0xff]
    %v4227 = vld [vmem:[%s4215 + $0x58] sm:$0xff]
    %v4228 = vld [vmem:[%s4215 + $0x60] sm:$0xff]
    %v4229 = vld [vmem:[%s4215 + $0x68] sm:$0xff]
    %v4230 = vld [vmem:[%s4215 + $0x70] sm:$0xff]
    %v4231 = vld [vmem:[%s4215 + $0x78] sm:$0xff]
    %4232 = vmatprep.subr.mxu0 0.0
    %4233 = vmatpush1.msra.mxu0 %v4216
    %4234 = vmatprep.subr.mxu0 0.0
    %4235 = vmatpush1.msra.mxu0 %v4217
    %4236 = vmatprep.subr.mxu0 0.0
    %4237 = vmatpush1.msra.mxu0 %v4218
    %4238 = vmatprep.subr.mxu0 0.0
    %4239 = vmatpush1.msra.mxu0 %v4219
    %4240 = vmatprep.subr.mxu0 0.0
    %4241 = vmatpush1.msra.mxu0 %v4220
    %4242 = vmatprep.subr.mxu0 0.0
    %4243 = vmatpush1.msra.mxu0 %v4221
    %4244 = vmatprep.subr.mxu0 0.0
    %4245 = vmatpush1.msra.mxu0 %v4222
    %4246 = vmatprep.subr.mxu0 0.0
    %4247 = vmatpush1.msra.mxu0 %v4223
    %4248 = vmatprep.subr.mxu0 0.0
    %4249 = vmatpush1.msra.mxu0 %v4224
    %4250 = vmatprep.subr.mxu0 0.0
    %4251 = vmatpush1.msra.mxu0 %v4225
    %4252 = vmatprep.subr.mxu0 0.0
    %4253 = vmatpush1.msra.mxu0 %v4226
    %4254 = vmatprep.subr.mxu0 0.0
    %4255 = vmatpush1.msra.mxu0 %v4227
    %4256 = vmatprep.subr.mxu0 0.0
    %4257 = vmatpush1.msra.mxu0 %v4228
    %4258 = vmatprep.subr.mxu0 0.0
    %4259 = vmatpush1.msra.mxu0 %v4229
    %4260 = vmatprep.subr.mxu0 0.0
    %4261 = vmatpush1.msra.mxu0 %v4230
    %4262 = vmatprep.subr.mxu0 0.0
    %4263 = vmatpush1.msra.mxu0 %v4231
    %4264 = vmatprep.subr.mxu0 0.0
    %4265 = vmatpush1.msra.mxu0 0.0
    %4266 = vmatprep.subr.mxu0 0.0
    %4267 = vmatpush1.msra.mxu0 0.0
    %4268 = vmatprep.subr.mxu0 0.0
    %4269 = vmatpush1.msra.mxu0 0.0
    %4270 = vmatprep.subr.mxu0 0.0
    %4271 = vmatpush1.msra.mxu0 0.0
    %4272 = vmatprep.subr.mxu0 0.0
    %4273 = vmatpush1.msra.mxu0 0.0
    %4274 = vmatprep.subr.mxu0 0.0
    %4275 = vmatpush1.msra.mxu0 0.0
    %4276 = vmatprep.subr.mxu0 0.0
    %4277 = vmatpush1.msra.mxu0 0.0
    %4278 = vmatprep.subr.mxu0 0.0
    %4279 = vmatpush1.msra.mxu0 0.0
    %4280 = vmatprep.subr.mxu0 0.0
    %4281 = vmatpush1.msra.mxu0 0.0
    %4282 = vmatprep.subr.mxu0 0.0
    %4283 = vmatpush1.msra.mxu0 0.0
    %4284 = vmatprep.subr.mxu0 0.0
    %4285 = vmatpush1.msra.mxu0 0.0
    %4286 = vmatprep.subr.mxu0 0.0
    %4287 = vmatpush1.msra.mxu0 0.0
    %4288 = vmatprep.subr.mxu0 0.0
    %4289 = vmatpush1.msra.mxu0 0.0
    %4290 = vmatprep.subr.mxu0 0.0
    %4291 = vmatpush1.msra.mxu0 0.0
    %4292 = vmatprep.subr.mxu0 0.0
    %4293 = vmatpush1.msra.mxu0 0.0
    %4294 = vmatprep.subr.mxu0 0.0
    %4295 = vmatpush1.msra.mxu0 0.0
    %4296 = vmatprep.mubr.f32.mxu0 0.0
    %4297 = vmatmul.mubr.f32.gmra.mrb[0].mxu0 %v4212
    %v4298 = vpop.f32.mrb[0].mxu0
    %v4299 = vadd.f32 0.0, %v4298
    %v4300 = vpop.f32.mrb[0].mxu0
    %4301 = vdwg.mxu0
    %4302 = vmatprep.subr.mxu0 0.0
    %4303 = vmatpush1.msra.mxu0 %v4044
    %4304 = vmatprep.subr.mxu0 0.0
    %4305 = vmatpush1.msra.mxu0 %v4045
    %4306 = vmatprep.subr.mxu0 0.0
    %4307 = vmatpush1.msra.mxu0 %v4046
    %4308 = vmatprep.subr.mxu0 0.0
    %4309 = vmatpush1.msra.mxu0 %v4047
    %4310 = vmatprep.subr.mxu0 0.0
    %4311 = vmatpush1.msra.mxu0 %v4048
    %4312 = vmatprep.subr.mxu0 0.0
    %4313 = vmatpush1.msra.mxu0 %v4049
    %4314 = vmatprep.subr.mxu0 0.0
    %4315 = vmatpush1.msra.mxu0 %v4050
    %4316 = vmatprep.subr.mxu0 0.0
    %4317 = vmatpush1.msra.mxu0 %v4051
    %4318 = vmatprep.subr.mxu0 0.0
    %4319 = vmatpush1.msra.mxu0 %v4052
    %4320 = vmatprep.subr.mxu0 0.0
    %4321 = vmatpush1.msra.mxu0 %v4053
    %4322 = vmatprep.subr.mxu0 0.0
    %4323 = vmatpush1.msra.mxu0 %v4054
    %4324 = vmatprep.subr.mxu0 0.0
    %4325 = vmatpush1.msra.mxu0 %v4055
    %4326 = vmatprep.subr.mxu0 0.0
    %4327 = vmatpush1.msra.mxu0 %v4056
    %4328 = vmatprep.subr.mxu0 0.0
    %4329 = vmatpush1.msra.mxu0 %v4057
    %4330 = vmatprep.subr.mxu0 0.0
    %4331 = vmatpush1.msra.mxu0 %v4058
    %4332 = vmatprep.subr.mxu0 0.0
    %4333 = vmatpush1.msra.mxu0 %v4059
    %4334 = vmatprep.subr.mxu0 0.0
    %4335 = vmatpush1.msra.mxu0 0.0
    %4336 = vmatprep.subr.mxu0 0.0
    %4337 = vmatpush1.msra.mxu0 0.0
    %4338 = vmatprep.subr.mxu0 0.0
    %4339 = vmatpush1.msra.mxu0 0.0
    %4340 = vmatprep.subr.mxu0 0.0
    %4341 = vmatpush1.msra.mxu0 0.0
    %4342 = vmatprep.subr.mxu0 0.0
    %4343 = vmatpush1.msra.mxu0 0.0
    %4344 = vmatprep.subr.mxu0 0.0
    %4345 = vmatpush1.msra.mxu0 0.0
    %4346 = vmatprep.subr.mxu0 0.0
    %4347 = vmatpush1.msra.mxu0 0.0
    %4348 = vmatprep.subr.mxu0 0.0
    %4349 = vmatpush1.msra.mxu0 0.0
    %4350 = vmatprep.subr.mxu0 0.0
    %4351 = vmatpush1.msra.mxu0 0.0
    %4352 = vmatprep.subr.mxu0 0.0
    %4353 = vmatpush1.msra.mxu0 0.0
    %4354 = vmatprep.subr.mxu0 0.0
    %4355 = vmatpush1.msra.mxu0 0.0
    %4356 = vmatprep.subr.mxu0 0.0
    %4357 = vmatpush1.msra.mxu0 0.0
    %4358 = vmatprep.subr.mxu0 0.0
    %4359 = vmatpush1.msra.mxu0 0.0
    %4360 = vmatprep.subr.mxu0 0.0
    %4361 = vmatpush1.msra.mxu0 0.0
    %4362 = vmatprep.subr.mxu0 0.0
    %4363 = vmatpush1.msra.mxu0 0.0
    %4364 = vmatprep.subr.mxu0 0.0
    %4365 = vmatpush1.msra.mxu0 0.0
    %4366 = vmatprep.mubr.f32.mxu0 0.0
    %4367 = vmatmul.mubr.f32.gmra.mrb[0].mxu0 %v4040
    %v4368 = vpop.f32.mrb[0].mxu0
    %v4369 = vadd.f32 %v4299, %v4368
    %v4370 = vpop.f32.mrb[0].mxu0
    %4371 = vdwg.mxu0
    %4372 = vmatprep.subr.mxu0 0.0
    %4373 = vmatpush1.xpose.msra.mxu0 %v3724
    %4374 = vmatprep.subr.mxu0 0.0
    %4375 = vmatpush1.xpose.msra.mxu0 0.0
    %4376 = vmatprep.subr.mxu0 0.0
    %4377 = vmatpush1.xpose.msra.mxu0 0.0
    %4378 = vmatprep.subr.mxu0 0.0
    %4379 = vmatpush1.xpose.msra.mxu0 0.0
    %4380 = vmatprep.subr.mxu0 0.0
    %4381 = vmatpush1.xpose.msra.mxu0 0.0
    %4382 = vmatprep.subr.mxu0 0.0
    %4383 = vmatpush1.xpose.msra.mxu0 0.0
    %4384 = vmatprep.subr.mxu0 0.0
    %4385 = vmatpush1.xpose.msra.mxu0 0.0
    %4386 = vmatprep.subr.mxu0 0.0
    %4387 = vmatpush1.xpose.msra.mxu0 0.0
    %4388 = vmatprep.subr.mxu0 0.0
    %4389 = vmatpush1.xpose.msra.mxu0 0.0
    %4390 = vmatprep.subr.mxu0 0.0
    %4391 = vmatpush1.xpose.msra.mxu0 0.0
    %4392 = vmatprep.subr.mxu0 0.0
    %4393 = vmatpush1.xpose.msra.mxu0 0.0
    %4394 = vmatprep.subr.mxu0 0.0
    %4395 = vmatpush1.xpose.msra.mxu0 0.0
    %4396 = vmatprep.subr.mxu0 0.0
    %4397 = vmatpush1.xpose.msra.mxu0 0.0
    %4398 = vmatprep.subr.mxu0 0.0
    %4399 = vmatpush1.xpose.msra.mxu0 0.0
    %4400 = vmatprep.subr.mxu0 0.0
    %4401 = vmatpush1.xpose.msra.mxu0 0.0
    %4402 = vmatprep.subr.mxu0 0.0
    %4403 = vmatpush1.xpose.msra.mxu0 0.0
    %4404 = vmatprep.subr.mxu0 0.0
    %4405 = vmatpush1.xpose.msra.mxu0 0.0
    %4406 = vmatprep.subr.mxu0 0.0
    %4407 = vmatpush1.xpose.msra.mxu0 0.0
    %4408 = vmatprep.subr.mxu0 0.0
    %4409 = vmatpush1.xpose.msra.mxu0 0.0
    %4410 = vmatprep.subr.mxu0 0.0
    %4411 = vmatpush1.xpose.msra.mxu0 0.0
    %4412 = vmatprep.subr.mxu0 0.0
    %4413 = vmatpush1.xpose.msra.mxu0 0.0
    %4414 = vmatprep.subr.mxu0 0.0
    %4415 = vmatpush1.xpose.msra.mxu0 0.0
    %4416 = vmatprep.subr.mxu0 0.0
    %4417 = vmatpush1.xpose.msra.mxu0 0.0
    %4418 = vmatprep.subr.mxu0 0.0
    %4419 = vmatpush1.xpose.msra.mxu0 0.0
    %4420 = vmatprep.subr.mxu0 0.0
    %4421 = vmatpush1.xpose.msra.mxu0 0.0
    %4422 = vmatprep.subr.mxu0 0.0
    %4423 = vmatpush1.xpose.msra.mxu0 0.0
    %4424 = vmatprep.subr.mxu0 0.0
    %4425 = vmatpush1.xpose.msra.mxu0 0.0
    %4426 = vmatprep.subr.mxu0 0.0
    %4427 = vmatpush1.xpose.msra.mxu0 0.0
    %4428 = vmatprep.subr.mxu0 0.0
    %4429 = vmatpush1.xpose.msra.mxu0 0.0
    %4430 = vmatprep.subr.mxu0 0.0
    %4431 = vmatpush1.xpose.msra.mxu0 0.0
    %4432 = vmatprep.subr.mxu0 0.0
    %4433 = vmatpush1.xpose.msra.mxu0 0.0
    %4434 = vmatprep.subr.mxu0 0.0
    %4435 = vmatpush1.xpose.msra.mxu0 0.0
    %4436 = vmatprep.mubr.f32.mxu0 0.0
    %4437 = vmatmul.mubr.f32.gmra.mrb[0].mxu0 %v3570
    %v4438 = vpop.f32.mrb[0].mxu0
    %v4439 = vadd.f32 0.0, %v4438
    %v4440 = vpop.f32.mrb[0].mxu0
    %4441 = vdwg.mxu0
    %v4442 = vmul.f32 %v4439, 0.35355338
    %v4443 = vsel %vm1072, %v4442, -inf
    %4444 = vmax.xlane.f32.xlu0 %v4443
    %v4445 = vpop.xlane.xlu0 %4444
    %v4446 = vsub.f32 %v4442, %v4445
    %v4447 = vmul.f32 %v4446, 1.442695
    %v4448 = vpow.pop %v4447
    %v4449 = vsel %vm1072, %v4448, 0.0
    %4450 = vadd.xlane.f32.xlu0 %v4449
    %v4451 = vpop.xlane.xlu0 %4450
    %v4452 = vrcp.pop %v4451
    %v4453 = vmul.f32 %v4448, %v4452
    %v4455 = vsel %vm1072, %v4453, 0
    %4457 = vmatprep.subr.mxu0 0.0
    %4458 = vmatpush1.msra.mxu0 %v3878
    %4459 = vmatprep.subr.mxu0 0.0
    %4460 = vmatpush1.msra.mxu0 0.0
    %4461 = vmatprep.subr.mxu0 0.0
    %4462 = vmatpush1.msra.mxu0 0.0
    %4463 = vmatprep.subr.mxu0 0.0
    %4464 = vmatpush1.msra.mxu0 0.0
    %4465 = vmatprep.subr.mxu0 0.0
    %4466 = vmatpush1.msra.mxu0 0.0
    %4467 = vmatprep.subr.mxu0 0.0
    %4468 = vmatpush1.msra.mxu0 0.0
    %4469 = vmatprep.subr.mxu0 0.0
    %4470 = vmatpush1.msra.mxu0 0.0
    %4471 = vmatprep.subr.mxu0 0.0
    %4472 = vmatpush1.msra.mxu0 0.0
    %4473 = vmatprep.subr.mxu0 0.0
    %4474 = vmatpush1.msra.mxu0 0.0
    %4475 = vmatprep.subr.mxu0 0.0
    %4476 = vmatpush1.msra.mxu0 0.0
    %4477 = vmatprep.subr.mxu0 0.0
    %4478 = vmatpush1.msra.mxu0 0.0
    %4479 = vmatprep.subr.mxu0 0.0
    %4480 = vmatpush1.msra.mxu0 0.0
    %4481 = vmatprep.subr.mxu0 0.0
    %4482 = vmatpush1.msra.mxu0 0.0
    %4483 = vmatprep.subr.mxu0 0.0
    %4484 = vmatpush1.msra.mxu0 0.0
    %4485 = vmatprep.subr.mxu0 0.0
    %4486 = vmatpush1.msra.mxu0 0.0
    %4487 = vmatprep.subr.mxu0 0.0
    %4488 = vmatpush1.msra.mxu0 0.0
    %4489 = vmatprep.subr.mxu0 0.0
    %4490 = vmatpush1.msra.mxu0 0.0
    %4491 = vmatprep.subr.mxu0 0.0
    %4492 = vmatpush1.msra.mxu0 0.0
    %4493 = vmatprep.subr.mxu0 0.0
    %4494 = vmatpush1.msra.mxu0 0.0
    %4495 = vmatprep.subr.mxu0 0.0
    %4496 = vmatpush1.msra.mxu0 0.0
    %4497 = vmatprep.subr.mxu0 0.0
    %4498 = vmatpush1.msra.mxu0 0.0
    %4499 = vmatprep.subr.mxu0 0.0
    %4500 = vmatpush1.msra.mxu0 0.0
    %4501 = vmatprep.subr.mxu0 0.0
    %4502 = vmatpush1.msra.mxu0 0.0
    %4503 = vmatprep.subr.mxu0 0.0
    %4504 = vmatpush1.msra.mxu0 0.0
    %4505 = vmatprep.subr.mxu0 0.0
    %4506 = vmatpush1.msra.mxu0 0.0
    %4507 = vmatprep.subr.mxu0 0.0
    %4508 = vmatpush1.msra.mxu0 0.0
    %4509 = vmatprep.subr.mxu0 0.0
    %4510 = vmatpush1.msra.mxu0 0.0
    %4511 = vmatprep.subr.mxu0 0.0
    %4512 = vmatpush1.msra.mxu0 0.0
    %4513 = vmatprep.subr.mxu0 0.0
    %4514 = vmatpush1.msra.mxu0 0.0
    %4515 = vmatprep.subr.mxu0 0.0
    %4516 = vmatpush1.msra.mxu0 0.0
    %4517 = vmatprep.subr.mxu0 0.0
    %4518 = vmatpush1.msra.mxu0 0.0
    %4519 = vmatprep.subr.mxu0 0.0
    %4520 = vmatpush1.msra.mxu0 0.0
    %4521 = vmatprep.mubr.f32.mxu0 0.0
    %4522 = vmatmul.mubr.f32.gmra.mrb[0].mxu0 %v4455
    %v4523 = vpop.f32.mrb[0].mxu0
    %v4524 = vadd.f32 0.0, %v4523
    %v4525 = vpop.f32.mrb[0].mxu0
    %4526 = vdwg.mxu0
    %s4527 = scalar_lea.vmem [#allocation6], 768
    %v4528 = vld [vmem:[%s4527] sm:$0xff]
    %v4529 = vld [vmem:[%s4527 + $0x8] sm:$0xff]
    %v4530 = vld [vmem:[%s4527 + $0x10] sm:$0xff]
    %v4531 = vld [vmem:[%s4527 + $0x18] sm:$0xff]
    %v4532 = vld [vmem:[%s4527 + $0x20] sm:$0xff]
    %v4533 = vld [vmem:[%s4527 + $0x28] sm:$0xff]
    %v4534 = vld [vmem:[%s4527 + $0x30] sm:$0xff]
    %v4535 = vld [vmem:[%s4527 + $0x38] sm:$0xff]
    %v4536 = vld [vmem:[%s4527 + $0x40] sm:$0xff]
    %v4537 = vld [vmem:[%s4527 + $0x48] sm:$0xff]
    %v4538 = vld [vmem:[%s4527 + $0x50] sm:$0xff]
    %v4539 = vld [vmem:[%s4527 + $0x58] sm:$0xff]
    %v4540 = vld [vmem:[%s4527 + $0x60] sm:$0xff]
    %v4541 = vld [vmem:[%s4527 + $0x68] sm:$0xff]
    %v4542 = vld [vmem:[%s4527 + $0x70] sm:$0xff]
    %v4543 = vld [vmem:[%s4527 + $0x78] sm:$0xff]
    %4544 = vmatprep.subr.mxu0 0.0
    %4545 = vmatpush1.msra.mxu0 %v4528
    %4546 = vmatprep.subr.mxu0 0.0
    %4547 = vmatpush1.msra.mxu0 %v4529
    %4548 = vmatprep.subr.mxu0 0.0
    %4549 = vmatpush1.msra.mxu0 %v4530
    %4550 = vmatprep.subr.mxu0 0.0
    %4551 = vmatpush1.msra.mxu0 %v4531
    %4552 = vmatprep.subr.mxu0 0.0
    %4553 = vmatpush1.msra.mxu0 %v4532
    %4554 = vmatprep.subr.mxu0 0.0
    %4555 = vmatpush1.msra.mxu0 %v4533
    %4556 = vmatprep.subr.mxu0 0.0
    %4557 = vmatpush1.msra.mxu0 %v4534
    %4558 = vmatprep.subr.mxu0 0.0
    %4559 = vmatpush1.msra.mxu0 %v4535
    %4560 = vmatprep.subr.mxu0 0.0
    %4561 = vmatpush1.msra.mxu0 %v4536
    %4562 = vmatprep.subr.mxu0 0.0
    %4563 = vmatpush1.msra.mxu0 %v4537
    %4564 = vmatprep.subr.mxu0 0.0
    %4565 = vmatpush1.msra.mxu0 %v4538
    %4566 = vmatprep.subr.mxu0 0.0
    %4567 = vmatpush1.msra.mxu0 %v4539
    %4568 = vmatprep.subr.mxu0 0.0
    %4569 = vmatpush1.msra.mxu0 %v4540
    %4570 = vmatprep.subr.mxu0 0.0
    %4571 = vmatpush1.msra.mxu0 %v4541
    %4572 = vmatprep.subr.mxu0 0.0
    %4573 = vmatpush1.msra.mxu0 %v4542
    %4574 = vmatprep.subr.mxu0 0.0
    %4575 = vmatpush1.msra.mxu0 %v4543
    %4576 = vmatprep.subr.mxu0 0.0
    %4577 = vmatpush1.msra.mxu0 0.0
    %4578 = vmatprep.subr.mxu0 0.0
    %4579 = vmatpush1.msra.mxu0 0.0
    %4580 = vmatprep.subr.mxu0 0.0
    %4581 = vmatpush1.msra.mxu0 0.0
    %4582 = vmatprep.subr.mxu0 0.0
    %4583 = vmatpush1.msra.mxu0 0.0
    %4584 = vmatprep.subr.mxu0 0.0
    %4585 = vmatpush1.msra.mxu0 0.0
    %4586 = vmatprep.subr.mxu0 0.0
    %4587 = vmatpush1.msra.mxu0 0.0
    %4588 = vmatprep.subr.mxu0 0.0
    %4589 = vmatpush1.msra.mxu0 0.0
    %4590 = vmatprep.subr.mxu0 0.0
    %4591 = vmatpush1.msra.mxu0 0.0
    %4592 = vmatprep.subr.mxu0 0.0
    %4593 = vmatpush1.msra.mxu0 0.0
    %4594 = vmatprep.subr.mxu0 0.0
    %4595 = vmatpush1.msra.mxu0 0.0
    %4596 = vmatprep.subr.mxu0 0.0
    %4597 = vmatpush1.msra.mxu0 0.0
    %4598 = vmatprep.subr.mxu0 0.0
    %4599 = vmatpush1.msra.mxu0 0.0
    %4600 = vmatprep.subr.mxu0 0.0
    %4601 = vmatpush1.msra.mxu0 0.0
    %4602 = vmatprep.subr.mxu0 0.0
    %4603 = vmatpush1.msra.mxu0 0.0
    %4604 = vmatprep.subr.mxu0 0.0
    %4605 = vmatpush1.msra.mxu0 0.0
    %4606 = vmatprep.subr.mxu0 0.0
    %4607 = vmatpush1.msra.mxu0 0.0
    %4608 = vmatprep.mubr.f32.mxu0 0.0
    %4609 = vmatmul.mubr.f32.gmra.mrb[0].mxu0 %v4524
    %v4610 = vpop.f32.mrb[0].mxu0
    %v4611 = vadd.f32 0.0, %v4610
    %v4612 = vpop.f32.mrb[0].mxu0
    %4613 = vdwg.mxu0
    %v4614 = vadd.f32 %v4369, %v4611
    %4615 = vmatprep.subr.mxu0 0.0
    %4616 = vmatpush1.xpose.msra.mxu0 %v3726
    %4617 = vmatprep.subr.mxu0 0.0
    %4618 = vmatpush1.xpose.msra.mxu0 0.0
    %4619 = vmatprep.subr.mxu0 0.0
    %4620 = vmatpush1.xpose.msra.mxu0 0.0
    %4621 = vmatprep.subr.mxu0 0.0
    %4622 = vmatpush1.xpose.msra.mxu0 0.0
    %4623 = vmatprep.subr.mxu0 0.0
    %4624 = vmatpush1.xpose.msra.mxu0 0.0
    %4625 = vmatprep.subr.mxu0 0.0
    %4626 = vmatpush1.xpose.msra.mxu0 0.0
    %4627 = vmatprep.subr.mxu0 0.0
    %4628 = vmatpush1.xpose.msra.mxu0 0.0
    %4629 = vmatprep.subr.mxu0 0.0
    %4630 = vmatpush1.xpose.msra.mxu0 0.0
    %4631 = vmatprep.subr.mxu0 0.0
    %4632 = vmatpush1.xpose.msra.mxu0 0.0
    %4633 = vmatprep.subr.mxu0 0.0
    %4634 = vmatpush1.xpose.msra.mxu0 0.0
    %4635 = vmatprep.subr.mxu0 0.0
    %4636 = vmatpush1.xpose.msra.mxu0 0.0
    %4637 = vmatprep.subr.mxu0 0.0
    %4638 = vmatpush1.xpose.msra.mxu0 0.0
    %4639 = vmatprep.subr.mxu0 0.0
    %4640 = vmatpush1.xpose.msra.mxu0 0.0
    %4641 = vmatprep.subr.mxu0 0.0
    %4642 = vmatpush1.xpose.msra.mxu0 0.0
    %4643 = vmatprep.subr.mxu0 0.0
    %4644 = vmatpush1.xpose.msra.mxu0 0.0
    %4645 = vmatprep.subr.mxu0 0.0
    %4646 = vmatpush1.xpose.msra.mxu0 0.0
    %4647 = vmatprep.subr.mxu0 0.0
    %4648 = vmatpush1.xpose.msra.mxu0 0.0
    %4649 = vmatprep.subr.mxu0 0.0
    %4650 = vmatpush1.xpose.msra.mxu0 0.0
    %4651 = vmatprep.subr.mxu0 0.0
    %4652 = vmatpush1.xpose.msra.mxu0 0.0
    %4653 = vmatprep.subr.mxu0 0.0
    %4654 = vmatpush1.xpose.msra.mxu0 0.0
    %4655 = vmatprep.subr.mxu0 0.0
    %4656 = vmatpush1.xpose.msra.mxu0 0.0
    %4657 = vmatprep.subr.mxu0 0.0
    %4658 = vmatpush1.xpose.msra.mxu0 0.0
    %4659 = vmatprep.subr.mxu0 0.0
    %4660 = vmatpush1.xpose.msra.mxu0 0.0
    %4661 = vmatprep.subr.mxu0 0.0
    %4662 = vmatpush1.xpose.msra.mxu0 0.0
    %4663 = vmatprep.subr.mxu0 0.0
    %4664 = vmatpush1.xpose.msra.mxu0 0.0
    %4665 = vmatprep.subr.mxu0 0.0
    %4666 = vmatpush1.xpose.msra.mxu0 0.0
    %4667 = vmatprep.subr.mxu0 0.0
    %4668 = vmatpush1.xpose.msra.mxu0 0.0
    %4669 = vmatprep.subr.mxu0 0.0
    %4670 = vmatpush1.xpose.msra.mxu0 0.0
    %4671 = vmatprep.subr.mxu0 0.0
    %4672 = vmatpush1.xpose.msra.mxu0 0.0
    %4673 = vmatprep.subr.mxu0 0.0
    %4674 = vmatpush1.xpose.msra.mxu0 0.0
    %4675 = vmatprep.subr.mxu0 0.0
    %4676 = vmatpush1.xpose.msra.mxu0 0.0
    %4677 = vmatprep.subr.mxu0 0.0
    %4678 = vmatpush1.xpose.msra.mxu0 0.0
    %4679 = vmatprep.mubr.f32.mxu0 0.0
    %4680 = vmatmul.mubr.f32.gmra.mrb[0].mxu0 %v3572
    %v4681 = vpop.f32.mrb[0].mxu0
    %v4682 = vadd.f32 0.0, %v4681
    %v4683 = vpop.f32.mrb[0].mxu0
    %4684 = vdwg.mxu0
    %v4685 = vmul.f32 %v4682, 0.35355338
    %v4686 = vsel %vm1072, %v4685, -inf
    %4687 = vmax.xlane.f32.xlu0 %v4686
    %v4688 = vpop.xlane.xlu0 %4687
    %v4689 = vsub.f32 %v4685, %v4688
    %v4690 = vmul.f32 %v4689, 1.442695
    %v4691 = vpow.pop %v4690
    %v4692 = vsel %vm1072, %v4691, 0.0
    %4693 = vadd.xlane.f32.xlu0 %v4692
    %v4694 = vpop.xlane.xlu0 %4693
    %v4695 = vrcp.pop %v4694
    %v4696 = vmul.f32 %v4691, %v4695
    %v4698 = vsel %vm1072, %v4696, 0
    %4700 = vmatprep.subr.mxu0 0.0
    %4701 = vmatpush1.msra.mxu0 %v3880
    %4702 = vmatprep.subr.mxu0 0.0
    %4703 = vmatpush1.msra.mxu0 0.0
    %4704 = vmatprep.subr.mxu0 0.0
    %4705 = vmatpush1.msra.mxu0 0.0
    %4706 = vmatprep.subr.mxu0 0.0
    %4707 = vmatpush1.msra.mxu0 0.0
    %4708 = vmatprep.subr.mxu0 0.0
    %4709 = vmatpush1.msra.mxu0 0.0
    %4710 = vmatprep.subr.mxu0 0.0
    %4711 = vmatpush1.msra.mxu0 0.0
    %4712 = vmatprep.subr.mxu0 0.0
    %4713 = vmatpush1.msra.mxu0 0.0
    %4714 = vmatprep.subr.mxu0 0.0
    %4715 = vmatpush1.msra.mxu0 0.0
    %4716 = vmatprep.subr.mxu0 0.0
    %4717 = vmatpush1.msra.mxu0 0.0
    %4718 = vmatprep.subr.mxu0 0.0
    %4719 = vmatpush1.msra.mxu0 0.0
    %4720 = vmatprep.subr.mxu0 0.0
    %4721 = vmatpush1.msra.mxu0 0.0
    %4722 = vmatprep.subr.mxu0 0.0
    %4723 = vmatpush1.msra.mxu0 0.0
    %4724 = vmatprep.subr.mxu0 0.0
    %4725 = vmatpush1.msra.mxu0 0.0
    %4726 = vmatprep.subr.mxu0 0.0
    %4727 = vmatpush1.msra.mxu0 0.0
    %4728 = vmatprep.subr.mxu0 0.0
    %4729 = vmatpush1.msra.mxu0 0.0
    %4730 = vmatprep.subr.mxu0 0.0
    %4731 = vmatpush1.msra.mxu0 0.0
    %4732 = vmatprep.subr.mxu0 0.0
    %4733 = vmatpush1.msra.mxu0 0.0
    %4734 = vmatprep.subr.mxu0 0.0
    %4735 = vmatpush1.msra.mxu0 0.0
    %4736 = vmatprep.subr.mxu0 0.0
    %4737 = vmatpush1.msra.mxu0 0.0
    %4738 = vmatprep.subr.mxu0 0.0
    %4739 = vmatpush1.msra.mxu0 0.0
    %4740 = vmatprep.subr.mxu0 0.0
    %4741 = vmatpush1.msra.mxu0 0.0
    %4742 = vmatprep.subr.mxu0 0.0
    %4743 = vmatpush1.msra.mxu0 0.0
    %4744 = vmatprep.subr.mxu0 0.0
    %4745 = vmatpush1.msra.mxu0 0.0
    %4746 = vmatprep.subr.mxu0 0.0
    %4747 = vmatpush1.msra.mxu0 0.0
    %4748 = vmatprep.subr.mxu0 0.0
    %4749 = vmatpush1.msra.mxu0 0.0
    %4750 = vmatprep.subr.mxu0 0.0
    %4751 = vmatpush1.msra.mxu0 0.0
    %4752 = vmatprep.subr.mxu0 0.0
    %4753 = vmatpush1.msra.mxu0 0.0
    %4754 = vmatprep.subr.mxu0 0.0
    %4755 = vmatpush1.msra.mxu0 0.0
    %4756 = vmatprep.subr.mxu0 0.0
    %4757 = vmatpush1.msra.mxu0 0.0
    %4758 = vmatprep.subr.mxu0 0.0
    %4759 = vmatpush1.msra.mxu0 0.0
    %4760 = vmatprep.subr.mxu0 0.0
    %4761 = vmatpush1.msra.mxu0 0.0
    %4762 = vmatprep.subr.mxu0 0.0
    %4763 = vmatpush1.msra.mxu0 0.0
    %4764 = vmatprep.mubr.f32.mxu0 0.0
    %4765 = vmatmul.mubr.f32.gmra.mrb[0].mxu0 %v4698
    %v4766 = vpop.f32.mrb[0].mxu0
    %v4767 = vadd.f32 0.0, %v4766
    %v4768 = vpop.f32.mrb[0].mxu0
    %4769 = vdwg.mxu0
    %s4770 = scalar_lea.vmem [#allocation6], 896
    %v4771 = vld [vmem:[%s4770] sm:$0xff]
    %v4772 = vld [vmem:[%s4770 + $0x8] sm:$0xff]
    %v4773 = vld [vmem:[%s4770 + $0x10] sm:$0xff]
    %v4774 = vld [vmem:[%s4770 + $0x18] sm:$0xff]
    %v4775 = vld [vmem:[%s4770 + $0x20] sm:$0xff]
    %v4776 = vld [vmem:[%s4770 + $0x28] sm:$0xff]
    %v4777 = vld [vmem:[%s4770 + $0x30] sm:$0xff]
    %v4778 = vld [vmem:[%s4770 + $0x38] sm:$0xff]
    %v4779 = vld [vmem:[%s4770 + $0x40] sm:$0xff]
    %v4780 = vld [vmem:[%s4770 + $0x48] sm:$0xff]
    %v4781 = vld [vmem:[%s4770 + $0x50] sm:$0xff]
    %v4782 = vld [vmem:[%s4770 + $0x58] sm:$0xff]
    %v4783 = vld [vmem:[%s4770 + $0x60] sm:$0xff]
    %v4784 = vld [vmem:[%s4770 + $0x68] sm:$0xff]
    %v4785 = vld [vmem:[%s4770 + $0x70] sm:$0xff]
    %v4786 = vld [vmem:[%s4770 + $0x78] sm:$0xff]
    %4787 = vmatprep.subr.mxu0 0.0
    %4788 = vmatpush1.msra.mxu0 %v4771
    %4789 = vmatprep.subr.mxu0 0.0
    %4790 = vmatpush1.msra.mxu0 %v4772
    %4791 = vmatprep.subr.mxu0 0.0
    %4792 = vmatpush1.msra.mxu0 %v4773
    %4793 = vmatprep.subr.mxu0 0.0
    %4794 = vmatpush1.msra.mxu0 %v4774
    %4795 = vmatprep.subr.mxu0 0.0
    %4796 = vmatpush1.msra.mxu0 %v4775
    %4797 = vmatprep.subr.mxu0 0.0
    %4798 = vmatpush1.msra.mxu0 %v4776
    %4799 = vmatprep.subr.mxu0 0.0
    %4800 = vmatpush1.msra.mxu0 %v4777
    %4801 = vmatprep.subr.mxu0 0.0
    %4802 = vmatpush1.msra.mxu0 %v4778
    %4803 = vmatprep.subr.mxu0 0.0
    %4804 = vmatpush1.msra.mxu0 %v4779
    %4805 = vmatprep.subr.mxu0 0.0
    %4806 = vmatpush1.msra.mxu0 %v4780
    %4807 = vmatprep.subr.mxu0 0.0
    %4808 = vmatpush1.msra.mxu0 %v4781
    %4809 = vmatprep.subr.mxu0 0.0
    %4810 = vmatpush1.msra.mxu0 %v4782
    %4811 = vmatprep.subr.mxu0 0.0
    %4812 = vmatpush1.msra.mxu0 %v4783
    %4813 = vmatprep.subr.mxu0 0.0
    %4814 = vmatpush1.msra.mxu0 %v4784
    %4815 = vmatprep.subr.mxu0 0.0
    %4816 = vmatpush1.msra.mxu0 %v4785
    %4817 = vmatprep.subr.mxu0 0.0
    %4818 = vmatpush1.msra.mxu0 %v4786
    %4819 = vmatprep.subr.mxu0 0.0
    %4820 = vmatpush1.msra.mxu0 0.0
    %4821 = vmatprep.subr.mxu0 0.0
    %4822 = vmatpush1.msra.mxu0 0.0
    %4823 = vmatprep.subr.mxu0 0.0
    %4824 = vmatpush1.msra.mxu0 0.0
    %4825 = vmatprep.subr.mxu0 0.0
    %4826 = vmatpush1.msra.mxu0 0.0
    %4827 = vmatprep.subr.mxu0 0.0
    %4828 = vmatpush1.msra.mxu0 0.0
    %4829 = vmatprep.subr.mxu0 0.0
    %4830 = vmatpush1.msra.mxu0 0.0
    %4831 = vmatprep.subr.mxu0 0.0
    %4832 = vmatpush1.msra.mxu0 0.0
    %4833 = vmatprep.subr.mxu0 0.0
    %4834 = vmatpush1.msra.mxu0 0.0
    %4835 = vmatprep.subr.mxu0 0.0
    %4836 = vmatpush1.msra.mxu0 0.0
    %4837 = vmatprep.subr.mxu0 0.0
    %4838 = vmatpush1.msra.mxu0 0.0
    %4839 = vmatprep.subr.mxu0 0.0
    %4840 = vmatpush1.msra.mxu0 0.0
    %4841 = vmatprep.subr.mxu0 0.0
    %4842 = vmatpush1.msra.mxu0 0.0
    %4843 = vmatprep.subr.mxu0 0.0
    %4844 = vmatpush1.msra.mxu0 0.0
    %4845 = vmatprep.subr.mxu0 0.0
    %4846 = vmatpush1.msra.mxu0 0.0
    %4847 = vmatprep.subr.mxu0 0.0
    %4848 = vmatpush1.msra.mxu0 0.0
    %4849 = vmatprep.subr.mxu0 0.0
    %4850 = vmatpush1.msra.mxu0 0.0
    %4851 = vmatprep.mubr.f32.mxu0 0.0
    %4852 = vmatmul.mubr.f32.gmra.mrb[0].mxu0 %v4767
    %v4853 = vpop.f32.mrb[0].mxu0
    %v4854 = vadd.f32 0.0, %v4853
    %v4855 = vpop.f32.mrb[0].mxu0
    %4856 = vdwg.mxu0
    %v4857 = vadd.f32 %v4614, %v4854
    %4858 = vmatprep.subr.mxu0 0.0
    %4859 = vmatpush1.xpose.msra.mxu0 %v3653
    %4860 = vmatprep.subr.mxu0 0.0
    %4861 = vmatpush1.xpose.msra.mxu0 0.0
    %4862 = vmatprep.subr.mxu0 0.0
    %4863 = vmatpush1.xpose.msra.mxu0 0.0
    %4864 = vmatprep.subr.mxu0 0.0
    %4865 = vmatpush1.xpose.msra.mxu0 0.0
    %4866 = vmatprep.subr.mxu0 0.0
    %4867 = vmatpush1.xpose.msra.mxu0 0.0
    %4868 = vmatprep.subr.mxu0 0.0
    %4869 = vmatpush1.xpose.msra.mxu0 0.0
    %4870 = vmatprep.subr.mxu0 0.0
    %4871 = vmatpush1.xpose.msra.mxu0 0.0
    %4872 = vmatprep.subr.mxu0 0.0
    %4873 = vmatpush1.xpose.msra.mxu0 0.0
    %4874 = vmatprep.subr.mxu0 0.0
    %4875 = vmatpush1.xpose.msra.mxu0 0.0
    %4876 = vmatprep.subr.mxu0 0.0
    %4877 = vmatpush1.xpose.msra.mxu0 0.0
    %4878 = vmatprep.subr.mxu0 0.0
    %4879 = vmatpush1.xpose.msra.mxu0 0.0
    %4880 = vmatprep.subr.mxu0 0.0
    %4881 = vmatpush1.xpose.msra.mxu0 0.0
    %4882 = vmatprep.subr.mxu0 0.0
    %4883 = vmatpush1.xpose.msra.mxu0 0.0
    %4884 = vmatprep.subr.mxu0 0.0
    %4885 = vmatpush1.xpose.msra.mxu0 0.0
    %4886 = vmatprep.subr.mxu0 0.0
    %4887 = vmatpush1.xpose.msra.mxu0 0.0
    %4888 = vmatprep.subr.mxu0 0.0
    %4889 = vmatpush1.xpose.msra.mxu0 0.0
    %4890 = vmatprep.subr.mxu0 0.0
    %4891 = vmatpush1.xpose.msra.mxu0 0.0
    %4892 = vmatprep.subr.mxu0 0.0
    %4893 = vmatpush1.xpose.msra.mxu0 0.0
    %4894 = vmatprep.subr.mxu0 0.0
    %4895 = vmatpush1.xpose.msra.mxu0 0.0
    %4896 = vmatprep.subr.mxu0 0.0
    %4897 = vmatpush1.xpose.msra.mxu0 0.0
    %4898 = vmatprep.subr.mxu0 0.0
    %4899 = vmatpush1.xpose.msra.mxu0 0.0
    %4900 = vmatprep.subr.mxu0 0.0
    %4901 = vmatpush1.xpose.msra.mxu0 0.0
    %4902 = vmatprep.subr.mxu0 0.0
    %4903 = vmatpush1.xpose.msra.mxu0 0.0
    %4904 = vmatprep.subr.mxu0 0.0
    %4905 = vmatpush1.xpose.msra.mxu0 0.0
    %4906 = vmatprep.subr.mxu0 0.0
    %4907 = vmatpush1.xpose.msra.mxu0 0.0
    %4908 = vmatprep.subr.mxu0 0.0
    %4909 = vmatpush1.xpose.msra.mxu0 0.0
    %4910 = vmatprep.subr.mxu0 0.0
    %4911 = vmatpush1.xpose.msra.mxu0 0.0
    %4912 = vmatprep.subr.mxu0 0.0
    %4913 = vmatpush1.xpose.msra.mxu0 0.0
    %4914 = vmatprep.subr.mxu0 0.0
    %4915 = vmatpush1.xpose.msra.mxu0 0.0
    %4916 = vmatprep.subr.mxu0 0.0
    %4917 = vmatpush1.xpose.msra.mxu0 0.0
    %4918 = vmatprep.subr.mxu0 0.0
    %4919 = vmatpush1.xpose.msra.mxu0 0.0
    %4920 = vmatprep.subr.mxu0 0.0
    %4921 = vmatpush1.xpose.msra.mxu0 0.0
    %4922 = vmatprep.mubr.f32.mxu0 0.0
    %4923 = vmatmul.mubr.f32.gmra.mrb[0].mxu0 %v3499
    %v4924 = vpop.f32.mrb[0].mxu0
    %v4925 = vadd.f32 0.0, %v4924
    %v4926 = vpop.f32.mrb[0].mxu0
    %4927 = vdwg.mxu0
    %v4928 = vmul.f32 %v4925, 0.35355338
    %v4929 = vsel %vm1072, %v4928, -inf
    %4930 = vmax.xlane.f32.xlu0 %v4929
    %v4931 = vpop.xlane.xlu0 %4930
    %v4932 = vsub.f32 %v4928, %v4931
    %v4933 = vmul.f32 %v4932, 1.442695
    %v4934 = vpow.pop %v4933
    %v4935 = vsel %vm1072, %v4934, 0.0
    %4936 = vadd.xlane.f32.xlu0 %v4935
    %v4937 = vpop.xlane.xlu0 %4936
    %v4938 = vrcp.pop %v4937
    %v4939 = vmul.f32 %v4934, %v4938
    %v4941 = vsel %vm1072, %v4939, 0
    %4943 = vmatprep.subr.mxu0 0.0
    %4944 = vmatpush1.msra.mxu0 %v3807
    %4945 = vmatprep.subr.mxu0 0.0
    %4946 = vmatpush1.msra.mxu0 0.0
    %4947 = vmatprep.subr.mxu0 0.0
    %4948 = vmatpush1.msra.mxu0 0.0
    %4949 = vmatprep.subr.mxu0 0.0
    %4950 = vmatpush1.msra.mxu0 0.0
    %4951 = vmatprep.subr.mxu0 0.0
    %4952 = vmatpush1.msra.mxu0 0.0
    %4953 = vmatprep.subr.mxu0 0.0
    %4954 = vmatpush1.msra.mxu0 0.0
    %4955 = vmatprep.subr.mxu0 0.0
    %4956 = vmatpush1.msra.mxu0 0.0
    %4957 = vmatprep.subr.mxu0 0.0
    %4958 = vmatpush1.msra.mxu0 0.0
    %4959 = vmatprep.subr.mxu0 0.0
    %4960 = vmatpush1.msra.mxu0 0.0
    %4961 = vmatprep.subr.mxu0 0.0
    %4962 = vmatpush1.msra.mxu0 0.0
    %4963 = vmatprep.subr.mxu0 0.0
    %4964 = vmatpush1.msra.mxu0 0.0
    %4965 = vmatprep.subr.mxu0 0.0
    %4966 = vmatpush1.msra.mxu0 0.0
    %4967 = vmatprep.subr.mxu0 0.0
    %4968 = vmatpush1.msra.mxu0 0.0
    %4969 = vmatprep.subr.mxu0 0.0
    %4970 = vmatpush1.msra.mxu0 0.0
    %4971 = vmatprep.subr.mxu0 0.0
    %4972 = vmatpush1.msra.mxu0 0.0
    %4973 = vmatprep.subr.mxu0 0.0
    %4974 = vmatpush1.msra.mxu0 0.0
    %4975 = vmatprep.subr.mxu0 0.0
    %4976 = vmatpush1.msra.mxu0 0.0
    %4977 = vmatprep.subr.mxu0 0.0
    %4978 = vmatpush1.msra.mxu0 0.0
    %4979 = vmatprep.subr.mxu0 0.0
    %4980 = vmatpush1.msra.mxu0 0.0
    %4981 = vmatprep.subr.mxu0 0.0
    %4982 = vmatpush1.msra.mxu0 0.0
    %4983 = vmatprep.subr.mxu0 0.0
    %4984 = vmatpush1.msra.mxu0 0.0
    %4985 = vmatprep.subr.mxu0 0.0
    %4986 = vmatpush1.msra.mxu0 0.0
    %4987 = vmatprep.subr.mxu0 0.0
    %4988 = vmatpush1.msra.mxu0 0.0
    %4989 = vmatprep.subr.mxu0 0.0
    %4990 = vmatpush1.msra.mxu0 0.0
    %4991 = vmatprep.subr.mxu0 0.0
    %4992 = vmatpush1.msra.mxu0 0.0
    %4993 = vmatprep.subr.mxu0 0.0
    %4994 = vmatpush1.msra.mxu0 0.0
    %4995 = vmatprep.subr.mxu0 0.0
    %4996 = vmatpush1.msra.mxu0 0.0
    %4997 = vmatprep.subr.mxu0 0.0
    %4998 = vmatpush1.msra.mxu0 0.0
    %4999 = vmatprep.subr.mxu0 0.0
    %5000 = vmatpush1.msra.mxu0 0.0
    %5001 = vmatprep.subr.mxu0 0.0
    %5002 = vmatpush1.msra.mxu0 0.0
    %5003 = vmatprep.subr.mxu0 0.0
    %5004 = vmatpush1.msra.mxu0 0.0
    %5005 = vmatprep.subr.mxu0 0.0
    %5006 = vmatpush1.msra.mxu0 0.0
    %5007 = vmatprep.mubr.f32.mxu0 0.0
    %5008 = vmatmul.mubr.f32.gmra.mrb[0].mxu0 %v4941
    %v5009 = vpop.f32.mrb[0].mxu0
    %v5010 = vadd.f32 0.0, %v5009
    %v5011 = vpop.f32.mrb[0].mxu0
    %5012 = vdwg.mxu0
    %5013 = vmatprep.subr.mxu0 0.0
    %5014 = vmatpush1.xpose.msra.mxu0 %v3655
    %5015 = vmatprep.subr.mxu0 0.0
    %5016 = vmatpush1.xpose.msra.mxu0 0.0
    %5017 = vmatprep.subr.mxu0 0.0
    %5018 = vmatpush1.xpose.msra.mxu0 0.0
    %5019 = vmatprep.subr.mxu0 0.0
    %5020 = vmatpush1.xpose.msra.mxu0 0.0
    %5021 = vmatprep.subr.mxu0 0.0
    %5022 = vmatpush1.xpose.msra.mxu0 0.0
    %5023 = vmatprep.subr.mxu0 0.0
    %5024 = vmatpush1.xpose.msra.mxu0 0.0
    %5025 = vmatprep.subr.mxu0 0.0
    %5026 = vmatpush1.xpose.msra.mxu0 0.0
    %5027 = vmatprep.subr.mxu0 0.0
    %5028 = vmatpush1.xpose.msra.mxu0 0.0
    %5029 = vmatprep.subr.mxu0 0.0
    %5030 = vmatpush1.xpose.msra.mxu0 0.0
    %5031 = vmatprep.subr.mxu0 0.0
    %5032 = vmatpush1.xpose.msra.mxu0 0.0
    %5033 = vmatprep.subr.mxu0 0.0
    %5034 = vmatpush1.xpose.msra.mxu0 0.0
    %5035 = vmatprep.subr.mxu0 0.0
    %5036 = vmatpush1.xpose.msra.mxu0 0.0
    %5037 = vmatprep.subr.mxu0 0.0
    %5038 = vmatpush1.xpose.msra.mxu0 0.0
    %5039 = vmatprep.subr.mxu0 0.0
    %5040 = vmatpush1.xpose.msra.mxu0 0.0
    %5041 = vmatprep.subr.mxu0 0.0
    %5042 = vmatpush1.xpose.msra.mxu0 0.0
    %5043 = vmatprep.subr.mxu0 0.0
    %5044 = vmatpush1.xpose.msra.mxu0 0.0
    %5045 = vmatprep.subr.mxu0 0.0
    %5046 = vmatpush1.xpose.msra.mxu0 0.0
    %5047 = vmatprep.subr.mxu0 0.0
    %5048 = vmatpush1.xpose.msra.mxu0 0.0
    %5049 = vmatprep.subr.mxu0 0.0
    %5050 = vmatpush1.xpose.msra.mxu0 0.0
    %5051 = vmatprep.subr.mxu0 0.0
    %5052 = vmatpush1.xpose.msra.mxu0 0.0
    %5053 = vmatprep.subr.mxu0 0.0
    %5054 = vmatpush1.xpose.msra.mxu0 0.0
    %5055 = vmatprep.subr.mxu0 0.0
    %5056 = vmatpush1.xpose.msra.mxu0 0.0
    %5057 = vmatprep.subr.mxu0 0.0
    %5058 = vmatpush1.xpose.msra.mxu0 0.0
    %5059 = vmatprep.subr.mxu0 0.0
    %5060 = vmatpush1.xpose.msra.mxu0 0.0
    %5061 = vmatprep.subr.mxu0 0.0
    %5062 = vmatpush1.xpose.msra.mxu0 0.0
    %5063 = vmatprep.subr.mxu0 0.0
    %5064 = vmatpush1.xpose.msra.mxu0 0.0
    %5065 = vmatprep.subr.mxu0 0.0
    %5066 = vmatpush1.xpose.msra.mxu0 0.0
    %5067 = vmatprep.subr.mxu0 0.0
    %5068 = vmatpush1.xpose.msra.mxu0 0.0
    %5069 = vmatprep.subr.mxu0 0.0
    %5070 = vmatpush1.xpose.msra.mxu0 0.0
    %5071 = vmatprep.subr.mxu0 0.0
    %5072 = vmatpush1.xpose.msra.mxu0 0.0
    %5073 = vmatprep.subr.mxu0 0.0
    %5074 = vmatpush1.xpose.msra.mxu0 0.0
    %5075 = vmatprep.subr.mxu0 0.0
    %5076 = vmatpush1.xpose.msra.mxu0 0.0
    %5077 = vmatprep.mubr.f32.mxu0 0.0
    %5078 = vmatmul.mubr.f32.gmra.mrb[0].mxu0 %v3501
    %v5079 = vpop.f32.mrb[0].mxu0
    %v5080 = vadd.f32 0.0, %v5079
    %v5081 = vpop.f32.mrb[0].mxu0
    %5082 = vdwg.mxu0
    %v5083 = vmul.f32 %v5080, 0.35355338
    %v5084 = vsel %vm1072, %v5083, -inf
    %5085 = vmax.xlane.f32.xlu0 %v5084
    %v5086 = vpop.xlane.xlu0 %5085
    %v5087 = vsub.f32 %v5083, %v5086
    %v5088 = vmul.f32 %v5087, 1.442695
    %v5089 = vpow.pop %v5088
    %v5090 = vsel %vm1072, %v5089, 0.0
    %5091 = vadd.xlane.f32.xlu0 %v5090
    %v5092 = vpop.xlane.xlu0 %5091
    %v5093 = vrcp.pop %v5092
    %v5094 = vmul.f32 %v5089, %v5093
    %v5096 = vsel %vm1072, %v5094, 0
    %5098 = vmatprep.subr.mxu0 0.0
    %5099 = vmatpush1.msra.mxu0 %v3809
    %5100 = vmatprep.subr.mxu0 0.0
    %5101 = vmatpush1.msra.mxu0 0.0
    %5102 = vmatprep.subr.mxu0 0.0
    %5103 = vmatpush1.msra.mxu0 0.0
    %5104 = vmatprep.subr.mxu0 0.0
    %5105 = vmatpush1.msra.mxu0 0.0
    %5106 = vmatprep.subr.mxu0 0.0
    %5107 = vmatpush1.msra.mxu0 0.0
    %5108 = vmatprep.subr.mxu0 0.0
    %5109 = vmatpush1.msra.mxu0 0.0
    %5110 = vmatprep.subr.mxu0 0.0
    %5111 = vmatpush1.msra.mxu0 0.0
    %5112 = vmatprep.subr.mxu0 0.0
    %5113 = vmatpush1.msra.mxu0 0.0
    %5114 = vmatprep.subr.mxu0 0.0
    %5115 = vmatpush1.msra.mxu0 0.0
    %5116 = vmatprep.subr.mxu0 0.0
    %5117 = vmatpush1.msra.mxu0 0.0
    %5118 = vmatprep.subr.mxu0 0.0
    %5119 = vmatpush1.msra.mxu0 0.0
    %5120 = vmatprep.subr.mxu0 0.0
    %5121 = vmatpush1.msra.mxu0 0.0
    %5122 = vmatprep.subr.mxu0 0.0
    %5123 = vmatpush1.msra.mxu0 0.0
    %5124 = vmatprep.subr.mxu0 0.0
    %5125 = vmatpush1.msra.mxu0 0.0
    %5126 = vmatprep.subr.mxu0 0.0
    %5127 = vmatpush1.msra.mxu0 0.0
    %5128 = vmatprep.subr.mxu0 0.0
    %5129 = vmatpush1.msra.mxu0 0.0
    %5130 = vmatprep.subr.mxu0 0.0
    %5131 = vmatpush1.msra.mxu0 0.0
    %5132 = vmatprep.subr.mxu0 0.0
    %5133 = vmatpush1.msra.mxu0 0.0
    %5134 = vmatprep.subr.mxu0 0.0
    %5135 = vmatpush1.msra.mxu0 0.0
    %5136 = vmatprep.subr.mxu0 0.0
    %5137 = vmatpush1.msra.mxu0 0.0
    %5138 = vmatprep.subr.mxu0 0.0
    %5139 = vmatpush1.msra.mxu0 0.0
    %5140 = vmatprep.subr.mxu0 0.0
    %5141 = vmatpush1.msra.mxu0 0.0
    %5142 = vmatprep.subr.mxu0 0.0
    %5143 = vmatpush1.msra.mxu0 0.0
    %5144 = vmatprep.subr.mxu0 0.0
    %5145 = vmatpush1.msra.mxu0 0.0
    %5146 = vmatprep.subr.mxu0 0.0
    %5147 = vmatpush1.msra.mxu0 0.0
    %5148 = vmatprep.subr.mxu0 0.0
    %5149 = vmatpush1.msra.mxu0 0.0
    %5150 = vmatprep.subr.mxu0 0.0
    %5151 = vmatpush1.msra.mxu0 0.0
    %5152 = vmatprep.subr.mxu0 0.0
    %5153 = vmatpush1.msra.mxu0 0.0
    %5154 = vmatprep.subr.mxu0 0.0
    %5155 = vmatpush1.msra.mxu0 0.0
    %5156 = vmatprep.subr.mxu0 0.0
    %5157 = vmatpush1.msra.mxu0 0.0
    %5158 = vmatprep.subr.mxu0 0.0
    %5159 = vmatpush1.msra.mxu0 0.0
    %5160 = vmatprep.subr.mxu0 0.0
    %5161 = vmatpush1.msra.mxu0 0.0
    %5162 = vmatprep.mubr.f32.mxu0 0.0
    %5163 = vmatmul.mubr.f32.gmra.mrb[0].mxu0 %v5096
    %v5164 = vpop.f32.mrb[0].mxu0
    %v5165 = vadd.f32 0.0, %v5164
    %v5166 = vpop.f32.mrb[0].mxu0
    %5167 = vdwg.mxu0
    %5168 = vmatprep.subr.mxu0 0.0
    %5169 = vmatpush1.msra.mxu0 %v4216
    %5170 = vmatprep.subr.mxu0 0.0
    %5171 = vmatpush1.msra.mxu0 %v4217
    %5172 = vmatprep.subr.mxu0 0.0
    %5173 = vmatpush1.msra.mxu0 %v4218
    %5174 = vmatprep.subr.mxu0 0.0
    %5175 = vmatpush1.msra.mxu0 %v4219
    %5176 = vmatprep.subr.mxu0 0.0
    %5177 = vmatpush1.msra.mxu0 %v4220
    %5178 = vmatprep.subr.mxu0 0.0
    %5179 = vmatpush1.msra.mxu0 %v4221
    %5180 = vmatprep.subr.mxu0 0.0
    %5181 = vmatpush1.msra.mxu0 %v4222
    %5182 = vmatprep.subr.mxu0 0.0
    %5183 = vmatpush1.msra.mxu0 %v4223
    %5184 = vmatprep.subr.mxu0 0.0
    %5185 = vmatpush1.msra.mxu0 %v4224
    %5186 = vmatprep.subr.mxu0 0.0
    %5187 = vmatpush1.msra.mxu0 %v4225
    %5188 = vmatprep.subr.mxu0 0.0
    %5189 = vmatpush1.msra.mxu0 %v4226
    %5190 = vmatprep.subr.mxu0 0.0
    %5191 = vmatpush1.msra.mxu0 %v4227
    %5192 = vmatprep.subr.mxu0 0.0
    %5193 = vmatpush1.msra.mxu0 %v4228
    %5194 = vmatprep.subr.mxu0 0.0
    %5195 = vmatpush1.msra.mxu0 %v4229
    %5196 = vmatprep.subr.mxu0 0.0
    %5197 = vmatpush1.msra.mxu0 %v4230
    %5198 = vmatprep.subr.mxu0 0.0
    %5199 = vmatpush1.msra.mxu0 %v4231
    %5200 = vmatprep.subr.mxu0 0.0
    %5201 = vmatpush1.msra.mxu0 0.0
    %5202 = vmatprep.subr.mxu0 0.0
    %5203 = vmatpush1.msra.mxu0 0.0
    %5204 = vmatprep.subr.mxu0 0.0
    %5205 = vmatpush1.msra.mxu0 0.0
    %5206 = vmatprep.subr.mxu0 0.0
    %5207 = vmatpush1.msra.mxu0 0.0
    %5208 = vmatprep.subr.mxu0 0.0
    %5209 = vmatpush1.msra.mxu0 0.0
    %5210 = vmatprep.subr.mxu0 0.0
    %5211 = vmatpush1.msra.mxu0 0.0
    %5212 = vmatprep.subr.mxu0 0.0
    %5213 = vmatpush1.msra.mxu0 0.0
    %5214 = vmatprep.subr.mxu0 0.0
    %5215 = vmatpush1.msra.mxu0 0.0
    %5216 = vmatprep.subr.mxu0 0.0
    %5217 = vmatpush1.msra.mxu0 0.0
    %5218 = vmatprep.subr.mxu0 0.0
    %5219 = vmatpush1.msra.mxu0 0.0
    %5220 = vmatprep.subr.mxu0 0.0
    %5221 = vmatpush1.msra.mxu0 0.0
    %5222 = vmatprep.subr.mxu0 0.0
    %5223 = vmatpush1.msra.mxu0 0.0
    %5224 = vmatprep.subr.mxu0 0.0
    %5225 = vmatpush1.msra.mxu0 0.0
    %5226 = vmatprep.subr.mxu0 0.0
    %5227 = vmatpush1.msra.mxu0 0.0
    %5228 = vmatprep.subr.mxu0 0.0
    %5229 = vmatpush1.msra.mxu0 0.0
    %5230 = vmatprep.subr.mxu0 0.0
    %5231 = vmatpush1.msra.mxu0 0.0
    %5232 = vmatprep.mubr.f32.mxu0 0.0
    %5233 = vmatmul.mubr.f32.gmra.mrb[0].mxu0 %v5165
    %v5234 = vpop.f32.mrb[0].mxu0
    %v5235 = vadd.f32 0.0, %v5234
    %v5236 = vpop.f32.mrb[0].mxu0
    %5237 = vdwg.mxu0
    %5238 = vmatprep.subr.mxu0 0.0
    %5239 = vmatpush1.msra.mxu0 %v4044
    %5240 = vmatprep.subr.mxu0 0.0
    %5241 = vmatpush1.msra.mxu0 %v4045
    %5242 = vmatprep.subr.mxu0 0.0
    %5243 = vmatpush1.msra.mxu0 %v4046
    %5244 = vmatprep.subr.mxu0 0.0
    %5245 = vmatpush1.msra.mxu0 %v4047
    %5246 = vmatprep.subr.mxu0 0.0
    %5247 = vmatpush1.msra.mxu0 %v4048
    %5248 = vmatprep.subr.mxu0 0.0
    %5249 = vmatpush1.msra.mxu0 %v4049
    %5250 = vmatprep.subr.mxu0 0.0
    %5251 = vmatpush1.msra.mxu0 %v4050
    %5252 = vmatprep.subr.mxu0 0.0
    %5253 = vmatpush1.msra.mxu0 %v4051
    %5254 = vmatprep.subr.mxu0 0.0
    %5255 = vmatpush1.msra.mxu0 %v4052
    %5256 = vmatprep.subr.mxu0 0.0
    %5257 = vmatpush1.msra.mxu0 %v4053
    %5258 = vmatprep.subr.mxu0 0.0
    %5259 = vmatpush1.msra.mxu0 %v4054
    %5260 = vmatprep.subr.mxu0 0.0
    %5261 = vmatpush1.msra.mxu0 %v4055
    %5262 = vmatprep.subr.mxu0 0.0
    %5263 = vmatpush1.msra.mxu0 %v4056
    %5264 = vmatprep.subr.mxu0 0.0
    %5265 = vmatpush1.msra.mxu0 %v4057
    %5266 = vmatprep.subr.mxu0 0.0
    %5267 = vmatpush1.msra.mxu0 %v4058
    %5268 = vmatprep.subr.mxu0 0.0
    %5269 = vmatpush1.msra.mxu0 %v4059
    %5270 = vmatprep.subr.mxu0 0.0
    %5271 = vmatpush1.msra.mxu0 0.0
    %5272 = vmatprep.subr.mxu0 0.0
    %5273 = vmatpush1.msra.mxu0 0.0
    %5274 = vmatprep.subr.mxu0 0.0
    %5275 = vmatpush1.msra.mxu0 0.0
    %5276 = vmatprep.subr.mxu0 0.0
    %5277 = vmatpush1.msra.mxu0 0.0
    %5278 = vmatprep.subr.mxu0 0.0
    %5279 = vmatpush1.msra.mxu0 0.0
    %5280 = vmatprep.subr.mxu0 0.0
    %5281 = vmatpush1.msra.mxu0 0.0
    %5282 = vmatprep.subr.mxu0 0.0
    %5283 = vmatpush1.msra.mxu0 0.0
    %5284 = vmatprep.subr.mxu0 0.0
    %5285 = vmatpush1.msra.mxu0 0.0
    %5286 = vmatprep.subr.mxu0 0.0
    %5287 = vmatpush1.msra.mxu0 0.0
    %5288 = vmatprep.subr.mxu0 0.0
    %5289 = vmatpush1.msra.mxu0 0.0
    %5290 = vmatprep.subr.mxu0 0.0
    %5291 = vmatpush1.msra.mxu0 0.0
    %5292 = vmatprep.subr.mxu0 0.0
    %5293 = vmatpush1.msra.mxu0 0.0
    %5294 = vmatprep.subr.mxu0 0.0
    %5295 = vmatpush1.msra.mxu0 0.0
    %5296 = vmatprep.subr.mxu0 0.0
    %5297 = vmatpush1.msra.mxu0 0.0
    %5298 = vmatprep.subr.mxu0 0.0
    %5299 = vmatpush1.msra.mxu0 0.0
    %5300 = vmatprep.subr.mxu0 0.0
    %5301 = vmatpush1.msra.mxu0 0.0
    %5302 = vmatprep.mubr.f32.mxu0 0.0
    %5303 = vmatmul.mubr.f32.gmra.mrb[0].mxu0 %v5010
    %v5304 = vpop.f32.mrb[0].mxu0
    %v5305 = vadd.f32 %v5235, %v5304
    %v5306 = vpop.f32.mrb[0].mxu0
    %5307 = vdwg.mxu0
    %5308 = vmatprep.subr.mxu0 0.0
    %5309 = vmatpush1.xpose.msra.mxu0 %v3730
    %5310 = vmatprep.subr.mxu0 0.0
    %5311 = vmatpush1.xpose.msra.mxu0 0.0
    %5312 = vmatprep.subr.mxu0 0.0
    %5313 = vmatpush1.xpose.msra.mxu0 0.0
    %5314 = vmatprep.subr.mxu0 0.0
    %5315 = vmatpush1.xpose.msra.mxu0 0.0
    %5316 = vmatprep.subr.mxu0 0.0
    %5317 = vmatpush1.xpose.msra.mxu0 0.0
    %5318 = vmatprep.subr.mxu0 0.0
    %5319 = vmatpush1.xpose.msra.mxu0 0.0
    %5320 = vmatprep.subr.mxu0 0.0
    %5321 = vmatpush1.xpose.msra.mxu0 0.0
    %5322 = vmatprep.subr.mxu0 0.0
    %5323 = vmatpush1.xpose.msra.mxu0 0.0
    %5324 = vmatprep.subr.mxu0 0.0
    %5325 = vmatpush1.xpose.msra.mxu0 0.0
    %5326 = vmatprep.subr.mxu0 0.0
    %5327 = vmatpush1.xpose.msra.mxu0 0.0
    %5328 = vmatprep.subr.mxu0 0.0
    %5329 = vmatpush1.xpose.msra.mxu0 0.0
    %5330 = vmatprep.subr.mxu0 0.0
    %5331 = vmatpush1.xpose.msra.mxu0 0.0
    %5332 = vmatprep.subr.mxu0 0.0
    %5333 = vmatpush1.xpose.msra.mxu0 0.0
    %5334 = vmatprep.subr.mxu0 0.0
    %5335 = vmatpush1.xpose.msra.mxu0 0.0
    %5336 = vmatprep.subr.mxu0 0.0
    %5337 = vmatpush1.xpose.msra.mxu0 0.0
    %5338 = vmatprep.subr.mxu0 0.0
    %5339 = vmatpush1.xpose.msra.mxu0 0.0
    %5340 = vmatprep.subr.mxu0 0.0
    %5341 = vmatpush1.xpose.msra.mxu0 0.0
    %5342 = vmatprep.subr.mxu0 0.0
    %5343 = vmatpush1.xpose.msra.mxu0 0.0
    %5344 = vmatprep.subr.mxu0 0.0
    %5345 = vmatpush1.xpose.msra.mxu0 0.0
    %5346 = vmatprep.subr.mxu0 0.0
    %5347 = vmatpush1.xpose.msra.mxu0 0.0
    %5348 = vmatprep.subr.mxu0 0.0
    %5349 = vmatpush1.xpose.msra.mxu0 0.0
    %5350 = vmatprep.subr.mxu0 0.0
    %5351 = vmatpush1.xpose.msra.mxu0 0.0
    %5352 = vmatprep.subr.mxu0 0.0
    %5353 = vmatpush1.xpose.msra.mxu0 0.0
    %5354 = vmatprep.subr.mxu0 0.0
    %5355 = vmatpush1.xpose.msra.mxu0 0.0
    %5356 = vmatprep.subr.mxu0 0.0
    %5357 = vmatpush1.xpose.msra.mxu0 0.0
    %5358 = vmatprep.subr.mxu0 0.0
    %5359 = vmatpush1.xpose.msra.mxu0 0.0
    %5360 = vmatprep.subr.mxu0 0.0
    %5361 = vmatpush1.xpose.msra.mxu0 0.0
    %5362 = vmatprep.subr.mxu0 0.0
    %5363 = vmatpush1.xpose.msra.mxu0 0.0
    %5364 = vmatprep.subr.mxu0 0.0
    %5365 = vmatpush1.xpose.msra.mxu0 0.0
    %5366 = vmatprep.subr.mxu0 0.0
    %5367 = vmatpush1.xpose.msra.mxu0 0.0
    %5368 = vmatprep.subr.mxu0 0.0
    %5369 = vmatpush1.xpose.msra.mxu0 0.0
    %5370 = vmatprep.subr.mxu0 0.0
    %5371 = vmatpush1.xpose.msra.mxu0 0.0
    %5372 = vmatprep.mubr.f32.mxu0 0.0
    %5373 = vmatmul.mubr.f32.gmra.mrb[0].mxu0 %v3576
    %v5374 = vpop.f32.mrb[0].mxu0
    %v5375 = vadd.f32 0.0, %v5374
    %v5376 = vpop.f32.mrb[0].mxu0
    %5377 = vdwg.mxu0
    %v5378 = vmul.f32 %v5375, 0.35355338
    %v5379 = vsel %vm1072, %v5378, -inf
    %5380 = vmax.xlane.f32.xlu0 %v5379
    %v5381 = vpop.xlane.xlu0 %5380
    %v5382 = vsub.f32 %v5378, %v5381
    %v5383 = vmul.f32 %v5382, 1.442695
    %v5384 = vpow.pop %v5383
    %v5385 = vsel %vm1072, %v5384, 0.0
    %5386 = vadd.xlane.f32.xlu0 %v5385
    %v5387 = vpop.xlane.xlu0 %5386
    %v5388 = vrcp.pop %v5387
    %v5389 = vmul.f32 %v5384, %v5388
    %v5391 = vsel %vm1072, %v5389, 0
    %5393 = vmatprep.subr.mxu0 0.0
    %5394 = vmatpush1.msra.mxu0 %v3884
    %5395 = vmatprep.subr.mxu0 0.0
    %5396 = vmatpush1.msra.mxu0 0.0
    %5397 = vmatprep.subr.mxu0 0.0
    %5398 = vmatpush1.msra.mxu0 0.0
    %5399 = vmatprep.subr.mxu0 0.0
    %5400 = vmatpush1.msra.mxu0 0.0
    %5401 = vmatprep.subr.mxu0 0.0
    %5402 = vmatpush1.msra.mxu0 0.0
    %5403 = vmatprep.subr.mxu0 0.0
    %5404 = vmatpush1.msra.mxu0 0.0
    %5405 = vmatprep.subr.mxu0 0.0
    %5406 = vmatpush1.msra.mxu0 0.0
    %5407 = vmatprep.subr.mxu0 0.0
    %5408 = vmatpush1.msra.mxu0 0.0
    %5409 = vmatprep.subr.mxu0 0.0
    %5410 = vmatpush1.msra.mxu0 0.0
    %5411 = vmatprep.subr.mxu0 0.0
    %5412 = vmatpush1.msra.mxu0 0.0
    %5413 = vmatprep.subr.mxu0 0.0
    %5414 = vmatpush1.msra.mxu0 0.0
    %5415 = vmatprep.subr.mxu0 0.0
    %5416 = vmatpush1.msra.mxu0 0.0
    %5417 = vmatprep.subr.mxu0 0.0
    %5418 = vmatpush1.msra.mxu0 0.0
    %5419 = vmatprep.subr.mxu0 0.0
    %5420 = vmatpush1.msra.mxu0 0.0
    %5421 = vmatprep.subr.mxu0 0.0
    %5422 = vmatpush1.msra.mxu0 0.0
    %5423 = vmatprep.subr.mxu0 0.0
    %5424 = vmatpush1.msra.mxu0 0.0
    %5425 = vmatprep.subr.mxu0 0.0
    %5426 = vmatpush1.msra.mxu0 0.0
    %5427 = vmatprep.subr.mxu0 0.0
    %5428 = vmatpush1.msra.mxu0 0.0
    %5429 = vmatprep.subr.mxu0 0.0
    %5430 = vmatpush1.msra.mxu0 0.0
    %5431 = vmatprep.subr.mxu0 0.0
    %5432 = vmatpush1.msra.mxu0 0.0
    %5433 = vmatprep.subr.mxu0 0.0
    %5434 = vmatpush1.msra.mxu0 0.0
    %5435 = vmatprep.subr.mxu0 0.0
    %5436 = vmatpush1.msra.mxu0 0.0
    %5437 = vmatprep.subr.mxu0 0.0
    %5438 = vmatpush1.msra.mxu0 0.0
    %5439 = vmatprep.subr.mxu0 0.0
    %5440 = vmatpush1.msra.mxu0 0.0
    %5441 = vmatprep.subr.mxu0 0.0
    %5442 = vmatpush1.msra.mxu0 0.0
    %5443 = vmatprep.subr.mxu0 0.0
    %5444 = vmatpush1.msra.mxu0 0.0
    %5445 = vmatprep.subr.mxu0 0.0
    %5446 = vmatpush1.msra.mxu0 0.0
    %5447 = vmatprep.subr.mxu0 0.0
    %5448 = vmatpush1.msra.mxu0 0.0
    %5449 = vmatprep.subr.mxu0 0.0
    %5450 = vmatpush1.msra.mxu0 0.0
    %5451 = vmatprep.subr.mxu0 0.0
    %5452 = vmatpush1.msra.mxu0 0.0
    %5453 = vmatprep.subr.mxu0 0.0
    %5454 = vmatpush1.msra.mxu0 0.0
    %5455 = vmatprep.subr.mxu0 0.0
    %5456 = vmatpush1.msra.mxu0 0.0
    %5457 = vmatprep.mubr.f32.mxu0 0.0
    %5458 = vmatmul.mubr.f32.gmra.mrb[0].mxu0 %v5391
    %v5459 = vpop.f32.mrb[0].mxu0
    %v5460 = vadd.f32 0.0, %v5459
    %v5461 = vpop.f32.mrb[0].mxu0
    %5462 = vdwg.mxu0
    %5463 = vmatprep.subr.mxu0 0.0
    %5464 = vmatpush1.msra.mxu0 %v4528
    %5465 = vmatprep.subr.mxu0 0.0
    %5466 = vmatpush1.msra.mxu0 %v4529
    %5467 = vmatprep.subr.mxu0 0.0
    %5468 = vmatpush1.msra.mxu0 %v4530
    %5469 = vmatprep.subr.mxu0 0.0
    %5470 = vmatpush1.msra.mxu0 %v4531
    %5471 = vmatprep.subr.mxu0 0.0
    %5472 = vmatpush1.msra.mxu0 %v4532
    %5473 = vmatprep.subr.mxu0 0.0
    %5474 = vmatpush1.msra.mxu0 %v4533
    %5475 = vmatprep.subr.mxu0 0.0
    %5476 = vmatpush1.msra.mxu0 %v4534
    %5477 = vmatprep.subr.mxu0 0.0
    %5478 = vmatpush1.msra.mxu0 %v4535
    %5479 = vmatprep.subr.mxu0 0.0
    %5480 = vmatpush1.msra.mxu0 %v4536
    %5481 = vmatprep.subr.mxu0 0.0
    %5482 = vmatpush1.msra.mxu0 %v4537
    %5483 = vmatprep.subr.mxu0 0.0
    %5484 = vmatpush1.msra.mxu0 %v4538
    %5485 = vmatprep.subr.mxu0 0.0
    %5486 = vmatpush1.msra.mxu0 %v4539
    %5487 = vmatprep.subr.mxu0 0.0
    %5488 = vmatpush1.msra.mxu0 %v4540
    %5489 = vmatprep.subr.mxu0 0.0
    %5490 = vmatpush1.msra.mxu0 %v4541
    %5491 = vmatprep.subr.mxu0 0.0
    %5492 = vmatpush1.msra.mxu0 %v4542
    %5493 = vmatprep.subr.mxu0 0.0
    %5494 = vmatpush1.msra.mxu0 %v4543
    %5495 = vmatprep.subr.mxu0 0.0
    %5496 = vmatpush1.msra.mxu0 0.0
    %5497 = vmatprep.subr.mxu0 0.0
    %5498 = vmatpush1.msra.mxu0 0.0
    %5499 = vmatprep.subr.mxu0 0.0
    %5500 = vmatpush1.msra.mxu0 0.0
    %5501 = vmatprep.subr.mxu0 0.0
    %5502 = vmatpush1.msra.mxu0 0.0
    %5503 = vmatprep.subr.mxu0 0.0
    %5504 = vmatpush1.msra.mxu0 0.0
    %5505 = vmatprep.subr.mxu0 0.0
    %5506 = vmatpush1.msra.mxu0 0.0
    %5507 = vmatprep.subr.mxu0 0.0
    %5508 = vmatpush1.msra.mxu0 0.0
    %5509 = vmatprep.subr.mxu0 0.0
    %5510 = vmatpush1.msra.mxu0 0.0
    %5511 = vmatprep.subr.mxu0 0.0
    %5512 = vmatpush1.msra.mxu0 0.0
    %5513 = vmatprep.subr.mxu0 0.0
    %5514 = vmatpush1.msra.mxu0 0.0
    %5515 = vmatprep.subr.mxu0 0.0
    %5516 = vmatpush1.msra.mxu0 0.0
    %5517 = vmatprep.subr.mxu0 0.0
    %5518 = vmatpush1.msra.mxu0 0.0
    %5519 = vmatprep.subr.mxu0 0.0
    %5520 = vmatpush1.msra.mxu0 0.0
    %5521 = vmatprep.subr.mxu0 0.0
    %5522 = vmatpush1.msra.mxu0 0.0
    %5523 = vmatprep.subr.mxu0 0.0
    %5524 = vmatpush1.msra.mxu0 0.0
    %5525 = vmatprep.subr.mxu0 0.0
    %5526 = vmatpush1.msra.mxu0 0.0
    %5527 = vmatprep.mubr.f32.mxu0 0.0
    %5528 = vmatmul.mubr.f32.gmra.mrb[0].mxu0 %v5460
    %v5529 = vpop.f32.mrb[0].mxu0
    %v5530 = vadd.f32 0.0, %v5529
    %v5531 = vpop.f32.mrb[0].mxu0
    %5532 = vdwg.mxu0
    %v5533 = vadd.f32 %v5305, %v5530
    %5534 = vmatprep.subr.mxu0 0.0
    %5535 = vmatpush1.xpose.msra.mxu0 %v3732
    %5536 = vmatprep.subr.mxu0 0.0
    %5537 = vmatpush1.xpose.msra.mxu0 0.0
    %5538 = vmatprep.subr.mxu0 0.0
    %5539 = vmatpush1.xpose.msra.mxu0 0.0
    %5540 = vmatprep.subr.mxu0 0.0
    %5541 = vmatpush1.xpose.msra.mxu0 0.0
    %5542 = vmatprep.subr.mxu0 0.0
    %5543 = vmatpush1.xpose.msra.mxu0 0.0
    %5544 = vmatprep.subr.mxu0 0.0
    %5545 = vmatpush1.xpose.msra.mxu0 0.0
    %5546 = vmatprep.subr.mxu0 0.0
    %5547 = vmatpush1.xpose.msra.mxu0 0.0
    %5548 = vmatprep.subr.mxu0 0.0
    %5549 = vmatpush1.xpose.msra.mxu0 0.0
    %5550 = vmatprep.subr.mxu0 0.0
    %5551 = vmatpush1.xpose.msra.mxu0 0.0
    %5552 = vmatprep.subr.mxu0 0.0
    %5553 = vmatpush1.xpose.msra.mxu0 0.0
    %5554 = vmatprep.subr.mxu0 0.0
    %5555 = vmatpush1.xpose.msra.mxu0 0.0
    %5556 = vmatprep.subr.mxu0 0.0
    %5557 = vmatpush1.xpose.msra.mxu0 0.0
    %5558 = vmatprep.subr.mxu0 0.0
    %5559 = vmatpush1.xpose.msra.mxu0 0.0
    %5560 = vmatprep.subr.mxu0 0.0
    %5561 = vmatpush1.xpose.msra.mxu0 0.0
    %5562 = vmatprep.subr.mxu0 0.0
    %5563 = vmatpush1.xpose.msra.mxu0 0.0
    %5564 = vmatprep.subr.mxu0 0.0
    %5565 = vmatpush1.xpose.msra.mxu0 0.0
    %5566 = vmatprep.subr.mxu0 0.0
    %5567 = vmatpush1.xpose.msra.mxu0 0.0
    %5568 = vmatprep.subr.mxu0 0.0
    %5569 = vmatpush1.xpose.msra.mxu0 0.0
    %5570 = vmatprep.subr.mxu0 0.0
    %5571 = vmatpush1.xpose.msra.mxu0 0.0
    %5572 = vmatprep.subr.mxu0 0.0
    %5573 = vmatpush1.xpose.msra.mxu0 0.0
    %5574 = vmatprep.subr.mxu0 0.0
    %5575 = vmatpush1.xpose.msra.mxu0 0.0
    %5576 = vmatprep.subr.mxu0 0.0
    %5577 = vmatpush1.xpose.msra.mxu0 0.0
    %5578 = vmatprep.subr.mxu0 0.0
    %5579 = vmatpush1.xpose.msra.mxu0 0.0
    %5580 = vmatprep.subr.mxu0 0.0
    %5581 = vmatpush1.xpose.msra.mxu0 0.0
    %5582 = vmatprep.subr.mxu0 0.0
    %5583 = vmatpush1.xpose.msra.mxu0 0.0
    %5584 = vmatprep.subr.mxu0 0.0
    %5585 = vmatpush1.xpose.msra.mxu0 0.0
    %5586 = vmatprep.subr.mxu0 0.0
    %5587 = vmatpush1.xpose.msra.mxu0 0.0
    %5588 = vmatprep.subr.mxu0 0.0
    %5589 = vmatpush1.xpose.msra.mxu0 0.0
    %5590 = vmatprep.subr.mxu0 0.0
    %5591 = vmatpush1.xpose.msra.mxu0 0.0
    %5592 = vmatprep.subr.mxu0 0.0
    %5593 = vmatpush1.xpose.msra.mxu0 0.0
    %5594 = vmatprep.subr.mxu0 0.0
    %5595 = vmatpush1.xpose.msra.mxu0 0.0
    %5596 = vmatprep.subr.mxu0 0.0
    %5597 = vmatpush1.xpose.msra.mxu0 0.0
    %5598 = vmatprep.mubr.f32.mxu0 0.0
    %5599 = vmatmul.mubr.f32.gmra.mrb[0].mxu0 %v3578
    %v5600 = vpop.f32.mrb[0].mxu0
    %v5601 = vadd.f32 0.0, %v5600
    %v5602 = vpop.f32.mrb[0].mxu0
    %5603 = vdwg.mxu0
    %v5604 = vmul.f32 %v5601, 0.35355338
    %v5605 = vsel %vm1072, %v5604, -inf
    %5606 = vmax.xlane.f32.xlu0 %v5605
    %v5607 = vpop.xlane.xlu0 %5606
    %v5608 = vsub.f32 %v5604, %v5607
    %v5609 = vmul.f32 %v5608, 1.442695
    %v5610 = vpow.pop %v5609
    %v5611 = vsel %vm1072, %v5610, 0.0
    %5612 = vadd.xlane.f32.xlu0 %v5611
    %v5613 = vpop.xlane.xlu0 %5612
    %v5614 = vrcp.pop %v5613
    %v5615 = vmul.f32 %v5610, %v5614
    %v5617 = vsel %vm1072, %v5615, 0
    %5619 = vmatprep.subr.mxu0 0.0
    %5620 = vmatpush1.msra.mxu0 %v3886
    %5621 = vmatprep.subr.mxu0 0.0
    %5622 = vmatpush1.msra.mxu0 0.0
    %5623 = vmatprep.subr.mxu0 0.0
    %5624 = vmatpush1.msra.mxu0 0.0
    %5625 = vmatprep.subr.mxu0 0.0
    %5626 = vmatpush1.msra.mxu0 0.0
    %5627 = vmatprep.subr.mxu0 0.0
    %5628 = vmatpush1.msra.mxu0 0.0
    %5629 = vmatprep.subr.mxu0 0.0
    %5630 = vmatpush1.msra.mxu0 0.0
    %5631 = vmatprep.subr.mxu0 0.0
    %5632 = vmatpush1.msra.mxu0 0.0
    %5633 = vmatprep.subr.mxu0 0.0
    %5634 = vmatpush1.msra.mxu0 0.0
    %5635 = vmatprep.subr.mxu0 0.0
    %5636 = vmatpush1.msra.mxu0 0.0
    %5637 = vmatprep.subr.mxu0 0.0
    %5638 = vmatpush1.msra.mxu0 0.0
    %5639 = vmatprep.subr.mxu0 0.0
    %5640 = vmatpush1.msra.mxu0 0.0
    %5641 = vmatprep.subr.mxu0 0.0
    %5642 = vmatpush1.msra.mxu0 0.0
    %5643 = vmatprep.subr.mxu0 0.0
    %5644 = vmatpush1.msra.mxu0 0.0
    %5645 = vmatprep.subr.mxu0 0.0
    %5646 = vmatpush1.msra.mxu0 0.0
    %5647 = vmatprep.subr.mxu0 0.0
    %5648 = vmatpush1.msra.mxu0 0.0
    %5649 = vmatprep.subr.mxu0 0.0
    %5650 = vmatpush1.msra.mxu0 0.0
    %5651 = vmatprep.subr.mxu0 0.0
    %5652 = vmatpush1.msra.mxu0 0.0
    %5653 = vmatprep.subr.mxu0 0.0
    %5654 = vmatpush1.msra.mxu0 0.0
    %5655 = vmatprep.subr.mxu0 0.0
    %5656 = vmatpush1.msra.mxu0 0.0
    %5657 = vmatprep.subr.mxu0 0.0
    %5658 = vmatpush1.msra.mxu0 0.0
    %5659 = vmatprep.subr.mxu0 0.0
    %5660 = vmatpush1.msra.mxu0 0.0
    %5661 = vmatprep.subr.mxu0 0.0
    %5662 = vmatpush1.msra.mxu0 0.0
    %5663 = vmatprep.subr.mxu0 0.0
    %5664 = vmatpush1.msra.mxu0 0.0
    %5665 = vmatprep.subr.mxu0 0.0
    %5666 = vmatpush1.msra.mxu0 0.0
    %5667 = vmatprep.subr.mxu0 0.0
    %5668 = vmatpush1.msra.mxu0 0.0
    %5669 = vmatprep.subr.mxu0 0.0
    %5670 = vmatpush1.msra.mxu0 0.0
    %5671 = vmatprep.subr.mxu0 0.0
    %5672 = vmatpush1.msra.mxu0 0.0
    %5673 = vmatprep.subr.mxu0 0.0
    %5674 = vmatpush1.msra.mxu0 0.0
    %5675 = vmatprep.subr.mxu0 0.0
    %5676 = vmatpush1.msra.mxu0 0.0
    %5677 = vmatprep.subr.mxu0 0.0
    %5678 = vmatpush1.msra.mxu0 0.0
    %5679 = vmatprep.subr.mxu0 0.0
    %5680 = vmatpush1.msra.mxu0 0.0
    %5681 = vmatprep.subr.mxu0 0.0
    %5682 = vmatpush1.msra.mxu0 0.0
    %5683 = vmatprep.mubr.f32.mxu0 0.0
    %5684 = vmatmul.mubr.f32.gmra.mrb[0].mxu0 %v5617
    %v5685 = vpop.f32.mrb[0].mxu0
    %v5686 = vadd.f32 0.0, %v5685
    %v5687 = vpop.f32.mrb[0].mxu0
    %5688 = vdwg.mxu0
    %5689 = vmatprep.subr.mxu0 0.0
    %5690 = vmatpush1.msra.mxu0 %v4771
    %5691 = vmatprep.subr.mxu0 0.0
    %5692 = vmatpush1.msra.mxu0 %v4772
    %5693 = vmatprep.subr.mxu0 0.0
    %5694 = vmatpush1.msra.mxu0 %v4773
    %5695 = vmatprep.subr.mxu0 0.0
    %5696 = vmatpush1.msra.mxu0 %v4774
    %5697 = vmatprep.subr.mxu0 0.0
    %5698 = vmatpush1.msra.mxu0 %v4775
    %5699 = vmatprep.subr.mxu0 0.0
    %5700 = vmatpush1.msra.mxu0 %v4776
    %5701 = vmatprep.subr.mxu0 0.0
    %5702 = vmatpush1.msra.mxu0 %v4777
    %5703 = vmatprep.subr.mxu0 0.0
    %5704 = vmatpush1.msra.mxu0 %v4778
    %5705 = vmatprep.subr.mxu0 0.0
    %5706 = vmatpush1.msra.mxu0 %v4779
    %5707 = vmatprep.subr.mxu0 0.0
    %5708 = vmatpush1.msra.mxu0 %v4780
    %5709 = vmatprep.subr.mxu0 0.0
    %5710 = vmatpush1.msra.mxu0 %v4781
    %5711 = vmatprep.subr.mxu0 0.0
    %5712 = vmatpush1.msra.mxu0 %v4782
    %5713 = vmatprep.subr.mxu0 0.0
    %5714 = vmatpush1.msra.mxu0 %v4783
    %5715 = vmatprep.subr.mxu0 0.0
    %5716 = vmatpush1.msra.mxu0 %v4784
    %5717 = vmatprep.subr.mxu0 0.0
    %5718 = vmatpush1.msra.mxu0 %v4785
    %5719 = vmatprep.subr.mxu0 0.0
    %5720 = vmatpush1.msra.mxu0 %v4786
    %5721 = vmatprep.subr.mxu0 0.0
    %5722 = vmatpush1.msra.mxu0 0.0
    %5723 = vmatprep.subr.mxu0 0.0
    %5724 = vmatpush1.msra.mxu0 0.0
    %5725 = vmatprep.subr.mxu0 0.0
    %5726 = vmatpush1.msra.mxu0 0.0
    %5727 = vmatprep.subr.mxu0 0.0
    %5728 = vmatpush1.msra.mxu0 0.0
    %5729 = vmatprep.subr.mxu0 0.0
    %5730 = vmatpush1.msra.mxu0 0.0
    %5731 = vmatprep.subr.mxu0 0.0
    %5732 = vmatpush1.msra.mxu0 0.0
    %5733 = vmatprep.subr.mxu0 0.0
    %5734 = vmatpush1.msra.mxu0 0.0
    %5735 = vmatprep.subr.mxu0 0.0
    %5736 = vmatpush1.msra.mxu0 0.0
    %5737 = vmatprep.subr.mxu0 0.0
    %5738 = vmatpush1.msra.mxu0 0.0
    %5739 = vmatprep.subr.mxu0 0.0
    %5740 = vmatpush1.msra.mxu0 0.0
    %5741 = vmatprep.subr.mxu0 0.0
    %5742 = vmatpush1.msra.mxu0 0.0
    %5743 = vmatprep.subr.mxu0 0.0
    %5744 = vmatpush1.msra.mxu0 0.0
    %5745 = vmatprep.subr.mxu0 0.0
    %5746 = vmatpush1.msra.mxu0 0.0
    %5747 = vmatprep.subr.mxu0 0.0
    %5748 = vmatpush1.msra.mxu0 0.0
    %5749 = vmatprep.subr.mxu0 0.0
    %5750 = vmatpush1.msra.mxu0 0.0
    %5751 = vmatprep.subr.mxu0 0.0
    %5752 = vmatpush1.msra.mxu0 0.0
    %5753 = vmatprep.mubr.f32.mxu0 0.0
    %5754 = vmatmul.mubr.f32.gmra.mrb[0].mxu0 %v5686
    %v5755 = vpop.f32.mrb[0].mxu0
    %v5756 = vadd.f32 0.0, %v5755
    %v5757 = vpop.f32.mrb[0].mxu0
    %5758 = vdwg.mxu0
    %v5759 = vadd.f32 %v5533, %v5756
    %s5760 = scalar_lea.vmem [#allocation7], 1
    %v5761 = vld [vmem:[%s5760] sm:$0x1]
    %v5763 = vlaneseq
    %v5764 = vshrl.u32 %v5763, 7
    %v5765 = vsub.s32 0, %v5764
    %v5766 = vrot.slane %v5761, %v5765
    %v5768 = vadd.f32 %v4857, %v5766
    %v5769 = vadd.f32 %v5759, %v5766
    %v5770 = vadd.f32 %v3166, %v5768
    %v5771 = vadd.f32 %v3167, %v5769
    %s5772 = scalar_lea.vmem [#allocation9], 1
    %v5773 = vld [vmem:[%s5772] sm:$0x1]
    %s5774 = scalar_lea.vmem [#allocation10], 1
    %v5775 = vld [vmem:[%s5774] sm:$0x1]
    %5776 = vadd.xlane.f32.xlu0 %v5770
    %v5777 = vpop.xlane.xlu0 %5776
    %5778 = vadd.xlane.f32.xlu0 %v5771
    %v5779 = vpop.xlane.xlu0 %5778
    %v5780 = vmul.f32 %v5777, 0.03125
    %v5781 = vmul.f32 %v5779, 0.03125
    %v5782 = vsub.f32 %v5770, %v5780
    %v5783 = vsub.f32 %v5771, %v5781
    %v5784 = vmul.f32 %v5782, %v274
    %v5785 = vmul.f32 %v5783, %v274
    %v5786 = vmul.f32 %v5784, %v5784
    %v5787 = vmul.f32 %v5785, %v5785
    %5788 = vadd.xlane.f32.xlu0 %v5786
    %v5789 = vpop.xlane.xlu0 %5788
    %5790 = vadd.xlane.f32.xlu0 %v5787
    %v5791 = vpop.xlane.xlu0 %5790
    %v5792 = vmul.f32 %v5789, 0.03125
    %v5793 = vmul.f32 %v5791, 0.03125
    %v5794 = vadd.f32 %v5792, 1e-05
    %v5795 = vadd.f32 %v5793, 1e-05
    %v5796 = vrsqrt.pop %v5794
    %v5797 = vrsqrt.pop %v5795
    %v5798 = vmul.f32 %v5784, %v5796
    %v5799 = vmul.f32 %v5785, %v5797
    %v5801 = vlaneseq
    %v5802 = vshrl.u32 %v5801, 7
    %v5803 = vsub.s32 0, %v5802
    %v5804 = vrot.slane %v5773, %v5803
    %v5806 = vmul.f32 %v5798, %v5804
    %v5807 = vmul.f32 %v5799, %v5804
    %v5809 = vlaneseq
    %v5810 = vshrl.u32 %v5809, 7
    %v5811 = vsub.s32 0, %v5810
    %v5812 = vrot.slane %v5775, %v5811
    %v5814 = vadd.f32 %v5806, %v5812
    %v5815 = vadd.f32 %v5807, %v5812
    %s5816 = scalar_lea.vmem [#allocation12], 128
    %v5817 = vld [vmem:[%s5816] sm:$0xff]
    %v5818 = vld [vmem:[%s5816 + $0x8] sm:$0xff]
    %v5819 = vld [vmem:[%s5816 + $0x10] sm:$0xff]
    %v5820 = vld [vmem:[%s5816 + $0x18] sm:$0xff]
    %v5821 = vld [vmem:[%s5816 + $0x20] sm:$0xff]
    %v5822 = vld [vmem:[%s5816 + $0x28] sm:$0xff]
    %v5823 = vld [vmem:[%s5816 + $0x30] sm:$0xff]
    %v5824 = vld [vmem:[%s5816 + $0x38] sm:$0xff]
    %v5825 = vld [vmem:[%s5816 + $0x40] sm:$0xff]
    %v5826 = vld [vmem:[%s5816 + $0x48] sm:$0xff]
    %v5827 = vld [vmem:[%s5816 + $0x50] sm:$0xff]
    %v5828 = vld [vmem:[%s5816 + $0x58] sm:$0xff]
    %v5829 = vld [vmem:[%s5816 + $0x60] sm:$0xff]
    %v5830 = vld [vmem:[%s5816 + $0x68] sm:$0xff]
    %v5831 = vld [vmem:[%s5816 + $0x70] sm:$0xff]
    %v5832 = vld [vmem:[%s5816 + $0x78] sm:$0xff]
    %s5833 = scalar_lea.vmem [#allocation13], 1
    %v5834 = vld [vmem:[%s5833] sm:$0x1]
    %v5836 = vlaneseq
    %v5837 = vshrl.u32 %v5836, 7
    %v5838 = vsub.s32 0, %v5837
    %v5839 = vrot.slane %v5834, %v5838
    %5841 = vmatprep.subr.mxu0 0.0
    %5842 = vmatpush1.msra.mxu0 %v5817
    %5843 = vmatprep.subr.mxu0 0.0
    %5844 = vmatpush1.msra.mxu0 %v5818
    %5845 = vmatprep.subr.mxu0 0.0
    %5846 = vmatpush1.msra.mxu0 %v5819
    %5847 = vmatprep.subr.mxu0 0.0
    %5848 = vmatpush1.msra.mxu0 %v5820
    %5849 = vmatprep.subr.mxu0 0.0
    %5850 = vmatpush1.msra.mxu0 %v5821
    %5851 = vmatprep.subr.mxu0 0.0
    %5852 = vmatpush1.msra.mxu0 %v5822
    %5853 = vmatprep.subr.mxu0 0.0
    %5854 = vmatpush1.msra.mxu0 %v5823
    %5855 = vmatprep.subr.mxu0 0.0
    %5856 = vmatpush1.msra.mxu0 %v5824
    %5857 = vmatprep.subr.mxu0 0.0
    %5858 = vmatpush1.msra.mxu0 %v5825
    %5859 = vmatprep.subr.mxu0 0.0
    %5860 = vmatpush1.msra.mxu0 %v5826
    %5861 = vmatprep.subr.mxu0 0.0
    %5862 = vmatpush1.msra.mxu0 %v5827
    %5863 = vmatprep.subr.mxu0 0.0
    %5864 = vmatpush1.msra.mxu0 %v5828
    %5865 = vmatprep.subr.mxu0 0.0
    %5866 = vmatpush1.msra.mxu0 %v5829
    %5867 = vmatprep.subr.mxu0 0.0
    %5868 = vmatpush1.msra.mxu0 %v5830
    %5869 = vmatprep.subr.mxu0 0.0
    %5870 = vmatpush1.msra.mxu0 %v5831
    %5871 = vmatprep.subr.mxu0 0.0
    %5872 = vmatpush1.msra.mxu0 %v5832
    %5873 = vmatprep.subr.mxu0 0.0
    %5874 = vmatpush1.msra.mxu0 0.0
    %5875 = vmatprep.subr.mxu0 0.0
    %5876 = vmatpush1.msra.mxu0 0.0
    %5877 = vmatprep.subr.mxu0 0.0
    %5878 = vmatpush1.msra.mxu0 0.0
    %5879 = vmatprep.subr.mxu0 0.0
    %5880 = vmatpush1.msra.mxu0 0.0
    %5881 = vmatprep.subr.mxu0 0.0
    %5882 = vmatpush1.msra.mxu0 0.0
    %5883 = vmatprep.subr.mxu0 0.0
    %5884 = vmatpush1.msra.mxu0 0.0
    %5885 = vmatprep.subr.mxu0 0.0
    %5886 = vmatpush1.msra.mxu0 0.0
    %5887 = vmatprep.subr.mxu0 0.0
    %5888 = vmatpush1.msra.mxu0 0.0
    %5889 = vmatprep.subr.mxu0 0.0
    %5890 = vmatpush1.msra.mxu0 0.0
    %5891 = vmatprep.subr.mxu0 0.0
    %5892 = vmatpush1.msra.mxu0 0.0
    %5893 = vmatprep.subr.mxu0 0.0
    %5894 = vmatpush1.msra.mxu0 0.0
    %5895 = vmatprep.subr.mxu0 0.0
    %5896 = vmatpush1.msra.mxu0 0.0
    %5897 = vmatprep.subr.mxu0 0.0
    %5898 = vmatpush1.msra.mxu0 0.0
    %5899 = vmatprep.subr.mxu0 0.0
    %5900 = vmatpush1.msra.mxu0 0.0
    %5901 = vmatprep.subr.mxu0 0.0
    %5902 = vmatpush1.msra.mxu0 0.0
    %5903 = vmatprep.subr.mxu0 0.0
    %5904 = vmatpush1.msra.mxu0 0.0
    %5905 = vmatprep.mubr.f32.mxu0 0.0
    %5906 = vmatmul.mubr.f32.gmra.mrb[0].mxu0 %v5814
    %v5907 = vpop.f32.mrb[0].mxu0
    %v5908 = vadd.f32 %v5839, %v5907
    %v5909 = vpop.f32.mrb[0].mxu0
    %5910 = vmatprep.mubr.f32.mxu0 0.0
    %5911 = vmatmul.mubr.f32.gmra.mrb[0].mxu0 %v5815
    %v5912 = vpop.f32.mrb[0].mxu0
    %v5913 = vadd.f32 %v5839, %v5912
    %v5914 = vpop.f32.mrb[0].mxu0
    %5915 = vdwg.mxu0
    %v5916 = vmax.f32 %v5908, 0.0
    %v5917 = vmax.f32 %v5913, 0.0
    %s5918 = scalar_lea.vmem [#allocation15], 128
    %v5919 = vld [vmem:[%s5918] sm:$0xff]
    %v5920 = vld [vmem:[%s5918 + $0x8] sm:$0xff]
    %v5921 = vld [vmem:[%s5918 + $0x10] sm:$0xff]
    %v5922 = vld [vmem:[%s5918 + $0x18] sm:$0xff]
    %v5923 = vld [vmem:[%s5918 + $0x20] sm:$0xff]
    %v5924 = vld [vmem:[%s5918 + $0x28] sm:$0xff]
    %v5925 = vld [vmem:[%s5918 + $0x30] sm:$0xff]
    %v5926 = vld [vmem:[%s5918 + $0x38] sm:$0xff]
    %v5927 = vld [vmem:[%s5918 + $0x40] sm:$0xff]
    %v5928 = vld [vmem:[%s5918 + $0x48] sm:$0xff]
    %v5929 = vld [vmem:[%s5918 + $0x50] sm:$0xff]
    %v5930 = vld [vmem:[%s5918 + $0x58] sm:$0xff]
    %v5931 = vld [vmem:[%s5918 + $0x60] sm:$0xff]
    %v5932 = vld [vmem:[%s5918 + $0x68] sm:$0xff]
    %v5933 = vld [vmem:[%s5918 + $0x70] sm:$0xff]
    %v5934 = vld [vmem:[%s5918 + $0x78] sm:$0xff]
    %s5935 = scalar_lea.vmem [#allocation16], 1
    %v5936 = vld [vmem:[%s5935] sm:$0x1]
    %v5938 = vlaneseq
    %v5939 = vshrl.u32 %v5938, 7
    %v5940 = vsub.s32 0, %v5939
    %v5941 = vrot.slane %v5936, %v5940
    %5943 = vmatprep.subr.mxu0 0.0
    %5944 = vmatpush1.msra.mxu0 %v5919
    %5945 = vmatprep.subr.mxu0 0.0
    %5946 = vmatpush1.msra.mxu0 %v5920
    %5947 = vmatprep.subr.mxu0 0.0
    %5948 = vmatpush1.msra.mxu0 %v5921
    %5949 = vmatprep.subr.mxu0 0.0
    %5950 = vmatpush1.msra.mxu0 %v5922
    %5951 = vmatprep.subr.mxu0 0.0
    %5952 = vmatpush1.msra.mxu0 %v5923
    %5953 = vmatprep.subr.mxu0 0.0
    %5954 = vmatpush1.msra.mxu0 %v5924
    %5955 = vmatprep.subr.mxu0 0.0
    %5956 = vmatpush1.msra.mxu0 %v5925
    %5957 = vmatprep.subr.mxu0 0.0
    %5958 = vmatpush1.msra.mxu0 %v5926
    %5959 = vmatprep.subr.mxu0 0.0
    %5960 = vmatpush1.msra.mxu0 %v5927
    %5961 = vmatprep.subr.mxu0 0.0
    %5962 = vmatpush1.msra.mxu0 %v5928
    %5963 = vmatprep.subr.mxu0 0.0
    %5964 = vmatpush1.msra.mxu0 %v5929
    %5965 = vmatprep.subr.mxu0 0.0
    %5966 = vmatpush1.msra.mxu0 %v5930
    %5967 = vmatprep.subr.mxu0 0.0
    %5968 = vmatpush1.msra.mxu0 %v5931
    %5969 = vmatprep.subr.mxu0 0.0
    %5970 = vmatpush1.msra.mxu0 %v5932
    %5971 = vmatprep.subr.mxu0 0.0
    %5972 = vmatpush1.msra.mxu0 %v5933
    %5973 = vmatprep.subr.mxu0 0.0
    %5974 = vmatpush1.msra.mxu0 %v5934
    %5975 = vmatprep.subr.mxu0 0.0
    %5976 = vmatpush1.msra.mxu0 0.0
    %5977 = vmatprep.subr.mxu0 0.0
    %5978 = vmatpush1.msra.mxu0 0.0
    %5979 = vmatprep.subr.mxu0 0.0
    %5980 = vmatpush1.msra.mxu0 0.0
    %5981 = vmatprep.subr.mxu0 0.0
    %5982 = vmatpush1.msra.mxu0 0.0
    %5983 = vmatprep.subr.mxu0 0.0
    %5984 = vmatpush1.msra.mxu0 0.0
    %5985 = vmatprep.subr.mxu0 0.0
    %5986 = vmatpush1.msra.mxu0 0.0
    %5987 = vmatprep.subr.mxu0 0.0
    %5988 = vmatpush1.msra.mxu0 0.0
    %5989 = vmatprep.subr.mxu0 0.0
    %5990 = vmatpush1.msra.mxu0 0.0
    %5991 = vmatprep.subr.mxu0 0.0
    %5992 = vmatpush1.msra.mxu0 0.0
    %5993 = vmatprep.subr.mxu0 0.0
    %5994 = vmatpush1.msra.mxu0 0.0
    %5995 = vmatprep.subr.mxu0 0.0
    %5996 = vmatpush1.msra.mxu0 0.0
    %5997 = vmatprep.subr.mxu0 0.0
    %5998 = vmatpush1.msra.mxu0 0.0
    %5999 = vmatprep.subr.mxu0 0.0
    %6000 = vmatpush1.msra.mxu0 0.0
    %6001 = vmatprep.subr.mxu0 0.0
    %6002 = vmatpush1.msra.mxu0 0.0
    %6003 = vmatprep.subr.mxu0 0.0
    %6004 = vmatpush1.msra.mxu0 0.0
    %6005 = vmatprep.subr.mxu0 0.0
    %6006 = vmatpush1.msra.mxu0 0.0
    %6007 = vmatprep.mubr.f32.mxu0 0.0
    %6008 = vmatmul.mubr.f32.gmra.mrb[0].mxu0 %v5916
    %v6009 = vpop.f32.mrb[0].mxu0
    %v6010 = vadd.f32 %v5941, %v6009
    %v6011 = vpop.f32.mrb[0].mxu0
    %6012 = vmatprep.mubr.f32.mxu0 0.0
    %6013 = vmatmul.mubr.f32.gmra.mrb[0].mxu0 %v5917
    %v6014 = vpop.f32.mrb[0].mxu0
    %v6015 = vadd.f32 %v5941, %v6014
    %v6016 = vpop.f32.mrb[0].mxu0
    %6017 = vdwg.mxu0
    %v6018 = vadd.f32 %v5814, %v6010
    %v6019 = vadd.f32 %v5815, %v6015
    %s6020 = scalar_lea.vmem [#allocation18], 1
    %v6021 = vld [vmem:[%s6020] sm:$0x1]
    %s6022 = scalar_lea.vmem [#allocation19], 1
    %v6023 = vld [vmem:[%s6022] sm:$0x1]
    %6024 = vadd.xlane.f32.xlu0 %v6018
    %v6025 = vpop.xlane.xlu0 %6024
    %6026 = vadd.xlane.f32.xlu0 %v6019
    %v6027 = vpop.xlane.xlu0 %6026
    %v6028 = vmul.f32 %v6025, 0.03125
    %v6029 = vmul.f32 %v6027, 0.03125
    %v6030 = vsub.f32 %v6018, %v6028
    %v6031 = vsub.f32 %v6019, %v6029
    %v6032 = vmul.f32 %v6030, %v274
    %v6033 = vmul.f32 %v6031, %v274
    %v6034 = vmul.f32 %v6032, %v6032
    %v6035 = vmul.f32 %v6033, %v6033
    %6036 = vadd.xlane.f32.xlu0 %v6034
    %v6037 = vpop.xlane.xlu0 %6036
    %6038 = vadd.xlane.f32.xlu0 %v6035
    %v6039 = vpop.xlane.xlu0 %6038
    %v6040 = vmul.f32 %v6037, 0.03125
    %v6041 = vmul.f32 %v6039, 0.03125
    %v6042 = vadd.f32 %v6040, 1e-05
    %v6043 = vadd.f32 %v6041, 1e-05
    %v6044 = vrsqrt.pop %v6042
    %v6045 = vrsqrt.pop %v6043
    %v6046 = vmul.f32 %v6032, %v6044
    %v6047 = vmul.f32 %v6033, %v6045
    %v6049 = vlaneseq
    %v6050 = vshrl.u32 %v6049, 7
    %v6051 = vsub.s32 0, %v6050
    %v6052 = vrot.slane %v6021, %v6051
    %v6054 = vmul.f32 %v6046, %v6052
    %v6055 = vmul.f32 %v6047, %v6052
    %v6057 = vlaneseq
    %v6058 = vshrl.u32 %v6057, 7
    %v6059 = vsub.s32 0, %v6058
    %v6060 = vrot.slane %v6023, %v6059
    %v6062 = vadd.f32 %v6054, %v6060
    %v6063 = vadd.f32 %v6055, %v6060
    %v6064 = vld [vmem:[#allocation21] sm:$0x1]
    %v6065 = vld [vmem:[#allocation22] sm:$0x1]
    %6066 = vadd.xlane.f32.xlu0 %v6062
    %v6067 = vpop.xlane.xlu0 %6066
    %6068 = vadd.xlane.f32.xlu0 %v6063
    %v6069 = vpop.xlane.xlu0 %6068
    %v6070 = vmul.f32 %v6067, 0.03125
    %v6071 = vmul.f32 %v6069, 0.03125
    %v6072 = vsub.f32 %v6062, %v6070
    %v6073 = vsub.f32 %v6063, %v6071
    %v6074 = vmul.f32 %v6072, %v274
    %v6075 = vmul.f32 %v6073, %v274
    %v6076 = vmul.f32 %v6074, %v6074
    %v6077 = vmul.f32 %v6075, %v6075
    %6078 = vadd.xlane.f32.xlu0 %v6076
    %v6079 = vpop.xlane.xlu0 %6078
    %6080 = vadd.xlane.f32.xlu0 %v6077
    %v6081 = vpop.xlane.xlu0 %6080
    %v6082 = vmul.f32 %v6079, 0.03125
    %v6083 = vmul.f32 %v6081, 0.03125
    %v6084 = vadd.f32 %v6082, 1e-05
    %v6085 = vadd.f32 %v6083, 1e-05
    %v6086 = vrsqrt.pop %v6084
    %v6087 = vrsqrt.pop %v6085
    %v6088 = vmul.f32 %v6074, %v6086
    %v6089 = vmul.f32 %v6075, %v6087
    %v6091 = vlaneseq
    %v6092 = vshrl.u32 %v6091, 7
    %v6093 = vsub.s32 0, %v6092
    %v6094 = vrot.slane %v6064, %v6093
    %v6096 = vmul.f32 %v6088, %v6094
    %v6097 = vmul.f32 %v6089, %v6094
    %v6099 = vlaneseq
    %v6100 = vshrl.u32 %v6099, 7
    %v6101 = vsub.s32 0, %v6100
    %v6102 = vrot.slane %v6065, %v6101
    %v6104 = vadd.f32 %v6096, %v6102
    %v6105 = vadd.f32 %v6097, %v6102
    %v6106 = vld [vmem:[#allocation24] sm:$0xff]
    %v6107 = vld [vmem:[#allocation24 + $0x8] sm:$0xff]
    %v6108 = vld [vmem:[#allocation24 + $0x10] sm:$0xff]
    %v6109 = vld [vmem:[#allocation24 + $0x18] sm:$0xff]
    %v6110 = vld [vmem:[#allocation24 + $0x20] sm:$0xff]
    %v6111 = vld [vmem:[#allocation24 + $0x28] sm:$0xff]
    %v6112 = vld [vmem:[#allocation24 + $0x30] sm:$0xff]
    %v6113 = vld [vmem:[#allocation24 + $0x38] sm:$0xff]
    %v6114 = vld [vmem:[#allocation24 + $0x40] sm:$0xff]
    %v6115 = vld [vmem:[#allocation24 + $0x48] sm:$0xff]
    %v6116 = vld [vmem:[#allocation24 + $0x50] sm:$0xff]
    %v6117 = vld [vmem:[#allocation24 + $0x58] sm:$0xff]
    %v6118 = vld [vmem:[#allocation24 + $0x60] sm:$0xff]
    %v6119 = vld [vmem:[#allocation24 + $0x68] sm:$0xff]
    %v6120 = vld [vmem:[#allocation24 + $0x70] sm:$0xff]
    %v6121 = vld [vmem:[#allocation24 + $0x78] sm:$0xff]
    %v6122 = vld [vmem:[#allocation25] sm:$0x1]
    %v6124 = vlaneseq
    %v6125 = vshrl.u32 %v6124, 7
    %v6126 = vsub.s32 0, %v6125
    %v6127 = vrot.slane %v6122, %v6126
    %6129 = vmatprep.subr.mxu0 0.0
    %6130 = vmatpush1.msra.mxu0 %v6106
    %6131 = vmatprep.subr.mxu0 0.0
    %6132 = vmatpush1.msra.mxu0 %v6107
    %6133 = vmatprep.subr.mxu0 0.0
    %6134 = vmatpush1.msra.mxu0 %v6108
    %6135 = vmatprep.subr.mxu0 0.0
    %6136 = vmatpush1.msra.mxu0 %v6109
    %6137 = vmatprep.subr.mxu0 0.0
    %6138 = vmatpush1.msra.mxu0 %v6110
    %6139 = vmatprep.subr.mxu0 0.0
    %6140 = vmatpush1.msra.mxu0 %v6111
    %6141 = vmatprep.subr.mxu0 0.0
    %6142 = vmatpush1.msra.mxu0 %v6112
    %6143 = vmatprep.subr.mxu0 0.0
    %6144 = vmatpush1.msra.mxu0 %v6113
    %6145 = vmatprep.subr.mxu0 0.0
    %6146 = vmatpush1.msra.mxu0 %v6114
    %6147 = vmatprep.subr.mxu0 0.0
    %6148 = vmatpush1.msra.mxu0 %v6115
    %6149 = vmatprep.subr.mxu0 0.0
    %6150 = vmatpush1.msra.mxu0 %v6116
    %6151 = vmatprep.subr.mxu0 0.0
    %6152 = vmatpush1.msra.mxu0 %v6117
    %6153 = vmatprep.subr.mxu0 0.0
    %6154 = vmatpush1.msra.mxu0 %v6118
    %6155 = vmatprep.subr.mxu0 0.0
    %6156 = vmatpush1.msra.mxu0 %v6119
    %6157 = vmatprep.subr.mxu0 0.0
    %6158 = vmatpush1.msra.mxu0 %v6120
    %6159 = vmatprep.subr.mxu0 0.0
    %6160 = vmatpush1.msra.mxu0 %v6121
    %6161 = vmatprep.subr.mxu0 0.0
    %6162 = vmatpush1.msra.mxu0 0.0
    %6163 = vmatprep.subr.mxu0 0.0
    %6164 = vmatpush1.msra.mxu0 0.0
    %6165 = vmatprep.subr.mxu0 0.0
    %6166 = vmatpush1.msra.mxu0 0.0
    %6167 = vmatprep.subr.mxu0 0.0
    %6168 = vmatpush1.msra.mxu0 0.0
    %6169 = vmatprep.subr.mxu0 0.0
    %6170 = vmatpush1.msra.mxu0 0.0
    %6171 = vmatprep.subr.mxu0 0.0
    %6172 = vmatpush1.msra.mxu0 0.0
    %6173 = vmatprep.subr.mxu0 0.0
    %6174 = vmatpush1.msra.mxu0 0.0
    %6175 = vmatprep.subr.mxu0 0.0
    %6176 = vmatpush1.msra.mxu0 0.0
    %6177 = vmatprep.subr.mxu0 0.0
    %6178 = vmatpush1.msra.mxu0 0.0
    %6179 = vmatprep.subr.mxu0 0.0
    %6180 = vmatpush1.msra.mxu0 0.0
    %6181 = vmatprep.subr.mxu0 0.0
    %6182 = vmatpush1.msra.mxu0 0.0
    %6183 = vmatprep.subr.mxu0 0.0
    %6184 = vmatpush1.msra.mxu0 0.0
    %6185 = vmatprep.subr.mxu0 0.0
    %6186 = vmatpush1.msra.mxu0 0.0
    %6187 = vmatprep.subr.mxu0 0.0
    %6188 = vmatpush1.msra.mxu0 0.0
    %6189 = vmatprep.subr.mxu0 0.0
    %6190 = vmatpush1.msra.mxu0 0.0
    %6191 = vmatprep.subr.mxu0 0.0
    %6192 = vmatpush1.msra.mxu0 0.0
    %6193 = vmatprep.mubr.f32.mxu0 0.0
    %6194 = vmatmul.mubr.f32.gmra.mrb[0].mxu0 %v6104
    %v6195 = vpop.f32.mrb[0].mxu0
    %v6196 = vadd.f32 %v6127, %v6195
    %v6197 = vpop.f32.mrb[0].mxu0
    %6198 = vmatprep.mubr.f32.mxu0 0.0
    %6199 = vmatmul.mubr.f32.gmra.mrb[0].mxu0 %v6105
    %v6200 = vpop.f32.mrb[0].mxu0
    %v6201 = vadd.f32 %v6127, %v6200
    %v6202 = vpop.f32.mrb[0].mxu0
    %6203 = vdwg.mxu0
    %v6204 = vsel %vm275, 1, 0
    %vm6205 = vcmp.eq.s32.totalorder %v6204, 1
    %v6206 = vsel %vm6205, %v6196, -1e+30
    %v6207 = vsel %vm6205, %v6201, -1e+30
    %6208 = vmax.xlane.f32.xlu0 %v6206
    %v6209 = vpop.xlane.xlu0 %6208
    %6210 = vmax.xlane.f32.xlu0 %v6207
    %v6211 = vpop.xlane.xlu0 %6210
    %v6212 = vsub.f32 %v6206, %v6209
    %v6213 = vsub.f32 %v6207, %v6211
    %v6214 = vmul.f32 %v6212, 1.442695
    %v6215 = vpow.pop %v6214
    %v6216 = vmul.f32 %v6213, 1.442695
    %v6217 = vpow.pop %v6216
    %6218 = vadd.xlane.f32.xlu0 %v6215
    %v6219 = vpop.xlane.xlu0 %6218
    %6220 = vadd.xlane.f32.xlu0 %v6217
    %v6221 = vpop.xlane.xlu0 %6220
    %v6222 = vrcp.pop %v6219
    %v6223 = vmul.f32 %v6215, %v6222
    %v6224 = vrcp.pop %v6221
    %v6225 = vmul.f32 %v6217, %v6224
    %6226 = vst [vmem:[%s18] sm:$0xff] %v6223
    %6227 = vst [vmem:[%s18 + $0x8] sm:$0xff] %v6225
    // Predicated region
    $region138: #{transformer_forward.1} parent=1 // pred_check
      _
    $region139: #{transformer_forward.1} parent=1 // pred_check_branch
      %6229 = sbr.rel (0) target = $region141
    $region140: #{transformer_forward.1} parent=1 // pred_region
      _
    $region141: #{transformer_forward.1} parent=1 // pred_fallthru
      _
    // Predicated region
    $region142: #{transformer_forward.1} parent=1 // pred_check
      _
    $region143: #{transformer_forward.1} parent=1 // pred_check_branch
      %6231 = sbr.rel (0) target = $region145
    $region144: #{transformer_forward.1} parent=1 // pred_region
      _
    $region145: #{transformer_forward.1} parent=1 // pred_fallthru
      _
    %6232 = vsyncpa [#allocation3], 1
    %6233 = vsyncpa [#allocation5], 1
    %6234 = vsyncpa [#allocation8], 1
    %6235 = vsyncpa [#allocation11], 1
    %6236 = vsyncpa [#allocation14], 1
    %6237 = vsyncpa [#allocation17], 1
    %6238 = vsyncpa [#allocation20], 1
    %6239 = vsyncpa [#allocation23], 1
    %6240 = vsyncpa [#allocation26], 1

</llo_original>
